<compile_context>
chip_gen: v6e
topology: v6e:2x2x1
jax: 0.10.0
libtpu: 0.0.40
codegen_flags: <defaults>
</compile_context>

<pallas_src>
import functools

import jax
import jax.numpy as jnp
from jax import lax
from jax.experimental import pallas as pl
from jax.experimental.pallas import tpu as pltpu


_VMEM = pl.BlockSpec(memory_space=pltpu.MemorySpace.VMEM)


# --------------------------------------------------------------------- activation helpers
def _erf_approx(x):
    # Abramowitz & Stegun 7.1.26 (abs err ~1.5e-7); the divide goes to the EUP.
    p = 0.3275911
    a1, a2, a3, a4, a5 = 0.254829592, -0.284496736, 1.421413741, -1.453152027, 1.061405429
    ax = jnp.abs(x)
    t = pl.reciprocal(1.0 + p * ax, approx=True)
    poly = ((((a5 * t + a4) * t + a3) * t + a2) * t + a1) * t
    y = 1.0 - poly * jnp.exp(-(ax * ax))
    return jnp.where(x >= 0, y, -y)


def _gelu(x):
    # PyTorch nn.GELU() default (erf form); math kept in f32 (v5e VPU has no bf16).
    return 0.5 * x * (1.0 + _erf_approx(x * 0.7071067811865476))


# --------------------------------------------------------------------- conv + BN + GELU + pool
def _conv_bn_gelu_pool_kernel(x_ref, w_ref, b_ref, scale_ref, shift_ref, o_ref, y_sc):
    """Fused Conv1d (sum of K shifted matmuls) + BatchNorm(eval) + GELU + MaxPool1d(3).

    x_ref:  (1, T_in, C_in)   f32   one batch element, channels-last
    w_ref:  (K, C_in, C_out)  bf16  per-tap weight matrices
    b/scale/shift: (1, C_out) f32   conv bias and folded BN
    o_ref:  (1, T_pool, C_out) f32  pooled output
    y_sc:   (T_pool*3, C_out) f32   pre-pool activations (never leave VMEM)
    """
    K = w_ref.shape[0]
    C_out = w_ref.shape[2]
    T_pool = o_ref.shape[1]
    T_c = y_sc.shape[0]                       # = 3 * T_pool (pool remainder dropped)

    x = x_ref[0]                              # (T_in, C_in) f32
    acc = jnp.zeros((T_c, C_out), jnp.float32)
    for k in range(K):                        # static unroll over taps; bf16 MXU, f32 acc
        acc = acc + jnp.dot(x[k:k + T_c, :].astype(jnp.bfloat16), w_ref[k],
                            preferred_element_type=jnp.float32)

    y_sc[...] = _gelu((acc + b_ref[...]) * scale_ref[...] + shift_ref[...])

    # MaxPool1d(3): strided reads of the VMEM scratch, elementwise max of the 3 phases.
    p0 = y_sc[pl.ds(0, T_pool, stride=3), :]
    p1 = y_sc[pl.ds(1, T_pool, stride=3), :]
    p2 = y_sc[pl.ds(2, T_pool, stride=3), :]
    o_ref[0] = jnp.maximum(jnp.maximum(p0, p1), p2)


def conv_bn_gelu_pool(x, w, b, scale, shift):
    # TODO(synk): for very long sequences, also tile the time axis (and budget tiles to
    # v7x's 64 MiB VMEM); at this model's sizes one block per batch element fits easily.
    B, T_in, C_in = x.shape
    K, _, C_out = w.shape
    T_out = T_in - K + 1
    T_pool = T_out // 3
    return pl.pallas_call(
        _conv_bn_gelu_pool_kernel,
        out_shape=jax.ShapeDtypeStruct((B, T_pool, C_out), jnp.float32),
        grid=(B,),
        in_specs=[
            pl.BlockSpec((1, T_in, C_in), lambda i: (i, 0, 0)),
            pl.BlockSpec((K, C_in, C_out), lambda i: (0, 0, 0)),
            pl.BlockSpec((1, C_out), lambda i: (0, 0)),
            pl.BlockSpec((1, C_out), lambda i: (0, 0)),
            pl.BlockSpec((1, C_out), lambda i: (0, 0)),
        ],
        out_specs=pl.BlockSpec((1, T_pool, C_out), lambda i: (i, 0, 0)),
        scratch_shapes=[pltpu.VMEM((T_pool * 3, C_out), jnp.float32)],
        compiler_params=pltpu.CompilerParams(dimension_semantics=("parallel",)),
    )(x, w, b, scale, shift)


# --------------------------------------------------------------------- fused 2-layer LSTM
def _lstm2_kernel(x_ref, wih0_ref, whh0_ref, b0_ref, wih1_ref, whh1_ref, b1_ref,
                  o_ref, gx_sc, h1_sc):
    """Two stacked LSTM layers fused in one kernel (PyTorch gate order i, f, g, o).

    x_ref:   (T*B, Din) f32       time-major flattened input
    wih*_t:  (Din|H, 4H) bf16     whh*_t: (H, 4H) bf16     b*: (1, 4H) f32 (= b_ih + b_hh)
    o_ref:   (T, B, H) f32        layer-1 hidden sequence
    gx_sc:   (T*B, 4H) f32        hoisted input-projection gates (reused by both layers)
    h1_sc:   (T*B, H)  f32        layer-0 hidden sequence, kept in VMEM
    """
    T, B, H = o_ref.shape

    def gate_math(gates, c_prev):
        i = jax.nn.sigmoid(gates[:, 0 * H:1 * H])
        f = jax.nn.sigmoid(gates[:, 1 * H:2 * H])
        g = jnp.tanh(gates[:, 2 * H:3 * H])
        o = jax.nn.sigmoid(gates[:, 3 * H:4 * H])
        c = f * c_prev + i * g
        return o * jnp.tanh(c), c

    # ---- layer 0: input projection hoisted out of the recurrence (one big matmul) ----
    gx_sc[...] = jnp.dot(x_ref[...].astype(jnp.bfloat16), wih0_ref[...],
                         preferred_element_type=jnp.float32) + b0_ref[...]
    h = jnp.zeros((B, H), jnp.float32)
    c = jnp.zeros((B, H), jnp.float32)
    for t in range(T):                        # fully unrolled; only h @ Whh is serial
        gates = gx_sc[pl.ds(t * B, B), :] + jnp.dot(
            h.astype(jnp.bfloat16), whh0_ref[...], preferred_element_type=jnp.float32)
        h, c = gate_math(gates, c)
        h1_sc[pl.ds(t * B, B), :] = h

    # ---- layer 1: same, fed by the layer-0 sequence that never left VMEM ----
    # TODO(synk): optional wavefront pipelining (layer 2 one step behind layer 1) not done.
    gx_sc[...] = jnp.dot(h1_sc[...].astype(jnp.bfloat16), wih1_ref[...],
                         preferred_element_type=jnp.float32) + b1_ref[...]
    h = jnp.zeros((B, H), jnp.float32)
    c = jnp.zeros((B, H), jnp.float32)
    for t in range(T):
        gates = gx_sc[pl.ds(t * B, B), :] + jnp.dot(
            h.astype(jnp.bfloat16), whh1_ref[...], preferred_element_type=jnp.float32)
        h, c = gate_math(gates, c)
        o_ref[t] = h


def lstm2_stack(x_flat, T, B, wih0, whh0, b0, wih1, whh1, b1):
    H = whh0.shape[0]
    return pl.pallas_call(
        _lstm2_kernel,
        out_shape=jax.ShapeDtypeStruct((T, B, H), jnp.float32),
        in_specs=[_VMEM] * 7,
        out_specs=_VMEM,
        scratch_shapes=[pltpu.VMEM((T * B, 4 * H), jnp.float32),
                        pltpu.VMEM((T * B, H), jnp.float32)],
    )(x_flat, wih0, whh0, b0, wih1, whh1, b1)


# ------------------------------------------------------- LayerNorm + attention + classifier
def _attn_cls_kernel(x_ref, g_ref, beta_ref, aw1_ref, ab1_ref, aw2_ref, ab2_ref,
                     cw1_ref, cb1_ref, cs_ref, csh_ref, cw2_ref, cb2_ref, o_ref):
    # One batch element per grid step: LayerNorm -> Linear/Tanh/Linear -> softmax(T)
    # -> weighted sum -> Linear -> BN(eval) -> GELU -> Linear.
    x = x_ref[0]                                                   # (T, H)
    mean = jnp.mean(x, axis=-1, keepdims=True)
    xc = x - mean
    var = jnp.mean(xc * xc, axis=-1, keepdims=True)
    xn = xc * lax.rsqrt(var + 1e-5) * g_ref[...] + beta_ref[...]   # LayerNorm(128)

    a1 = jnp.tanh(jnp.dot(xn, aw1_ref[...], preferred_element_type=jnp.float32)
                  + ab1_ref[...])                                  # (T, 64)
    s = jnp.sum(a1 * aw2_ref[...], axis=-1, keepdims=True) + ab2_ref[...]   # (T, 1)
    m = jnp.max(s, axis=0, keepdims=True)
    e = jnp.exp(s - m)
    w = e / jnp.sum(e, axis=0, keepdims=True)                      # softmax over time
    # context = sum_t w_t * LayerNormed features (matches torch: lstm_out is re-bound to
    # the LayerNormed tensor before both the attention MLP and the weighted sum).
    ctx = jnp.sum(w * xn, axis=0, keepdims=True)                   # (1, H)

    h = jnp.dot(ctx, cw1_ref[...], preferred_element_type=jnp.float32) + cb1_ref[...]
    h = _gelu(h * cs_ref[...] + csh_ref[...])                      # BatchNorm1d(128) eval
    o_ref[0] = jnp.dot(h, cw2_ref[...], preferred_element_type=jnp.float32) + cb2_ref[...]


def attn_pool_classifier(lstm_bth, p):
    B, T, H = lstm_bth.shape
    D = p["attn_w1_t"].shape[1]
    N = p["cls_w2_t"].shape[1]
    out = pl.pallas_call(
        _attn_cls_kernel,
        out_shape=jax.ShapeDtypeStruct((B, 1, N), jnp.float32),
        grid=(B,),
        in_specs=[
            pl.BlockSpec((1, T, H), lambda b: (b, 0, 0)),
            pl.BlockSpec((1, H), lambda b: (0, 0)),    # LN gamma
            pl.BlockSpec((1, H), lambda b: (0, 0)),    # LN beta
            pl.BlockSpec((H, D), lambda b: (0, 0)),    # attn W1^T
            pl.BlockSpec((1, D), lambda b: (0, 0)),    # attn b1
            pl.BlockSpec((1, D), lambda b: (0, 0)),    # attn W2 row
            pl.BlockSpec((1, 1), lambda b: (0, 0)),    # attn b2
            pl.BlockSpec((H, H), lambda b: (0, 0)),    # cls W1^T
            pl.BlockSpec((1, H), lambda b: (0, 0)),    # cls b1
            pl.BlockSpec((1, H), lambda b: (0, 0)),    # cls BN scale
            pl.BlockSpec((1, H), lambda b: (0, 0)),    # cls BN shift
            pl.BlockSpec((H, N), lambda b: (0, 0)),    # cls W2^T
            pl.BlockSpec((1, N), lambda b: (0, 0)),    # cls b2
        ],
        out_specs=pl.BlockSpec((1, 1, N), lambda b: (b, 0, 0)),
        compiler_params=pltpu.CompilerParams(dimension_semantics=("parallel",)),
    )(lstm_bth, p["ln_gamma"], p["ln_beta"],
      p["attn_w1_t"], p["attn_b1"], p["attn_w2"], p["attn_b2"],
      p["cls_w1_t"], p["cls_b1"], p["cls_bn_scale"], p["cls_bn_shift"],
      p["cls_w2_t"], p["cls_b2"])
    return out


# --------------------------------------------------------------------------------- model
def init_params(key):
    H = 128
    ks = jax.random.split(key, 12)

    def kaiming(k, shape, fan_in):
        return jax.random.normal(k, shape, jnp.float32) * jnp.sqrt(2.0 / fan_in)

    conv1_w = kaiming(ks[0], (32, 2, 15), 2 * 15)       # torch layout (C_out, C_in, K)
    conv1_b = jax.random.normal(ks[1], (32,), jnp.float32) * 0.05
    conv2_w = kaiming(ks[2], (64, 32, 15), 32 * 15)
    conv2_b = jax.random.normal(ks[3], (64,), jnp.float32) * 0.05
    wih0 = kaiming(ks[4], (4 * H, 64), 64)
    whh0 = kaiming(ks[5], (4 * H, H), H)
    wih1 = kaiming(ks[6], (4 * H, H), H)
    whh1 = kaiming(ks[7], (4 * H, H), H)
    attn_w1 = kaiming(ks[8], (64, H), H)
    attn_w2 = kaiming(ks[9], (1, 64), 64)
    cls_w1 = kaiming(ks[10], (H, H), H)
    cls_w2 = kaiming(ks[11], (5, H), H)

    # Conv1 (stride 3, K=15) re-expressed as a stride-1, K=5 conv on a space-to-depth(3)
    # input:  wq[q, p*C_in + c, o] = w[o, c, 3q + p].
    w1q = jnp.transpose(conv1_w.reshape(32, 2, 5, 3), (2, 3, 1, 0)).reshape(5, 6, 32)
    # Conv2: per-tap (C_in, C_out) matrices:  w2k[k, c, o] = w[o, c, k].
    w2k = jnp.transpose(conv2_w, (2, 1, 0))

    eps = 1e-5
    bn_scale = lambda c: jnp.ones((1, c), jnp.float32) / jnp.sqrt(1.0 + eps)  # fresh stats
    bn_shift = lambda c: jnp.zeros((1, c), jnp.float32)

    # PyTorch LSTM has b_ih AND b_hh per layer; the kernel takes their SUM.
    b_ih0 = jnp.zeros((4 * H,), jnp.float32); b_hh0 = jnp.zeros((4 * H,), jnp.float32)
    b_ih1 = jnp.zeros((4 * H,), jnp.float32); b_hh1 = jnp.zeros((4 * H,), jnp.float32)

    return {
        "conv1_wq": w1q.astype(jnp.bfloat16), "conv1_b": conv1_b.reshape(1, -1),
        "bn1_scale": bn_scale(32), "bn1_shift": bn_shift(32),
        "conv2_wk": w2k.astype(jnp.bfloat16), "conv2_b": conv2_b.reshape(1, -1),
        "bn2_scale": bn_scale(64), "bn2_shift": bn_shift(64),
        "wih0_t": wih0.T.astype(jnp.bfloat16), "whh0_t": whh0.T.astype(jnp.bfloat16),
        "lstm_b0": (b_ih0 + b_hh0).reshape(1, -1),
        "wih1_t": wih1.T.astype(jnp.bfloat16), "whh1_t": whh1.T.astype(jnp.bfloat16),
        "lstm_b1": (b_ih1 + b_hh1).reshape(1, -1),
        "ln_gamma": jnp.ones((1, H), jnp.float32), "ln_beta": jnp.zeros((1, H), jnp.float32),
        "attn_w1_t": attn_w1.T, "attn_b1": jnp.zeros((1, 64), jnp.float32),
        "attn_w2": attn_w2, "attn_b2": jnp.zeros((1, 1), jnp.float32),
        "cls_w1_t": cls_w1.T, "cls_b1": jnp.zeros((1, H), jnp.float32),
        "cls_bn_scale": bn_scale(H), "cls_bn_shift": bn_shift(H),
        "cls_w2_t": cls_w2.T, "cls_b2": jnp.zeros((1, 5), jnp.float32),
    }


def eeg_hybrid_forward(x, p):
    """x: (B, T, 2) float32 -> logits (B, 5). Eval-mode forward of EEGHybridModel."""
    B, T, c_in = x.shape

    # --- CNN block 1: Conv1d(2,32,k=15,s=3) + BN + GELU + MaxPool(3) ---
    T1 = (T - 15) // 3 + 1
    rows = T1 + 4                                        # space-to-depth rows needed
    xr = x[:, : rows * 3, :].reshape(B, rows, 3 * c_in)  # (B, rows, 6), host reshape only
    y1 = conv_bn_gelu_pool(xr, p["conv1_wq"], p["conv1_b"], p["bn1_scale"], p["bn1_shift"])

    # --- CNN block 2: Conv1d(32,64,k=15) + BN + GELU + MaxPool(3) (+Dropout = id) ---
    y2 = conv_bn_gelu_pool(y1, p["conv2_wk"], p["conv2_b"], p["bn2_scale"], p["bn2_shift"])

    # --- 2-layer LSTM (hidden=128), batch_first; inter-layer dropout = id ---
    Tl = y2.shape[1]
    x_tb = jnp.transpose(y2, (1, 0, 2)).reshape(Tl * B, y2.shape[2])     # (T*B, 64)
    lstm_out = lstm2_stack(x_tb, Tl, B,
                           p["wih0_t"], p["whh0_t"], p["lstm_b0"],
                           p["wih1_t"], p["whh1_t"], p["lstm_b1"])       # (T, B, 128)
    lstm_bth = jnp.transpose(lstm_out, (1, 0, 2))                        # (B, T, 128)

    # --- LayerNorm + attention pooling + classifier head (one fused kernel) ---
    logits = attn_pool_classifier(lstm_bth, p)                           # (B, 1, 5)
    return logits.reshape(B, -1)


# TODO(synk): training-mode BatchNorm (batch statistics) and dropout masks are not
# implemented; this reproduces the module's eval-mode forward pass.

if __name__ == "__main__":
    key = jax.random.PRNGKey(0)
    k_x, k_p = jax.random.split(key)
    # CNN-consistent small shape: T=300 -> conv/pool pipeline gives LSTM seq len 6.
    B, T, C_IN = 2, 300, 2
    x = jax.random.normal(k_x, (B, T, C_IN), jnp.float32)
    params = init_params(k_p)

    fwd = jax.jit(functools.partial(eeg_hybrid_forward, p=params))
    logits = jax.block_until_ready(fwd(x))
    assert logits.shape == (B, 5), logits.shape
    assert bool(jnp.all(jnp.isfinite(logits)))
    print("KERNEL_OK")
</pallas_src>

<mosaic_0001>
module attributes {stable_mosaic.version = 11 : i64} {
  func.func @_conv_bn_gelu_pool_kernel(%arg0: i32, %arg1: memref<1x100x6xf32, #tpu.memory_space<vmem>>, %arg2: memref<5x6x32xbf16, #tpu.memory_space<vmem>>, %arg3: memref<1x32xf32, #tpu.memory_space<vmem>>, %arg4: memref<1x32xf32, #tpu.memory_space<vmem>>, %arg5: memref<1x32xf32, #tpu.memory_space<vmem>>, %arg6: memref<1x32x32xf32, #tpu.memory_space<vmem>>, %arg7: memref<96x32xf32, #tpu.memory_space<vmem>>) attributes {dimension_semantics = [#tpu.dimension_semantics<parallel>], iteration_bounds = array<i64: 2>, scalar_prefetch = 0 : i64, scratch_operands = 1 : i64, tpu.core_type = #tpu.core_type<tc>, window_params = [{transform_indices = @transform_0, window_bounds = array<i64: 1, 100, 6>}, {pipeline_mode = #tpu.pipeline_mode<synchronous>, transform_indices = @transform_1, window_bounds = array<i64: 5, 6, 32>}, {pipeline_mode = #tpu.pipeline_mode<synchronous>, transform_indices = @transform_2, window_bounds = array<i64: 1, 32>}, {pipeline_mode = #tpu.pipeline_mode<synchronous>, transform_indices = @transform_3, window_bounds = array<i64: 1, 32>}, {pipeline_mode = #tpu.pipeline_mode<synchronous>, transform_indices = @transform_4, window_bounds = array<i64: 1, 32>}, {transform_indices = @transform_5, window_bounds = array<i64: 1, 32, 32>}]} {
    %c0 = arith.constant 0 : index
    %c0_0 = arith.constant 0 : index
    %c0_1 = arith.constant 0 : index
    %0 = vector.load %arg1[%c0, %c0_0, %c0_1] : memref<1x100x6xf32, #tpu.memory_space<vmem>>, vector<1x100x6xf32>
    %1 = vector.shape_cast %0 : vector<1x100x6xf32> to vector<100x6xf32>
    %cst = arith.constant 0.000000e+00 : f32
    %2 = vector.broadcast %cst : f32 to vector<96x32xf32>
    %3 = vector.extract_strided_slice %1 {offsets = [0, 0], sizes = [96, 6], strides = [1, 1]} : vector<100x6xf32> to vector<96x6xf32>
    %4 = arith.truncf %3 : vector<96x6xf32> to vector<96x6xbf16>
    %c0_2 = arith.constant 0 : index
    %c0_3 = arith.constant 0 : index
    %c0_4 = arith.constant 0 : index
    %5 = vector.load %arg2[%c0_2, %c0_3, %c0_4] : memref<5x6x32xbf16, #tpu.memory_space<vmem>>, vector<1x6x32xbf16>
    %6 = vector.shape_cast %5 : vector<1x6x32xbf16> to vector<6x32xbf16>
    %cst_5 = arith.constant dense<0.000000e+00> : vector<96x32xf32>
    %7 = tpu.matmul %4, %6, %cst_5 {dimension_numbers = #tpu.dot_dimension_numbers<[1], [0], [0], [1], [0, 0, 1, 1], [], []>} : vector<96x6xbf16>, vector<6x32xbf16>, vector<96x32xf32> -> vector<96x32xf32>
    %8 = arith.addf %2, %7 : vector<96x32xf32>
    %9 = vector.extract_strided_slice %1 {offsets = [1, 0], sizes = [96, 6], strides = [1, 1]} : vector<100x6xf32> to vector<96x6xf32>
    %10 = arith.truncf %9 : vector<96x6xf32> to vector<96x6xbf16>
    %c1 = arith.constant 1 : index
    %c0_6 = arith.constant 0 : index
    %c0_7 = arith.constant 0 : index
    %11 = vector.load %arg2[%c1, %c0_6, %c0_7] : memref<5x6x32xbf16, #tpu.memory_space<vmem>>, vector<1x6x32xbf16>
    %12 = vector.shape_cast %11 : vector<1x6x32xbf16> to vector<6x32xbf16>
    %cst_8 = arith.constant dense<0.000000e+00> : vector<96x32xf32>
    %13 = tpu.matmul %10, %12, %cst_8 {dimension_numbers = #tpu.dot_dimension_numbers<[1], [0], [0], [1], [0, 0, 1, 1], [], []>} : vector<96x6xbf16>, vector<6x32xbf16>, vector<96x32xf32> -> vector<96x32xf32>
    %14 = arith.addf %8, %13 : vector<96x32xf32>
    %15 = vector.extract_strided_slice %1 {offsets = [2, 0], sizes = [96, 6], strides = [1, 1]} : vector<100x6xf32> to vector<96x6xf32>
    %16 = arith.truncf %15 : vector<96x6xf32> to vector<96x6xbf16>
    %c2 = arith.constant 2 : index
    %c0_9 = arith.constant 0 : index
    %c0_10 = arith.constant 0 : index
    %17 = vector.load %arg2[%c2, %c0_9, %c0_10] : memref<5x6x32xbf16, #tpu.memory_space<vmem>>, vector<1x6x32xbf16>
    %18 = vector.shape_cast %17 : vector<1x6x32xbf16> to vector<6x32xbf16>
    %cst_11 = arith.constant dense<0.000000e+00> : vector<96x32xf32>
    %19 = tpu.matmul %16, %18, %cst_11 {dimension_numbers = #tpu.dot_dimension_numbers<[1], [0], [0], [1], [0, 0, 1, 1], [], []>} : vector<96x6xbf16>, vector<6x32xbf16>, vector<96x32xf32> -> vector<96x32xf32>
    %20 = arith.addf %14, %19 : vector<96x32xf32>
    %21 = vector.extract_strided_slice %1 {offsets = [3, 0], sizes = [96, 6], strides = [1, 1]} : vector<100x6xf32> to vector<96x6xf32>
    %22 = arith.truncf %21 : vector<96x6xf32> to vector<96x6xbf16>
    %c3 = arith.constant 3 : index
    %c0_12 = arith.constant 0 : index
    %c0_13 = arith.constant 0 : index
    %23 = vector.load %arg2[%c3, %c0_12, %c0_13] : memref<5x6x32xbf16, #tpu.memory_space<vmem>>, vector<1x6x32xbf16>
    %24 = vector.shape_cast %23 : vector<1x6x32xbf16> to vector<6x32xbf16>
    %cst_14 = arith.constant dense<0.000000e+00> : vector<96x32xf32>
    %25 = tpu.matmul %22, %24, %cst_14 {dimension_numbers = #tpu.dot_dimension_numbers<[1], [0], [0], [1], [0, 0, 1, 1], [], []>} : vector<96x6xbf16>, vector<6x32xbf16>, vector<96x32xf32> -> vector<96x32xf32>
    %26 = arith.addf %20, %25 : vector<96x32xf32>
    %27 = vector.extract_strided_slice %1 {offsets = [4, 0], sizes = [96, 6], strides = [1, 1]} : vector<100x6xf32> to vector<96x6xf32>
    %28 = arith.truncf %27 : vector<96x6xf32> to vector<96x6xbf16>
    %c4 = arith.constant 4 : index
    %c0_15 = arith.constant 0 : index
    %c0_16 = arith.constant 0 : index
    %29 = vector.load %arg2[%c4, %c0_15, %c0_16] : memref<5x6x32xbf16, #tpu.memory_space<vmem>>, vector<1x6x32xbf16>
    %30 = vector.shape_cast %29 : vector<1x6x32xbf16> to vector<6x32xbf16>
    %cst_17 = arith.constant dense<0.000000e+00> : vector<96x32xf32>
    %31 = tpu.matmul %28, %30, %cst_17 {dimension_numbers = #tpu.dot_dimension_numbers<[1], [0], [0], [1], [0, 0, 1, 1], [], []>} : vector<96x6xbf16>, vector<6x32xbf16>, vector<96x32xf32> -> vector<96x32xf32>
    %32 = arith.addf %26, %31 : vector<96x32xf32>
    %c0_18 = arith.constant 0 : index
    %c0_19 = arith.constant 0 : index
    %33 = vector.load %arg3[%c0_18, %c0_19] : memref<1x32xf32, #tpu.memory_space<vmem>>, vector<1x32xf32>
    %34 = vector.broadcast %33 : vector<1x32xf32> to vector<96x32xf32>
    %35 = arith.addf %32, %34 : vector<96x32xf32>
    %c0_20 = arith.constant 0 : index
    %c0_21 = arith.constant 0 : index
    %36 = vector.load %arg4[%c0_20, %c0_21] : memref<1x32xf32, #tpu.memory_space<vmem>>, vector<1x32xf32>
    %37 = vector.broadcast %36 : vector<1x32xf32> to vector<96x32xf32>
    %38 = arith.mulf %35, %37 : vector<96x32xf32>
    %c0_22 = arith.constant 0 : index
    %c0_23 = arith.constant 0 : index
    %39 = vector.load %arg5[%c0_22, %c0_23] : memref<1x32xf32, #tpu.memory_space<vmem>>, vector<1x32xf32>
    %40 = vector.broadcast %39 : vector<1x32xf32> to vector<96x32xf32>
    %41 = arith.addf %38, %40 : vector<96x32xf32>
    %cst_24 = arith.constant 5.000000e-01 : f32
    %42 = vector.broadcast %cst_24 : f32 to vector<96x32xf32>
    %43 = arith.mulf %42, %41 : vector<96x32xf32>
    %cst_25 = arith.constant 0.707106769 : f32
    %44 = vector.broadcast %cst_25 : f32 to vector<96x32xf32>
    %45 = arith.mulf %41, %44 : vector<96x32xf32>
    %46 = math.absf %45 : vector<96x32xf32>
    %cst_26 = arith.constant 0.327591091 : f32
    %47 = vector.broadcast %cst_26 : f32 to vector<96x32xf32>
    %48 = arith.mulf %47, %46 : vector<96x32xf32>
    %cst_27 = arith.constant 1.000000e+00 : f32
    %49 = vector.broadcast %cst_27 : f32 to vector<96x32xf32>
    %50 = arith.addf %49, %48 : vector<96x32xf32>
    %51 = tpu.reciprocal %50 {approx = true} : vector<96x32xf32> -> vector<96x32xf32>
    %cst_28 = arith.constant 1.06140542 : f32
    %52 = vector.broadcast %cst_28 : f32 to vector<96x32xf32>
    %53 = arith.mulf %52, %51 : vector<96x32xf32>
    %cst_29 = arith.constant -1.45315206 : f32
    %54 = vector.broadcast %cst_29 : f32 to vector<96x32xf32>
    %55 = arith.addf %53, %54 : vector<96x32xf32>
    %56 = arith.mulf %55, %51 : vector<96x32xf32>
    %cst_30 = arith.constant 1.42141378 : f32
    %57 = vector.broadcast %cst_30 : f32 to vector<96x32xf32>
    %58 = arith.addf %56, %57 : vector<96x32xf32>
    %59 = arith.mulf %58, %51 : vector<96x32xf32>
    %cst_31 = arith.constant -0.284496725 : f32
    %60 = vector.broadcast %cst_31 : f32 to vector<96x32xf32>
    %61 = arith.addf %59, %60 : vector<96x32xf32>
    %62 = arith.mulf %61, %51 : vector<96x32xf32>
    %cst_32 = arith.constant 0.254829586 : f32
    %63 = vector.broadcast %cst_32 : f32 to vector<96x32xf32>
    %64 = arith.addf %62, %63 : vector<96x32xf32>
    %65 = arith.mulf %64, %51 : vector<96x32xf32>
    %66 = arith.mulf %46, %46 : vector<96x32xf32>
    %cst_33 = arith.constant 0.000000e+00 : f32
    %67 = vector.broadcast %cst_33 : f32 to vector<96x32xf32>
    %68 = arith.subf %67, %66 : vector<96x32xf32>
    %69 = math.exp %68 : vector<96x32xf32>
    %70 = arith.mulf %65, %69 : vector<96x32xf32>
    %cst_34 = arith.constant 1.000000e+00 : f32
    %71 = vector.broadcast %cst_34 : f32 to vector<96x32xf32>
    %72 = arith.subf %71, %70 : vector<96x32xf32>
    %cst_35 = arith.constant 0.000000e+00 : f32
    %73 = vector.broadcast %cst_35 : f32 to vector<96x32xf32>
    %74 = arith.cmpf oge, %45, %73 : vector<96x32xf32>
    %cst_36 = arith.constant 0.000000e+00 : f32
    %75 = vector.broadcast %cst_36 : f32 to vector<96x32xf32>
    %76 = arith.subf %75, %72 : vector<96x32xf32>
    %77 = arith.select %74, %72, %76 : vector<96x32xi1>, vector<96x32xf32>
    %cst_37 = arith.constant 1.000000e+00 : f32
    %78 = vector.broadcast %cst_37 : f32 to vector<96x32xf32>
    %79 = arith.addf %78, %77 : vector<96x32xf32>
    %80 = arith.mulf %43, %79 : vector<96x32xf32>
    %c0_38 = arith.constant 0 : index
    %c0_39 = arith.constant 0 : index
    %81 = vector.load %arg7[%c0_38, %c0_39] : memref<96x32xf32, #tpu.memory_space<vmem>>, vector<96x32xf32>
    tpu.vector_store %arg7[%c0_38, %c0_39], %80 {strides = array<i32>} : memref<96x32xf32, #tpu.memory_space<vmem>>, vector<96x32xf32>,
    %c0_40 = arith.constant 0 : index
    %c0_41 = arith.constant 0 : index
    %82 = tpu.strided_load %arg7[%c0_40, %c0_41] {strides = array<i32: 3, 1>} : memref<96x32xf32, #tpu.memory_space<vmem>>, vector<32x32xf32>
    %c1_42 = arith.constant 1 : index
    %c0_43 = arith.constant 0 : index
    %83 = tpu.strided_load %arg7[%c1_42, %c0_43] {strides = array<i32: 3, 1>} : memref<96x32xf32, #tpu.memory_space<vmem>>, vector<32x32xf32>
    %c2_44 = arith.constant 2 : index
    %c0_45 = arith.constant 0 : index
    %84 = tpu.strided_load %arg7[%c2_44, %c0_45] {strides = array<i32: 3, 1>} : memref<96x32xf32, #tpu.memory_space<vmem>>, vector<32x32xf32>
    %85 = arith.maximumf %82, %83 : vector<32x32xf32>
    %86 = arith.maximumf %85, %84 : vector<32x32xf32>
    %c0_46 = arith.constant 0 : index
    %c0_47 = arith.constant 0 : index
    %c0_48 = arith.constant 0 : index
    %87 = vector.load %arg6[%c0_46, %c0_47, %c0_48] : memref<1x32x32xf32, #tpu.memory_space<vmem>>, vector<1x32x32xf32>
    %88 = vector.shape_cast %87 : vector<1x32x32xf32> to vector<32x32xf32>
    %89 = vector.shape_cast %86 : vector<32x32xf32> to vector<1x32x32xf32>
    tpu.vector_store %arg6[%c0_46, %c0_47, %c0_48], %89 {strides = array<i32>} : memref<1x32x32xf32, #tpu.memory_space<vmem>>, vector<1x32x32xf32>,
    return
  }
  func.func @transform_0(%arg0: i32) -> (i32, i32, i32) {
    %c0_i32 = arith.constant 0 : i32
    %c0_i32_0 = arith.constant 0 : i32
    %c0_i32_1 = arith.constant 0 : i32
    return %arg0, %c0_i32, %c0_i32_0 : i32, i32, i32
  }
  func.func @transform_1(%arg0: i32) -> (i32, i32, i32) {
    %c0_i32 = arith.constant 0 : i32
    %c0_i32_0 = arith.constant 0 : i32
    %c0_i32_1 = arith.constant 0 : i32
    %c0_i32_2 = arith.constant 0 : i32
    return %c0_i32, %c0_i32_0, %c0_i32_1 : i32, i32, i32
  }
  func.func @transform_2(%arg0: i32) -> (i32, i32) {
    %c0_i32 = arith.constant 0 : i32
    %c0_i32_0 = arith.constant 0 : i32
    %c0_i32_1 = arith.constant 0 : i32
    return %c0_i32, %c0_i32_0 : i32, i32
  }
  func.func @transform_3(%arg0: i32) -> (i32, i32) {
    %c0_i32 = arith.constant 0 : i32
    %c0_i32_0 = arith.constant 0 : i32
    %c0_i32_1 = arith.constant 0 : i32
    return %c0_i32, %c0_i32_0 : i32, i32
  }
  func.func @transform_4(%arg0: i32) -> (i32, i32) {
    %c0_i32 = arith.constant 0 : i32
    %c0_i32_0 = arith.constant 0 : i32
    %c0_i32_1 = arith.constant 0 : i32
    return %c0_i32, %c0_i32_0 : i32, i32
  }
  func.func @transform_5(%arg0: i32) -> (i32, i32, i32) {
    %c0_i32 = arith.constant 0 : i32
    %c0_i32_0 = arith.constant 0 : i32
    %c0_i32_1 = arith.constant 0 : i32
    return %arg0, %c0_i32, %c0_i32_0 : i32, i32, i32
  }
}

module attributes {stable_mosaic.version = 11 : i64} {
  func.func @_conv_bn_gelu_pool_kernel(%arg0: i32, %arg1: memref<1x32x32xf32, #tpu.memory_space<vmem>>, %arg2: memref<15x32x64xbf16, #tpu.memory_space<vmem>>, %arg3: memref<1x64xf32, #tpu.memory_space<vmem>>, %arg4: memref<1x64xf32, #tpu.memory_space<vmem>>, %arg5: memref<1x64xf32, #tpu.memory_space<vmem>>, %arg6: memref<1x6x64xf32, #tpu.memory_space<vmem>>, %arg7: memref<18x64xf32, #tpu.memory_space<vmem>>) attributes {dimension_semantics = [#tpu.dimension_semantics<parallel>], iteration_bounds = array<i64: 2>, scalar_prefetch = 0 : i64, scratch_operands = 1 : i64, tpu.core_type = #tpu.core_type<tc>, window_params = [{transform_indices = @transform_0, window_bounds = array<i64: 1, 32, 32>}, {pipeline_mode = #tpu.pipeline_mode<synchronous>, transform_indices = @transform_1, window_bounds = array<i64: 15, 32, 64>}, {pipeline_mode = #tpu.pipeline_mode<synchronous>, transform_indices = @transform_2, window_bounds = array<i64: 1, 64>}, {pipeline_mode = #tpu.pipeline_mode<synchronous>, transform_indices = @transform_3, window_bounds = array<i64: 1, 64>}, {pipeline_mode = #tpu.pipeline_mode<synchronous>, transform_indices = @transform_4, window_bounds = array<i64: 1, 64>}, {transform_indices = @transform_5, window_bounds = array<i64: 1, 6, 64>}]} {
    %c0 = arith.constant 0 : index
    %c0_0 = arith.constant 0 : index
    %c0_1 = arith.constant 0 : index
    %0 = vector.load %arg1[%c0, %c0_0, %c0_1] : memref<1x32x32xf32, #tpu.memory_space<vmem>>, vector<1x32x32xf32>
    %1 = vector.shape_cast %0 : vector<1x32x32xf32> to vector<32x32xf32>
    %cst = arith.constant 0.000000e+00 : f32
    %2 = vector.broadcast %cst : f32 to vector<18x64xf32>
    %3 = vector.extract_strided_slice %1 {offsets = [0, 0], sizes = [18, 32], strides = [1, 1]} : vector<32x32xf32> to vector<18x32xf32>
    %4 = arith.truncf %3 : vector<18x32xf32> to vector<18x32xbf16>
    %c0_2 = arith.constant 0 : index
    %c0_3 = arith.constant 0 : index
    %c0_4 = arith.constant 0 : index
    %5 = vector.load %arg2[%c0_2, %c0_3, %c0_4] : memref<15x32x64xbf16, #tpu.memory_space<vmem>>, vector<1x32x64xbf16>
    %6 = vector.shape_cast %5 : vector<1x32x64xbf16> to vector<32x64xbf16>
    %cst_5 = arith.constant dense<0.000000e+00> : vector<18x64xf32>
    %7 = tpu.matmul %4, %6, %cst_5 {dimension_numbers = #tpu.dot_dimension_numbers<[1], [0], [0], [1], [0, 0, 1, 1], [], []>} : vector<18x32xbf16>, vector<32x64xbf16>, vector<18x64xf32> -> vector<18x64xf32>
    %8 = arith.addf %2, %7 : vector<18x64xf32>
    %9 = vector.extract_strided_slice %1 {offsets = [1, 0], sizes = [18, 32], strides = [1, 1]} : vector<32x32xf32> to vector<18x32xf32>
    %10 = arith.truncf %9 : vector<18x32xf32> to vector<18x32xbf16>
    %c1 = arith.constant 1 : index
    %c0_6 = arith.constant 0 : index
    %c0_7 = arith.constant 0 : index
    %11 = vector.load %arg2[%c1, %c0_6, %c0_7] : memref<15x32x64xbf16, #tpu.memory_space<vmem>>, vector<1x32x64xbf16>
    %12 = vector.shape_cast %11 : vector<1x32x64xbf16> to vector<32x64xbf16>
    %cst_8 = arith.constant dense<0.000000e+00> : vector<18x64xf32>
    %13 = tpu.matmul %10, %12, %cst_8 {dimension_numbers = #tpu.dot_dimension_numbers<[1], [0], [0], [1], [0, 0, 1, 1], [], []>} : vector<18x32xbf16>, vector<32x64xbf16>, vector<18x64xf32> -> vector<18x64xf32>
    %14 = arith.addf %8, %13 : vector<18x64xf32>
    %15 = vector.extract_strided_slice %1 {offsets = [2, 0], sizes = [18, 32], strides = [1, 1]} : vector<32x32xf32> to vector<18x32xf32>
    %16 = arith.truncf %15 : vector<18x32xf32> to vector<18x32xbf16>
    %c2 = arith.constant 2 : index
    %c0_9 = arith.constant 0 : index
    %c0_10 = arith.constant 0 : index
    %17 = vector.load %arg2[%c2, %c0_9, %c0_10] : memref<15x32x64xbf16, #tpu.memory_space<vmem>>, vector<1x32x64xbf16>
    %18 = vector.shape_cast %17 : vector<1x32x64xbf16> to vector<32x64xbf16>
    %cst_11 = arith.constant dense<0.000000e+00> : vector<18x64xf32>
    %19 = tpu.matmul %16, %18, %cst_11 {dimension_numbers = #tpu.dot_dimension_numbers<[1], [0], [0], [1], [0, 0, 1, 1], [], []>} : vector<18x32xbf16>, vector<32x64xbf16>, vector<18x64xf32> -> vector<18x64xf32>
    %20 = arith.addf %14, %19 : vector<18x64xf32>
    %21 = vector.extract_strided_slice %1 {offsets = [3, 0], sizes = [18, 32], strides = [1, 1]} : vector<32x32xf32> to vector<18x32xf32>
    %22 = arith.truncf %21 : vector<18x32xf32> to vector<18x32xbf16>
    %c3 = arith.constant 3 : index
    %c0_12 = arith.constant 0 : index
    %c0_13 = arith.constant 0 : index
    %23 = vector.load %arg2[%c3, %c0_12, %c0_13] : memref<15x32x64xbf16, #tpu.memory_space<vmem>>, vector<1x32x64xbf16>
    %24 = vector.shape_cast %23 : vector<1x32x64xbf16> to vector<32x64xbf16>
    %cst_14 = arith.constant dense<0.000000e+00> : vector<18x64xf32>
    %25 = tpu.matmul %22, %24, %cst_14 {dimension_numbers = #tpu.dot_dimension_numbers<[1], [0], [0], [1], [0, 0, 1, 1], [], []>} : vector<18x32xbf16>, vector<32x64xbf16>, vector<18x64xf32> -> vector<18x64xf32>
    %26 = arith.addf %20, %25 : vector<18x64xf32>
    %27 = vector.extract_strided_slice %1 {offsets = [4, 0], sizes = [18, 32], strides = [1, 1]} : vector<32x32xf32> to vector<18x32xf32>
    %28 = arith.truncf %27 : vector<18x32xf32> to vector<18x32xbf16>
    %c4 = arith.constant 4 : index
    %c0_15 = arith.constant 0 : index
    %c0_16 = arith.constant 0 : index
    %29 = vector.load %arg2[%c4, %c0_15, %c0_16] : memref<15x32x64xbf16, #tpu.memory_space<vmem>>, vector<1x32x64xbf16>
    %30 = vector.shape_cast %29 : vector<1x32x64xbf16> to vector<32x64xbf16>
    %cst_17 = arith.constant dense<0.000000e+00> : vector<18x64xf32>
    %31 = tpu.matmul %28, %30, %cst_17 {dimension_numbers = #tpu.dot_dimension_numbers<[1], [0], [0], [1], [0, 0, 1, 1], [], []>} : vector<18x32xbf16>, vector<32x64xbf16>, vector<18x64xf32> -> vector<18x64xf32>
    %32 = arith.addf %26, %31 : vector<18x64xf32>
    %33 = vector.extract_strided_slice %1 {offsets = [5, 0], sizes = [18, 32], strides = [1, 1]} : vector<32x32xf32> to vector<18x32xf32>
    %34 = arith.truncf %33 : vector<18x32xf32> to vector<18x32xbf16>
    %c5 = arith.constant 5 : index
    %c0_18 = arith.constant 0 : index
    %c0_19 = arith.constant 0 : index
    %35 = vector.load %arg2[%c5, %c0_18, %c0_19] : memref<15x32x64xbf16, #tpu.memory_space<vmem>>, vector<1x32x64xbf16>
    %36 = vector.shape_cast %35 : vector<1x32x64xbf16> to vector<32x64xbf16>
    %cst_20 = arith.constant dense<0.000000e+00> : vector<18x64xf32>
    %37 = tpu.matmul %34, %36, %cst_20 {dimension_numbers = #tpu.dot_dimension_numbers<[1], [0], [0], [1], [0, 0, 1, 1], [], []>} : vector<18x32xbf16>, vector<32x64xbf16>, vector<18x64xf32> -> vector<18x64xf32>
    %38 = arith.addf %32, %37 : vector<18x64xf32>
    %39 = vector.extract_strided_slice %1 {offsets = [6, 0], sizes = [18, 32], strides = [1, 1]} : vector<32x32xf32> to vector<18x32xf32>
    %40 = arith.truncf %39 : vector<18x32xf32> to vector<18x32xbf16>
    %c6 = arith.constant 6 : index
    %c0_21 = arith.constant 0 : index
    %c0_22 = arith.constant 0 : index
    %41 = vector.load %arg2[%c6, %c0_21, %c0_22] : memref<15x32x64xbf16, #tpu.memory_space<vmem>>, vector<1x32x64xbf16>
    %42 = vector.shape_cast %41 : vector<1x32x64xbf16> to vector<32x64xbf16>
    %cst_23 = arith.constant dense<0.000000e+00> : vector<18x64xf32>
    %43 = tpu.matmul %40, %42, %cst_23 {dimension_numbers = #tpu.dot_dimension_numbers<[1], [0], [0], [1], [0, 0, 1, 1], [], []>} : vector<18x32xbf16>, vector<32x64xbf16>, vector<18x64xf32> -> vector<18x64xf32>
    %44 = arith.addf %38, %43 : vector<18x64xf32>
    %45 = vector.extract_strided_slice %1 {offsets = [7, 0], sizes = [18, 32], strides = [1, 1]} : vector<32x32xf32> to vector<18x32xf32>
    %46 = arith.truncf %45 : vector<18x32xf32> to vector<18x32xbf16>
    %c7 = arith.constant 7 : index
    %c0_24 = arith.constant 0 : index
    %c0_25 = arith.constant 0 : index
    %47 = vector.load %arg2[%c7, %c0_24, %c0_25] : memref<15x32x64xbf16, #tpu.memory_space<vmem>>, vector<1x32x64xbf16>
    %48 = vector.shape_cast %47 : vector<1x32x64xbf16> to vector<32x64xbf16>
    %cst_26 = arith.constant dense<0.000000e+00> : vector<18x64xf32>
    %49 = tpu.matmul %46, %48, %cst_26 {dimension_numbers = #tpu.dot_dimension_numbers<[1], [0], [0], [1], [0, 0, 1, 1], [], []>} : vector<18x32xbf16>, vector<32x64xbf16>, vector<18x64xf32> -> vector<18x64xf32>
    %50 = arith.addf %44, %49 : vector<18x64xf32>
    %51 = vector.extract_strided_slice %1 {offsets = [8, 0], sizes = [18, 32], strides = [1, 1]} : vector<32x32xf32> to vector<18x32xf32>
    %52 = arith.truncf %51 : vector<18x32xf32> to vector<18x32xbf16>
    %c8 = arith.constant 8 : index
    %c0_27 = arith.constant 0 : index
    %c0_28 = arith.constant 0 : index
    %53 = vector.load %arg2[%c8, %c0_27, %c0_28] : memref<15x32x64xbf16, #tpu.memory_space<vmem>>, vector<1x32x64xbf16>
    %54 = vector.shape_cast %53 : vector<1x32x64xbf16> to vector<32x64xbf16>
    %cst_29 = arith.constant dense<0.000000e+00> : vector<18x64xf32>
    %55 = tpu.matmul %52, %54, %cst_29 {dimension_numbers = #tpu.dot_dimension_numbers<[1], [0], [0], [1], [0, 0, 1, 1], [], []>} : vector<18x32xbf16>, vector<32x64xbf16>, vector<18x64xf32> -> vector<18x64xf32>
    %56 = arith.addf %50, %55 : vector<18x64xf32>
    %57 = vector.extract_strided_slice %1 {offsets = [9, 0], sizes = [18, 32], strides = [1, 1]} : vector<32x32xf32> to vector<18x32xf32>
    %58 = arith.truncf %57 : vector<18x32xf32> to vector<18x32xbf16>
    %c9 = arith.constant 9 : index
    %c0_30 = arith.constant 0 : index
    %c0_31 = arith.constant 0 : index
    %59 = vector.load %arg2[%c9, %c0_30, %c0_31] : memref<15x32x64xbf16, #tpu.memory_space<vmem>>, vector<1x32x64xbf16>
    %60 = vector.shape_cast %59 : vector<1x32x64xbf16> to vector<32x64xbf16>
    %cst_32 = arith.constant dense<0.000000e+00> : vector<18x64xf32>
    %61 = tpu.matmul %58, %60, %cst_32 {dimension_numbers = #tpu.dot_dimension_numbers<[1], [0], [0], [1], [0, 0, 1, 1], [], []>} : vector<18x32xbf16>, vector<32x64xbf16>, vector<18x64xf32> -> vector<18x64xf32>
    %62 = arith.addf %56, %61 : vector<18x64xf32>
    %63 = vector.extract_strided_slice %1 {offsets = [10, 0], sizes = [18, 32], strides = [1, 1]} : vector<32x32xf32> to vector<18x32xf32>
    %64 = arith.truncf %63 : vector<18x32xf32> to vector<18x32xbf16>
    %c10 = arith.constant 10 : index
    %c0_33 = arith.constant 0 : index
    %c0_34 = arith.constant 0 : index
    %65 = vector.load %arg2[%c10, %c0_33, %c0_34] : memref<15x32x64xbf16, #tpu.memory_space<vmem>>, vector<1x32x64xbf16>
    %66 = vector.shape_cast %65 : vector<1x32x64xbf16> to vector<32x64xbf16>
    %cst_35 = arith.constant dense<0.000000e+00> : vector<18x64xf32>
    %67 = tpu.matmul %64, %66, %cst_35 {dimension_numbers = #tpu.dot_dimension_numbers<[1], [0], [0], [1], [0, 0, 1, 1], [], []>} : vector<18x32xbf16>, vector<32x64xbf16>, vector<18x64xf32> -> vector<18x64xf32>
    %68 = arith.addf %62, %67 : vector<18x64xf32>
    %69 = vector.extract_strided_slice %1 {offsets = [11, 0], sizes = [18, 32], strides = [1, 1]} : vector<32x32xf32> to vector<18x32xf32>
    %70 = arith.truncf %69 : vector<18x32xf32> to vector<18x32xbf16>
    %c11 = arith.constant 11 : index
    %c0_36 = arith.constant 0 : index
    %c0_37 = arith.constant 0 : index
    %71 = vector.load %arg2[%c11, %c0_36, %c0_37] : memref<15x32x64xbf16, #tpu.memory_space<vmem>>, vector<1x32x64xbf16>
    %72 = vector.shape_cast %71 : vector<1x32x64xbf16> to vector<32x64xbf16>
    %cst_38 = arith.constant dense<0.000000e+00> : vector<18x64xf32>
    %73 = tpu.matmul %70, %72, %cst_38 {dimension_numbers = #tpu.dot_dimension_numbers<[1], [0], [0], [1], [0, 0, 1, 1], [], []>} : vector<18x32xbf16>, vector<32x64xbf16>, vector<18x64xf32> -> vector<18x64xf32>
    %74 = arith.addf %68, %73 : vector<18x64xf32>
    %75 = vector.extract_strided_slice %1 {offsets = [12, 0], sizes = [18, 32], strides = [1, 1]} : vector<32x32xf32> to vector<18x32xf32>
    %76 = arith.truncf %75 : vector<18x32xf32> to vector<18x32xbf16>
    %c12 = arith.constant 12 : index
    %c0_39 = arith.constant 0 : index
    %c0_40 = arith.constant 0 : index
    %77 = vector.load %arg2[%c12, %c0_39, %c0_40] : memref<15x32x64xbf16, #tpu.memory_space<vmem>>, vector<1x32x64xbf16>
    %78 = vector.shape_cast %77 : vector<1x32x64xbf16> to vector<32x64xbf16>
    %cst_41 = arith.constant dense<0.000000e+00> : vector<18x64xf32>
    %79 = tpu.matmul %76, %78, %cst_41 {dimension_numbers = #tpu.dot_dimension_numbers<[1], [0], [0], [1], [0, 0, 1, 1], [], []>} : vector<18x32xbf16>, vector<32x64xbf16>, vector<18x64xf32> -> vector<18x64xf32>
    %80 = arith.addf %74, %79 : vector<18x64xf32>
    %81 = vector.extract_strided_slice %1 {offsets = [13, 0], sizes = [18, 32], strides = [1, 1]} : vector<32x32xf32> to vector<18x32xf32>
    %82 = arith.truncf %81 : vector<18x32xf32> to vector<18x32xbf16>
    %c13 = arith.constant 13 : index
    %c0_42 = arith.constant 0 : index
    %c0_43 = arith.constant 0 : index
    %83 = vector.load %arg2[%c13, %c0_42, %c0_43] : memref<15x32x64xbf16, #tpu.memory_space<vmem>>, vector<1x32x64xbf16>
    %84 = vector.shape_cast %83 : vector<1x32x64xbf16> to vector<32x64xbf16>
    %cst_44 = arith.constant dense<0.000000e+00> : vector<18x64xf32>
    %85 = tpu.matmul %82, %84, %cst_44 {dimension_numbers = #tpu.dot_dimension_numbers<[1], [0], [0], [1], [0, 0, 1, 1], [], []>} : vector<18x32xbf16>, vector<32x64xbf16>, vector<18x64xf32> -> vector<18x64xf32>
    %86 = arith.addf %80, %85 : vector<18x64xf32>
    %87 = vector.extract_strided_slice %1 {offsets = [14, 0], sizes = [18, 32], strides = [1, 1]} : vector<32x32xf32> to vector<18x32xf32>
    %88 = arith.truncf %87 : vector<18x32xf32> to vector<18x32xbf16>
    %c14 = arith.constant 14 : index
    %c0_45 = arith.constant 0 : index
    %c0_46 = arith.constant 0 : index
    %89 = vector.load %arg2[%c14, %c0_45, %c0_46] : memref<15x32x64xbf16, #tpu.memory_space<vmem>>, vector<1x32x64xbf16>
    %90 = vector.shape_cast %89 : vector<1x32x64xbf16> to vector<32x64xbf16>
    %cst_47 = arith.constant dense<0.000000e+00> : vector<18x64xf32>
    %91 = tpu.matmul %88, %90, %cst_47 {dimension_numbers = #tpu.dot_dimension_numbers<[1], [0], [0], [1], [0, 0, 1, 1], [], []>} : vector<18x32xbf16>, vector<32x64xbf16>, vector<18x64xf32> -> vector<18x64xf32>
    %92 = arith.addf %86, %91 : vector<18x64xf32>
    %c0_48 = arith.constant 0 : index
    %c0_49 = arith.constant 0 : index
    %93 = vector.load %arg3[%c0_48, %c0_49] : memref<1x64xf32, #tpu.memory_space<vmem>>, vector<1x64xf32>
    %94 = vector.broadcast %93 : vector<1x64xf32> to vector<18x64xf32>
    %95 = arith.addf %92, %94 : vector<18x64xf32>
    %c0_50 = arith.constant 0 : index
    %c0_51 = arith.constant 0 : index
    %96 = vector.load %arg4[%c0_50, %c0_51] : memref<1x64xf32, #tpu.memory_space<vmem>>, vector<1x64xf32>
    %97 = vector.broadcast %96 : vector<1x64xf32> to vector<18x64xf32>
    %98 = arith.mulf %95, %97 : vector<18x64xf32>
    %c0_52 = arith.constant 0 : index
    %c0_53 = arith.constant 0 : index
    %99 = vector.load %arg5[%c0_52, %c0_53] : memref<1x64xf32, #tpu.memory_space<vmem>>, vector<1x64xf32>
    %100 = vector.broadcast %99 : vector<1x64xf32> to vector<18x64xf32>
    %101 = arith.addf %98, %100 : vector<18x64xf32>
    %cst_54 = arith.constant 5.000000e-01 : f32
    %102 = vector.broadcast %cst_54 : f32 to vector<18x64xf32>
    %103 = arith.mulf %102, %101 : vector<18x64xf32>
    %cst_55 = arith.constant 0.707106769 : f32
    %104 = vector.broadcast %cst_55 : f32 to vector<18x64xf32>
    %105 = arith.mulf %101, %104 : vector<18x64xf32>
    %106 = math.absf %105 : vector<18x64xf32>
    %cst_56 = arith.constant 0.327591091 : f32
    %107 = vector.broadcast %cst_56 : f32 to vector<18x64xf32>
    %108 = arith.mulf %107, %106 : vector<18x64xf32>
    %cst_57 = arith.constant 1.000000e+00 : f32
    %109 = vector.broadcast %cst_57 : f32 to vector<18x64xf32>
    %110 = arith.addf %109, %108 : vector<18x64xf32>
    %111 = tpu.reciprocal %110 {approx = true} : vector<18x64xf32> -> vector<18x64xf32>
    %cst_58 = arith.constant 1.06140542 : f32
    %112 = vector.broadcast %cst_58 : f32 to vector<18x64xf32>
    %113 = arith.mulf %112, %111 : vector<18x64xf32>
    %cst_59 = arith.constant -1.45315206 : f32
    %114 = vector.broadcast %cst_59 : f32 to vector<18x64xf32>
    %115 = arith.addf %113, %114 : vector<18x64xf32>
    %116 = arith.mulf %115, %111 : vector<18x64xf32>
    %cst_60 = arith.constant 1.42141378 : f32
    %117 = vector.broadcast %cst_60 : f32 to vector<18x64xf32>
    %118 = arith.addf %116, %117 : vector<18x64xf32>
    %119 = arith.mulf %118, %111 : vector<18x64xf32>
    %cst_61 = arith.constant -0.284496725 : f32
    %120 = vector.broadcast %cst_61 : f32 to vector<18x64xf32>
    %121 = arith.addf %119, %120 : vector<18x64xf32>
    %122 = arith.mulf %121, %111 : vector<18x64xf32>
    %cst_62 = arith.constant 0.254829586 : f32
    %123 = vector.broadcast %cst_62 : f32 to vector<18x64xf32>
    %124 = arith.addf %122, %123 : vector<18x64xf32>
    %125 = arith.mulf %124, %111 : vector<18x64xf32>
    %126 = arith.mulf %106, %106 : vector<18x64xf32>
    %cst_63 = arith.constant 0.000000e+00 : f32
    %127 = vector.broadcast %cst_63 : f32 to vector<18x64xf32>
    %128 = arith.subf %127, %126 : vector<18x64xf32>
    %129 = math.exp %128 : vector<18x64xf32>
    %130 = arith.mulf %125, %129 : vector<18x64xf32>
    %cst_64 = arith.constant 1.000000e+00 : f32
    %131 = vector.broadcast %cst_64 : f32 to vector<18x64xf32>
    %132 = arith.subf %131, %130 : vector<18x64xf32>
    %cst_65 = arith.constant 0.000000e+00 : f32
    %133 = vector.broadcast %cst_65 : f32 to vector<18x64xf32>
    %134 = arith.cmpf oge, %105, %133 : vector<18x64xf32>
    %cst_66 = arith.constant 0.000000e+00 : f32
    %135 = vector.broadcast %cst_66 : f32 to vector<18x64xf32>
    %136 = arith.subf %135, %132 : vector<18x64xf32>
    %137 = arith.select %134, %132, %136 : vector<18x64xi1>, vector<18x64xf32>
    %cst_67 = arith.constant 1.000000e+00 : f32
    %138 = vector.broadcast %cst_67 : f32 to vector<18x64xf32>
    %139 = arith.addf %138, %137 : vector<18x64xf32>
    %140 = arith.mulf %103, %139 : vector<18x64xf32>
    %c0_68 = arith.constant 0 : index
    %c0_69 = arith.constant 0 : index
    %141 = vector.load %arg7[%c0_68, %c0_69] : memref<18x64xf32, #tpu.memory_space<vmem>>, vector<18x64xf32>
    tpu.vector_store %arg7[%c0_68, %c0_69], %140 {strides = array<i32>} : memref<18x64xf32, #tpu.memory_space<vmem>>, vector<18x64xf32>,
    %c0_70 = arith.constant 0 : index
    %c0_71 = arith.constant 0 : index
    %142 = tpu.strided_load %arg7[%c0_70, %c0_71] {strides = array<i32: 3, 1>} : memref<18x64xf32, #tpu.memory_space<vmem>>, vector<6x64xf32>
    %c1_72 = arith.constant 1 : index
    %c0_73 = arith.constant 0 : index
    %143 = tpu.strided_load %arg7[%c1_72, %c0_73] {strides = array<i32: 3, 1>} : memref<18x64xf32, #tpu.memory_space<vmem>>, vector<6x64xf32>
    %c2_74 = arith.constant 2 : index
    %c0_75 = arith.constant 0 : index
    %144 = tpu.strided_load %arg7[%c2_74, %c0_75] {strides = array<i32: 3, 1>} : memref<18x64xf32, #tpu.memory_space<vmem>>, vector<6x64xf32>
    %145 = arith.maximumf %142, %143 : vector<6x64xf32>
    %146 = arith.maximumf %145, %144 : vector<6x64xf32>
    %c0_76 = arith.constant 0 : index
    %c0_77 = arith.constant 0 : index
    %c0_78 = arith.constant 0 : index
    %147 = vector.load %arg6[%c0_76, %c0_77, %c0_78] : memref<1x6x64xf32, #tpu.memory_space<vmem>>, vector<1x6x64xf32>
    %148 = vector.shape_cast %147 : vector<1x6x64xf32> to vector<6x64xf32>
    %149 = vector.shape_cast %146 : vector<6x64xf32> to vector<1x6x64xf32>
    tpu.vector_store %arg6[%c0_76, %c0_77, %c0_78], %149 {strides = array<i32>} : memref<1x6x64xf32, #tpu.memory_space<vmem>>, vector<1x6x64xf32>,
    return
  }
  func.func @transform_0(%arg0: i32) -> (i32, i32, i32) {
    %c0_i32 = arith.constant 0 : i32
    %c0_i32_0 = arith.constant 0 : i32
    %c0_i32_1 = arith.constant 0 : i32
    return %arg0, %c0_i32, %c0_i32_0 : i32, i32, i32
  }
  func.func @transform_1(%arg0: i32) -> (i32, i32, i32) {
    %c0_i32 = arith.constant 0 : i32
    %c0_i32_0 = arith.constant 0 : i32
    %c0_i32_1 = arith.constant 0 : i32
    %c0_i32_2 = arith.constant 0 : i32
    return %c0_i32, %c0_i32_0, %c0_i32_1 : i32, i32, i32
  }
  func.func @transform_2(%arg0: i32) -> (i32, i32) {
    %c0_i32 = arith.constant 0 : i32
    %c0_i32_0 = arith.constant 0 : i32
    %c0_i32_1 = arith.constant 0 : i32
    return %c0_i32, %c0_i32_0 : i32, i32
  }
  func.func @transform_3(%arg0: i32) -> (i32, i32) {
    %c0_i32 = arith.constant 0 : i32
    %c0_i32_0 = arith.constant 0 : i32
    %c0_i32_1 = arith.constant 0 : i32
    return %c0_i32, %c0_i32_0 : i32, i32
  }
  func.func @transform_4(%arg0: i32) -> (i32, i32) {
    %c0_i32 = arith.constant 0 : i32
    %c0_i32_0 = arith.constant 0 : i32
    %c0_i32_1 = arith.constant 0 : i32
    return %c0_i32, %c0_i32_0 : i32, i32
  }
  func.func @transform_5(%arg0: i32) -> (i32, i32, i32) {
    %c0_i32 = arith.constant 0 : i32
    %c0_i32_0 = arith.constant 0 : i32
    %c0_i32_1 = arith.constant 0 : i32
    return %arg0, %c0_i32, %c0_i32_0 : i32, i32, i32
  }
}

module attributes {stable_mosaic.version = 11 : i64} {
  func.func @_lstm2_kernel(%arg0: memref<12x64xf32, #tpu.memory_space<vmem>>, %arg1: memref<64x512xbf16, #tpu.memory_space<vmem>>, %arg2: memref<128x512xbf16, #tpu.memory_space<vmem>>, %arg3: memref<1x512xf32, #tpu.memory_space<vmem>>, %arg4: memref<128x512xbf16, #tpu.memory_space<vmem>>, %arg5: memref<128x512xbf16, #tpu.memory_space<vmem>>, %arg6: memref<1x512xf32, #tpu.memory_space<vmem>>, %arg7: memref<6x2x128xf32, #tpu.memory_space<vmem>>, %arg8: memref<12x512xf32, #tpu.memory_space<vmem>>, %arg9: memref<12x128xf32, #tpu.memory_space<vmem>>) attributes {dimension_semantics = [], scalar_prefetch = 0 : i64, scratch_operands = 2 : i64, tpu.core_type = #tpu.core_type<tc>} {
    %c0 = arith.constant 0 : index
    %c0_0 = arith.constant 0 : index
    %0 = vector.load %arg0[%c0, %c0_0] : memref<12x64xf32, #tpu.memory_space<vmem>>, vector<12x64xf32>
    %1 = arith.truncf %0 : vector<12x64xf32> to vector<12x64xbf16>
    %c0_1 = arith.constant 0 : index
    %c0_2 = arith.constant 0 : index
    %2 = vector.load %arg1[%c0_1, %c0_2] : memref<64x512xbf16, #tpu.memory_space<vmem>>, vector<64x512xbf16>
    %cst = arith.constant dense<0.000000e+00> : vector<12x512xf32>
    %3 = tpu.matmul %1, %2, %cst {dimension_numbers = #tpu.dot_dimension_numbers<[1], [0], [0], [1], [0, 0, 1, 1], [], []>} : vector<12x64xbf16>, vector<64x512xbf16>, vector<12x512xf32> -> vector<12x512xf32>
    %c0_3 = arith.constant 0 : index
    %c0_4 = arith.constant 0 : index
    %4 = vector.load %arg3[%c0_3, %c0_4] : memref<1x512xf32, #tpu.memory_space<vmem>>, vector<1x512xf32>
    %5 = vector.broadcast %4 : vector<1x512xf32> to vector<12x512xf32>
    %6 = arith.addf %3, %5 : vector<12x512xf32>
    %c0_5 = arith.constant 0 : index
    %c0_6 = arith.constant 0 : index
    %7 = vector.load %arg8[%c0_5, %c0_6] : memref<12x512xf32, #tpu.memory_space<vmem>>, vector<12x512xf32>
    tpu.vector_store %arg8[%c0_5, %c0_6], %6 {strides = array<i32>} : memref<12x512xf32, #tpu.memory_space<vmem>>, vector<12x512xf32>,
    %cst_7 = arith.constant 0.000000e+00 : f32
    %8 = vector.broadcast %cst_7 : f32 to vector<2x128xf32>
    %cst_8 = arith.constant 0.000000e+00 : f32
    %9 = vector.broadcast %cst_8 : f32 to vector<2x128xf32>
    %c0_9 = arith.constant 0 : index
    %c0_10 = arith.constant 0 : index
    %10 = vector.load %arg8[%c0_9, %c0_10] : memref<12x512xf32, #tpu.memory_space<vmem>>, vector<2x512xf32>
    %11 = arith.truncf %8 : vector<2x128xf32> to vector<2x128xbf16>
    %c0_11 = arith.constant 0 : index
    %c0_12 = arith.constant 0 : index
    %12 = vector.load %arg2[%c0_11, %c0_12] : memref<128x512xbf16, #tpu.memory_space<vmem>>, vector<128x512xbf16>
    %cst_13 = arith.constant dense<0.000000e+00> : vector<2x512xf32>
    %13 = tpu.matmul %11, %12, %cst_13 {dimension_numbers = #tpu.dot_dimension_numbers<[1], [0], [0], [1], [0, 0, 1, 1], [], []>} : vector<2x128xbf16>, vector<128x512xbf16>, vector<2x512xf32> -> vector<2x512xf32>
    %14 = arith.addf %10, %13 : vector<2x512xf32>
    %15 = vector.extract_strided_slice %14 {offsets = [0, 0], sizes = [2, 128], strides = [1, 1]} : vector<2x512xf32> to vector<2x128xf32>
    %16 = arith.negf %15 : vector<2x128xf32>
    %17 = math.exp %16 : vector<2x128xf32>
    %cst_14 = arith.constant 1.000000e+00 : f32
    %18 = vector.broadcast %cst_14 : f32 to vector<2x128xf32>
    %19 = arith.addf %18, %17 : vector<2x128xf32>
    %20 = arith.divf %18, %19 : vector<2x128xf32>
    %21 = vector.extract_strided_slice %14 {offsets = [0, 128], sizes = [2, 128], strides = [1, 1]} : vector<2x512xf32> to vector<2x128xf32>
    %22 = arith.negf %21 : vector<2x128xf32>
    %23 = math.exp %22 : vector<2x128xf32>
    %cst_15 = arith.constant 1.000000e+00 : f32
    %24 = vector.broadcast %cst_15 : f32 to vector<2x128xf32>
    %25 = arith.addf %24, %23 : vector<2x128xf32>
    %26 = arith.divf %24, %25 : vector<2x128xf32>
    %27 = vector.extract_strided_slice %14 {offsets = [0, 256], sizes = [2, 128], strides = [1, 1]} : vector<2x512xf32> to vector<2x128xf32>
    %28 = math.tanh %27 : vector<2x128xf32>
    %29 = vector.extract_strided_slice %14 {offsets = [0, 384], sizes = [2, 128], strides = [1, 1]} : vector<2x512xf32> to vector<2x128xf32>
    %30 = arith.negf %29 : vector<2x128xf32>
    %31 = math.exp %30 : vector<2x128xf32>
    %cst_16 = arith.constant 1.000000e+00 : f32
    %32 = vector.broadcast %cst_16 : f32 to vector<2x128xf32>
    %33 = arith.addf %32, %31 : vector<2x128xf32>
    %34 = arith.divf %32, %33 : vector<2x128xf32>
    %35 = arith.mulf %26, %9 : vector<2x128xf32>
    %36 = arith.mulf %20, %28 : vector<2x128xf32>
    %37 = arith.addf %35, %36 : vector<2x128xf32>
    %38 = math.tanh %37 : vector<2x128xf32>
    %39 = arith.mulf %34, %38 : vector<2x128xf32>
    %c0_17 = arith.constant 0 : index
    %c0_18 = arith.constant 0 : index
    %40 = vector.load %arg9[%c0_17, %c0_18] : memref<12x128xf32, #tpu.memory_space<vmem>>, vector<2x128xf32>
    tpu.vector_store %arg9[%c0_17, %c0_18], %39 {strides = array<i32>} : memref<12x128xf32, #tpu.memory_space<vmem>>, vector<2x128xf32>,
    %c2 = arith.constant 2 : index
    %c0_19 = arith.constant 0 : index
    %41 = vector.load %arg8[%c2, %c0_19] : memref<12x512xf32, #tpu.memory_space<vmem>>, vector<2x512xf32>
    %42 = arith.truncf %39 : vector<2x128xf32> to vector<2x128xbf16>
    %c0_20 = arith.constant 0 : index
    %c0_21 = arith.constant 0 : index
    %43 = vector.load %arg2[%c0_20, %c0_21] : memref<128x512xbf16, #tpu.memory_space<vmem>>, vector<128x512xbf16>
    %cst_22 = arith.constant dense<0.000000e+00> : vector<2x512xf32>
    %44 = tpu.matmul %42, %43, %cst_22 {dimension_numbers = #tpu.dot_dimension_numbers<[1], [0], [0], [1], [0, 0, 1, 1], [], []>} : vector<2x128xbf16>, vector<128x512xbf16>, vector<2x512xf32> -> vector<2x512xf32>
    %45 = arith.addf %41, %44 : vector<2x512xf32>
    %46 = vector.extract_strided_slice %45 {offsets = [0, 0], sizes = [2, 128], strides = [1, 1]} : vector<2x512xf32> to vector<2x128xf32>
    %47 = arith.negf %46 : vector<2x128xf32>
    %48 = math.exp %47 : vector<2x128xf32>
    %cst_23 = arith.constant 1.000000e+00 : f32
    %49 = vector.broadcast %cst_23 : f32 to vector<2x128xf32>
    %50 = arith.addf %49, %48 : vector<2x128xf32>
    %51 = arith.divf %49, %50 : vector<2x128xf32>
    %52 = vector.extract_strided_slice %45 {offsets = [0, 128], sizes = [2, 128], strides = [1, 1]} : vector<2x512xf32> to vector<2x128xf32>
    %53 = arith.negf %52 : vector<2x128xf32>
    %54 = math.exp %53 : vector<2x128xf32>
    %cst_24 = arith.constant 1.000000e+00 : f32
    %55 = vector.broadcast %cst_24 : f32 to vector<2x128xf32>
    %56 = arith.addf %55, %54 : vector<2x128xf32>
    %57 = arith.divf %55, %56 : vector<2x128xf32>
    %58 = vector.extract_strided_slice %45 {offsets = [0, 256], sizes = [2, 128], strides = [1, 1]} : vector<2x512xf32> to vector<2x128xf32>
    %59 = math.tanh %58 : vector<2x128xf32>
    %60 = vector.extract_strided_slice %45 {offsets = [0, 384], sizes = [2, 128], strides = [1, 1]} : vector<2x512xf32> to vector<2x128xf32>
    %61 = arith.negf %60 : vector<2x128xf32>
    %62 = math.exp %61 : vector<2x128xf32>
    %cst_25 = arith.constant 1.000000e+00 : f32
    %63 = vector.broadcast %cst_25 : f32 to vector<2x128xf32>
    %64 = arith.addf %63, %62 : vector<2x128xf32>
    %65 = arith.divf %63, %64 : vector<2x128xf32>
    %66 = arith.mulf %57, %37 : vector<2x128xf32>
    %67 = arith.mulf %51, %59 : vector<2x128xf32>
    %68 = arith.addf %66, %67 : vector<2x128xf32>
    %69 = math.tanh %68 : vector<2x128xf32>
    %70 = arith.mulf %65, %69 : vector<2x128xf32>
    %c2_26 = arith.constant 2 : index
    %c0_27 = arith.constant 0 : index
    %71 = vector.load %arg9[%c2_26, %c0_27] : memref<12x128xf32, #tpu.memory_space<vmem>>, vector<2x128xf32>
    tpu.vector_store %arg9[%c2_26, %c0_27], %70 {strides = array<i32>} : memref<12x128xf32, #tpu.memory_space<vmem>>, vector<2x128xf32>,
    %c4 = arith.constant 4 : index
    %c0_28 = arith.constant 0 : index
    %72 = vector.load %arg8[%c4, %c0_28] : memref<12x512xf32, #tpu.memory_space<vmem>>, vector<2x512xf32>
    %73 = arith.truncf %70 : vector<2x128xf32> to vector<2x128xbf16>
    %c0_29 = arith.constant 0 : index
    %c0_30 = arith.constant 0 : index
    %74 = vector.load %arg2[%c0_29, %c0_30] : memref<128x512xbf16, #tpu.memory_space<vmem>>, vector<128x512xbf16>
    %cst_31 = arith.constant dense<0.000000e+00> : vector<2x512xf32>
    %75 = tpu.matmul %73, %74, %cst_31 {dimension_numbers = #tpu.dot_dimension_numbers<[1], [0], [0], [1], [0, 0, 1, 1], [], []>} : vector<2x128xbf16>, vector<128x512xbf16>, vector<2x512xf32> -> vector<2x512xf32>
    %76 = arith.addf %72, %75 : vector<2x512xf32>
    %77 = vector.extract_strided_slice %76 {offsets = [0, 0], sizes = [2, 128], strides = [1, 1]} : vector<2x512xf32> to vector<2x128xf32>
    %78 = arith.negf %77 : vector<2x128xf32>
    %79 = math.exp %78 : vector<2x128xf32>
    %cst_32 = arith.constant 1.000000e+00 : f32
    %80 = vector.broadcast %cst_32 : f32 to vector<2x128xf32>
    %81 = arith.addf %80, %79 : vector<2x128xf32>
    %82 = arith.divf %80, %81 : vector<2x128xf32>
    %83 = vector.extract_strided_slice %76 {offsets = [0, 128], sizes = [2, 128], strides = [1, 1]} : vector<2x512xf32> to vector<2x128xf32>
    %84 = arith.negf %83 : vector<2x128xf32>
    %85 = math.exp %84 : vector<2x128xf32>
    %cst_33 = arith.constant 1.000000e+00 : f32
    %86 = vector.broadcast %cst_33 : f32 to vector<2x128xf32>
    %87 = arith.addf %86, %85 : vector<2x128xf32>
    %88 = arith.divf %86, %87 : vector<2x128xf32>
    %89 = vector.extract_strided_slice %76 {offsets = [0, 256], sizes = [2, 128], strides = [1, 1]} : vector<2x512xf32> to vector<2x128xf32>
    %90 = math.tanh %89 : vector<2x128xf32>
    %91 = vector.extract_strided_slice %76 {offsets = [0, 384], sizes = [2, 128], strides = [1, 1]} : vector<2x512xf32> to vector<2x128xf32>
    %92 = arith.negf %91 : vector<2x128xf32>
    %93 = math.exp %92 : vector<2x128xf32>
    %cst_34 = arith.constant 1.000000e+00 : f32
    %94 = vector.broadcast %cst_34 : f32 to vector<2x128xf32>
    %95 = arith.addf %94, %93 : vector<2x128xf32>
    %96 = arith.divf %94, %95 : vector<2x128xf32>
    %97 = arith.mulf %88, %68 : vector<2x128xf32>
    %98 = arith.mulf %82, %90 : vector<2x128xf32>
    %99 = arith.addf %97, %98 : vector<2x128xf32>
    %100 = math.tanh %99 : vector<2x128xf32>
    %101 = arith.mulf %96, %100 : vector<2x128xf32>
    %c4_35 = arith.constant 4 : index
    %c0_36 = arith.constant 0 : index
    %102 = vector.load %arg9[%c4_35, %c0_36] : memref<12x128xf32, #tpu.memory_space<vmem>>, vector<2x128xf32>
    tpu.vector_store %arg9[%c4_35, %c0_36], %101 {strides = array<i32>} : memref<12x128xf32, #tpu.memory_space<vmem>>, vector<2x128xf32>,
    %c6 = arith.constant 6 : index
    %c0_37 = arith.constant 0 : index
    %103 = vector.load %arg8[%c6, %c0_37] : memref<12x512xf32, #tpu.memory_space<vmem>>, vector<2x512xf32>
    %104 = arith.truncf %101 : vector<2x128xf32> to vector<2x128xbf16>
    %c0_38 = arith.constant 0 : index
    %c0_39 = arith.constant 0 : index
    %105 = vector.load %arg2[%c0_38, %c0_39] : memref<128x512xbf16, #tpu.memory_space<vmem>>, vector<128x512xbf16>
    %cst_40 = arith.constant dense<0.000000e+00> : vector<2x512xf32>
    %106 = tpu.matmul %104, %105, %cst_40 {dimension_numbers = #tpu.dot_dimension_numbers<[1], [0], [0], [1], [0, 0, 1, 1], [], []>} : vector<2x128xbf16>, vector<128x512xbf16>, vector<2x512xf32> -> vector<2x512xf32>
    %107 = arith.addf %103, %106 : vector<2x512xf32>
    %108 = vector.extract_strided_slice %107 {offsets = [0, 0], sizes = [2, 128], strides = [1, 1]} : vector<2x512xf32> to vector<2x128xf32>
    %109 = arith.negf %108 : vector<2x128xf32>
    %110 = math.exp %109 : vector<2x128xf32>
    %cst_41 = arith.constant 1.000000e+00 : f32
    %111 = vector.broadcast %cst_41 : f32 to vector<2x128xf32>
    %112 = arith.addf %111, %110 : vector<2x128xf32>
    %113 = arith.divf %111, %112 : vector<2x128xf32>
    %114 = vector.extract_strided_slice %107 {offsets = [0, 128], sizes = [2, 128], strides = [1, 1]} : vector<2x512xf32> to vector<2x128xf32>
    %115 = arith.negf %114 : vector<2x128xf32>
    %116 = math.exp %115 : vector<2x128xf32>
    %cst_42 = arith.constant 1.000000e+00 : f32
    %117 = vector.broadcast %cst_42 : f32 to vector<2x128xf32>
    %118 = arith.addf %117, %116 : vector<2x128xf32>
    %119 = arith.divf %117, %118 : vector<2x128xf32>
    %120 = vector.extract_strided_slice %107 {offsets = [0, 256], sizes = [2, 128], strides = [1, 1]} : vector<2x512xf32> to vector<2x128xf32>
    %121 = math.tanh %120 : vector<2x128xf32>
    %122 = vector.extract_strided_slice %107 {offsets = [0, 384], sizes = [2, 128], strides = [1, 1]} : vector<2x512xf32> to vector<2x128xf32>
    %123 = arith.negf %122 : vector<2x128xf32>
    %124 = math.exp %123 : vector<2x128xf32>
    %cst_43 = arith.constant 1.000000e+00 : f32
    %125 = vector.broadcast %cst_43 : f32 to vector<2x128xf32>
    %126 = arith.addf %125, %124 : vector<2x128xf32>
    %127 = arith.divf %125, %126 : vector<2x128xf32>
    %128 = arith.mulf %119, %99 : vector<2x128xf32>
    %129 = arith.mulf %113, %121 : vector<2x128xf32>
    %130 = arith.addf %128, %129 : vector<2x128xf32>
    %131 = math.tanh %130 : vector<2x128xf32>
    %132 = arith.mulf %127, %131 : vector<2x128xf32>
    %c6_44 = arith.constant 6 : index
    %c0_45 = arith.constant 0 : index
    %133 = vector.load %arg9[%c6_44, %c0_45] : memref<12x128xf32, #tpu.memory_space<vmem>>, vector<2x128xf32>
    tpu.vector_store %arg9[%c6_44, %c0_45], %132 {strides = array<i32>} : memref<12x128xf32, #tpu.memory_space<vmem>>, vector<2x128xf32>,
    %c8 = arith.constant 8 : index
    %c0_46 = arith.constant 0 : index
    %134 = vector.load %arg8[%c8, %c0_46] : memref<12x512xf32, #tpu.memory_space<vmem>>, vector<2x512xf32>
    %135 = arith.truncf %132 : vector<2x128xf32> to vector<2x128xbf16>
    %c0_47 = arith.constant 0 : index
    %c0_48 = arith.constant 0 : index
    %136 = vector.load %arg2[%c0_47, %c0_48] : memref<128x512xbf16, #tpu.memory_space<vmem>>, vector<128x512xbf16>
    %cst_49 = arith.constant dense<0.000000e+00> : vector<2x512xf32>
    %137 = tpu.matmul %135, %136, %cst_49 {dimension_numbers = #tpu.dot_dimension_numbers<[1], [0], [0], [1], [0, 0, 1, 1], [], []>} : vector<2x128xbf16>, vector<128x512xbf16>, vector<2x512xf32> -> vector<2x512xf32>
    %138 = arith.addf %134, %137 : vector<2x512xf32>
    %139 = vector.extract_strided_slice %138 {offsets = [0, 0], sizes = [2, 128], strides = [1, 1]} : vector<2x512xf32> to vector<2x128xf32>
    %140 = arith.negf %139 : vector<2x128xf32>
    %141 = math.exp %140 : vector<2x128xf32>
    %cst_50 = arith.constant 1.000000e+00 : f32
    %142 = vector.broadcast %cst_50 : f32 to vector<2x128xf32>
    %143 = arith.addf %142, %141 : vector<2x128xf32>
    %144 = arith.divf %142, %143 : vector<2x128xf32>
    %145 = vector.extract_strided_slice %138 {offsets = [0, 128], sizes = [2, 128], strides = [1, 1]} : vector<2x512xf32> to vector<2x128xf32>
    %146 = arith.negf %145 : vector<2x128xf32>
    %147 = math.exp %146 : vector<2x128xf32>
    %cst_51 = arith.constant 1.000000e+00 : f32
    %148 = vector.broadcast %cst_51 : f32 to vector<2x128xf32>
    %149 = arith.addf %148, %147 : vector<2x128xf32>
    %150 = arith.divf %148, %149 : vector<2x128xf32>
    %151 = vector.extract_strided_slice %138 {offsets = [0, 256], sizes = [2, 128], strides = [1, 1]} : vector<2x512xf32> to vector<2x128xf32>
    %152 = math.tanh %151 : vector<2x128xf32>
    %153 = vector.extract_strided_slice %138 {offsets = [0, 384], sizes = [2, 128], strides = [1, 1]} : vector<2x512xf32> to vector<2x128xf32>
    %154 = arith.negf %153 : vector<2x128xf32>
    %155 = math.exp %154 : vector<2x128xf32>
    %cst_52 = arith.constant 1.000000e+00 : f32
    %156 = vector.broadcast %cst_52 : f32 to vector<2x128xf32>
    %157 = arith.addf %156, %155 : vector<2x128xf32>
    %158 = arith.divf %156, %157 : vector<2x128xf32>
    %159 = arith.mulf %150, %130 : vector<2x128xf32>
    %160 = arith.mulf %144, %152 : vector<2x128xf32>
    %161 = arith.addf %159, %160 : vector<2x128xf32>
    %162 = math.tanh %161 : vector<2x128xf32>
    %163 = arith.mulf %158, %162 : vector<2x128xf32>
    %c8_53 = arith.constant 8 : index
    %c0_54 = arith.constant 0 : index
    %164 = vector.load %arg9[%c8_53, %c0_54] : memref<12x128xf32, #tpu.memory_space<vmem>>, vector<2x128xf32>
    tpu.vector_store %arg9[%c8_53, %c0_54], %163 {strides = array<i32>} : memref<12x128xf32, #tpu.memory_space<vmem>>, vector<2x128xf32>,
    %c10 = arith.constant 10 : index
    %c0_55 = arith.constant 0 : index
    %165 = vector.load %arg8[%c10, %c0_55] : memref<12x512xf32, #tpu.memory_space<vmem>>, vector<2x512xf32>
    %166 = arith.truncf %163 : vector<2x128xf32> to vector<2x128xbf16>
    %c0_56 = arith.constant 0 : index
    %c0_57 = arith.constant 0 : index
    %167 = vector.load %arg2[%c0_56, %c0_57] : memref<128x512xbf16, #tpu.memory_space<vmem>>, vector<128x512xbf16>
    %cst_58 = arith.constant dense<0.000000e+00> : vector<2x512xf32>
    %168 = tpu.matmul %166, %167, %cst_58 {dimension_numbers = #tpu.dot_dimension_numbers<[1], [0], [0], [1], [0, 0, 1, 1], [], []>} : vector<2x128xbf16>, vector<128x512xbf16>, vector<2x512xf32> -> vector<2x512xf32>
    %169 = arith.addf %165, %168 : vector<2x512xf32>
    %170 = vector.extract_strided_slice %169 {offsets = [0, 0], sizes = [2, 128], strides = [1, 1]} : vector<2x512xf32> to vector<2x128xf32>
    %171 = arith.negf %170 : vector<2x128xf32>
    %172 = math.exp %171 : vector<2x128xf32>
    %cst_59 = arith.constant 1.000000e+00 : f32
    %173 = vector.broadcast %cst_59 : f32 to vector<2x128xf32>
    %174 = arith.addf %173, %172 : vector<2x128xf32>
    %175 = arith.divf %173, %174 : vector<2x128xf32>
    %176 = vector.extract_strided_slice %169 {offsets = [0, 128], sizes = [2, 128], strides = [1, 1]} : vector<2x512xf32> to vector<2x128xf32>
    %177 = arith.negf %176 : vector<2x128xf32>
    %178 = math.exp %177 : vector<2x128xf32>
    %cst_60 = arith.constant 1.000000e+00 : f32
    %179 = vector.broadcast %cst_60 : f32 to vector<2x128xf32>
    %180 = arith.addf %179, %178 : vector<2x128xf32>
    %181 = arith.divf %179, %180 : vector<2x128xf32>
    %182 = vector.extract_strided_slice %169 {offsets = [0, 256], sizes = [2, 128], strides = [1, 1]} : vector<2x512xf32> to vector<2x128xf32>
    %183 = math.tanh %182 : vector<2x128xf32>
    %184 = vector.extract_strided_slice %169 {offsets = [0, 384], sizes = [2, 128], strides = [1, 1]} : vector<2x512xf32> to vector<2x128xf32>
    %185 = arith.negf %184 : vector<2x128xf32>
    %186 = math.exp %185 : vector<2x128xf32>
    %cst_61 = arith.constant 1.000000e+00 : f32
    %187 = vector.broadcast %cst_61 : f32 to vector<2x128xf32>
    %188 = arith.addf %187, %186 : vector<2x128xf32>
    %189 = arith.divf %187, %188 : vector<2x128xf32>
    %190 = arith.mulf %181, %161 : vector<2x128xf32>
    %191 = arith.mulf %175, %183 : vector<2x128xf32>
    %192 = arith.addf %190, %191 : vector<2x128xf32>
    %193 = math.tanh %192 : vector<2x128xf32>
    %194 = arith.mulf %189, %193 : vector<2x128xf32>
    %c10_62 = arith.constant 10 : index
    %c0_63 = arith.constant 0 : index
    %195 = vector.load %arg9[%c10_62, %c0_63] : memref<12x128xf32, #tpu.memory_space<vmem>>, vector<2x128xf32>
    tpu.vector_store %arg9[%c10_62, %c0_63], %194 {strides = array<i32>} : memref<12x128xf32, #tpu.memory_space<vmem>>, vector<2x128xf32>,
    %c0_64 = arith.constant 0 : index
    %c0_65 = arith.constant 0 : index
    %196 = vector.load %arg9[%c0_64, %c0_65] : memref<12x128xf32, #tpu.memory_space<vmem>>, vector<12x128xf32>
    %197 = arith.truncf %196 : vector<12x128xf32> to vector<12x128xbf16>
    %c0_66 = arith.constant 0 : index
    %c0_67 = arith.constant 0 : index
    %198 = vector.load %arg4[%c0_66, %c0_67] : memref<128x512xbf16, #tpu.memory_space<vmem>>, vector<128x512xbf16>
    %cst_68 = arith.constant dense<0.000000e+00> : vector<12x512xf32>
    %199 = tpu.matmul %197, %198, %cst_68 {dimension_numbers = #tpu.dot_dimension_numbers<[1], [0], [0], [1], [0, 0, 1, 1], [], []>} : vector<12x128xbf16>, vector<128x512xbf16>, vector<12x512xf32> -> vector<12x512xf32>
    %c0_69 = arith.constant 0 : index
    %c0_70 = arith.constant 0 : index
    %200 = vector.load %arg6[%c0_69, %c0_70] : memref<1x512xf32, #tpu.memory_space<vmem>>, vector<1x512xf32>
    %201 = vector.broadcast %200 : vector<1x512xf32> to vector<12x512xf32>
    %202 = arith.addf %199, %201 : vector<12x512xf32>
    %c0_71 = arith.constant 0 : index
    %c0_72 = arith.constant 0 : index
    %203 = vector.load %arg8[%c0_71, %c0_72] : memref<12x512xf32, #tpu.memory_space<vmem>>, vector<12x512xf32>
    tpu.vector_store %arg8[%c0_71, %c0_72], %202 {strides = array<i32>} : memref<12x512xf32, #tpu.memory_space<vmem>>, vector<12x512xf32>,
    %cst_73 = arith.constant 0.000000e+00 : f32
    %204 = vector.broadcast %cst_73 : f32 to vector<2x128xf32>
    %cst_74 = arith.constant 0.000000e+00 : f32
    %205 = vector.broadcast %cst_74 : f32 to vector<2x128xf32>
    %c0_75 = arith.constant 0 : index
    %c0_76 = arith.constant 0 : index
    %206 = vector.load %arg8[%c0_75, %c0_76] : memref<12x512xf32, #tpu.memory_space<vmem>>, vector<2x512xf32>
    %207 = arith.truncf %204 : vector<2x128xf32> to vector<2x128xbf16>
    %c0_77 = arith.constant 0 : index
    %c0_78 = arith.constant 0 : index
    %208 = vector.load %arg5[%c0_77, %c0_78] : memref<128x512xbf16, #tpu.memory_space<vmem>>, vector<128x512xbf16>
    %cst_79 = arith.constant dense<0.000000e+00> : vector<2x512xf32>
    %209 = tpu.matmul %207, %208, %cst_79 {dimension_numbers = #tpu.dot_dimension_numbers<[1], [0], [0], [1], [0, 0, 1, 1], [], []>} : vector<2x128xbf16>, vector<128x512xbf16>, vector<2x512xf32> -> vector<2x512xf32>
    %210 = arith.addf %206, %209 : vector<2x512xf32>
    %211 = vector.extract_strided_slice %210 {offsets = [0, 0], sizes = [2, 128], strides = [1, 1]} : vector<2x512xf32> to vector<2x128xf32>
    %212 = arith.negf %211 : vector<2x128xf32>
    %213 = math.exp %212 : vector<2x128xf32>
    %cst_80 = arith.constant 1.000000e+00 : f32
    %214 = vector.broadcast %cst_80 : f32 to vector<2x128xf32>
    %215 = arith.addf %214, %213 : vector<2x128xf32>
    %216 = arith.divf %214, %215 : vector<2x128xf32>
    %217 = vector.extract_strided_slice %210 {offsets = [0, 128], sizes = [2, 128], strides = [1, 1]} : vector<2x512xf32> to vector<2x128xf32>
    %218 = arith.negf %217 : vector<2x128xf32>
    %219 = math.exp %218 : vector<2x128xf32>
    %cst_81 = arith.constant 1.000000e+00 : f32
    %220 = vector.broadcast %cst_81 : f32 to vector<2x128xf32>
    %221 = arith.addf %220, %219 : vector<2x128xf32>
    %222 = arith.divf %220, %221 : vector<2x128xf32>
    %223 = vector.extract_strided_slice %210 {offsets = [0, 256], sizes = [2, 128], strides = [1, 1]} : vector<2x512xf32> to vector<2x128xf32>
    %224 = math.tanh %223 : vector<2x128xf32>
    %225 = vector.extract_strided_slice %210 {offsets = [0, 384], sizes = [2, 128], strides = [1, 1]} : vector<2x512xf32> to vector<2x128xf32>
    %226 = arith.negf %225 : vector<2x128xf32>
    %227 = math.exp %226 : vector<2x128xf32>
    %cst_82 = arith.constant 1.000000e+00 : f32
    %228 = vector.broadcast %cst_82 : f32 to vector<2x128xf32>
    %229 = arith.addf %228, %227 : vector<2x128xf32>
    %230 = arith.divf %228, %229 : vector<2x128xf32>
    %231 = arith.mulf %222, %205 : vector<2x128xf32>
    %232 = arith.mulf %216, %224 : vector<2x128xf32>
    %233 = arith.addf %231, %232 : vector<2x128xf32>
    %234 = math.tanh %233 : vector<2x128xf32>
    %235 = arith.mulf %230, %234 : vector<2x128xf32>
    %c0_83 = arith.constant 0 : index
    %c0_84 = arith.constant 0 : index
    %c0_85 = arith.constant 0 : index
    %236 = vector.load %arg7[%c0_83, %c0_84, %c0_85] : memref<6x2x128xf32, #tpu.memory_space<vmem>>, vector<1x2x128xf32>
    %237 = vector.shape_cast %236 : vector<1x2x128xf32> to vector<2x128xf32>
    %238 = vector.shape_cast %235 : vector<2x128xf32> to vector<1x2x128xf32>
    tpu.vector_store %arg7[%c0_83, %c0_84, %c0_85], %238 {strides = array<i32>} : memref<6x2x128xf32, #tpu.memory_space<vmem>>, vector<1x2x128xf32>,
    %c2_86 = arith.constant 2 : index
    %c0_87 = arith.constant 0 : index
    %239 = vector.load %arg8[%c2_86, %c0_87] : memref<12x512xf32, #tpu.memory_space<vmem>>, vector<2x512xf32>
    %240 = arith.truncf %235 : vector<2x128xf32> to vector<2x128xbf16>
    %c0_88 = arith.constant 0 : index
    %c0_89 = arith.constant 0 : index
    %241 = vector.load %arg5[%c0_88, %c0_89] : memref<128x512xbf16, #tpu.memory_space<vmem>>, vector<128x512xbf16>
    %cst_90 = arith.constant dense<0.000000e+00> : vector<2x512xf32>
    %242 = tpu.matmul %240, %241, %cst_90 {dimension_numbers = #tpu.dot_dimension_numbers<[1], [0], [0], [1], [0, 0, 1, 1], [], []>} : vector<2x128xbf16>, vector<128x512xbf16>, vector<2x512xf32> -> vector<2x512xf32>
    %243 = arith.addf %239, %242 : vector<2x512xf32>
    %244 = vector.extract_strided_slice %243 {offsets = [0, 0], sizes = [2, 128], strides = [1, 1]} : vector<2x512xf32> to vector<2x128xf32>
    %245 = arith.negf %244 : vector<2x128xf32>
    %246 = math.exp %245 : vector<2x128xf32>
    %cst_91 = arith.constant 1.000000e+00 : f32
    %247 = vector.broadcast %cst_91 : f32 to vector<2x128xf32>
    %248 = arith.addf %247, %246 : vector<2x128xf32>
    %249 = arith.divf %247, %248 : vector<2x128xf32>
    %250 = vector.extract_strided_slice %243 {offsets = [0, 128], sizes = [2, 128], strides = [1, 1]} : vector<2x512xf32> to vector<2x128xf32>
    %251 = arith.negf %250 : vector<2x128xf32>
    %252 = math.exp %251 : vector<2x128xf32>
    %cst_92 = arith.constant 1.000000e+00 : f32
    %253 = vector.broadcast %cst_92 : f32 to vector<2x128xf32>
    %254 = arith.addf %253, %252 : vector<2x128xf32>
    %255 = arith.divf %253, %254 : vector<2x128xf32>
    %256 = vector.extract_strided_slice %243 {offsets = [0, 256], sizes = [2, 128], strides = [1, 1]} : vector<2x512xf32> to vector<2x128xf32>
    %257 = math.tanh %256 : vector<2x128xf32>
    %258 = vector.extract_strided_slice %243 {offsets = [0, 384], sizes = [2, 128], strides = [1, 1]} : vector<2x512xf32> to vector<2x128xf32>
    %259 = arith.negf %258 : vector<2x128xf32>
    %260 = math.exp %259 : vector<2x128xf32>
    %cst_93 = arith.constant 1.000000e+00 : f32
    %261 = vector.broadcast %cst_93 : f32 to vector<2x128xf32>
    %262 = arith.addf %261, %260 : vector<2x128xf32>
    %263 = arith.divf %261, %262 : vector<2x128xf32>
    %264 = arith.mulf %255, %233 : vector<2x128xf32>
    %265 = arith.mulf %249, %257 : vector<2x128xf32>
    %266 = arith.addf %264, %265 : vector<2x128xf32>
    %267 = math.tanh %266 : vector<2x128xf32>
    %268 = arith.mulf %263, %267 : vector<2x128xf32>
    %c1 = arith.constant 1 : index
    %c0_94 = arith.constant 0 : index
    %c0_95 = arith.constant 0 : index
    %269 = vector.load %arg7[%c1, %c0_94, %c0_95] : memref<6x2x128xf32, #tpu.memory_space<vmem>>, vector<1x2x128xf32>
    %270 = vector.shape_cast %269 : vector<1x2x128xf32> to vector<2x128xf32>
    %271 = vector.shape_cast %268 : vector<2x128xf32> to vector<1x2x128xf32>
    tpu.vector_store %arg7[%c1, %c0_94, %c0_95], %271 {strides = array<i32>} : memref<6x2x128xf32, #tpu.memory_space<vmem>>, vector<1x2x128xf32>,
    %c4_96 = arith.constant 4 : index
    %c0_97 = arith.constant 0 : index
    %272 = vector.load %arg8[%c4_96, %c0_97] : memref<12x512xf32, #tpu.memory_space<vmem>>, vector<2x512xf32>
    %273 = arith.truncf %268 : vector<2x128xf32> to vector<2x128xbf16>
    %c0_98 = arith.constant 0 : index
    %c0_99 = arith.constant 0 : index
    %274 = vector.load %arg5[%c0_98, %c0_99] : memref<128x512xbf16, #tpu.memory_space<vmem>>, vector<128x512xbf16>
    %cst_100 = arith.constant dense<0.000000e+00> : vector<2x512xf32>
    %275 = tpu.matmul %273, %274, %cst_100 {dimension_numbers = #tpu.dot_dimension_numbers<[1], [0], [0], [1], [0, 0, 1, 1], [], []>} : vector<2x128xbf16>, vector<128x512xbf16>, vector<2x512xf32> -> vector<2x512xf32>
    %276 = arith.addf %272, %275 : vector<2x512xf32>
    %277 = vector.extract_strided_slice %276 {offsets = [0, 0], sizes = [2, 128], strides = [1, 1]} : vector<2x512xf32> to vector<2x128xf32>
    %278 = arith.negf %277 : vector<2x128xf32>
    %279 = math.exp %278 : vector<2x128xf32>
    %cst_101 = arith.constant 1.000000e+00 : f32
    %280 = vector.broadcast %cst_101 : f32 to vector<2x128xf32>
    %281 = arith.addf %280, %279 : vector<2x128xf32>
    %282 = arith.divf %280, %281 : vector<2x128xf32>
    %283 = vector.extract_strided_slice %276 {offsets = [0, 128], sizes = [2, 128], strides = [1, 1]} : vector<2x512xf32> to vector<2x128xf32>
    %284 = arith.negf %283 : vector<2x128xf32>
    %285 = math.exp %284 : vector<2x128xf32>
    %cst_102 = arith.constant 1.000000e+00 : f32
    %286 = vector.broadcast %cst_102 : f32 to vector<2x128xf32>
    %287 = arith.addf %286, %285 : vector<2x128xf32>
    %288 = arith.divf %286, %287 : vector<2x128xf32>
    %289 = vector.extract_strided_slice %276 {offsets = [0, 256], sizes = [2, 128], strides = [1, 1]} : vector<2x512xf32> to vector<2x128xf32>
    %290 = math.tanh %289 : vector<2x128xf32>
    %291 = vector.extract_strided_slice %276 {offsets = [0, 384], sizes = [2, 128], strides = [1, 1]} : vector<2x512xf32> to vector<2x128xf32>
    %292 = arith.negf %291 : vector<2x128xf32>
    %293 = math.exp %292 : vector<2x128xf32>
    %cst_103 = arith.constant 1.000000e+00 : f32
    %294 = vector.broadcast %cst_103 : f32 to vector<2x128xf32>
    %295 = arith.addf %294, %293 : vector<2x128xf32>
    %296 = arith.divf %294, %295 : vector<2x128xf32>
    %297 = arith.mulf %288, %266 : vector<2x128xf32>
    %298 = arith.mulf %282, %290 : vector<2x128xf32>
    %299 = arith.addf %297, %298 : vector<2x128xf32>
    %300 = math.tanh %299 : vector<2x128xf32>
    %301 = arith.mulf %296, %300 : vector<2x128xf32>
    %c2_104 = arith.constant 2 : index
    %c0_105 = arith.constant 0 : index
    %c0_106 = arith.constant 0 : index
    %302 = vector.load %arg7[%c2_104, %c0_105, %c0_106] : memref<6x2x128xf32, #tpu.memory_space<vmem>>, vector<1x2x128xf32>
    %303 = vector.shape_cast %302 : vector<1x2x128xf32> to vector<2x128xf32>
    %304 = vector.shape_cast %301 : vector<2x128xf32> to vector<1x2x128xf32>
    tpu.vector_store %arg7[%c2_104, %c0_105, %c0_106], %304 {strides = array<i32>} : memref<6x2x128xf32, #tpu.memory_space<vmem>>, vector<1x2x128xf32>,
    %c6_107 = arith.constant 6 : index
    %c0_108 = arith.constant 0 : index
    %305 = vector.load %arg8[%c6_107, %c0_108] : memref<12x512xf32, #tpu.memory_space<vmem>>, vector<2x512xf32>
    %306 = arith.truncf %301 : vector<2x128xf32> to vector<2x128xbf16>
    %c0_109 = arith.constant 0 : index
    %c0_110 = arith.constant 0 : index
    %307 = vector.load %arg5[%c0_109, %c0_110] : memref<128x512xbf16, #tpu.memory_space<vmem>>, vector<128x512xbf16>
    %cst_111 = arith.constant dense<0.000000e+00> : vector<2x512xf32>
    %308 = tpu.matmul %306, %307, %cst_111 {dimension_numbers = #tpu.dot_dimension_numbers<[1], [0], [0], [1], [0, 0, 1, 1], [], []>} : vector<2x128xbf16>, vector<128x512xbf16>, vector<2x512xf32> -> vector<2x512xf32>
    %309 = arith.addf %305, %308 : vector<2x512xf32>
    %310 = vector.extract_strided_slice %309 {offsets = [0, 0], sizes = [2, 128], strides = [1, 1]} : vector<2x512xf32> to vector<2x128xf32>
    %311 = arith.negf %310 : vector<2x128xf32>
    %312 = math.exp %311 : vector<2x128xf32>
    %cst_112 = arith.constant 1.000000e+00 : f32
    %313 = vector.broadcast %cst_112 : f32 to vector<2x128xf32>
    %314 = arith.addf %313, %312 : vector<2x128xf32>
    %315 = arith.divf %313, %314 : vector<2x128xf32>
    %316 = vector.extract_strided_slice %309 {offsets = [0, 128], sizes = [2, 128], strides = [1, 1]} : vector<2x512xf32> to vector<2x128xf32>
    %317 = arith.negf %316 : vector<2x128xf32>
    %318 = math.exp %317 : vector<2x128xf32>
    %cst_113 = arith.constant 1.000000e+00 : f32
    %319 = vector.broadcast %cst_113 : f32 to vector<2x128xf32>
    %320 = arith.addf %319, %318 : vector<2x128xf32>
    %321 = arith.divf %319, %320 : vector<2x128xf32>
    %322 = vector.extract_strided_slice %309 {offsets = [0, 256], sizes = [2, 128], strides = [1, 1]} : vector<2x512xf32> to vector<2x128xf32>
    %323 = math.tanh %322 : vector<2x128xf32>
    %324 = vector.extract_strided_slice %309 {offsets = [0, 384], sizes = [2, 128], strides = [1, 1]} : vector<2x512xf32> to vector<2x128xf32>
    %325 = arith.negf %324 : vector<2x128xf32>
    %326 = math.exp %325 : vector<2x128xf32>
    %cst_114 = arith.constant 1.000000e+00 : f32
    %327 = vector.broadcast %cst_114 : f32 to vector<2x128xf32>
    %328 = arith.addf %327, %326 : vector<2x128xf32>
    %329 = arith.divf %327, %328 : vector<2x128xf32>
    %330 = arith.mulf %321, %299 : vector<2x128xf32>
    %331 = arith.mulf %315, %323 : vector<2x128xf32>
    %332 = arith.addf %330, %331 : vector<2x128xf32>
    %333 = math.tanh %332 : vector<2x128xf32>
    %334 = arith.mulf %329, %333 : vector<2x128xf32>
    %c3 = arith.constant 3 : index
    %c0_115 = arith.constant 0 : index
    %c0_116 = arith.constant 0 : index
    %335 = vector.load %arg7[%c3, %c0_115, %c0_116] : memref<6x2x128xf32, #tpu.memory_space<vmem>>, vector<1x2x128xf32>
    %336 = vector.shape_cast %335 : vector<1x2x128xf32> to vector<2x128xf32>
    %337 = vector.shape_cast %334 : vector<2x128xf32> to vector<1x2x128xf32>
    tpu.vector_store %arg7[%c3, %c0_115, %c0_116], %337 {strides = array<i32>} : memref<6x2x128xf32, #tpu.memory_space<vmem>>, vector<1x2x128xf32>,
    %c8_117 = arith.constant 8 : index
    %c0_118 = arith.constant 0 : index
    %338 = vector.load %arg8[%c8_117, %c0_118] : memref<12x512xf32, #tpu.memory_space<vmem>>, vector<2x512xf32>
    %339 = arith.truncf %334 : vector<2x128xf32> to vector<2x128xbf16>
    %c0_119 = arith.constant 0 : index
    %c0_120 = arith.constant 0 : index
    %340 = vector.load %arg5[%c0_119, %c0_120] : memref<128x512xbf16, #tpu.memory_space<vmem>>, vector<128x512xbf16>
    %cst_121 = arith.constant dense<0.000000e+00> : vector<2x512xf32>
    %341 = tpu.matmul %339, %340, %cst_121 {dimension_numbers = #tpu.dot_dimension_numbers<[1], [0], [0], [1], [0, 0, 1, 1], [], []>} : vector<2x128xbf16>, vector<128x512xbf16>, vector<2x512xf32> -> vector<2x512xf32>
    %342 = arith.addf %338, %341 : vector<2x512xf32>
    %343 = vector.extract_strided_slice %342 {offsets = [0, 0], sizes = [2, 128], strides = [1, 1]} : vector<2x512xf32> to vector<2x128xf32>
    %344 = arith.negf %343 : vector<2x128xf32>
    %345 = math.exp %344 : vector<2x128xf32>
    %cst_122 = arith.constant 1.000000e+00 : f32
    %346 = vector.broadcast %cst_122 : f32 to vector<2x128xf32>
    %347 = arith.addf %346, %345 : vector<2x128xf32>
    %348 = arith.divf %346, %347 : vector<2x128xf32>
    %349 = vector.extract_strided_slice %342 {offsets = [0, 128], sizes = [2, 128], strides = [1, 1]} : vector<2x512xf32> to vector<2x128xf32>
    %350 = arith.negf %349 : vector<2x128xf32>
    %351 = math.exp %350 : vector<2x128xf32>
    %cst_123 = arith.constant 1.000000e+00 : f32
    %352 = vector.broadcast %cst_123 : f32 to vector<2x128xf32>
    %353 = arith.addf %352, %351 : vector<2x128xf32>
    %354 = arith.divf %352, %353 : vector<2x128xf32>
    %355 = vector.extract_strided_slice %342 {offsets = [0, 256], sizes = [2, 128], strides = [1, 1]} : vector<2x512xf32> to vector<2x128xf32>
    %356 = math.tanh %355 : vector<2x128xf32>
    %357 = vector.extract_strided_slice %342 {offsets = [0, 384], sizes = [2, 128], strides = [1, 1]} : vector<2x512xf32> to vector<2x128xf32>
    %358 = arith.negf %357 : vector<2x128xf32>
    %359 = math.exp %358 : vector<2x128xf32>
    %cst_124 = arith.constant 1.000000e+00 : f32
    %360 = vector.broadcast %cst_124 : f32 to vector<2x128xf32>
    %361 = arith.addf %360, %359 : vector<2x128xf32>
    %362 = arith.divf %360, %361 : vector<2x128xf32>
    %363 = arith.mulf %354, %332 : vector<2x128xf32>
    %364 = arith.mulf %348, %356 : vector<2x128xf32>
    %365 = arith.addf %363, %364 : vector<2x128xf32>
    %366 = math.tanh %365 : vector<2x128xf32>
    %367 = arith.mulf %362, %366 : vector<2x128xf32>
    %c4_125 = arith.constant 4 : index
    %c0_126 = arith.constant 0 : index
    %c0_127 = arith.constant 0 : index
    %368 = vector.load %arg7[%c4_125, %c0_126, %c0_127] : memref<6x2x128xf32, #tpu.memory_space<vmem>>, vector<1x2x128xf32>
    %369 = vector.shape_cast %368 : vector<1x2x128xf32> to vector<2x128xf32>
    %370 = vector.shape_cast %367 : vector<2x128xf32> to vector<1x2x128xf32>
    tpu.vector_store %arg7[%c4_125, %c0_126, %c0_127], %370 {strides = array<i32>} : memref<6x2x128xf32, #tpu.memory_space<vmem>>, vector<1x2x128xf32>,
    %c10_128 = arith.constant 10 : index
    %c0_129 = arith.constant 0 : index
    %371 = vector.load %arg8[%c10_128, %c0_129] : memref<12x512xf32, #tpu.memory_space<vmem>>, vector<2x512xf32>
    %372 = arith.truncf %367 : vector<2x128xf32> to vector<2x128xbf16>
    %c0_130 = arith.constant 0 : index
    %c0_131 = arith.constant 0 : index
    %373 = vector.load %arg5[%c0_130, %c0_131] : memref<128x512xbf16, #tpu.memory_space<vmem>>, vector<128x512xbf16>
    %cst_132 = arith.constant dense<0.000000e+00> : vector<2x512xf32>
    %374 = tpu.matmul %372, %373, %cst_132 {dimension_numbers = #tpu.dot_dimension_numbers<[1], [0], [0], [1], [0, 0, 1, 1], [], []>} : vector<2x128xbf16>, vector<128x512xbf16>, vector<2x512xf32> -> vector<2x512xf32>
    %375 = arith.addf %371, %374 : vector<2x512xf32>
    %376 = vector.extract_strided_slice %375 {offsets = [0, 0], sizes = [2, 128], strides = [1, 1]} : vector<2x512xf32> to vector<2x128xf32>
    %377 = arith.negf %376 : vector<2x128xf32>
    %378 = math.exp %377 : vector<2x128xf32>
    %cst_133 = arith.constant 1.000000e+00 : f32
    %379 = vector.broadcast %cst_133 : f32 to vector<2x128xf32>
    %380 = arith.addf %379, %378 : vector<2x128xf32>
    %381 = arith.divf %379, %380 : vector<2x128xf32>
    %382 = vector.extract_strided_slice %375 {offsets = [0, 128], sizes = [2, 128], strides = [1, 1]} : vector<2x512xf32> to vector<2x128xf32>
    %383 = arith.negf %382 : vector<2x128xf32>
    %384 = math.exp %383 : vector<2x128xf32>
    %cst_134 = arith.constant 1.000000e+00 : f32
    %385 = vector.broadcast %cst_134 : f32 to vector<2x128xf32>
    %386 = arith.addf %385, %384 : vector<2x128xf32>
    %387 = arith.divf %385, %386 : vector<2x128xf32>
    %388 = vector.extract_strided_slice %375 {offsets = [0, 256], sizes = [2, 128], strides = [1, 1]} : vector<2x512xf32> to vector<2x128xf32>
    %389 = math.tanh %388 : vector<2x128xf32>
    %390 = vector.extract_strided_slice %375 {offsets = [0, 384], sizes = [2, 128], strides = [1, 1]} : vector<2x512xf32> to vector<2x128xf32>
    %391 = arith.negf %390 : vector<2x128xf32>
    %392 = math.exp %391 : vector<2x128xf32>
    %cst_135 = arith.constant 1.000000e+00 : f32
    %393 = vector.broadcast %cst_135 : f32 to vector<2x128xf32>
    %394 = arith.addf %393, %392 : vector<2x128xf32>
    %395 = arith.divf %393, %394 : vector<2x128xf32>
    %396 = arith.mulf %387, %365 : vector<2x128xf32>
    %397 = arith.mulf %381, %389 : vector<2x128xf32>
    %398 = arith.addf %396, %397 : vector<2x128xf32>
    %399 = math.tanh %398 : vector<2x128xf32>
    %400 = arith.mulf %395, %399 : vector<2x128xf32>
    %c5 = arith.constant 5 : index
    %c0_136 = arith.constant 0 : index
    %c0_137 = arith.constant 0 : index
    %401 = vector.load %arg7[%c5, %c0_136, %c0_137] : memref<6x2x128xf32, #tpu.memory_space<vmem>>, vector<1x2x128xf32>
    %402 = vector.shape_cast %401 : vector<1x2x128xf32> to vector<2x128xf32>
    %403 = vector.shape_cast %400 : vector<2x128xf32> to vector<1x2x128xf32>
    tpu.vector_store %arg7[%c5, %c0_136, %c0_137], %403 {strides = array<i32>} : memref<6x2x128xf32, #tpu.memory_space<vmem>>, vector<1x2x128xf32>,
    return
  }
}

module attributes {stable_mosaic.version = 11 : i64} {
  func.func @_attn_cls_kernel(%arg0: i32, %arg1: memref<1x6x128xf32, #tpu.memory_space<vmem>>, %arg2: memref<1x128xf32, #tpu.memory_space<vmem>>, %arg3: memref<1x128xf32, #tpu.memory_space<vmem>>, %arg4: memref<128x64xf32, #tpu.memory_space<vmem>>, %arg5: memref<1x64xf32, #tpu.memory_space<vmem>>, %arg6: memref<1x64xf32, #tpu.memory_space<vmem>>, %arg7: memref<1x1xf32, #tpu.memory_space<vmem>>, %arg8: memref<128x128xf32, #tpu.memory_space<vmem>>, %arg9: memref<1x128xf32, #tpu.memory_space<vmem>>, %arg10: memref<1x128xf32, #tpu.memory_space<vmem>>, %arg11: memref<1x128xf32, #tpu.memory_space<vmem>>, %arg12: memref<128x5xf32, #tpu.memory_space<vmem>>, %arg13: memref<1x5xf32, #tpu.memory_space<vmem>>, %arg14: memref<1x1x5xf32, #tpu.memory_space<vmem>>) attributes {dimension_semantics = [#tpu.dimension_semantics<parallel>], iteration_bounds = array<i64: 2>, scalar_prefetch = 0 : i64, scratch_operands = 0 : i64, tpu.core_type = #tpu.core_type<tc>, window_params = [{transform_indices = @transform_0, window_bounds = array<i64: 1, 6, 128>}, {pipeline_mode = #tpu.pipeline_mode<synchronous>, transform_indices = @transform_1, window_bounds = array<i64: 1, 128>}, {pipeline_mode = #tpu.pipeline_mode<synchronous>, transform_indices = @transform_2, window_bounds = array<i64: 1, 128>}, {pipeline_mode = #tpu.pipeline_mode<synchronous>, transform_indices = @transform_3, window_bounds = array<i64: 128, 64>}, {pipeline_mode = #tpu.pipeline_mode<synchronous>, transform_indices = @transform_4, window_bounds = array<i64: 1, 64>}, {pipeline_mode = #tpu.pipeline_mode<synchronous>, transform_indices = @transform_5, window_bounds = array<i64: 1, 64>}, {pipeline_mode = #tpu.pipeline_mode<synchronous>, transform_indices = @transform_6, window_bounds = array<i64: 1, 1>}, {pipeline_mode = #tpu.pipeline_mode<synchronous>, transform_indices = @transform_7, window_bounds = array<i64: 128, 128>}, {pipeline_mode = #tpu.pipeline_mode<synchronous>, transform_indices = @transform_8, window_bounds = array<i64: 1, 128>}, {pipeline_mode = #tpu.pipeline_mode<synchronous>, transform_indices = @transform_9, window_bounds = array<i64: 1, 128>}, {pipeline_mode = #tpu.pipeline_mode<synchronous>, transform_indices = @transform_10, window_bounds = array<i64: 1, 128>}, {pipeline_mode = #tpu.pipeline_mode<synchronous>, transform_indices = @transform_11, window_bounds = array<i64: 128, 5>}, {pipeline_mode = #tpu.pipeline_mode<synchronous>, transform_indices = @transform_12, window_bounds = array<i64: 1, 5>}, {transform_indices = @transform_13, window_bounds = array<i64: 1, 1, 5>}]} {
    %c0 = arith.constant 0 : index
    %c0_0 = arith.constant 0 : index
    %c0_1 = arith.constant 0 : index
    %0 = vector.load %arg1[%c0, %c0_0, %c0_1] : memref<1x6x128xf32, #tpu.memory_space<vmem>>, vector<1x6x128xf32>
    %1 = vector.shape_cast %0 : vector<1x6x128xf32> to vector<6x128xf32>
    %cst = arith.constant dense<0.000000e+00> : vector<6xf32>
    %2 = vector.multi_reduction <add>, %1, %cst [1] : vector<6x128xf32> to vector<6xf32>
    %3 = vector.shape_cast %2 : vector<6xf32> to vector<6x1xf32>
    %cst_2 = arith.constant 1.280000e+02 : f32
    %4 = vector.broadcast %cst_2 : f32 to vector<6x1xf32>
    %5 = arith.divf %3, %4 : vector<6x1xf32>
    %6 = vector.broadcast %5 : vector<6x1xf32> to vector<6x128xf32>
    %7 = arith.subf %1, %6 : vector<6x128xf32>
    %8 = arith.mulf %7, %7 : vector<6x128xf32>
    %cst_3 = arith.constant dense<0.000000e+00> : vector<6xf32>
    %9 = vector.multi_reduction <add>, %8, %cst_3 [1] : vector<6x128xf32> to vector<6xf32>
    %10 = vector.shape_cast %9 : vector<6xf32> to vector<6x1xf32>
    %cst_4 = arith.constant 1.280000e+02 : f32
    %11 = vector.broadcast %cst_4 : f32 to vector<6x1xf32>
    %12 = arith.divf %10, %11 : vector<6x1xf32>
    %cst_5 = arith.constant 9.99999974E-6 : f32
    %13 = vector.broadcast %cst_5 : f32 to vector<6x1xf32>
    %14 = arith.addf %12, %13 : vector<6x1xf32>
    %15 = math.rsqrt %14 : vector<6x1xf32>
    %16 = vector.broadcast %15 : vector<6x1xf32> to vector<6x128xf32>
    %17 = arith.mulf %7, %16 : vector<6x128xf32>
    %c0_6 = arith.constant 0 : index
    %c0_7 = arith.constant 0 : index
    %18 = vector.load %arg2[%c0_6, %c0_7] : memref<1x128xf32, #tpu.memory_space<vmem>>, vector<1x128xf32>
    %19 = vector.broadcast %18 : vector<1x128xf32> to vector<6x128xf32>
    %20 = arith.mulf %17, %19 : vector<6x128xf32>
    %c0_8 = arith.constant 0 : index
    %c0_9 = arith.constant 0 : index
    %21 = vector.load %arg3[%c0_8, %c0_9] : memref<1x128xf32, #tpu.memory_space<vmem>>, vector<1x128xf32>
    %22 = vector.broadcast %21 : vector<1x128xf32> to vector<6x128xf32>
    %23 = arith.addf %20, %22 : vector<6x128xf32>
    %c0_10 = arith.constant 0 : index
    %c0_11 = arith.constant 0 : index
    %24 = vector.load %arg4[%c0_10, %c0_11] : memref<128x64xf32, #tpu.memory_space<vmem>>, vector<128x64xf32>
    %cst_12 = arith.constant dense<0.000000e+00> : vector<6x64xf32>
    %25 = tpu.matmul %23, %24, %cst_12 {dimension_numbers = #tpu.dot_dimension_numbers<[1], [0], [0], [1], [0, 0, 1, 1], [], []>} : vector<6x128xf32>, vector<128x64xf32>, vector<6x64xf32> -> vector<6x64xf32>
    %c0_13 = arith.constant 0 : index
    %c0_14 = arith.constant 0 : index
    %26 = vector.load %arg5[%c0_13, %c0_14] : memref<1x64xf32, #tpu.memory_space<vmem>>, vector<1x64xf32>
    %27 = vector.broadcast %26 : vector<1x64xf32> to vector<6x64xf32>
    %28 = arith.addf %25, %27 : vector<6x64xf32>
    %29 = math.tanh %28 : vector<6x64xf32>
    %c0_15 = arith.constant 0 : index
    %c0_16 = arith.constant 0 : index
    %30 = vector.load %arg6[%c0_15, %c0_16] : memref<1x64xf32, #tpu.memory_space<vmem>>, vector<1x64xf32>
    %31 = vector.broadcast %30 : vector<1x64xf32> to vector<6x64xf32>
    %32 = arith.mulf %29, %31 : vector<6x64xf32>
    %cst_17 = arith.constant dense<0.000000e+00> : vector<6xf32>
    %33 = vector.multi_reduction <add>, %32, %cst_17 [1] : vector<6x64xf32> to vector<6xf32>
    %34 = vector.shape_cast %33 : vector<6xf32> to vector<6x1xf32>
    %c0_18 = arith.constant 0 : index
    %c0_19 = arith.constant 0 : index
    %35 = vector.load %arg7[%c0_18, %c0_19] : memref<1x1xf32, #tpu.memory_space<vmem>>, vector<1x1xf32>
    %36 = vector.broadcast %35 : vector<1x1xf32> to vector<6x1xf32>
    %37 = arith.addf %34, %36 : vector<6x1xf32>
    %cst_20 = arith.constant dense<0xFF800000> : vector<1xf32>
    %38 = vector.multi_reduction <maximumf>, %37, %cst_20 [0] : vector<6x1xf32> to vector<1xf32>
    %39 = vector.shape_cast %38 : vector<1xf32> to vector<1x1xf32>
    %40 = vector.broadcast %39 : vector<1x1xf32> to vector<6x1xf32>
    %41 = arith.subf %37, %40 : vector<6x1xf32>
    %42 = math.exp %41 : vector<6x1xf32>
    %cst_21 = arith.constant dense<0.000000e+00> : vector<1xf32>
    %43 = vector.multi_reduction <add>, %42, %cst_21 [0] : vector<6x1xf32> to vector<1xf32>
    %44 = vector.shape_cast %43 : vector<1xf32> to vector<1x1xf32>
    %45 = vector.broadcast %44 : vector<1x1xf32> to vector<6x1xf32>
    %46 = arith.divf %42, %45 : vector<6x1xf32>
    %47 = vector.broadcast %46 : vector<6x1xf32> to vector<6x128xf32>
    %48 = arith.mulf %47, %23 : vector<6x128xf32>
    %cst_22 = arith.constant dense<0.000000e+00> : vector<128xf32>
    %49 = vector.multi_reduction <add>, %48, %cst_22 [0] : vector<6x128xf32> to vector<128xf32>
    %50 = vector.shape_cast %49 : vector<128xf32> to vector<1x128xf32>
    %c0_23 = arith.constant 0 : index
    %c0_24 = arith.constant 0 : index
    %51 = vector.load %arg8[%c0_23, %c0_24] : memref<128x128xf32, #tpu.memory_space<vmem>>, vector<128x128xf32>
    %cst_25 = arith.constant dense<0.000000e+00> : vector<1x128xf32>
    %52 = tpu.matmul %50, %51, %cst_25 {dimension_numbers = #tpu.dot_dimension_numbers<[1], [0], [0], [1], [0, 0, 1, 1], [], []>} : vector<1x128xf32>, vector<128x128xf32>, vector<1x128xf32> -> vector<1x128xf32>
    %c0_26 = arith.constant 0 : index
    %c0_27 = arith.constant 0 : index
    %53 = vector.load %arg9[%c0_26, %c0_27] : memref<1x128xf32, #tpu.memory_space<vmem>>, vector<1x128xf32>
    %54 = arith.addf %52, %53 : vector<1x128xf32>
    %c0_28 = arith.constant 0 : index
    %c0_29 = arith.constant 0 : index
    %55 = vector.load %arg10[%c0_28, %c0_29] : memref<1x128xf32, #tpu.memory_space<vmem>>, vector<1x128xf32>
    %56 = arith.mulf %54, %55 : vector<1x128xf32>
    %c0_30 = arith.constant 0 : index
    %c0_31 = arith.constant 0 : index
    %57 = vector.load %arg11[%c0_30, %c0_31] : memref<1x128xf32, #tpu.memory_space<vmem>>, vector<1x128xf32>
    %58 = arith.addf %56, %57 : vector<1x128xf32>
    %cst_32 = arith.constant 5.000000e-01 : f32
    %59 = vector.broadcast %cst_32 : f32 to vector<1x128xf32>
    %60 = arith.mulf %59, %58 : vector<1x128xf32>
    %cst_33 = arith.constant 0.707106769 : f32
    %61 = vector.broadcast %cst_33 : f32 to vector<1x128xf32>
    %62 = arith.mulf %58, %61 : vector<1x128xf32>
    %63 = math.absf %62 : vector<1x128xf32>
    %cst_34 = arith.constant 0.327591091 : f32
    %64 = vector.broadcast %cst_34 : f32 to vector<1x128xf32>
    %65 = arith.mulf %64, %63 : vector<1x128xf32>
    %cst_35 = arith.constant 1.000000e+00 : f32
    %66 = vector.broadcast %cst_35 : f32 to vector<1x128xf32>
    %67 = arith.addf %66, %65 : vector<1x128xf32>
    %68 = tpu.reciprocal %67 {approx = true} : vector<1x128xf32> -> vector<1x128xf32>
    %cst_36 = arith.constant 1.06140542 : f32
    %69 = vector.broadcast %cst_36 : f32 to vector<1x128xf32>
    %70 = arith.mulf %69, %68 : vector<1x128xf32>
    %cst_37 = arith.constant -1.45315206 : f32
    %71 = vector.broadcast %cst_37 : f32 to vector<1x128xf32>
    %72 = arith.addf %70, %71 : vector<1x128xf32>
    %73 = arith.mulf %72, %68 : vector<1x128xf32>
    %cst_38 = arith.constant 1.42141378 : f32
    %74 = vector.broadcast %cst_38 : f32 to vector<1x128xf32>
    %75 = arith.addf %73, %74 : vector<1x128xf32>
    %76 = arith.mulf %75, %68 : vector<1x128xf32>
    %cst_39 = arith.constant -0.284496725 : f32
    %77 = vector.broadcast %cst_39 : f32 to vector<1x128xf32>
    %78 = arith.addf %76, %77 : vector<1x128xf32>
    %79 = arith.mulf %78, %68 : vector<1x128xf32>
    %cst_40 = arith.constant 0.254829586 : f32
    %80 = vector.broadcast %cst_40 : f32 to vector<1x128xf32>
    %81 = arith.addf %79, %80 : vector<1x128xf32>
    %82 = arith.mulf %81, %68 : vector<1x128xf32>
    %83 = arith.mulf %63, %63 : vector<1x128xf32>
    %cst_41 = arith.constant 0.000000e+00 : f32
    %84 = vector.broadcast %cst_41 : f32 to vector<1x128xf32>
    %85 = arith.subf %84, %83 : vector<1x128xf32>
    %86 = math.exp %85 : vector<1x128xf32>
    %87 = arith.mulf %82, %86 : vector<1x128xf32>
    %cst_42 = arith.constant 1.000000e+00 : f32
    %88 = vector.broadcast %cst_42 : f32 to vector<1x128xf32>
    %89 = arith.subf %88, %87 : vector<1x128xf32>
    %cst_43 = arith.constant 0.000000e+00 : f32
    %90 = vector.broadcast %cst_43 : f32 to vector<1x128xf32>
    %91 = arith.cmpf oge, %62, %90 : vector<1x128xf32>
    %cst_44 = arith.constant 0.000000e+00 : f32
    %92 = vector.broadcast %cst_44 : f32 to vector<1x128xf32>
    %93 = arith.subf %92, %89 : vector<1x128xf32>
    %94 = arith.select %91, %89, %93 : vector<1x128xi1>, vector<1x128xf32>
    %cst_45 = arith.constant 1.000000e+00 : f32
    %95 = vector.broadcast %cst_45 : f32 to vector<1x128xf32>
    %96 = arith.addf %95, %94 : vector<1x128xf32>
    %97 = arith.mulf %60, %96 : vector<1x128xf32>
    %c0_46 = arith.constant 0 : index
    %c0_47 = arith.constant 0 : index
    %98 = vector.load %arg12[%c0_46, %c0_47] : memref<128x5xf32, #tpu.memory_space<vmem>>, vector<128x5xf32>
    %cst_48 = arith.constant dense<0.000000e+00> : vector<1x5xf32>
    %99 = tpu.matmul %97, %98, %cst_48 {dimension_numbers = #tpu.dot_dimension_numbers<[1], [0], [0], [1], [0, 0, 1, 1], [], []>} : vector<1x128xf32>, vector<128x5xf32>, vector<1x5xf32> -> vector<1x5xf32>
    %c0_49 = arith.constant 0 : index
    %c0_50 = arith.constant 0 : index
    %100 = vector.load %arg13[%c0_49, %c0_50] : memref<1x5xf32, #tpu.memory_space<vmem>>, vector<1x5xf32>
    %101 = arith.addf %99, %100 : vector<1x5xf32>
    %c0_51 = arith.constant 0 : index
    %c0_52 = arith.constant 0 : index
    %c0_53 = arith.constant 0 : index
    %102 = vector.load %arg14[%c0_51, %c0_52, %c0_53] : memref<1x1x5xf32, #tpu.memory_space<vmem>>, vector<1x1x5xf32>
    %103 = vector.shape_cast %102 : vector<1x1x5xf32> to vector<1x5xf32>
    %104 = vector.shape_cast %101 : vector<1x5xf32> to vector<1x1x5xf32>
    tpu.vector_store %arg14[%c0_51, %c0_52, %c0_53], %104 {strides = array<i32>} : memref<1x1x5xf32, #tpu.memory_space<vmem>>, vector<1x1x5xf32>,
    return
  }
  func.func @transform_0(%arg0: i32) -> (i32, i32, i32) {
    %c0_i32 = arith.constant 0 : i32
    %c0_i32_0 = arith.constant 0 : i32
    %c0_i32_1 = arith.constant 0 : i32
    return %arg0, %c0_i32, %c0_i32_0 : i32, i32, i32
  }
  func.func @transform_1(%arg0: i32) -> (i32, i32) {
    %c0_i32 = arith.constant 0 : i32
    %c0_i32_0 = arith.constant 0 : i32
    %c0_i32_1 = arith.constant 0 : i32
    return %c0_i32, %c0_i32_0 : i32, i32
  }
  func.func @transform_2(%arg0: i32) -> (i32, i32) {
    %c0_i32 = arith.constant 0 : i32
    %c0_i32_0 = arith.constant 0 : i32
    %c0_i32_1 = arith.constant 0 : i32
    return %c0_i32, %c0_i32_0 : i32, i32
  }
  func.func @transform_3(%arg0: i32) -> (i32, i32) {
    %c0_i32 = arith.constant 0 : i32
    %c0_i32_0 = arith.constant 0 : i32
    %c0_i32_1 = arith.constant 0 : i32
    return %c0_i32, %c0_i32_0 : i32, i32
  }
  func.func @transform_4(%arg0: i32) -> (i32, i32) {
    %c0_i32 = arith.constant 0 : i32
    %c0_i32_0 = arith.constant 0 : i32
    %c0_i32_1 = arith.constant 0 : i32
    return %c0_i32, %c0_i32_0 : i32, i32
  }
  func.func @transform_5(%arg0: i32) -> (i32, i32) {
    %c0_i32 = arith.constant 0 : i32
    %c0_i32_0 = arith.constant 0 : i32
    %c0_i32_1 = arith.constant 0 : i32
    return %c0_i32, %c0_i32_0 : i32, i32
  }
  func.func @transform_6(%arg0: i32) -> (i32, i32) {
    %c0_i32 = arith.constant 0 : i32
    %c0_i32_0 = arith.constant 0 : i32
    %c0_i32_1 = arith.constant 0 : i32
    return %c0_i32, %c0_i32_0 : i32, i32
  }
  func.func @transform_7(%arg0: i32) -> (i32, i32) {
    %c0_i32 = arith.constant 0 : i32
    %c0_i32_0 = arith.constant 0 : i32
    %c0_i32_1 = arith.constant 0 : i32
    return %c0_i32, %c0_i32_0 : i32, i32
  }
  func.func @transform_8(%arg0: i32) -> (i32, i32) {
    %c0_i32 = arith.constant 0 : i32
    %c0_i32_0 = arith.constant 0 : i32
    %c0_i32_1 = arith.constant 0 : i32
    return %c0_i32, %c0_i32_0 : i32, i32
  }
  func.func @transform_9(%arg0: i32) -> (i32, i32) {
    %c0_i32 = arith.constant 0 : i32
    %c0_i32_0 = arith.constant 0 : i32
    %c0_i32_1 = arith.constant 0 : i32
    return %c0_i32, %c0_i32_0 : i32, i32
  }
  func.func @transform_10(%arg0: i32) -> (i32, i32) {
    %c0_i32 = arith.constant 0 : i32
    %c0_i32_0 = arith.constant 0 : i32
    %c0_i32_1 = arith.constant 0 : i32
    return %c0_i32, %c0_i32_0 : i32, i32
  }
  func.func @transform_11(%arg0: i32) -> (i32, i32) {
    %c0_i32 = arith.constant 0 : i32
    %c0_i32_0 = arith.constant 0 : i32
    %c0_i32_1 = arith.constant 0 : i32
    return %c0_i32, %c0_i32_0 : i32, i32
  }
  func.func @transform_12(%arg0: i32) -> (i32, i32) {
    %c0_i32 = arith.constant 0 : i32
    %c0_i32_0 = arith.constant 0 : i32
    %c0_i32_1 = arith.constant 0 : i32
    return %c0_i32, %c0_i32_0 : i32, i32
  }
  func.func @transform_13(%arg0: i32) -> (i32, i32, i32) {
    %c0_i32 = arith.constant 0 : i32
    %c0_i32_0 = arith.constant 0 : i32
    %c0_i32_1 = arith.constant 0 : i32
    return %arg0, %c0_i32, %c0_i32_0 : i32, i32, i32
  }
}

</mosaic_0001>

<llo_original>
// kernel: eeg_hybrid_forward.4
$region0: #{eeg_hybrid_forward.4}
  #allocation0 [shape = 'u32[]', space=smem, size = 0x4, offset = 0x4, fixed_abs, tag = 'smem constant byte address 0x4 - core index']
  #allocation1 [shape = 'u32[144,128]{1,0:T(1,128)}', space=vmem, size = 0x12000, scoped, tag = 'internal scratch']
  #allocation2 [shape = 'f32[96,32]{1,0:T(8,128)}', space=vmem, size = 0xc000, scoped, tag = 'scratch operand']
  %s0 = inlined_call_operand.vmem [shape: f32[2,100,6], index: 0, kind: input, shape index: {}]
  %s1 = inlined_call_operand.vmem [shape: bf16[5,6,32], index: 1, kind: input, shape index: {}]
  %s2 = inlined_call_operand.vmem [shape: f32[1,32], index: 2, kind: input, shape index: {}]
  %s3 = inlined_call_operand.vmem [shape: f32[1,32], index: 3, kind: input, shape index: {}]
  %s4 = inlined_call_operand.vmem [shape: f32[1,32], index: 4, kind: input, shape index: {}]
  %s5 = inlined_call_operand.vmem [shape: f32[2,32,32], index: 5, kind: output, shape index: {}]
  %s6 = sld [smem:[#allocation0]]
  $region53: #{eeg_hybrid_forward.4} parent=0
    _
  %s8 = ssub.s32 1, %s6
  %s9 = scalar_select 0, %s8, %s6
  loop: start=0, step=1, limit=4
  $region2: #{eeg_hybrid_forward.4} parent=0 // loop_pre_header
    _
  $region3: #{eeg_hybrid_forward.4} parent=0 // loop_header
    %s11 = sphi 0, %s15
    %p12 = scmp.ge.s32.totalorder %s11, 4
    %s21 = sphi 0, %s23
    %s24 = sphi 0, %s21
    %s25 = sphi 0, %s24
    %s41 = sphi 0, %s25
    %s45 = sphi 0, %s45
    %s47 = sphi 0, %s45
    %s48 = sphi 0, %s47
    %s62 = sphi 0, %s48
    %s66 = sphi 0, %s66
    %s68 = sphi 0, %s66
    %s69 = sphi 0, %s68
    %s83 = sphi 0, %s69
    %s87 = sphi 0, %s87
    %s89 = sphi 0, %s87
    %s90 = sphi 0, %s89
    %s104 = sphi 0, %s90
    %s108 = sphi 0, %s108
    %s110 = sphi 0, %s108
    %s111 = sphi 0, %s110
    %s125 = sphi 0, %s111
    %s131 = sphi 0, %s133
    %s134 = sphi 0, %s131
    %s135 = sphi 0, %s134
    %s151 = sphi 0, %s135
  $region4: #{eeg_hybrid_forward.4} parent=0 // loop_header_branch
    %14 = sbr.rel (%p12) target = $region8
  $region5: #{eeg_hybrid_forward.4} parent=0 // loop_body
    %s16 = ssub.s32 %s11, 1
    %s17 = ssub.s32 %s11, 2
    %s18 = sadd.s32 %s11, 1
    %s19 = ssub.s32 %s11, %s18
    %p20 = scmp.eq.s32.totalorder %s19, 0
    %s22 = sadd.s32 %s21, 1
    %s23 = scalar_select %p20, %s21, %s22
    %p26 = pneg %p20
    %p27 = scmp.eq.s32.totalorder %s11, 1
    %p28 = por %p26, %p27
    %p29 = scmp.ne.s32.totalorder %s21, %s24
    %p30 = scmp.eq.s32.totalorder %s11, 0
    %p31 = por %p29, %p30
    %p32 = scmp.ne.s32.totalorder %s21, %s24
    %p33 = scmp.eq.s32.totalorder %s16, 1
    %p34 = por %p32, %p33
    %p35 = scmp.ne.s32.totalorder %s24, %s25
    %p36 = scmp.eq.s32.totalorder %s16, 0
    %p37 = por %p35, %p36
    %p38 = scmp.ne.s32.totalorder %s24, %s25
    %p39 = scmp.eq.s32.totalorder %s17, 1
    %p40 = por %p38, %p39
    %p42 = scmp.ne.s32.totalorder %s25, %s41
    %p43 = scmp.eq.s32.totalorder %s17, 0
    %p44 = por %p42, %p43
    %s46 = sadd.s32 %s45, 1
    %p49 = scmp.eq.s32.totalorder %s11, 1
    %p50 = scmp.ne.s32.totalorder %s45, %s47
    %p51 = scmp.eq.s32.totalorder %s11, 0
    %p52 = por %p50, %p51
    %p53 = scmp.ne.s32.totalorder %s45, %s47
    %p54 = scmp.eq.s32.totalorder %s16, 1
    %p55 = por %p53, %p54
    %p56 = scmp.ne.s32.totalorder %s47, %s48
    %p57 = scmp.eq.s32.totalorder %s16, 0
    %p58 = por %p56, %p57
    %p59 = scmp.ne.s32.totalorder %s47, %s48
    %p60 = scmp.eq.s32.totalorder %s17, 1
    %p61 = por %p59, %p60
    %p63 = scmp.ne.s32.totalorder %s48, %s62
    %p64 = scmp.eq.s32.totalorder %s17, 0
    %p65 = por %p63, %p64
    %s67 = sadd.s32 %s66, 1
    %p70 = scmp.eq.s32.totalorder %s11, 1
    %p71 = scmp.ne.s32.totalorder %s66, %s68
    %p72 = scmp.eq.s32.totalorder %s11, 0
    %p73 = por %p71, %p72
    %p74 = scmp.ne.s32.totalorder %s66, %s68
    %p75 = scmp.eq.s32.totalorder %s16, 1
    %p76 = por %p74, %p75
    %p77 = scmp.ne.s32.totalorder %s68, %s69
    %p78 = scmp.eq.s32.totalorder %s16, 0
    %p79 = por %p77, %p78
    %p80 = scmp.ne.s32.totalorder %s68, %s69
    %p81 = scmp.eq.s32.totalorder %s17, 1
    %p82 = por %p80, %p81
    %p84 = scmp.ne.s32.totalorder %s69, %s83
    %p85 = scmp.eq.s32.totalorder %s17, 0
    %p86 = por %p84, %p85
    %s88 = sadd.s32 %s87, 1
    %p91 = scmp.eq.s32.totalorder %s11, 1
    %p92 = scmp.ne.s32.totalorder %s87, %s89
    %p93 = scmp.eq.s32.totalorder %s11, 0
    %p94 = por %p92, %p93
    %p95 = scmp.ne.s32.totalorder %s87, %s89
    %p96 = scmp.eq.s32.totalorder %s16, 1
    %p97 = por %p95, %p96
    %p98 = scmp.ne.s32.totalorder %s89, %s90
    %p99 = scmp.eq.s32.totalorder %s16, 0
    %p100 = por %p98, %p99
    %p101 = scmp.ne.s32.totalorder %s89, %s90
    %p102 = scmp.eq.s32.totalorder %s17, 1
    %p103 = por %p101, %p102
    %p105 = scmp.ne.s32.totalorder %s90, %s104
    %p106 = scmp.eq.s32.totalorder %s17, 0
    %p107 = por %p105, %p106
    %s109 = sadd.s32 %s108, 1
    %p112 = scmp.eq.s32.totalorder %s11, 1
    %p113 = scmp.ne.s32.totalorder %s108, %s110
    %p114 = scmp.eq.s32.totalorder %s11, 0
    %p115 = por %p113, %p114
    %p116 = scmp.ne.s32.totalorder %s108, %s110
    %p117 = scmp.eq.s32.totalorder %s16, 1
    %p118 = por %p116, %p117
    %p119 = scmp.ne.s32.totalorder %s110, %s111
    %p120 = scmp.eq.s32.totalorder %s16, 0
    %p121 = por %p119, %p120
    %p122 = scmp.ne.s32.totalorder %s110, %s111
    %p123 = scmp.eq.s32.totalorder %s17, 1
    %p124 = por %p122, %p123
    %p126 = scmp.ne.s32.totalorder %s111, %s125
    %p127 = scmp.eq.s32.totalorder %s17, 0
    %p128 = por %p126, %p127
    %s129 = ssub.s32 %s11, %s18
    %p130 = scmp.eq.s32.totalorder %s129, 0
    %s132 = sadd.s32 %s131, 1
    %s133 = scalar_select %p130, %s131, %s132
    %p136 = pneg %p130
    %p137 = scmp.eq.s32.totalorder %s11, 1
    %p138 = por %p136, %p137
    %p139 = scmp.ne.s32.totalorder %s131, %s134
    %p140 = scmp.eq.s32.totalorder %s11, 0
    %p141 = por %p139, %p140
    %p142 = scmp.ne.s32.totalorder %s131, %s134
    %p143 = scmp.eq.s32.totalorder %s16, 1
    %p144 = por %p142, %p143
    %p145 = scmp.ne.s32.totalorder %s134, %s135
    %p146 = scmp.eq.s32.totalorder %s16, 0
    %p147 = por %p145, %p146
    %p148 = scmp.ne.s32.totalorder %s134, %s135
    %p149 = scmp.eq.s32.totalorder %s17, 1
    %p150 = por %p148, %p149
    %p152 = scmp.ne.s32.totalorder %s135, %s151
    %p153 = scmp.eq.s32.totalorder %s17, 0
    %p154 = por %p152, %p153
    %p155 = scmp.le.s32.totalorder 1, %s11
    %p156 = scmp.lt.s32.totalorder %s11, 3
    %p157 = pnand %p155, %p156
    %p158 = pneg %p157
    // Predicated region
    $region9: #{eeg_hybrid_forward.4} parent=5 // pred_check
      _
    $region10: #{eeg_hybrid_forward.4} parent=5 // pred_check_branch
      %160 = sbr.rel (%p157) target = $region12
    $region11: #{eeg_hybrid_forward.4} parent=5 // pred_region
      %s161 = ssub.s32 %s11, 1
      // Predicated region
      $region13: #{eeg_hybrid_forward.4} parent=11 // pred_check
        %p162 = pneg %p58
      $region14: #{eeg_hybrid_forward.4} parent=11 // pred_check_branch
        %164 = sbr.rel (%p162) target = $region16
      $region15: #{eeg_hybrid_forward.4} parent=11 // pred_region
        _
      $region16: #{eeg_hybrid_forward.4} parent=11 // pred_fallthru
        _
      // Predicated region
      $region17: #{eeg_hybrid_forward.4} parent=11 // pred_check
        %p165 = pneg %p79
      $region18: #{eeg_hybrid_forward.4} parent=11 // pred_check_branch
        %167 = sbr.rel (%p165) target = $region20
      $region19: #{eeg_hybrid_forward.4} parent=11 // pred_region
        _
      $region20: #{eeg_hybrid_forward.4} parent=11 // pred_fallthru
        _
      // Predicated region
      $region21: #{eeg_hybrid_forward.4} parent=11 // pred_check
        %p168 = pneg %p100
      $region22: #{eeg_hybrid_forward.4} parent=11 // pred_check_branch
        %170 = sbr.rel (%p168) target = $region24
      $region23: #{eeg_hybrid_forward.4} parent=11 // pred_region
        _
      $region24: #{eeg_hybrid_forward.4} parent=11 // pred_fallthru
        _
      // Predicated region
      $region25: #{eeg_hybrid_forward.4} parent=11 // pred_check
        %p171 = pneg %p121
      $region26: #{eeg_hybrid_forward.4} parent=11 // pred_check_branch
        %173 = sbr.rel (%p171) target = $region28
      $region27: #{eeg_hybrid_forward.4} parent=11 // pred_region
        _
      $region28: #{eeg_hybrid_forward.4} parent=11 // pred_fallthru
        _
    $region12: #{eeg_hybrid_forward.4} parent=5 // pred_fallthru
      _
    %p174 = scmp.lt.s32.totalorder %s11, 2
    // Predicated region
    $region29: #{eeg_hybrid_forward.4} parent=5 // pred_check
      %p175 = pneg %p174
    $region30: #{eeg_hybrid_forward.4} parent=5 // pred_check_branch
      %177 = sbr.rel (%p175) target = $region32
    $region31: #{eeg_hybrid_forward.4} parent=5 // pred_region
      // Predicated region
      $region33: #{eeg_hybrid_forward.4} parent=31 // pred_check
        %p178 = pneg %p31
      $region34: #{eeg_hybrid_forward.4} parent=31 // pred_check_branch
        %180 = sbr.rel (%p178) target = $region36
      $region35: #{eeg_hybrid_forward.4} parent=31 // pred_region
        %p181 = scmp.lt.s32.totalorder %s11, 1
        %s182 = scalar_select %p181, %s11, 1
        %s183 = smul.addr %s182, 13
        %s184 = smul.addr %s183, 8
        %s185 = scalar_lea.vmem %s0, %s184
      $region36: #{eeg_hybrid_forward.4} parent=31 // pred_fallthru
        _
    $region32: #{eeg_hybrid_forward.4} parent=5 // pred_fallthru
      _
    %p186 = scmp.le.s32.totalorder 1, %s11
    %p187 = scmp.lt.s32.totalorder %s11, 3
    %p188 = pnand %p186, %p187
    %p189 = pneg %p188
    // Predicated region
    $region37: #{eeg_hybrid_forward.4} parent=5 // pred_check
      _
    $region38: #{eeg_hybrid_forward.4} parent=5 // pred_check_branch
      %191 = sbr.rel (%p188) target = $region40
    $region39: #{eeg_hybrid_forward.4} parent=5 // pred_region
      %s192 = ssub.s32 %s11, 1
      %p193 = scmp.lt.s32.totalorder %s16, 1
      %s194 = scalar_select %p193, %s16, 1
      %s195 = smul.addr %s194, 13
      %s196 = smul.addr %s195, 8
      %s197 = scalar_lea.vmem %s0, %s196
      %p198 = pneg %p37
      %p199 = pneg %p34
      %p200 = pneg %p58
      %p201 = pneg %p55
      %p202 = pneg %p79
      %p203 = pneg %p76
      %p204 = pneg %p100
      %p205 = pneg %p97
      %p206 = pneg %p121
      %p207 = pneg %p118
      %p208 = pneg %p147
      %p209 = pneg %p144
      %p210 = scmp.lt.s32.totalorder %s16, 1
      %s211 = scalar_select %p210, %s16, 1
      %s212 = smul.addr %s211, 4
      %s213 = smul.addr %s212, 8
      %s214 = scalar_lea.vmem %s5, %s213
      %p215 = scmp.lt.s32.totalorder %s16, 1
      %s216 = scalar_select %p215, %s16, 1
      %s217 = smul.addr %s216, 13
      %s218 = smul.addr %s217, 8
      %s219 = scalar_lea.vmem %s0, %s218
      %p220 = scmp.lt.s32.totalorder %s16, 1
      %s221 = scalar_select %p220, %s16, 1
      %s222 = smul.addr %s221, 4
      %s223 = smul.addr %s222, 8
      %s224 = scalar_lea.vmem %s5, %s223
      %v226 = vld [vmem:[%s219] sm:$0xff]
      %v227 = vld [vmem:[%s219 + $0x8] sm:$0xff]
      %v228 = vld [vmem:[%s219 + $0x10] sm:$0xff]
      %v229 = vld [vmem:[%s219 + $0x18] sm:$0xff]
      %v230 = vld [vmem:[%s219 + $0x20] sm:$0xff]
      %v231 = vld [vmem:[%s219 + $0x28] sm:$0xff]
      %v232 = vld [vmem:[%s219 + $0x30] sm:$0xff]
      %v233 = vld [vmem:[%s219 + $0x38] sm:$0xff]
      %v234 = vld [vmem:[%s219 + $0x40] sm:$0xff]
      %v235 = vld [vmem:[%s219 + $0x48] sm:$0xff]
      %v236 = vld [vmem:[%s219 + $0x50] sm:$0xff]
      %v237 = vld [vmem:[%s219 + $0x58] sm:$0xff]
      %v238 = vld [vmem:[%s219 + $0x60] sm:$0xf]
      %v239 = vpack.c.bf16 %v227, %v226
      %v240 = vpack.c.bf16 %v229, %v228
      %v241 = vpack.c.bf16 %v231, %v230
      %v242 = vpack.c.bf16 %v233, %v232
      %v243 = vpack.c.bf16 %v235, %v234
      %v244 = vpack.c.bf16 %v237, %v236
      %v245 = vld [vmem:[%s1] sm:$0x7]
      %v246 = vpack.c.bf16 %v238, %v238
      %s247 = scalar_lea.vmem %s1, 4
      %v248 = vld [vmem:[%s247] sm:$0x7]
      %vm249 = vsmask.f32 7424
      %v251 = vshrl.u32 %v239, 16
      %v253 = vshll.u32 %v239, 16
      %v255 = vrot.slane %v253, 1
      %v256 = vor.u32 %v251, %v255
      %v258 = vshll.u32 %v240, 16
      %v260 = vrot.slane %v258, 1
      %v261 = vsel %vm249, %v256, %v260
      %v262 = vshrl.u32 %v240, 16
      %v264 = vor.u32 %v262, %v260
      %v266 = vshll.u32 %v241, 16
      %v268 = vrot.slane %v266, 1
      %v269 = vsel %vm249, %v264, %v268
      %v270 = vshrl.u32 %v241, 16
      %v272 = vor.u32 %v270, %v268
      %v274 = vshll.u32 %v242, 16
      %v276 = vrot.slane %v274, 1
      %v277 = vsel %vm249, %v272, %v276
      %v278 = vshrl.u32 %v242, 16
      %v280 = vor.u32 %v278, %v276
      %v282 = vshll.u32 %v243, 16
      %v284 = vrot.slane %v282, 1
      %v285 = vsel %vm249, %v280, %v284
      %v286 = vshrl.u32 %v243, 16
      %v288 = vor.u32 %v286, %v284
      %v290 = vshll.u32 %v244, 16
      %v292 = vrot.slane %v290, 1
      %v293 = vsel %vm249, %v288, %v292
      %v294 = vshrl.u32 %v244, 16
      %v296 = vor.u32 %v294, %v292
      %v298 = vshll.u32 %v246, 16
      %v300 = vrot.slane %v298, 1
      %v301 = vsel %vm249, %v296, %v300
      %vm302 = vcmask 48128
      %v304 = vsel %vm302, %v261, 0
      %v307 = vsel %vm302, %v269, 0
      %v310 = vsel %vm302, %v277, 0
      %v313 = vsel %vm302, %v285, 0
      %v316 = vsel %vm302, %v293, 0
      %v319 = vsel %vm302, %v301, 0
      %vm321 = vcmask 1042432
      %v323 = vsel %vm321, %v248, 0
      %325 = vmatprep.subr.bf16.mxu0 0
      %326 = vmatpush1.bf16.msra.mxu0 0
      %327 = vmatprep.subr.bf16.mxu0 0
      %328 = vmatpush1.bf16.msra.mxu0 0
      %329 = vmatprep.subr.bf16.mxu0 0
      %330 = vmatpush1.bf16.msra.mxu0 0
      %331 = vmatprep.subr.bf16.mxu0 0
      %332 = vmatpush1.bf16.msra.mxu0 0
      %333 = vmatprep.subr.bf16.mxu0 0
      %334 = vmatpush1.bf16.msra.mxu0 0
      %335 = vmatprep.subr.bf16.mxu0 0
      %336 = vmatpush1.bf16.msra.mxu0 0
      %337 = vmatprep.subr.bf16.mxu0 0
      %338 = vmatpush1.bf16.msra.mxu0 0
      %339 = vmatprep.subr.bf16.mxu0 0
      %340 = vmatpush1.bf16.msra.mxu0 %v323
      %341 = vmatprep.subr.bf16.mxu0 0
      %342 = vmatpush2.bf16.msra.mxu0 0
      %343 = vmatprep.subr.bf16.mxu0 0
      %344 = vmatpush2.bf16.msra.mxu0 0
      %345 = vmatprep.subr.bf16.mxu0 0
      %346 = vmatpush2.bf16.msra.mxu0 0
      %347 = vmatprep.subr.bf16.mxu0 0
      %348 = vmatpush2.bf16.msra.mxu0 0
      %349 = vmatprep.subr.bf16.mxu0 0
      %350 = vmatpush2.bf16.msra.mxu0 0
      %351 = vmatprep.subr.bf16.mxu0 0
      %352 = vmatpush2.bf16.msra.mxu0 0
      %353 = vmatprep.subr.bf16.mxu0 0
      %354 = vmatpush2.bf16.msra.mxu0 0
      %355 = vmatprep.subr.bf16.mxu0 0
      %356 = vmatpush2.bf16.msra.mxu0 0
      %357 = vmatprep.mubr.bf16.mxu0 0
      %358 = vmatmul.mubr.bf16.gmra.mxu0 %v304
      %v359 = vpop.f32.mrf.mxu0
      %v360 = vadd.f32 0.0, %v359
      %v361 = vpop.f32.mrf.mxu0
      %v362 = vpop.f32.mrf.mxu0
      %v363 = vadd.f32 0.0, %v362
      %v364 = vpop.f32.mrf.mxu0
      %365 = vmatprep.mubr.bf16.mxu0 0
      %366 = vmatmul.mubr.bf16.gmra.mxu0 %v307
      %v367 = vpop.f32.mrf.mxu0
      %v368 = vadd.f32 0.0, %v367
      %v369 = vpop.f32.mrf.mxu0
      %v370 = vpop.f32.mrf.mxu0
      %v371 = vadd.f32 0.0, %v370
      %v372 = vpop.f32.mrf.mxu0
      %373 = vmatprep.mubr.bf16.mxu0 0
      %374 = vmatmul.mubr.bf16.gmra.mxu0 %v310
      %v375 = vpop.f32.mrf.mxu0
      %v376 = vadd.f32 0.0, %v375
      %v377 = vpop.f32.mrf.mxu0
      %v378 = vpop.f32.mrf.mxu0
      %v379 = vadd.f32 0.0, %v378
      %v380 = vpop.f32.mrf.mxu0
      %381 = vmatprep.mubr.bf16.mxu0 0
      %382 = vmatmul.mubr.bf16.gmra.mxu0 %v313
      %v383 = vpop.f32.mrf.mxu0
      %v384 = vadd.f32 0.0, %v383
      %v385 = vpop.f32.mrf.mxu0
      %v386 = vpop.f32.mrf.mxu0
      %v387 = vadd.f32 0.0, %v386
      %v388 = vpop.f32.mrf.mxu0
      %389 = vmatprep.mubr.bf16.mxu0 0
      %390 = vmatmul.mubr.bf16.gmra.mxu0 %v316
      %v391 = vpop.f32.mrf.mxu0
      %v392 = vadd.f32 0.0, %v391
      %v393 = vpop.f32.mrf.mxu0
      %v394 = vpop.f32.mrf.mxu0
      %v395 = vadd.f32 0.0, %v394
      %v396 = vpop.f32.mrf.mxu0
      %397 = vmatprep.mubr.bf16.mxu0 0
      %398 = vmatmul.mubr.bf16.gmra.mxu0 %v319
      %v399 = vpop.f32.mrf.mxu0
      %v400 = vadd.f32 0.0, %v399
      %v401 = vpop.f32.mrf.mxu0
      %v402 = vpop.f32.mrf.mxu0
      %v403 = vadd.f32 0.0, %v402
      %v404 = vpop.f32.mrf.mxu0
      %405 = vdwg.mxu0
      %v406 = vsel %vm302, %v239, 0
      %v408 = vsel %vm302, %v240, 0
      %v410 = vsel %vm302, %v241, 0
      %v412 = vsel %vm302, %v242, 0
      %v414 = vsel %vm302, %v243, 0
      %v416 = vsel %vm302, %v244, 0
      %v419 = vsel %vm321, %v245, 0
      %421 = vmatprep.subr.bf16.mxu0 0
      %422 = vmatpush1.bf16.msra.mxu0 0
      %423 = vmatprep.subr.bf16.mxu0 0
      %424 = vmatpush1.bf16.msra.mxu0 0
      %425 = vmatprep.subr.bf16.mxu0 0
      %426 = vmatpush1.bf16.msra.mxu0 0
      %427 = vmatprep.subr.bf16.mxu0 0
      %428 = vmatpush1.bf16.msra.mxu0 0
      %429 = vmatprep.subr.bf16.mxu0 0
      %430 = vmatpush1.bf16.msra.mxu0 0
      %431 = vmatprep.subr.bf16.mxu0 0
      %432 = vmatpush1.bf16.msra.mxu0 0
      %433 = vmatprep.subr.bf16.mxu0 0
      %434 = vmatpush1.bf16.msra.mxu0 0
      %435 = vmatprep.subr.bf16.mxu0 0
      %436 = vmatpush1.bf16.msra.mxu0 %v419
      %437 = vmatprep.subr.bf16.mxu0 0
      %438 = vmatpush2.bf16.msra.mxu0 0
      %439 = vmatprep.subr.bf16.mxu0 0
      %440 = vmatpush2.bf16.msra.mxu0 0
      %441 = vmatprep.subr.bf16.mxu0 0
      %442 = vmatpush2.bf16.msra.mxu0 0
      %443 = vmatprep.subr.bf16.mxu0 0
      %444 = vmatpush2.bf16.msra.mxu0 0
      %445 = vmatprep.subr.bf16.mxu0 0
      %446 = vmatpush2.bf16.msra.mxu0 0
      %447 = vmatprep.subr.bf16.mxu0 0
      %448 = vmatpush2.bf16.msra.mxu0 0
      %449 = vmatprep.subr.bf16.mxu0 0
      %450 = vmatpush2.bf16.msra.mxu0 0
      %451 = vmatprep.subr.bf16.mxu0 0
      %452 = vmatpush2.bf16.msra.mxu0 0
      %453 = vmatprep.mubr.bf16.mxu0 0
      %454 = vmatmul.mubr.bf16.gmra.mxu0 %v406
      %v455 = vpop.f32.mrf.mxu0
      %v456 = vadd.f32 %v360, %v455
      %v457 = vpop.f32.mrf.mxu0
      %v458 = vpop.f32.mrf.mxu0
      %v459 = vadd.f32 %v363, %v458
      %v460 = vpop.f32.mrf.mxu0
      %461 = vmatprep.mubr.bf16.mxu0 0
      %462 = vmatmul.mubr.bf16.gmra.mxu0 %v408
      %v463 = vpop.f32.mrf.mxu0
      %v464 = vadd.f32 %v368, %v463
      %v465 = vpop.f32.mrf.mxu0
      %v466 = vpop.f32.mrf.mxu0
      %v467 = vadd.f32 %v371, %v466
      %v468 = vpop.f32.mrf.mxu0
      %469 = vmatprep.mubr.bf16.mxu0 0
      %470 = vmatmul.mubr.bf16.gmra.mxu0 %v410
      %v471 = vpop.f32.mrf.mxu0
      %v472 = vadd.f32 %v376, %v471
      %v473 = vpop.f32.mrf.mxu0
      %v474 = vpop.f32.mrf.mxu0
      %v475 = vadd.f32 %v379, %v474
      %v476 = vpop.f32.mrf.mxu0
      %477 = vmatprep.mubr.bf16.mxu0 0
      %478 = vmatmul.mubr.bf16.gmra.mxu0 %v412
      %v479 = vpop.f32.mrf.mxu0
      %v480 = vadd.f32 %v384, %v479
      %v481 = vpop.f32.mrf.mxu0
      %v482 = vpop.f32.mrf.mxu0
      %v483 = vadd.f32 %v387, %v482
      %v484 = vpop.f32.mrf.mxu0
      %485 = vmatprep.mubr.bf16.mxu0 0
      %486 = vmatmul.mubr.bf16.gmra.mxu0 %v414
      %v487 = vpop.f32.mrf.mxu0
      %v488 = vadd.f32 %v392, %v487
      %v489 = vpop.f32.mrf.mxu0
      %v490 = vpop.f32.mrf.mxu0
      %v491 = vadd.f32 %v395, %v490
      %v492 = vpop.f32.mrf.mxu0
      %493 = vmatprep.mubr.bf16.mxu0 0
      %494 = vmatmul.mubr.bf16.gmra.mxu0 %v416
      %v495 = vpop.f32.mrf.mxu0
      %v496 = vadd.f32 %v400, %v495
      %v497 = vpop.f32.mrf.mxu0
      %v498 = vpop.f32.mrf.mxu0
      %v499 = vadd.f32 %v403, %v498
      %v500 = vpop.f32.mrf.mxu0
      %501 = vdwg.mxu0
      %s502 = scalar_lea.vmem %s1, 8
      %v503 = vld [vmem:[%s502] sm:$0x7]
      %vm511 = vcmask 1046528
      %v512 = vrot.slane %v239, 1
      %v513 = vrot.slane %v240, 1
      %v514 = vsel %vm511, %v512, %v513
      %v515 = vrot.slane %v241, 1
      %v516 = vsel %vm511, %v513, %v515
      %v517 = vrot.slane %v242, 1
      %v518 = vsel %vm511, %v515, %v517
      %v519 = vrot.slane %v243, 1
      %v520 = vsel %vm511, %v517, %v519
      %v521 = vrot.slane %v244, 1
      %v522 = vsel %vm511, %v519, %v521
      %v523 = vrot.slane %v246, 1
      %v524 = vsel %vm511, %v521, %v523
      %v526 = vsel %vm302, %v514, 0
      %v529 = vsel %vm302, %v516, 0
      %v532 = vsel %vm302, %v518, 0
      %v535 = vsel %vm302, %v520, 0
      %v538 = vsel %vm302, %v522, 0
      %v541 = vsel %vm302, %v524, 0
      %v544 = vsel %vm321, %v503, 0
      %546 = vmatprep.subr.bf16.mxu0 0
      %547 = vmatpush1.bf16.msra.mxu0 0
      %548 = vmatprep.subr.bf16.mxu0 0
      %549 = vmatpush1.bf16.msra.mxu0 0
      %550 = vmatprep.subr.bf16.mxu0 0
      %551 = vmatpush1.bf16.msra.mxu0 0
      %552 = vmatprep.subr.bf16.mxu0 0
      %553 = vmatpush1.bf16.msra.mxu0 0
      %554 = vmatprep.subr.bf16.mxu0 0
      %555 = vmatpush1.bf16.msra.mxu0 0
      %556 = vmatprep.subr.bf16.mxu0 0
      %557 = vmatpush1.bf16.msra.mxu0 0
      %558 = vmatprep.subr.bf16.mxu0 0
      %559 = vmatpush1.bf16.msra.mxu0 0
      %560 = vmatprep.subr.bf16.mxu0 0
      %561 = vmatpush1.bf16.msra.mxu0 %v544
      %562 = vmatprep.subr.bf16.mxu0 0
      %563 = vmatpush2.bf16.msra.mxu0 0
      %564 = vmatprep.subr.bf16.mxu0 0
      %565 = vmatpush2.bf16.msra.mxu0 0
      %566 = vmatprep.subr.bf16.mxu0 0
      %567 = vmatpush2.bf16.msra.mxu0 0
      %568 = vmatprep.subr.bf16.mxu0 0
      %569 = vmatpush2.bf16.msra.mxu0 0
      %570 = vmatprep.subr.bf16.mxu0 0
      %571 = vmatpush2.bf16.msra.mxu0 0
      %572 = vmatprep.subr.bf16.mxu0 0
      %573 = vmatpush2.bf16.msra.mxu0 0
      %574 = vmatprep.subr.bf16.mxu0 0
      %575 = vmatpush2.bf16.msra.mxu0 0
      %576 = vmatprep.subr.bf16.mxu0 0
      %577 = vmatpush2.bf16.msra.mxu0 0
      %578 = vmatprep.mubr.bf16.mxu0 0
      %579 = vmatmul.mubr.bf16.gmra.mxu0 %v526
      %v580 = vpop.f32.mrf.mxu0
      %v581 = vadd.f32 0.0, %v580
      %v582 = vpop.f32.mrf.mxu0
      %v583 = vpop.f32.mrf.mxu0
      %v584 = vadd.f32 0.0, %v583
      %v585 = vpop.f32.mrf.mxu0
      %586 = vmatprep.mubr.bf16.mxu0 0
      %587 = vmatmul.mubr.bf16.gmra.mxu0 %v529
      %v588 = vpop.f32.mrf.mxu0
      %v589 = vadd.f32 0.0, %v588
      %v590 = vpop.f32.mrf.mxu0
      %v591 = vpop.f32.mrf.mxu0
      %v592 = vadd.f32 0.0, %v591
      %v593 = vpop.f32.mrf.mxu0
      %594 = vmatprep.mubr.bf16.mxu0 0
      %595 = vmatmul.mubr.bf16.gmra.mxu0 %v532
      %v596 = vpop.f32.mrf.mxu0
      %v597 = vadd.f32 0.0, %v596
      %v598 = vpop.f32.mrf.mxu0
      %v599 = vpop.f32.mrf.mxu0
      %v600 = vadd.f32 0.0, %v599
      %v601 = vpop.f32.mrf.mxu0
      %602 = vmatprep.mubr.bf16.mxu0 0
      %603 = vmatmul.mubr.bf16.gmra.mxu0 %v535
      %v604 = vpop.f32.mrf.mxu0
      %v605 = vadd.f32 0.0, %v604
      %v606 = vpop.f32.mrf.mxu0
      %v607 = vpop.f32.mrf.mxu0
      %v608 = vadd.f32 0.0, %v607
      %v609 = vpop.f32.mrf.mxu0
      %610 = vmatprep.mubr.bf16.mxu0 0
      %611 = vmatmul.mubr.bf16.gmra.mxu0 %v538
      %v612 = vpop.f32.mrf.mxu0
      %v613 = vadd.f32 0.0, %v612
      %v614 = vpop.f32.mrf.mxu0
      %v615 = vpop.f32.mrf.mxu0
      %v616 = vadd.f32 0.0, %v615
      %v617 = vpop.f32.mrf.mxu0
      %618 = vmatprep.mubr.bf16.mxu0 0
      %619 = vmatmul.mubr.bf16.gmra.mxu0 %v541
      %v620 = vpop.f32.mrf.mxu0
      %v621 = vadd.f32 0.0, %v620
      %v622 = vpop.f32.mrf.mxu0
      %v623 = vpop.f32.mrf.mxu0
      %v624 = vadd.f32 0.0, %v623
      %v625 = vpop.f32.mrf.mxu0
      %626 = vdwg.mxu0
      %v627 = vadd.f32 %v456, %v581
      %v628 = vadd.f32 %v459, %v584
      %v629 = vadd.f32 %v464, %v589
      %v630 = vadd.f32 %v467, %v592
      %v631 = vadd.f32 %v472, %v597
      %v632 = vadd.f32 %v475, %v600
      %v633 = vadd.f32 %v480, %v605
      %v634 = vadd.f32 %v483, %v608
      %v635 = vadd.f32 %v488, %v613
      %v636 = vadd.f32 %v491, %v616
      %v637 = vadd.f32 %v496, %v621
      %v638 = vadd.f32 %v499, %v624
      %s639 = scalar_lea.vmem %s1, 12
      %v640 = vld [vmem:[%s639] sm:$0x7]
      %vm641 = vsmask.f32 6400
      %v642 = vrot.slane %v251, 1
      %v643 = vrot.slane %v253, 2
      %v644 = vor.u32 %v642, %v643
      %v645 = vrot.slane %v262, 1
      %v646 = vrot.slane %v258, 2
      %v647 = vor.u32 %v645, %v646
      %v648 = vsel %vm641, %v644, %v647
      %v649 = vrot.slane %v270, 1
      %v650 = vrot.slane %v266, 2
      %v651 = vor.u32 %v649, %v650
      %v652 = vsel %vm641, %v647, %v651
      %v653 = vrot.slane %v278, 1
      %v654 = vrot.slane %v274, 2
      %v655 = vor.u32 %v653, %v654
      %v656 = vsel %vm641, %v651, %v655
      %v657 = vrot.slane %v286, 1
      %v658 = vrot.slane %v282, 2
      %v659 = vor.u32 %v657, %v658
      %v660 = vsel %vm641, %v655, %v659
      %v661 = vrot.slane %v294, 1
      %v662 = vrot.slane %v290, 2
      %v663 = vor.u32 %v661, %v662
      %v664 = vsel %vm641, %v659, %v663
      %v665 = vshrl.u32 %v246, 16
      %v667 = vrot.slane %v665, 1
      %v668 = vrot.slane %v298, 2
      %v669 = vor.u32 %v667, %v668
      %v670 = vsel %vm641, %v663, %v669
      %v672 = vsel %vm302, %v648, 0
      %v675 = vsel %vm302, %v652, 0
      %v678 = vsel %vm302, %v656, 0
      %v681 = vsel %vm302, %v660, 0
      %v684 = vsel %vm302, %v664, 0
      %v687 = vsel %vm302, %v670, 0
      %v690 = vsel %vm321, %v640, 0
      %692 = vmatprep.subr.bf16.mxu0 0
      %693 = vmatpush1.bf16.msra.mxu0 0
      %694 = vmatprep.subr.bf16.mxu0 0
      %695 = vmatpush1.bf16.msra.mxu0 0
      %696 = vmatprep.subr.bf16.mxu0 0
      %697 = vmatpush1.bf16.msra.mxu0 0
      %698 = vmatprep.subr.bf16.mxu0 0
      %699 = vmatpush1.bf16.msra.mxu0 0
      %700 = vmatprep.subr.bf16.mxu0 0
      %701 = vmatpush1.bf16.msra.mxu0 0
      %702 = vmatprep.subr.bf16.mxu0 0
      %703 = vmatpush1.bf16.msra.mxu0 0
      %704 = vmatprep.subr.bf16.mxu0 0
      %705 = vmatpush1.bf16.msra.mxu0 0
      %706 = vmatprep.subr.bf16.mxu0 0
      %707 = vmatpush1.bf16.msra.mxu0 %v690
      %708 = vmatprep.subr.bf16.mxu0 0
      %709 = vmatpush2.bf16.msra.mxu0 0
      %710 = vmatprep.subr.bf16.mxu0 0
      %711 = vmatpush2.bf16.msra.mxu0 0
      %712 = vmatprep.subr.bf16.mxu0 0
      %713 = vmatpush2.bf16.msra.mxu0 0
      %714 = vmatprep.subr.bf16.mxu0 0
      %715 = vmatpush2.bf16.msra.mxu0 0
      %716 = vmatprep.subr.bf16.mxu0 0
      %717 = vmatpush2.bf16.msra.mxu0 0
      %718 = vmatprep.subr.bf16.mxu0 0
      %719 = vmatpush2.bf16.msra.mxu0 0
      %720 = vmatprep.subr.bf16.mxu0 0
      %721 = vmatpush2.bf16.msra.mxu0 0
      %722 = vmatprep.subr.bf16.mxu0 0
      %723 = vmatpush2.bf16.msra.mxu0 0
      %724 = vmatprep.mubr.bf16.mxu0 0
      %725 = vmatmul.mubr.bf16.gmra.mxu0 %v672
      %v726 = vpop.f32.mrf.mxu0
      %v727 = vadd.f32 0.0, %v726
      %v728 = vpop.f32.mrf.mxu0
      %v729 = vpop.f32.mrf.mxu0
      %v730 = vadd.f32 0.0, %v729
      %v731 = vpop.f32.mrf.mxu0
      %732 = vmatprep.mubr.bf16.mxu0 0
      %733 = vmatmul.mubr.bf16.gmra.mxu0 %v675
      %v734 = vpop.f32.mrf.mxu0
      %v735 = vadd.f32 0.0, %v734
      %v736 = vpop.f32.mrf.mxu0
      %v737 = vpop.f32.mrf.mxu0
      %v738 = vadd.f32 0.0, %v737
      %v739 = vpop.f32.mrf.mxu0
      %740 = vmatprep.mubr.bf16.mxu0 0
      %741 = vmatmul.mubr.bf16.gmra.mxu0 %v678
      %v742 = vpop.f32.mrf.mxu0
      %v743 = vadd.f32 0.0, %v742
      %v744 = vpop.f32.mrf.mxu0
      %v745 = vpop.f32.mrf.mxu0
      %v746 = vadd.f32 0.0, %v745
      %v747 = vpop.f32.mrf.mxu0
      %748 = vmatprep.mubr.bf16.mxu0 0
      %749 = vmatmul.mubr.bf16.gmra.mxu0 %v681
      %v750 = vpop.f32.mrf.mxu0
      %v751 = vadd.f32 0.0, %v750
      %v752 = vpop.f32.mrf.mxu0
      %v753 = vpop.f32.mrf.mxu0
      %v754 = vadd.f32 0.0, %v753
      %v755 = vpop.f32.mrf.mxu0
      %756 = vmatprep.mubr.bf16.mxu0 0
      %757 = vmatmul.mubr.bf16.gmra.mxu0 %v684
      %v758 = vpop.f32.mrf.mxu0
      %v759 = vadd.f32 0.0, %v758
      %v760 = vpop.f32.mrf.mxu0
      %v761 = vpop.f32.mrf.mxu0
      %v762 = vadd.f32 0.0, %v761
      %v763 = vpop.f32.mrf.mxu0
      %764 = vmatprep.mubr.bf16.mxu0 0
      %765 = vmatmul.mubr.bf16.gmra.mxu0 %v687
      %v766 = vpop.f32.mrf.mxu0
      %v767 = vadd.f32 0.0, %v766
      %v768 = vpop.f32.mrf.mxu0
      %v769 = vpop.f32.mrf.mxu0
      %v770 = vadd.f32 0.0, %v769
      %v771 = vpop.f32.mrf.mxu0
      %772 = vdwg.mxu0
      %v773 = vadd.f32 %v627, %v727
      %v774 = vadd.f32 %v628, %v730
      %v775 = vadd.f32 %v629, %v735
      %v776 = vadd.f32 %v630, %v738
      %v777 = vadd.f32 %v631, %v743
      %v778 = vadd.f32 %v632, %v746
      %v779 = vadd.f32 %v633, %v751
      %v780 = vadd.f32 %v634, %v754
      %v781 = vadd.f32 %v635, %v759
      %v782 = vadd.f32 %v636, %v762
      %v783 = vadd.f32 %v637, %v767
      %v784 = vadd.f32 %v638, %v770
      %s785 = scalar_lea.vmem %s1, 16
      %v786 = vld [vmem:[%s785] sm:$0x7]
      %vm787 = vcmask 1045504
      %v788 = vrot.slane %v239, 2
      %v789 = vrot.slane %v240, 2
      %v790 = vsel %vm787, %v788, %v789
      %v791 = vrot.slane %v241, 2
      %v792 = vsel %vm787, %v789, %v791
      %v793 = vrot.slane %v242, 2
      %v794 = vsel %vm787, %v791, %v793
      %v795 = vrot.slane %v243, 2
      %v796 = vsel %vm787, %v793, %v795
      %v797 = vrot.slane %v244, 2
      %v798 = vsel %vm787, %v795, %v797
      %v799 = vrot.slane %v246, 2
      %v800 = vsel %vm787, %v797, %v799
      %v802 = vsel %vm302, %v790, 0
      %v805 = vsel %vm302, %v792, 0
      %v808 = vsel %vm302, %v794, 0
      %v811 = vsel %vm302, %v796, 0
      %v814 = vsel %vm302, %v798, 0
      %v817 = vsel %vm302, %v800, 0
      %v820 = vsel %vm321, %v786, 0
      %822 = vmatprep.subr.bf16.mxu0 0
      %823 = vmatpush1.bf16.msra.mxu0 0
      %824 = vmatprep.subr.bf16.mxu0 0
      %825 = vmatpush1.bf16.msra.mxu0 0
      %826 = vmatprep.subr.bf16.mxu0 0
      %827 = vmatpush1.bf16.msra.mxu0 0
      %828 = vmatprep.subr.bf16.mxu0 0
      %829 = vmatpush1.bf16.msra.mxu0 0
      %830 = vmatprep.subr.bf16.mxu0 0
      %831 = vmatpush1.bf16.msra.mxu0 0
      %832 = vmatprep.subr.bf16.mxu0 0
      %833 = vmatpush1.bf16.msra.mxu0 0
      %834 = vmatprep.subr.bf16.mxu0 0
      %835 = vmatpush1.bf16.msra.mxu0 0
      %836 = vmatprep.subr.bf16.mxu0 0
      %837 = vmatpush1.bf16.msra.mxu0 %v820
      %838 = vmatprep.subr.bf16.mxu0 0
      %839 = vmatpush2.bf16.msra.mxu0 0
      %840 = vmatprep.subr.bf16.mxu0 0
      %841 = vmatpush2.bf16.msra.mxu0 0
      %842 = vmatprep.subr.bf16.mxu0 0
      %843 = vmatpush2.bf16.msra.mxu0 0
      %844 = vmatprep.subr.bf16.mxu0 0
      %845 = vmatpush2.bf16.msra.mxu0 0
      %846 = vmatprep.subr.bf16.mxu0 0
      %847 = vmatpush2.bf16.msra.mxu0 0
      %848 = vmatprep.subr.bf16.mxu0 0
      %849 = vmatpush2.bf16.msra.mxu0 0
      %850 = vmatprep.subr.bf16.mxu0 0
      %851 = vmatpush2.bf16.msra.mxu0 0
      %852 = vmatprep.subr.bf16.mxu0 0
      %853 = vmatpush2.bf16.msra.mxu0 0
      %854 = vmatprep.mubr.bf16.mxu0 0
      %855 = vmatmul.mubr.bf16.gmra.mxu0 %v802
      %v856 = vpop.f32.mrf.mxu0
      %v857 = vadd.f32 0.0, %v856
      %v858 = vpop.f32.mrf.mxu0
      %v859 = vpop.f32.mrf.mxu0
      %v860 = vadd.f32 0.0, %v859
      %v861 = vpop.f32.mrf.mxu0
      %862 = vmatprep.mubr.bf16.mxu0 0
      %863 = vmatmul.mubr.bf16.gmra.mxu0 %v805
      %v864 = vpop.f32.mrf.mxu0
      %v865 = vadd.f32 0.0, %v864
      %v866 = vpop.f32.mrf.mxu0
      %v867 = vpop.f32.mrf.mxu0
      %v868 = vadd.f32 0.0, %v867
      %v869 = vpop.f32.mrf.mxu0
      %870 = vmatprep.mubr.bf16.mxu0 0
      %871 = vmatmul.mubr.bf16.gmra.mxu0 %v808
      %v872 = vpop.f32.mrf.mxu0
      %v873 = vadd.f32 0.0, %v872
      %v874 = vpop.f32.mrf.mxu0
      %v875 = vpop.f32.mrf.mxu0
      %v876 = vadd.f32 0.0, %v875
      %v877 = vpop.f32.mrf.mxu0
      %878 = vmatprep.mubr.bf16.mxu0 0
      %879 = vmatmul.mubr.bf16.gmra.mxu0 %v811
      %v880 = vpop.f32.mrf.mxu0
      %v881 = vadd.f32 0.0, %v880
      %v882 = vpop.f32.mrf.mxu0
      %v883 = vpop.f32.mrf.mxu0
      %v884 = vadd.f32 0.0, %v883
      %v885 = vpop.f32.mrf.mxu0
      %886 = vmatprep.mubr.bf16.mxu0 0
      %887 = vmatmul.mubr.bf16.gmra.mxu0 %v814
      %v888 = vpop.f32.mrf.mxu0
      %v889 = vadd.f32 0.0, %v888
      %v890 = vpop.f32.mrf.mxu0
      %v891 = vpop.f32.mrf.mxu0
      %v892 = vadd.f32 0.0, %v891
      %v893 = vpop.f32.mrf.mxu0
      %894 = vmatprep.mubr.bf16.mxu0 0
      %895 = vmatmul.mubr.bf16.gmra.mxu0 %v817
      %v896 = vpop.f32.mrf.mxu0
      %v897 = vadd.f32 0.0, %v896
      %v898 = vpop.f32.mrf.mxu0
      %v899 = vpop.f32.mrf.mxu0
      %v900 = vadd.f32 0.0, %v899
      %v901 = vpop.f32.mrf.mxu0
      %902 = vdwg.mxu0
      %v903 = vadd.f32 %v773, %v857
      %v904 = vadd.f32 %v774, %v860
      %v905 = vadd.f32 %v775, %v865
      %v906 = vadd.f32 %v776, %v868
      %v907 = vadd.f32 %v777, %v873
      %v908 = vadd.f32 %v778, %v876
      %v909 = vadd.f32 %v779, %v881
      %v910 = vadd.f32 %v780, %v884
      %v911 = vadd.f32 %v781, %v889
      %v912 = vadd.f32 %v782, %v892
      %v913 = vadd.f32 %v783, %v897
      %v914 = vadd.f32 %v784, %v900
      %v915 = vld [vmem:[%s2] sm:$0x1]
      %v917 = vlaneseq
      %v918 = vshrl.u32 %v917, 7
      %v919 = vsub.s32 0, %v918
      %v920 = vrot.slane %v915, %v919
      %v922 = vadd.f32 %v903, %v920
      %v923 = vadd.f32 %v904, %v920
      %v924 = vadd.f32 %v905, %v920
      %v925 = vadd.f32 %v906, %v920
      %v926 = vadd.f32 %v907, %v920
      %v927 = vadd.f32 %v908, %v920
      %v928 = vadd.f32 %v909, %v920
      %v929 = vadd.f32 %v910, %v920
      %v930 = vadd.f32 %v911, %v920
      %v931 = vadd.f32 %v912, %v920
      %v932 = vadd.f32 %v913, %v920
      %v933 = vadd.f32 %v914, %v920
      %v934 = vld [vmem:[%s3] sm:$0x1]
      %v936 = vlaneseq
      %v937 = vshrl.u32 %v936, 7
      %v938 = vsub.s32 0, %v937
      %v939 = vrot.slane %v934, %v938
      %v941 = vmul.f32 %v922, %v939
      %v942 = vmul.f32 %v923, %v939
      %v943 = vmul.f32 %v924, %v939
      %v944 = vmul.f32 %v925, %v939
      %v945 = vmul.f32 %v926, %v939
      %v946 = vmul.f32 %v927, %v939
      %v947 = vmul.f32 %v928, %v939
      %v948 = vmul.f32 %v929, %v939
      %v949 = vmul.f32 %v930, %v939
      %v950 = vmul.f32 %v931, %v939
      %v951 = vmul.f32 %v932, %v939
      %v952 = vmul.f32 %v933, %v939
      %v953 = vld [vmem:[%s4] sm:$0x1]
      %v955 = vlaneseq
      %v956 = vshrl.u32 %v955, 7
      %v957 = vsub.s32 0, %v956
      %v958 = vrot.slane %v953, %v957
      %v960 = vadd.f32 %v941, %v958
      %v961 = vadd.f32 %v942, %v958
      %v962 = vadd.f32 %v943, %v958
      %v963 = vadd.f32 %v944, %v958
      %v964 = vadd.f32 %v945, %v958
      %v965 = vadd.f32 %v946, %v958
      %v966 = vadd.f32 %v947, %v958
      %v967 = vadd.f32 %v948, %v958
      %v968 = vadd.f32 %v949, %v958
      %v969 = vadd.f32 %v950, %v958
      %v970 = vadd.f32 %v951, %v958
      %v971 = vadd.f32 %v952, %v958
      %v972 = vmul.f32 %v960, 0.5
      %v973 = vmul.f32 %v961, 0.5
      %v974 = vmul.f32 %v962, 0.5
      %v975 = vmul.f32 %v963, 0.5
      %v976 = vmul.f32 %v964, 0.5
      %v977 = vmul.f32 %v965, 0.5
      %v978 = vmul.f32 %v966, 0.5
      %v979 = vmul.f32 %v967, 0.5
      %v980 = vmul.f32 %v968, 0.5
      %v981 = vmul.f32 %v969, 0.5
      %v982 = vmul.f32 %v970, 0.5
      %v983 = vmul.f32 %v971, 0.5
      %v984 = vmul.f32 %v960, 0.70710677
      %v985 = vmul.f32 %v961, 0.70710677
      %v986 = vmul.f32 %v962, 0.70710677
      %v987 = vmul.f32 %v963, 0.70710677
      %v988 = vmul.f32 %v964, 0.70710677
      %v989 = vmul.f32 %v965, 0.70710677
      %v990 = vmul.f32 %v966, 0.70710677
      %v991 = vmul.f32 %v967, 0.70710677
      %v992 = vmul.f32 %v968, 0.70710677
      %v993 = vmul.f32 %v969, 0.70710677
      %v994 = vmul.f32 %v970, 0.70710677
      %v995 = vmul.f32 %v971, 0.70710677
      %v996 = vand.u32 2147483647, %v984
      %v997 = vand.u32 2147483647, %v985
      %v998 = vand.u32 2147483647, %v986
      %v999 = vand.u32 2147483647, %v987
      %v1000 = vand.u32 2147483647, %v988
      %v1001 = vand.u32 2147483647, %v989
      %v1002 = vand.u32 2147483647, %v990
      %v1003 = vand.u32 2147483647, %v991
      %v1004 = vand.u32 2147483647, %v992
      %v1005 = vand.u32 2147483647, %v993
      %v1006 = vand.u32 2147483647, %v994
      %v1007 = vand.u32 2147483647, %v995
      %v1008 = vmul.f32 %v996, 0.3275911
      %v1009 = vmul.f32 %v997, 0.3275911
      %v1010 = vmul.f32 %v998, 0.3275911
      %v1011 = vmul.f32 %v999, 0.3275911
      %v1012 = vmul.f32 %v1000, 0.3275911
      %v1013 = vmul.f32 %v1001, 0.3275911
      %v1014 = vmul.f32 %v1002, 0.3275911
      %v1015 = vmul.f32 %v1003, 0.3275911
      %v1016 = vmul.f32 %v1004, 0.3275911
      %v1017 = vmul.f32 %v1005, 0.3275911
      %v1018 = vmul.f32 %v1006, 0.3275911
      %v1019 = vmul.f32 %v1007, 0.3275911
      %v1020 = vadd.f32 %v1008, 1.0
      %v1021 = vadd.f32 %v1009, 1.0
      %v1022 = vadd.f32 %v1010, 1.0
      %v1023 = vadd.f32 %v1011, 1.0
      %v1024 = vadd.f32 %v1012, 1.0
      %v1025 = vadd.f32 %v1013, 1.0
      %v1026 = vadd.f32 %v1014, 1.0
      %v1027 = vadd.f32 %v1015, 1.0
      %v1028 = vadd.f32 %v1016, 1.0
      %v1029 = vadd.f32 %v1017, 1.0
      %v1030 = vadd.f32 %v1018, 1.0
      %v1031 = vadd.f32 %v1019, 1.0
      %v1032 = vrcp.pop %v1020
      %v1033 = vrcp.pop %v1021
      %v1034 = vrcp.pop %v1022
      %v1035 = vrcp.pop %v1023
      %v1036 = vrcp.pop %v1024
      %v1037 = vrcp.pop %v1025
      %v1038 = vrcp.pop %v1026
      %v1039 = vrcp.pop %v1027
      %v1040 = vrcp.pop %v1028
      %v1041 = vrcp.pop %v1029
      %v1042 = vrcp.pop %v1030
      %v1043 = vrcp.pop %v1031
      %v1044 = vmul.f32 %v1032, 1.0614054
      %v1045 = vmul.f32 %v1033, 1.0614054
      %v1046 = vmul.f32 %v1034, 1.0614054
      %v1047 = vmul.f32 %v1035, 1.0614054
      %v1048 = vmul.f32 %v1036, 1.0614054
      %v1049 = vmul.f32 %v1037, 1.0614054
      %v1050 = vmul.f32 %v1038, 1.0614054
      %v1051 = vmul.f32 %v1039, 1.0614054
      %v1052 = vmul.f32 %v1040, 1.0614054
      %v1053 = vmul.f32 %v1041, 1.0614054
      %v1054 = vmul.f32 %v1042, 1.0614054
      %v1055 = vmul.f32 %v1043, 1.0614054
      %v1056 = vadd.f32 %v1044, -1.4531521
      %v1057 = vadd.f32 %v1045, -1.4531521
      %v1058 = vadd.f32 %v1046, -1.4531521
      %v1059 = vadd.f32 %v1047, -1.4531521
      %v1060 = vadd.f32 %v1048, -1.4531521
      %v1061 = vadd.f32 %v1049, -1.4531521
      %v1062 = vadd.f32 %v1050, -1.4531521
      %v1063 = vadd.f32 %v1051, -1.4531521
      %v1064 = vadd.f32 %v1052, -1.4531521
      %v1065 = vadd.f32 %v1053, -1.4531521
      %v1066 = vadd.f32 %v1054, -1.4531521
      %v1067 = vadd.f32 %v1055, -1.4531521
      %v1068 = vmul.f32 %v1056, %v1032
      %v1069 = vmul.f32 %v1057, %v1033
      %v1070 = vmul.f32 %v1058, %v1034
      %v1071 = vmul.f32 %v1059, %v1035
      %v1072 = vmul.f32 %v1060, %v1036
      %v1073 = vmul.f32 %v1061, %v1037
      %v1074 = vmul.f32 %v1062, %v1038
      %v1075 = vmul.f32 %v1063, %v1039
      %v1076 = vmul.f32 %v1064, %v1040
      %v1077 = vmul.f32 %v1065, %v1041
      %v1078 = vmul.f32 %v1066, %v1042
      %v1079 = vmul.f32 %v1067, %v1043
      %v1080 = vadd.f32 %v1068, 1.4214138
      %v1081 = vadd.f32 %v1069, 1.4214138
      %v1082 = vadd.f32 %v1070, 1.4214138
      %v1083 = vadd.f32 %v1071, 1.4214138
      %v1084 = vadd.f32 %v1072, 1.4214138
      %v1085 = vadd.f32 %v1073, 1.4214138
      %v1086 = vadd.f32 %v1074, 1.4214138
      %v1087 = vadd.f32 %v1075, 1.4214138
      %v1088 = vadd.f32 %v1076, 1.4214138
      %v1089 = vadd.f32 %v1077, 1.4214138
      %v1090 = vadd.f32 %v1078, 1.4214138
      %v1091 = vadd.f32 %v1079, 1.4214138
      %v1092 = vmul.f32 %v1080, %v1032
      %v1093 = vmul.f32 %v1081, %v1033
      %v1094 = vmul.f32 %v1082, %v1034
      %v1095 = vmul.f32 %v1083, %v1035
      %v1096 = vmul.f32 %v1084, %v1036
      %v1097 = vmul.f32 %v1085, %v1037
      %v1098 = vmul.f32 %v1086, %v1038
      %v1099 = vmul.f32 %v1087, %v1039
      %v1100 = vmul.f32 %v1088, %v1040
      %v1101 = vmul.f32 %v1089, %v1041
      %v1102 = vmul.f32 %v1090, %v1042
      %v1103 = vmul.f32 %v1091, %v1043
      %v1104 = vadd.f32 %v1092, -0.28449672
      %v1105 = vadd.f32 %v1093, -0.28449672
      %v1106 = vadd.f32 %v1094, -0.28449672
      %v1107 = vadd.f32 %v1095, -0.28449672
      %v1108 = vadd.f32 %v1096, -0.28449672
      %v1109 = vadd.f32 %v1097, -0.28449672
      %v1110 = vadd.f32 %v1098, -0.28449672
      %v1111 = vadd.f32 %v1099, -0.28449672
      %v1112 = vadd.f32 %v1100, -0.28449672
      %v1113 = vadd.f32 %v1101, -0.28449672
      %v1114 = vadd.f32 %v1102, -0.28449672
      %v1115 = vadd.f32 %v1103, -0.28449672
      %v1116 = vmul.f32 %v1104, %v1032
      %v1117 = vmul.f32 %v1105, %v1033
      %v1118 = vmul.f32 %v1106, %v1034
      %v1119 = vmul.f32 %v1107, %v1035
      %v1120 = vmul.f32 %v1108, %v1036
      %v1121 = vmul.f32 %v1109, %v1037
      %v1122 = vmul.f32 %v1110, %v1038
      %v1123 = vmul.f32 %v1111, %v1039
      %v1124 = vmul.f32 %v1112, %v1040
      %v1125 = vmul.f32 %v1113, %v1041
      %v1126 = vmul.f32 %v1114, %v1042
      %v1127 = vmul.f32 %v1115, %v1043
      %v1128 = vadd.f32 %v1116, 0.2548296
      %v1129 = vadd.f32 %v1117, 0.2548296
      %v1130 = vadd.f32 %v1118, 0.2548296
      %v1131 = vadd.f32 %v1119, 0.2548296
      %v1132 = vadd.f32 %v1120, 0.2548296
      %v1133 = vadd.f32 %v1121, 0.2548296
      %v1134 = vadd.f32 %v1122, 0.2548296
      %v1135 = vadd.f32 %v1123, 0.2548296
      %v1136 = vadd.f32 %v1124, 0.2548296
      %v1137 = vadd.f32 %v1125, 0.2548296
      %v1138 = vadd.f32 %v1126, 0.2548296
      %v1139 = vadd.f32 %v1127, 0.2548296
      %v1140 = vmul.f32 %v1128, %v1032
      %v1141 = vmul.f32 %v1129, %v1033
      %v1142 = vmul.f32 %v1130, %v1034
      %v1143 = vmul.f32 %v1131, %v1035
      %v1144 = vmul.f32 %v1132, %v1036
      %v1145 = vmul.f32 %v1133, %v1037
      %v1146 = vmul.f32 %v1134, %v1038
      %v1147 = vmul.f32 %v1135, %v1039
      %v1148 = vmul.f32 %v1136, %v1040
      %v1149 = vmul.f32 %v1137, %v1041
      %v1150 = vmul.f32 %v1138, %v1042
      %v1151 = vmul.f32 %v1139, %v1043
      %v1152 = vmul.f32 %v996, %v996
      %v1153 = vmul.f32 %v997, %v997
      %v1154 = vmul.f32 %v998, %v998
      %v1155 = vmul.f32 %v999, %v999
      %v1156 = vmul.f32 %v1000, %v1000
      %v1157 = vmul.f32 %v1001, %v1001
      %v1158 = vmul.f32 %v1002, %v1002
      %v1159 = vmul.f32 %v1003, %v1003
      %v1160 = vmul.f32 %v1004, %v1004
      %v1161 = vmul.f32 %v1005, %v1005
      %v1162 = vmul.f32 %v1006, %v1006
      %v1163 = vmul.f32 %v1007, %v1007
      %v1164 = vsub.f32 0.0, %v1152
      %v1165 = vsub.f32 0.0, %v1153
      %v1166 = vsub.f32 0.0, %v1154
      %v1167 = vsub.f32 0.0, %v1155
      %v1168 = vsub.f32 0.0, %v1156
      %v1169 = vsub.f32 0.0, %v1157
      %v1170 = vsub.f32 0.0, %v1158
      %v1171 = vsub.f32 0.0, %v1159
      %v1172 = vsub.f32 0.0, %v1160
      %v1173 = vsub.f32 0.0, %v1161
      %v1174 = vsub.f32 0.0, %v1162
      %v1175 = vsub.f32 0.0, %v1163
      %v1176 = vmul.f32 %v1164, 1.442695
      %v1177 = vpow.pop %v1176
      %v1178 = vmul.f32 %v1165, 1.442695
      %v1179 = vpow.pop %v1178
      %v1180 = vmul.f32 %v1166, 1.442695
      %v1181 = vpow.pop %v1180
      %v1182 = vmul.f32 %v1167, 1.442695
      %v1183 = vpow.pop %v1182
      %v1184 = vmul.f32 %v1168, 1.442695
      %v1185 = vpow.pop %v1184
      %v1186 = vmul.f32 %v1169, 1.442695
      %v1187 = vpow.pop %v1186
      %v1188 = vmul.f32 %v1170, 1.442695
      %v1189 = vpow.pop %v1188
      %v1190 = vmul.f32 %v1171, 1.442695
      %v1191 = vpow.pop %v1190
      %v1192 = vmul.f32 %v1172, 1.442695
      %v1193 = vpow.pop %v1192
      %v1194 = vmul.f32 %v1173, 1.442695
      %v1195 = vpow.pop %v1194
      %v1196 = vmul.f32 %v1174, 1.442695
      %v1197 = vpow.pop %v1196
      %v1198 = vmul.f32 %v1175, 1.442695
      %v1199 = vpow.pop %v1198
      %v1200 = vmul.f32 %v1140, %v1177
      %v1201 = vmul.f32 %v1141, %v1179
      %v1202 = vmul.f32 %v1142, %v1181
      %v1203 = vmul.f32 %v1143, %v1183
      %v1204 = vmul.f32 %v1144, %v1185
      %v1205 = vmul.f32 %v1145, %v1187
      %v1206 = vmul.f32 %v1146, %v1189
      %v1207 = vmul.f32 %v1147, %v1191
      %v1208 = vmul.f32 %v1148, %v1193
      %v1209 = vmul.f32 %v1149, %v1195
      %v1210 = vmul.f32 %v1150, %v1197
      %v1211 = vmul.f32 %v1151, %v1199
      %v1212 = vsub.f32 1.0, %v1200
      %v1213 = vsub.f32 1.0, %v1201
      %v1214 = vsub.f32 1.0, %v1202
      %v1215 = vsub.f32 1.0, %v1203
      %v1216 = vsub.f32 1.0, %v1204
      %v1217 = vsub.f32 1.0, %v1205
      %v1218 = vsub.f32 1.0, %v1206
      %v1219 = vsub.f32 1.0, %v1207
      %v1220 = vsub.f32 1.0, %v1208
      %v1221 = vsub.f32 1.0, %v1209
      %v1222 = vsub.f32 1.0, %v1210
      %v1223 = vsub.f32 1.0, %v1211
      %vm1224 = vcmp.ge.f32.partialorder %v984, 0.0
      %vm1225 = vcmp.ge.f32.partialorder %v985, 0.0
      %vm1226 = vcmp.ge.f32.partialorder %v986, 0.0
      %vm1227 = vcmp.ge.f32.partialorder %v987, 0.0
      %vm1228 = vcmp.ge.f32.partialorder %v988, 0.0
      %vm1229 = vcmp.ge.f32.partialorder %v989, 0.0
      %vm1230 = vcmp.ge.f32.partialorder %v990, 0.0
      %vm1231 = vcmp.ge.f32.partialorder %v991, 0.0
      %vm1232 = vcmp.ge.f32.partialorder %v992, 0.0
      %vm1233 = vcmp.ge.f32.partialorder %v993, 0.0
      %vm1234 = vcmp.ge.f32.partialorder %v994, 0.0
      %vm1235 = vcmp.ge.f32.partialorder %v995, 0.0
      %v1236 = vsub.f32 0.0, %v1212
      %v1237 = vsub.f32 0.0, %v1213
      %v1238 = vsub.f32 0.0, %v1214
      %v1239 = vsub.f32 0.0, %v1215
      %v1240 = vsub.f32 0.0, %v1216
      %v1241 = vsub.f32 0.0, %v1217
      %v1242 = vsub.f32 0.0, %v1218
      %v1243 = vsub.f32 0.0, %v1219
      %v1244 = vsub.f32 0.0, %v1220
      %v1245 = vsub.f32 0.0, %v1221
      %v1246 = vsub.f32 0.0, %v1222
      %v1247 = vsub.f32 0.0, %v1223
      %v1248 = vsel %vm1224, %v1212, %v1236
      %v1249 = vsel %vm1225, %v1213, %v1237
      %v1250 = vsel %vm1226, %v1214, %v1238
      %v1251 = vsel %vm1227, %v1215, %v1239
      %v1252 = vsel %vm1228, %v1216, %v1240
      %v1253 = vsel %vm1229, %v1217, %v1241
      %v1254 = vsel %vm1230, %v1218, %v1242
      %v1255 = vsel %vm1231, %v1219, %v1243
      %v1256 = vsel %vm1232, %v1220, %v1244
      %v1257 = vsel %vm1233, %v1221, %v1245
      %v1258 = vsel %vm1234, %v1222, %v1246
      %v1259 = vsel %vm1235, %v1223, %v1247
      %v1260 = vadd.f32 %v1248, 1.0
      %v1261 = vadd.f32 %v1249, 1.0
      %v1262 = vadd.f32 %v1250, 1.0
      %v1263 = vadd.f32 %v1251, 1.0
      %v1264 = vadd.f32 %v1252, 1.0
      %v1265 = vadd.f32 %v1253, 1.0
      %v1266 = vadd.f32 %v1254, 1.0
      %v1267 = vadd.f32 %v1255, 1.0
      %v1268 = vadd.f32 %v1256, 1.0
      %v1269 = vadd.f32 %v1257, 1.0
      %v1270 = vadd.f32 %v1258, 1.0
      %v1271 = vadd.f32 %v1259, 1.0
      %v1272 = vmul.f32 %v972, %v1260
      %v1273 = vmul.f32 %v973, %v1261
      %v1274 = vmul.f32 %v974, %v1262
      %v1275 = vmul.f32 %v975, %v1263
      %v1276 = vmul.f32 %v976, %v1264
      %v1277 = vmul.f32 %v977, %v1265
      %v1278 = vmul.f32 %v978, %v1266
      %v1279 = vmul.f32 %v979, %v1267
      %v1280 = vmul.f32 %v980, %v1268
      %v1281 = vmul.f32 %v981, %v1269
      %v1282 = vmul.f32 %v982, %v1270
      %v1283 = vmul.f32 %v983, %v1271
      %vm1284 = vcmask 261120
      %1285 = vst.msk [vmem:[#allocation2] sm:$0xff] %vm1284, %v1272
      %1286 = vst.msk [vmem:[#allocation2 + $0x8] sm:$0xff] %vm1284, %v1273
      %1287 = vst.msk [vmem:[#allocation2 + $0x10] sm:$0xff] %vm1284, %v1274
      %1288 = vst.msk [vmem:[#allocation2 + $0x18] sm:$0xff] %vm1284, %v1275
      %1289 = vst.msk [vmem:[#allocation2 + $0x20] sm:$0xff] %vm1284, %v1276
      %1290 = vst.msk [vmem:[#allocation2 + $0x28] sm:$0xff] %vm1284, %v1277
      %1291 = vst.msk [vmem:[#allocation2 + $0x30] sm:$0xff] %vm1284, %v1278
      %1292 = vst.msk [vmem:[#allocation2 + $0x38] sm:$0xff] %vm1284, %v1279
      %1293 = vst.msk [vmem:[#allocation2 + $0x40] sm:$0xff] %vm1284, %v1280
      %1294 = vst.msk [vmem:[#allocation2 + $0x48] sm:$0xff] %vm1284, %v1281
      %1295 = vst.msk [vmem:[#allocation2 + $0x50] sm:$0xff] %vm1284, %v1282
      %1296 = vst.msk [vmem:[#allocation2 + $0x58] sm:$0xff] %vm1284, %v1283
      %v1297 = vld [vmem:[#allocation2] ss:$3 sm:$0xff]
      %s1298 = scalar_lea.vmem [#allocation2], 24
      %v1299 = vld [vmem:[%s1298] ss:$3 sm:$0xff]
      %s1300 = scalar_lea.vmem [#allocation2], 48
      %v1301 = vld [vmem:[%s1300] ss:$3 sm:$0xff]
      %s1302 = scalar_lea.vmem [#allocation2], 72
      %v1303 = vld [vmem:[%s1302] ss:$3 sm:$0xff]
      %s1304 = scalar_lea.vmem [#allocation2], 1
      %v1305 = vld [vmem:[%s1304] ss:$3 sm:$0xff]
      %s1306 = scalar_lea.vmem [#allocation2], 25
      %v1307 = vld [vmem:[%s1306] ss:$3 sm:$0xff]
      %s1308 = scalar_lea.vmem [#allocation2], 49
      %v1309 = vld [vmem:[%s1308] ss:$3 sm:$0xff]
      %s1310 = scalar_lea.vmem [#allocation2], 73
      %v1311 = vld [vmem:[%s1310] ss:$3 sm:$0xff]
      %s1312 = scalar_lea.vmem [#allocation2], 2
      %v1313 = vld [vmem:[%s1312] ss:$3 sm:$0xff]
      %s1314 = scalar_lea.vmem [#allocation2], 26
      %v1315 = vld [vmem:[%s1314] ss:$3 sm:$0xff]
      %s1316 = scalar_lea.vmem [#allocation2], 50
      %v1317 = vld [vmem:[%s1316] ss:$3 sm:$0xff]
      %s1318 = scalar_lea.vmem [#allocation2], 74
      %v1319 = vld [vmem:[%s1318] ss:$3 sm:$0xff]
      %v1320 = vmax.f32 %v1297, %v1305
      %v1321 = vmax.f32 %v1299, %v1307
      %v1322 = vmax.f32 %v1301, %v1309
      %v1323 = vmax.f32 %v1303, %v1311
      %v1324 = vmax.f32 %v1320, %v1313
      %v1325 = vmax.f32 %v1321, %v1315
      %v1326 = vmax.f32 %v1322, %v1317
      %v1327 = vmax.f32 %v1323, %v1319
      %1328 = vst.msk [vmem:[%s224] sm:$0xff] %vm1284, %v1324
      %1329 = vst.msk [vmem:[%s224 + $0x8] sm:$0xff] %vm1284, %v1325
      %1330 = vst.msk [vmem:[%s224 + $0x10] sm:$0xff] %vm1284, %v1326
      %1331 = vst.msk [vmem:[%s224 + $0x18] sm:$0xff] %vm1284, %v1327
      %p1332 = scmp.lt.s32.totalorder %s16, 1
      %s1333 = scalar_select %p1332, %s16, 1
      %s1334 = smul.addr %s1333, 4
      %s1335 = smul.addr %s1334, 8
      %s1336 = scalar_lea.vmem %s5, %s1335
      // Predicated region
      $region41: #{eeg_hybrid_forward.4} parent=39 // pred_check
        %p1337 = pneg %p144
      $region42: #{eeg_hybrid_forward.4} parent=39 // pred_check_branch
        %1339 = sbr.rel (%p1337) target = $region44
      $region43: #{eeg_hybrid_forward.4} parent=39 // pred_region
        _
      $region44: #{eeg_hybrid_forward.4} parent=39 // pred_fallthru
        _
    $region40: #{eeg_hybrid_forward.4} parent=5 // pred_fallthru
      _
    %p1340 = scmp.le.s32.totalorder 2, %s11
    // Predicated region
    $region45: #{eeg_hybrid_forward.4} parent=5 // pred_check
      %p1341 = pneg %p1340
    $region46: #{eeg_hybrid_forward.4} parent=5 // pred_check_branch
      %1343 = sbr.rel (%p1341) target = $region48
    $region47: #{eeg_hybrid_forward.4} parent=5 // pred_region
      %s1344 = ssub.s32 %s11, 2
      // Predicated region
      $region49: #{eeg_hybrid_forward.4} parent=47 // pred_check
        %p1345 = pneg %p150
      $region50: #{eeg_hybrid_forward.4} parent=47 // pred_check_branch
        %1347 = sbr.rel (%p1345) target = $region52
      $region51: #{eeg_hybrid_forward.4} parent=47 // pred_region
        %p1348 = scmp.lt.s32.totalorder %s17, 1
        %s1349 = scalar_select %p1348, %s17, 1
        %s1350 = smul.addr %s1349, 4
        %s1351 = smul.addr %s1350, 8
        %s1352 = scalar_lea.vmem %s5, %s1351
      $region52: #{eeg_hybrid_forward.4} parent=47 // pred_fallthru
        _
    $region48: #{eeg_hybrid_forward.4} parent=5 // pred_fallthru
      _
  $region6: #{eeg_hybrid_forward.4} parent=0 // loop_footer
    %s15 = sadd.s32 1, %s11
  $region7: #{eeg_hybrid_forward.4} parent=0 // loop_footer_branch
    %10 = sbr.rel target = $region3
  $region8: #{eeg_hybrid_forward.4} parent=0 // loop_exit
    _

// kernel: eeg_hybrid_forward.7
$region0: #{eeg_hybrid_forward.7}
  #allocation0 [shape = 'u32[]', space=smem, size = 0x4, offset = 0x4, fixed_abs, tag = 'smem constant byte address 0x4 - core index']
  #allocation1 [shape = 'u32[144,128]{1,0:T(1,128)}', space=vmem, size = 0x12000, scoped, tag = 'internal scratch']
  #allocation2 [shape = 'f32[1,1]{1,0:T(1,128)S(1)}', space=vmem, size = 0x200, scoped, tag = 'scoped memory for eeg_hybrid_forward.7']
  %s0 = inlined_call_operand.vmem [shape: f32[2,6,128], index: 0, kind: input, shape index: {}]
  %s1 = inlined_call_operand.vmem [shape: f32[1,128], index: 1, kind: input, shape index: {}]
  %s2 = inlined_call_operand.vmem [shape: f32[1,128], index: 2, kind: input, shape index: {}, may-alias: {2,8,10}]
  %s3 = inlined_call_operand.vmem [shape: f32[128,64], index: 3, kind: input, shape index: {}]
  %s4 = inlined_call_operand.vmem [shape: f32[1,64], index: 4, kind: input, shape index: {}]
  %s5 = inlined_call_operand.vmem [shape: f32[1,64], index: 5, kind: input, shape index: {}]
  %s6 = inlined_call_operand.<no memory space> [shape: f32[1,1], index: 6, kind: input, shape index: {}]
  %s7 = inlined_call_operand.vmem [shape: f32[128,128], index: 7, kind: input, shape index: {}]
  %s8 = inlined_call_operand.vmem [shape: f32[1,128], index: 8, kind: input, shape index: {}, may-alias: {2,8,10}]
  %s9 = inlined_call_operand.vmem [shape: f32[1,128], index: 9, kind: input, shape index: {}]
  %s10 = inlined_call_operand.vmem [shape: f32[1,128], index: 10, kind: input, shape index: {}, may-alias: {2,8,10}]
  %s11 = inlined_call_operand.vmem [shape: f32[128,5], index: 11, kind: input, shape index: {}]
  %s12 = inlined_call_operand.vmem [shape: f32[1,5], index: 12, kind: input, shape index: {}]
  %s13 = inlined_call_operand.hbm [shape: f32[2,1,5], index: 13, kind: output, shape index: {}]
  %s14 = sld [smem:[#allocation0]]
  $region85: #{eeg_hybrid_forward.7} parent=0
    _
  %s16 = ssub.s32 1, %s14
  %s17 = scalar_select 0, %s16, %s14
  %v18 = vstv %s6
  %19 = vst [vmem:[#allocation2] sm:$0x1] %v18
  $region1: #{eeg_hybrid_forward.7} parent=0
    #allocation3 [shape = 'u8[1024]{0}', space=vmem, size = 0x400, scoped, tag = 'output window, operand 0']
    #allocation4 [shape = 's32[2]{0}', space=sflag, size = 0x8, scoped, tag = 'scoped memory for eeg_hybrid_forward.7']
    %20 = vsyncpa [#allocation4], 0
    %s21 = scalar_lea.sflag [#allocation4], 1
    %22 = vsyncpa %s21, 0
    loop: start=0, step=1, limit=4
    $region2: #{eeg_hybrid_forward.7} parent=1 // loop_pre_header
      _
    $region3: #{eeg_hybrid_forward.7} parent=1 // loop_header
      %s24 = sphi 0, %s28
      %p25 = scmp.ge.s32.totalorder %s24, 4
      %s34 = sphi 0, %s36
      %s37 = sphi 0, %s34
      %s38 = sphi 0, %s37
      %s54 = sphi 0, %s38
      %s58 = sphi 0, %s58
      %s60 = sphi 0, %s58
      %s61 = sphi 0, %s60
      %s75 = sphi 0, %s61
      %s79 = sphi 0, %s79
      %s81 = sphi 0, %s79
      %s82 = sphi 0, %s81
      %s96 = sphi 0, %s82
      %s100 = sphi 0, %s100
      %s102 = sphi 0, %s100
      %s103 = sphi 0, %s102
      %s117 = sphi 0, %s103
      %s121 = sphi 0, %s121
      %s123 = sphi 0, %s121
      %s124 = sphi 0, %s123
      %s138 = sphi 0, %s124
      %s142 = sphi 0, %s142
      %s144 = sphi 0, %s142
      %s145 = sphi 0, %s144
      %s159 = sphi 0, %s145
      %s163 = sphi 0, %s163
      %s165 = sphi 0, %s163
      %s166 = sphi 0, %s165
      %s180 = sphi 0, %s166
      %s184 = sphi 0, %s184
      %s186 = sphi 0, %s184
      %s187 = sphi 0, %s186
      %s201 = sphi 0, %s187
      %s205 = sphi 0, %s205
      %s207 = sphi 0, %s205
      %s208 = sphi 0, %s207
      %s222 = sphi 0, %s208
      %s226 = sphi 0, %s226
      %s228 = sphi 0, %s226
      %s229 = sphi 0, %s228
      %s243 = sphi 0, %s229
      %s247 = sphi 0, %s247
      %s249 = sphi 0, %s247
      %s250 = sphi 0, %s249
      %s264 = sphi 0, %s250
      %s268 = sphi 0, %s268
      %s270 = sphi 0, %s268
      %s271 = sphi 0, %s270
      %s285 = sphi 0, %s271
      %s289 = sphi 0, %s289
      %s291 = sphi 0, %s289
      %s292 = sphi 0, %s291
      %s306 = sphi 0, %s292
      %s312 = sphi 0, %s314
      %s315 = sphi 0, %s312
      %s316 = sphi 0, %s315
      %s332 = sphi 0, %s316
    $region4: #{eeg_hybrid_forward.7} parent=1 // loop_header_branch
      %27 = sbr.rel (%p25) target = $region8
    $region5: #{eeg_hybrid_forward.7} parent=1 // loop_body
      %s29 = ssub.s32 %s24, 1
      %s30 = ssub.s32 %s24, 2
      %s31 = sadd.s32 %s24, 1
      %s32 = ssub.s32 %s24, %s31
      %p33 = scmp.eq.s32.totalorder %s32, 0
      %s35 = sadd.s32 %s34, 1
      %s36 = scalar_select %p33, %s34, %s35
      %p39 = pneg %p33
      %p40 = scmp.eq.s32.totalorder %s24, 1
      %p41 = por %p39, %p40
      %p42 = scmp.ne.s32.totalorder %s34, %s37
      %p43 = scmp.eq.s32.totalorder %s24, 0
      %p44 = por %p42, %p43
      %p45 = scmp.ne.s32.totalorder %s34, %s37
      %p46 = scmp.eq.s32.totalorder %s29, 1
      %p47 = por %p45, %p46
      %p48 = scmp.ne.s32.totalorder %s37, %s38
      %p49 = scmp.eq.s32.totalorder %s29, 0
      %p50 = por %p48, %p49
      %p51 = scmp.ne.s32.totalorder %s37, %s38
      %p52 = scmp.eq.s32.totalorder %s30, 1
      %p53 = por %p51, %p52
      %p55 = scmp.ne.s32.totalorder %s38, %s54
      %p56 = scmp.eq.s32.totalorder %s30, 0
      %p57 = por %p55, %p56
      %s59 = sadd.s32 %s58, 1
      %p62 = scmp.eq.s32.totalorder %s24, 1
      %p63 = scmp.ne.s32.totalorder %s58, %s60
      %p64 = scmp.eq.s32.totalorder %s24, 0
      %p65 = por %p63, %p64
      %p66 = scmp.ne.s32.totalorder %s58, %s60
      %p67 = scmp.eq.s32.totalorder %s29, 1
      %p68 = por %p66, %p67
      %p69 = scmp.ne.s32.totalorder %s60, %s61
      %p70 = scmp.eq.s32.totalorder %s29, 0
      %p71 = por %p69, %p70
      %p72 = scmp.ne.s32.totalorder %s60, %s61
      %p73 = scmp.eq.s32.totalorder %s30, 1
      %p74 = por %p72, %p73
      %p76 = scmp.ne.s32.totalorder %s61, %s75
      %p77 = scmp.eq.s32.totalorder %s30, 0
      %p78 = por %p76, %p77
      %s80 = sadd.s32 %s79, 1
      %p83 = scmp.eq.s32.totalorder %s24, 1
      %p84 = scmp.ne.s32.totalorder %s79, %s81
      %p85 = scmp.eq.s32.totalorder %s24, 0
      %p86 = por %p84, %p85
      %p87 = scmp.ne.s32.totalorder %s79, %s81
      %p88 = scmp.eq.s32.totalorder %s29, 1
      %p89 = por %p87, %p88
      %p90 = scmp.ne.s32.totalorder %s81, %s82
      %p91 = scmp.eq.s32.totalorder %s29, 0
      %p92 = por %p90, %p91
      %p93 = scmp.ne.s32.totalorder %s81, %s82
      %p94 = scmp.eq.s32.totalorder %s30, 1
      %p95 = por %p93, %p94
      %p97 = scmp.ne.s32.totalorder %s82, %s96
      %p98 = scmp.eq.s32.totalorder %s30, 0
      %p99 = por %p97, %p98
      %s101 = sadd.s32 %s100, 1
      %p104 = scmp.eq.s32.totalorder %s24, 1
      %p105 = scmp.ne.s32.totalorder %s100, %s102
      %p106 = scmp.eq.s32.totalorder %s24, 0
      %p107 = por %p105, %p106
      %p108 = scmp.ne.s32.totalorder %s100, %s102
      %p109 = scmp.eq.s32.totalorder %s29, 1
      %p110 = por %p108, %p109
      %p111 = scmp.ne.s32.totalorder %s102, %s103
      %p112 = scmp.eq.s32.totalorder %s29, 0
      %p113 = por %p111, %p112
      %p114 = scmp.ne.s32.totalorder %s102, %s103
      %p115 = scmp.eq.s32.totalorder %s30, 1
      %p116 = por %p114, %p115
      %p118 = scmp.ne.s32.totalorder %s103, %s117
      %p119 = scmp.eq.s32.totalorder %s30, 0
      %p120 = por %p118, %p119
      %s122 = sadd.s32 %s121, 1
      %p125 = scmp.eq.s32.totalorder %s24, 1
      %p126 = scmp.ne.s32.totalorder %s121, %s123
      %p127 = scmp.eq.s32.totalorder %s24, 0
      %p128 = por %p126, %p127
      %p129 = scmp.ne.s32.totalorder %s121, %s123
      %p130 = scmp.eq.s32.totalorder %s29, 1
      %p131 = por %p129, %p130
      %p132 = scmp.ne.s32.totalorder %s123, %s124
      %p133 = scmp.eq.s32.totalorder %s29, 0
      %p134 = por %p132, %p133
      %p135 = scmp.ne.s32.totalorder %s123, %s124
      %p136 = scmp.eq.s32.totalorder %s30, 1
      %p137 = por %p135, %p136
      %p139 = scmp.ne.s32.totalorder %s124, %s138
      %p140 = scmp.eq.s32.totalorder %s30, 0
      %p141 = por %p139, %p140
      %s143 = sadd.s32 %s142, 1
      %p146 = scmp.eq.s32.totalorder %s24, 1
      %p147 = scmp.ne.s32.totalorder %s142, %s144
      %p148 = scmp.eq.s32.totalorder %s24, 0
      %p149 = por %p147, %p148
      %p150 = scmp.ne.s32.totalorder %s142, %s144
      %p151 = scmp.eq.s32.totalorder %s29, 1
      %p152 = por %p150, %p151
      %p153 = scmp.ne.s32.totalorder %s144, %s145
      %p154 = scmp.eq.s32.totalorder %s29, 0
      %p155 = por %p153, %p154
      %p156 = scmp.ne.s32.totalorder %s144, %s145
      %p157 = scmp.eq.s32.totalorder %s30, 1
      %p158 = por %p156, %p157
      %p160 = scmp.ne.s32.totalorder %s145, %s159
      %p161 = scmp.eq.s32.totalorder %s30, 0
      %p162 = por %p160, %p161
      %s164 = sadd.s32 %s163, 1
      %p167 = scmp.eq.s32.totalorder %s24, 1
      %p168 = scmp.ne.s32.totalorder %s163, %s165
      %p169 = scmp.eq.s32.totalorder %s24, 0
      %p170 = por %p168, %p169
      %p171 = scmp.ne.s32.totalorder %s163, %s165
      %p172 = scmp.eq.s32.totalorder %s29, 1
      %p173 = por %p171, %p172
      %p174 = scmp.ne.s32.totalorder %s165, %s166
      %p175 = scmp.eq.s32.totalorder %s29, 0
      %p176 = por %p174, %p175
      %p177 = scmp.ne.s32.totalorder %s165, %s166
      %p178 = scmp.eq.s32.totalorder %s30, 1
      %p179 = por %p177, %p178
      %p181 = scmp.ne.s32.totalorder %s166, %s180
      %p182 = scmp.eq.s32.totalorder %s30, 0
      %p183 = por %p181, %p182
      %s185 = sadd.s32 %s184, 1
      %p188 = scmp.eq.s32.totalorder %s24, 1
      %p189 = scmp.ne.s32.totalorder %s184, %s186
      %p190 = scmp.eq.s32.totalorder %s24, 0
      %p191 = por %p189, %p190
      %p192 = scmp.ne.s32.totalorder %s184, %s186
      %p193 = scmp.eq.s32.totalorder %s29, 1
      %p194 = por %p192, %p193
      %p195 = scmp.ne.s32.totalorder %s186, %s187
      %p196 = scmp.eq.s32.totalorder %s29, 0
      %p197 = por %p195, %p196
      %p198 = scmp.ne.s32.totalorder %s186, %s187
      %p199 = scmp.eq.s32.totalorder %s30, 1
      %p200 = por %p198, %p199
      %p202 = scmp.ne.s32.totalorder %s187, %s201
      %p203 = scmp.eq.s32.totalorder %s30, 0
      %p204 = por %p202, %p203
      %s206 = sadd.s32 %s205, 1
      %p209 = scmp.eq.s32.totalorder %s24, 1
      %p210 = scmp.ne.s32.totalorder %s205, %s207
      %p211 = scmp.eq.s32.totalorder %s24, 0
      %p212 = por %p210, %p211
      %p213 = scmp.ne.s32.totalorder %s205, %s207
      %p214 = scmp.eq.s32.totalorder %s29, 1
      %p215 = por %p213, %p214
      %p216 = scmp.ne.s32.totalorder %s207, %s208
      %p217 = scmp.eq.s32.totalorder %s29, 0
      %p218 = por %p216, %p217
      %p219 = scmp.ne.s32.totalorder %s207, %s208
      %p220 = scmp.eq.s32.totalorder %s30, 1
      %p221 = por %p219, %p220
      %p223 = scmp.ne.s32.totalorder %s208, %s222
      %p224 = scmp.eq.s32.totalorder %s30, 0
      %p225 = por %p223, %p224
      %s227 = sadd.s32 %s226, 1
      %p230 = scmp.eq.s32.totalorder %s24, 1
      %p231 = scmp.ne.s32.totalorder %s226, %s228
      %p232 = scmp.eq.s32.totalorder %s24, 0
      %p233 = por %p231, %p232
      %p234 = scmp.ne.s32.totalorder %s226, %s228
      %p235 = scmp.eq.s32.totalorder %s29, 1
      %p236 = por %p234, %p235
      %p237 = scmp.ne.s32.totalorder %s228, %s229
      %p238 = scmp.eq.s32.totalorder %s29, 0
      %p239 = por %p237, %p238
      %p240 = scmp.ne.s32.totalorder %s228, %s229
      %p241 = scmp.eq.s32.totalorder %s30, 1
      %p242 = por %p240, %p241
      %p244 = scmp.ne.s32.totalorder %s229, %s243
      %p245 = scmp.eq.s32.totalorder %s30, 0
      %p246 = por %p244, %p245
      %s248 = sadd.s32 %s247, 1
      %p251 = scmp.eq.s32.totalorder %s24, 1
      %p252 = scmp.ne.s32.totalorder %s247, %s249
      %p253 = scmp.eq.s32.totalorder %s24, 0
      %p254 = por %p252, %p253
      %p255 = scmp.ne.s32.totalorder %s247, %s249
      %p256 = scmp.eq.s32.totalorder %s29, 1
      %p257 = por %p255, %p256
      %p258 = scmp.ne.s32.totalorder %s249, %s250
      %p259 = scmp.eq.s32.totalorder %s29, 0
      %p260 = por %p258, %p259
      %p261 = scmp.ne.s32.totalorder %s249, %s250
      %p262 = scmp.eq.s32.totalorder %s30, 1
      %p263 = por %p261, %p262
      %p265 = scmp.ne.s32.totalorder %s250, %s264
      %p266 = scmp.eq.s32.totalorder %s30, 0
      %p267 = por %p265, %p266
      %s269 = sadd.s32 %s268, 1
      %p272 = scmp.eq.s32.totalorder %s24, 1
      %p273 = scmp.ne.s32.totalorder %s268, %s270
      %p274 = scmp.eq.s32.totalorder %s24, 0
      %p275 = por %p273, %p274
      %p276 = scmp.ne.s32.totalorder %s268, %s270
      %p277 = scmp.eq.s32.totalorder %s29, 1
      %p278 = por %p276, %p277
      %p279 = scmp.ne.s32.totalorder %s270, %s271
      %p280 = scmp.eq.s32.totalorder %s29, 0
      %p281 = por %p279, %p280
      %p282 = scmp.ne.s32.totalorder %s270, %s271
      %p283 = scmp.eq.s32.totalorder %s30, 1
      %p284 = por %p282, %p283
      %p286 = scmp.ne.s32.totalorder %s271, %s285
      %p287 = scmp.eq.s32.totalorder %s30, 0
      %p288 = por %p286, %p287
      %s290 = sadd.s32 %s289, 1
      %p293 = scmp.eq.s32.totalorder %s24, 1
      %p294 = scmp.ne.s32.totalorder %s289, %s291
      %p295 = scmp.eq.s32.totalorder %s24, 0
      %p296 = por %p294, %p295
      %p297 = scmp.ne.s32.totalorder %s289, %s291
      %p298 = scmp.eq.s32.totalorder %s29, 1
      %p299 = por %p297, %p298
      %p300 = scmp.ne.s32.totalorder %s291, %s292
      %p301 = scmp.eq.s32.totalorder %s29, 0
      %p302 = por %p300, %p301
      %p303 = scmp.ne.s32.totalorder %s291, %s292
      %p304 = scmp.eq.s32.totalorder %s30, 1
      %p305 = por %p303, %p304
      %p307 = scmp.ne.s32.totalorder %s292, %s306
      %p308 = scmp.eq.s32.totalorder %s30, 0
      %p309 = por %p307, %p308
      %s310 = ssub.s32 %s24, %s31
      %p311 = scmp.eq.s32.totalorder %s310, 0
      %s313 = sadd.s32 %s312, 1
      %s314 = scalar_select %p311, %s312, %s313
      %p317 = pneg %p311
      %p318 = scmp.eq.s32.totalorder %s24, 1
      %p319 = por %p317, %p318
      %p320 = scmp.ne.s32.totalorder %s312, %s315
      %p321 = scmp.eq.s32.totalorder %s24, 0
      %p322 = por %p320, %p321
      %p323 = scmp.ne.s32.totalorder %s312, %s315
      %p324 = scmp.eq.s32.totalorder %s29, 1
      %p325 = por %p323, %p324
      %p326 = scmp.ne.s32.totalorder %s315, %s316
      %p327 = scmp.eq.s32.totalorder %s29, 0
      %p328 = por %p326, %p327
      %p329 = scmp.ne.s32.totalorder %s315, %s316
      %p330 = scmp.eq.s32.totalorder %s30, 1
      %p331 = por %p329, %p330
      %p333 = scmp.ne.s32.totalorder %s316, %s332
      %p334 = scmp.eq.s32.totalorder %s30, 0
      %p335 = por %p333, %p334
      %p336 = scmp.le.s32.totalorder 1, %s24
      %p337 = scmp.lt.s32.totalorder %s24, 3
      %p338 = pnand %p336, %p337
      %p339 = pneg %p338
      // Predicated region
      $region9: #{eeg_hybrid_forward.7} parent=5 // pred_check
        _
      $region10: #{eeg_hybrid_forward.7} parent=5 // pred_check_branch
        %341 = sbr.rel (%p338) target = $region12
      $region11: #{eeg_hybrid_forward.7} parent=5 // pred_region
        %s342 = ssub.s32 %s24, 1
        // Predicated region
        $region13: #{eeg_hybrid_forward.7} parent=11 // pred_check
          %p343 = pneg %p71
        $region14: #{eeg_hybrid_forward.7} parent=11 // pred_check_branch
          %345 = sbr.rel (%p343) target = $region16
        $region15: #{eeg_hybrid_forward.7} parent=11 // pred_region
          _
        $region16: #{eeg_hybrid_forward.7} parent=11 // pred_fallthru
          _
        // Predicated region
        $region17: #{eeg_hybrid_forward.7} parent=11 // pred_check
          %p346 = pneg %p92
        $region18: #{eeg_hybrid_forward.7} parent=11 // pred_check_branch
          %348 = sbr.rel (%p346) target = $region20
        $region19: #{eeg_hybrid_forward.7} parent=11 // pred_region
          _
        $region20: #{eeg_hybrid_forward.7} parent=11 // pred_fallthru
          _
        // Predicated region
        $region21: #{eeg_hybrid_forward.7} parent=11 // pred_check
          %p349 = pneg %p113
        $region22: #{eeg_hybrid_forward.7} parent=11 // pred_check_branch
          %351 = sbr.rel (%p349) target = $region24
        $region23: #{eeg_hybrid_forward.7} parent=11 // pred_region
          _
        $region24: #{eeg_hybrid_forward.7} parent=11 // pred_fallthru
          _
        // Predicated region
        $region25: #{eeg_hybrid_forward.7} parent=11 // pred_check
          %p352 = pneg %p134
        $region26: #{eeg_hybrid_forward.7} parent=11 // pred_check_branch
          %354 = sbr.rel (%p352) target = $region28
        $region27: #{eeg_hybrid_forward.7} parent=11 // pred_region
          _
        $region28: #{eeg_hybrid_forward.7} parent=11 // pred_fallthru
          _
        // Predicated region
        $region29: #{eeg_hybrid_forward.7} parent=11 // pred_check
          %p355 = pneg %p155
        $region30: #{eeg_hybrid_forward.7} parent=11 // pred_check_branch
          %357 = sbr.rel (%p355) target = $region32
        $region31: #{eeg_hybrid_forward.7} parent=11 // pred_region
          _
        $region32: #{eeg_hybrid_forward.7} parent=11 // pred_fallthru
          _
        // Predicated region
        $region33: #{eeg_hybrid_forward.7} parent=11 // pred_check
          %p358 = pneg %p176
        $region34: #{eeg_hybrid_forward.7} parent=11 // pred_check_branch
          %360 = sbr.rel (%p358) target = $region36
        $region35: #{eeg_hybrid_forward.7} parent=11 // pred_region
          _
        $region36: #{eeg_hybrid_forward.7} parent=11 // pred_fallthru
          _
        // Predicated region
        $region37: #{eeg_hybrid_forward.7} parent=11 // pred_check
          %p361 = pneg %p197
        $region38: #{eeg_hybrid_forward.7} parent=11 // pred_check_branch
          %363 = sbr.rel (%p361) target = $region40
        $region39: #{eeg_hybrid_forward.7} parent=11 // pred_region
          _
        $region40: #{eeg_hybrid_forward.7} parent=11 // pred_fallthru
          _
        // Predicated region
        $region41: #{eeg_hybrid_forward.7} parent=11 // pred_check
          %p364 = pneg %p218
        $region42: #{eeg_hybrid_forward.7} parent=11 // pred_check_branch
          %366 = sbr.rel (%p364) target = $region44
        $region43: #{eeg_hybrid_forward.7} parent=11 // pred_region
          _
        $region44: #{eeg_hybrid_forward.7} parent=11 // pred_fallthru
          _
        // Predicated region
        $region45: #{eeg_hybrid_forward.7} parent=11 // pred_check
          %p367 = pneg %p239
        $region46: #{eeg_hybrid_forward.7} parent=11 // pred_check_branch
          %369 = sbr.rel (%p367) target = $region48
        $region47: #{eeg_hybrid_forward.7} parent=11 // pred_region
          _
        $region48: #{eeg_hybrid_forward.7} parent=11 // pred_fallthru
          _
        // Predicated region
        $region49: #{eeg_hybrid_forward.7} parent=11 // pred_check
          %p370 = pneg %p260
        $region50: #{eeg_hybrid_forward.7} parent=11 // pred_check_branch
          %372 = sbr.rel (%p370) target = $region52
        $region51: #{eeg_hybrid_forward.7} parent=11 // pred_region
          _
        $region52: #{eeg_hybrid_forward.7} parent=11 // pred_fallthru
          _
        // Predicated region
        $region53: #{eeg_hybrid_forward.7} parent=11 // pred_check
          %p373 = pneg %p281
        $region54: #{eeg_hybrid_forward.7} parent=11 // pred_check_branch
          %375 = sbr.rel (%p373) target = $region56
        $region55: #{eeg_hybrid_forward.7} parent=11 // pred_region
          _
        $region56: #{eeg_hybrid_forward.7} parent=11 // pred_fallthru
          _
        // Predicated region
        $region57: #{eeg_hybrid_forward.7} parent=11 // pred_check
          %p376 = pneg %p302
        $region58: #{eeg_hybrid_forward.7} parent=11 // pred_check_branch
          %378 = sbr.rel (%p376) target = $region60
        $region59: #{eeg_hybrid_forward.7} parent=11 // pred_region
          _
        $region60: #{eeg_hybrid_forward.7} parent=11 // pred_fallthru
          _
      $region12: #{eeg_hybrid_forward.7} parent=5 // pred_fallthru
        _
      %p379 = scmp.lt.s32.totalorder %s24, 2
      // Predicated region
      $region61: #{eeg_hybrid_forward.7} parent=5 // pred_check
        %p380 = pneg %p379
      $region62: #{eeg_hybrid_forward.7} parent=5 // pred_check_branch
        %382 = sbr.rel (%p380) target = $region64
      $region63: #{eeg_hybrid_forward.7} parent=5 // pred_region
        // Predicated region
        $region65: #{eeg_hybrid_forward.7} parent=63 // pred_check
          %p383 = pneg %p44
        $region66: #{eeg_hybrid_forward.7} parent=63 // pred_check_branch
          %385 = sbr.rel (%p383) target = $region68
        $region67: #{eeg_hybrid_forward.7} parent=63 // pred_region
          %p386 = scmp.lt.s32.totalorder %s24, 1
          %s387 = scalar_select %p386, %s24, 1
          %s388 = smul.addr %s387, 8
          %s389 = scalar_lea.vmem %s0, %s388
        $region68: #{eeg_hybrid_forward.7} parent=63 // pred_fallthru
          _
      $region64: #{eeg_hybrid_forward.7} parent=5 // pred_fallthru
        _
      %p390 = scmp.le.s32.totalorder 1, %s24
      %p391 = scmp.lt.s32.totalorder %s24, 3
      %p392 = pnand %p390, %p391
      %p393 = pneg %p392
      // Predicated region
      $region69: #{eeg_hybrid_forward.7} parent=5 // pred_check
        _
      $region70: #{eeg_hybrid_forward.7} parent=5 // pred_check_branch
        %395 = sbr.rel (%p392) target = $region72
      $region71: #{eeg_hybrid_forward.7} parent=5 // pred_region
        %s396 = ssub.s32 %s24, 1
        %p397 = scmp.lt.s32.totalorder %s29, 1
        %s398 = scalar_select %p397, %s29, 1
        %s399 = smul.addr %s398, 8
        %s400 = scalar_lea.vmem %s0, %s399
        %p401 = pneg %p50
        %p402 = pneg %p47
        %p403 = pneg %p71
        %p404 = pneg %p68
        %p405 = pneg %p92
        %p406 = pneg %p89
        %p407 = pneg %p113
        %p408 = pneg %p110
        %p409 = pneg %p134
        %p410 = pneg %p131
        %p411 = pneg %p155
        %p412 = pneg %p152
        %p413 = pneg %p176
        %p414 = pneg %p173
        %p415 = pneg %p197
        %p416 = pneg %p194
        %p417 = pneg %p218
        %p418 = pneg %p215
        %p419 = pneg %p239
        %p420 = pneg %p236
        %p421 = pneg %p260
        %p422 = pneg %p257
        %p423 = pneg %p281
        %p424 = pneg %p278
        %p425 = pneg %p302
        %p426 = pneg %p299
        %p427 = pneg %p328
        %p428 = pneg %p325
        %s429 = sand.u32 %s315, 1
        %s430 = scalar_lea.sflag [#allocation4], %s429
        %s431 = sand.u32 %s315, 1
        %s432 = scalar_lea.vmem [#allocation3], %s431
        %p433 = scmp.lt.s32.totalorder %s29, 1
        %s434 = scalar_select %p433, %s29, 1
        %s435 = smul.addr %s434, 8
        %s436 = scalar_lea.vmem %s0, %s435
        %v437 = vld [vmem:[%s436] sm:$0x3f]
        %vm438 = vcmask 1045504
        %v439 = vsel %vm438, %v437, 0.0
        %440 = vadd.xlane.f32.xlu0 %v439
        %v441 = vpop.xlane.xlu0 %440
        %v442 = vrcp.pop 128.0
        %v443 = vmul.f32 %v441, %v442
        %v444 = vsub.f32 %v437, %v443
        %v445 = vmul.f32 %v444, %v444
        %v446 = vsel %vm438, %v445, 0.0
        %447 = vadd.xlane.f32.xlu0 %v446
        %v448 = vpop.xlane.xlu0 %447
        %v449 = vmul.f32 %v448, %v442
        %v450 = vadd.f32 %v449, 1e-05
        %v451 = vrsqrt.pop %v450
        %v452 = vmul.f32 %v444, %v451
        %v453 = vld [vmem:[%s1] sm:$0x1]
        %v455 = vlaneseq
        %v456 = vshrl.u32 %v455, 7
        %v457 = vsub.s32 0, %v456
        %v458 = vrot.slane %v453, %v457
        %v460 = vmul.f32 %v452, %v458
        %v461 = vld [vmem:[%s2] sm:$0x1]
        %v463 = vlaneseq
        %v464 = vshrl.u32 %v463, 7
        %v465 = vsub.s32 0, %v464
        %v466 = vrot.slane %v461, %v465
        %v468 = vadd.f32 %v460, %v466
        %v469 = vld [vmem:[%s3] sm:$0xff]
        %v470 = vld [vmem:[%s3 + $0x8] sm:$0xff]
        %v471 = vld [vmem:[%s3 + $0x10] sm:$0xff]
        %v472 = vld [vmem:[%s3 + $0x18] sm:$0xff]
        %v473 = vld [vmem:[%s3 + $0x20] sm:$0xff]
        %v474 = vld [vmem:[%s3 + $0x28] sm:$0xff]
        %v475 = vld [vmem:[%s3 + $0x30] sm:$0xff]
        %v476 = vld [vmem:[%s3 + $0x38] sm:$0xff]
        %v477 = vld [vmem:[%s3 + $0x40] sm:$0xff]
        %v478 = vld [vmem:[%s3 + $0x48] sm:$0xff]
        %v479 = vld [vmem:[%s3 + $0x50] sm:$0xff]
        %v480 = vld [vmem:[%s3 + $0x58] sm:$0xff]
        %v481 = vld [vmem:[%s3 + $0x60] sm:$0xff]
        %v482 = vld [vmem:[%s3 + $0x68] sm:$0xff]
        %v483 = vld [vmem:[%s3 + $0x70] sm:$0xff]
        %v484 = vld [vmem:[%s3 + $0x78] sm:$0xff]
        %v485 = vld [vmem:[%s4] sm:$0x1]
        %v487 = vlaneseq
        %v488 = vshrl.u32 %v487, 7
        %v489 = vsub.s32 0, %v488
        %v490 = vrot.slane %v485, %v489
        %492 = vmatprep.subr.mxu0 0.0
        %493 = vmatpush1.msra.mxu0 %v484
        %494 = vmatprep.subr.mxu0 0.0
        %495 = vmatpush1.msra.mxu0 %v483
        %496 = vmatprep.subr.mxu0 0.0
        %497 = vmatpush1.msra.mxu0 %v482
        %498 = vmatprep.subr.mxu0 0.0
        %499 = vmatpush1.msra.mxu0 %v481
        %500 = vmatprep.subr.mxu0 0.0
        %501 = vmatpush1.msra.mxu0 %v480
        %502 = vmatprep.subr.mxu0 0.0
        %503 = vmatpush1.msra.mxu0 %v479
        %504 = vmatprep.subr.mxu0 0.0
        %505 = vmatpush1.msra.mxu0 %v478
        %506 = vmatprep.subr.mxu0 0.0
        %507 = vmatpush1.msra.mxu0 %v477
        %508 = vmatprep.subr.mxu0 0.0
        %509 = vmatpush1.msra.mxu0 %v476
        %510 = vmatprep.subr.mxu0 0.0
        %511 = vmatpush1.msra.mxu0 %v475
        %512 = vmatprep.subr.mxu0 0.0
        %513 = vmatpush1.msra.mxu0 %v474
        %514 = vmatprep.subr.mxu0 0.0
        %515 = vmatpush1.msra.mxu0 %v473
        %516 = vmatprep.subr.mxu0 0.0
        %517 = vmatpush1.msra.mxu0 %v472
        %518 = vmatprep.subr.mxu0 0.0
        %519 = vmatpush1.msra.mxu0 %v471
        %520 = vmatprep.subr.mxu0 0.0
        %521 = vmatpush1.msra.mxu0 %v470
        %522 = vmatprep.subr.mxu0 0.0
        %523 = vmatpush1.msra.mxu0 %v469
        %524 = vmatprep.subr.mxu0 0.0
        %525 = vmatpush2.msra.mxu0 0.0
        %526 = vmatprep.subr.mxu0 0.0
        %527 = vmatpush2.msra.mxu0 0.0
        %528 = vmatprep.subr.mxu0 0.0
        %529 = vmatpush2.msra.mxu0 0.0
        %530 = vmatprep.subr.mxu0 0.0
        %531 = vmatpush2.msra.mxu0 0.0
        %532 = vmatprep.subr.mxu0 0.0
        %533 = vmatpush2.msra.mxu0 0.0
        %534 = vmatprep.subr.mxu0 0.0
        %535 = vmatpush2.msra.mxu0 0.0
        %536 = vmatprep.subr.mxu0 0.0
        %537 = vmatpush2.msra.mxu0 0.0
        %538 = vmatprep.subr.mxu0 0.0
        %539 = vmatpush2.msra.mxu0 0.0
        %540 = vmatprep.subr.mxu0 0.0
        %541 = vmatpush2.msra.mxu0 0.0
        %542 = vmatprep.subr.mxu0 0.0
        %543 = vmatpush2.msra.mxu0 0.0
        %544 = vmatprep.subr.mxu0 0.0
        %545 = vmatpush2.msra.mxu0 0.0
        %546 = vmatprep.subr.mxu0 0.0
        %547 = vmatpush2.msra.mxu0 0.0
        %548 = vmatprep.subr.mxu0 0.0
        %549 = vmatpush2.msra.mxu0 0.0
        %550 = vmatprep.subr.mxu0 0.0
        %551 = vmatpush2.msra.mxu0 0.0
        %552 = vmatprep.subr.mxu0 0.0
        %553 = vmatpush2.msra.mxu0 0.0
        %554 = vmatprep.subr.mxu0 0.0
        %555 = vmatpush2.msra.mxu0 0.0
        %556 = vmatprep.mubr.f32.mxu0 0.0
        %557 = vmatmul.mubr.f32.gmra.mxu0 %v468
        %v558 = vpop.f32.mrf.mxu0
        %v559 = vadd.f32 %v490, %v558
        %v560 = vpop.f32.mrf.mxu0
        %561 = vdwg.mxu0
        %v562 = vtanh.pop %v559
        %v563 = vld [vmem:[%s5] sm:$0x1]
        %v565 = vlaneseq
        %v566 = vshrl.u32 %v565, 7
        %v567 = vsub.s32 0, %v566
        %v568 = vrot.slane %v563, %v567
        %v570 = vmul.f32 %v562, %v568
        %vm571 = vcmask 521216
        %v572 = vsel %vm571, %v570, 0.0
        %573 = vadd.xlane.f32.xlu0 %v572
        %v574 = vpop.xlane.xlu0 %573
        %v575 = vld [vmem:[#allocation2] sm:$0x1]
        %v577 = vlaneseq
        %v578 = vshrl.u32 %v577, 7
        %v579 = vsub.s32 0, %v578
        %v580 = vrot.slane %v575, %v579
        %v582 = vadd.f32 %v574, %v580
        %vm583 = vcmask 5120
        %v584 = vsel %vm583, %v582, -inf
        %v585 = vrot.slane %v584, 4
        %v586 = vmax.f32 %v584, %v585
        %v587 = vrot.slane %v586, 2
        %v588 = vmax.f32 %v586, %v587
        %v589 = vrot.slane %v588, 1
        %v590 = vmax.f32 %v588, %v589
        %v591 = vsub.f32 %v582, %v590
        %v592 = vmul.f32 %v591, 1.442695
        %v593 = vpow.pop %v592
        %v594 = vsel %vm583, %v593, 0.0
        %v595 = vrot.slane %v594, 4
        %v596 = vadd.f32 %v594, %v595
        %v597 = vrot.slane %v596, 2
        %v598 = vadd.f32 %v596, %v597
        %v599 = vrot.slane %v598, 1
        %v600 = vadd.f32 %v598, %v599
        %v601 = vrcp.pop %v600
        %v602 = vmul.f32 %v593, %v601
        %604 = vset.pattern.permute.xlu0 0
        %605 = vperm.xlu0 %604, %v602
        %v606 = vpop.permute.xlu0 %605
        %v608 = vmul.f32 %v606, %v468
        %v609 = vsel %vm438, %v608, 0.0
        %v610 = vrot.slane %v609, 4
        %v611 = vadd.f32 %v609, %v610
        %v612 = vrot.slane %v611, 2
        %v613 = vadd.f32 %v611, %v612
        %v614 = vrot.slane %v613, 1
        %v615 = vadd.f32 %v613, %v614
        %v616 = vld [vmem:[%s7] sm:$0xff]
        %v617 = vld [vmem:[%s7 + $0x8] sm:$0xff]
        %v618 = vld [vmem:[%s7 + $0x10] sm:$0xff]
        %v619 = vld [vmem:[%s7 + $0x18] sm:$0xff]
        %v620 = vld [vmem:[%s7 + $0x20] sm:$0xff]
        %v621 = vld [vmem:[%s7 + $0x28] sm:$0xff]
        %v622 = vld [vmem:[%s7 + $0x30] sm:$0xff]
        %v623 = vld [vmem:[%s7 + $0x38] sm:$0xff]
        %v624 = vld [vmem:[%s7 + $0x40] sm:$0xff]
        %v625 = vld [vmem:[%s7 + $0x48] sm:$0xff]
        %v626 = vld [vmem:[%s7 + $0x50] sm:$0xff]
        %v627 = vld [vmem:[%s7 + $0x58] sm:$0xff]
        %v628 = vld [vmem:[%s7 + $0x60] sm:$0xff]
        %v629 = vld [vmem:[%s7 + $0x68] sm:$0xff]
        %v630 = vld [vmem:[%s7 + $0x70] sm:$0xff]
        %v631 = vld [vmem:[%s7 + $0x78] sm:$0xff]
        %v632 = vld [vmem:[%s8] sm:$0x1]
        %633 = vmatprep.subr.mxu0 0.0
        %634 = vmatpush1.msra.mxu0 %v631
        %635 = vmatprep.subr.mxu0 0.0
        %636 = vmatpush1.msra.mxu0 %v630
        %637 = vmatprep.subr.mxu0 0.0
        %638 = vmatpush1.msra.mxu0 %v629
        %639 = vmatprep.subr.mxu0 0.0
        %640 = vmatpush1.msra.mxu0 %v628
        %641 = vmatprep.subr.mxu0 0.0
        %642 = vmatpush1.msra.mxu0 %v627
        %643 = vmatprep.subr.mxu0 0.0
        %644 = vmatpush1.msra.mxu0 %v626
        %645 = vmatprep.subr.mxu0 0.0
        %646 = vmatpush1.msra.mxu0 %v625
        %647 = vmatprep.subr.mxu0 0.0
        %648 = vmatpush1.msra.mxu0 %v624
        %649 = vmatprep.subr.mxu0 0.0
        %650 = vmatpush1.msra.mxu0 %v623
        %651 = vmatprep.subr.mxu0 0.0
        %652 = vmatpush1.msra.mxu0 %v622
        %653 = vmatprep.subr.mxu0 0.0
        %654 = vmatpush1.msra.mxu0 %v621
        %655 = vmatprep.subr.mxu0 0.0
        %656 = vmatpush1.msra.mxu0 %v620
        %657 = vmatprep.subr.mxu0 0.0
        %658 = vmatpush1.msra.mxu0 %v619
        %659 = vmatprep.subr.mxu0 0.0
        %660 = vmatpush1.msra.mxu0 %v618
        %661 = vmatprep.subr.mxu0 0.0
        %662 = vmatpush1.msra.mxu0 %v617
        %663 = vmatprep.subr.mxu0 0.0
        %664 = vmatpush1.msra.mxu0 %v616
        %665 = vmatprep.subr.mxu0 0.0
        %666 = vmatpush2.msra.mxu0 0.0
        %667 = vmatprep.subr.mxu0 0.0
        %668 = vmatpush2.msra.mxu0 0.0
        %669 = vmatprep.subr.mxu0 0.0
        %670 = vmatpush2.msra.mxu0 0.0
        %671 = vmatprep.subr.mxu0 0.0
        %672 = vmatpush2.msra.mxu0 0.0
        %673 = vmatprep.subr.mxu0 0.0
        %674 = vmatpush2.msra.mxu0 0.0
        %675 = vmatprep.subr.mxu0 0.0
        %676 = vmatpush2.msra.mxu0 0.0
        %677 = vmatprep.subr.mxu0 0.0
        %678 = vmatpush2.msra.mxu0 0.0
        %679 = vmatprep.subr.mxu0 0.0
        %680 = vmatpush2.msra.mxu0 0.0
        %681 = vmatprep.subr.mxu0 0.0
        %682 = vmatpush2.msra.mxu0 0.0
        %683 = vmatprep.subr.mxu0 0.0
        %684 = vmatpush2.msra.mxu0 0.0
        %685 = vmatprep.subr.mxu0 0.0
        %686 = vmatpush2.msra.mxu0 0.0
        %687 = vmatprep.subr.mxu0 0.0
        %688 = vmatpush2.msra.mxu0 0.0
        %689 = vmatprep.subr.mxu0 0.0
        %690 = vmatpush2.msra.mxu0 0.0
        %691 = vmatprep.subr.mxu0 0.0
        %692 = vmatpush2.msra.mxu0 0.0
        %693 = vmatprep.subr.mxu0 0.0
        %694 = vmatpush2.msra.mxu0 0.0
        %695 = vmatprep.subr.mxu0 0.0
        %696 = vmatpush2.msra.mxu0 0.0
        %697 = vmatprep.mubr.f32.mxu0 0.0
        %698 = vmatmul.mubr.f32.gmra.mxu0 %v615
        %v699 = vpop.f32.mrf.mxu0
        %v700 = vadd.f32 %v632, %v699
        %v701 = vpop.f32.mrf.mxu0
        %702 = vdwg.mxu0
        %v703 = vld [vmem:[%s9] sm:$0x1]
        %v704 = vmul.f32 %v700, %v703
        %v705 = vld [vmem:[%s10] sm:$0x1]
        %v706 = vadd.f32 %v704, %v705
        %v707 = vmul.f32 %v706, 0.5
        %v708 = vmul.f32 %v706, 0.70710677
        %v709 = vand.u32 2147483647, %v708
        %v710 = vmul.f32 %v709, 0.3275911
        %v711 = vadd.f32 %v710, 1.0
        %v712 = vrcp.pop %v711
        %v713 = vmul.f32 %v712, 1.0614054
        %v714 = vadd.f32 %v713, -1.4531521
        %v715 = vmul.f32 %v714, %v712
        %v716 = vadd.f32 %v715, 1.4214138
        %v717 = vmul.f32 %v716, %v712
        %v718 = vadd.f32 %v717, -0.28449672
        %v719 = vmul.f32 %v718, %v712
        %v720 = vadd.f32 %v719, 0.2548296
        %v721 = vmul.f32 %v720, %v712
        %v722 = vmul.f32 %v709, %v709
        %v723 = vsub.f32 0.0, %v722
        %v724 = vmul.f32 %v723, 1.442695
        %v725 = vpow.pop %v724
        %v726 = vmul.f32 %v721, %v725
        %v727 = vsub.f32 1.0, %v726
        %vm728 = vcmp.ge.f32.partialorder %v708, 0.0
        %v729 = vsub.f32 0.0, %v727
        %v730 = vsel %vm728, %v727, %v729
        %v731 = vadd.f32 %v730, 1.0
        %v732 = vmul.f32 %v707, %v731
        %v733 = vld [vmem:[%s11] sm:$0xff]
        %v734 = vld [vmem:[%s11 + $0x8] sm:$0xff]
        %v735 = vld [vmem:[%s11 + $0x10] sm:$0xff]
        %v736 = vld [vmem:[%s11 + $0x18] sm:$0xff]
        %v737 = vld [vmem:[%s11 + $0x20] sm:$0xff]
        %v738 = vld [vmem:[%s11 + $0x28] sm:$0xff]
        %v739 = vld [vmem:[%s11 + $0x30] sm:$0xff]
        %v740 = vld [vmem:[%s11 + $0x38] sm:$0xff]
        %v741 = vld [vmem:[%s11 + $0x40] sm:$0xff]
        %v742 = vld [vmem:[%s11 + $0x48] sm:$0xff]
        %v743 = vld [vmem:[%s11 + $0x50] sm:$0xff]
        %v744 = vld [vmem:[%s11 + $0x58] sm:$0xff]
        %v745 = vld [vmem:[%s11 + $0x60] sm:$0xff]
        %v746 = vld [vmem:[%s11 + $0x68] sm:$0xff]
        %v747 = vld [vmem:[%s11 + $0x70] sm:$0xff]
        %v748 = vld [vmem:[%s11 + $0x78] sm:$0xff]
        %v749 = vld [vmem:[%s12] sm:$0x1]
        %750 = vmatprep.subr.mxu0 0.0
        %751 = vmatpush1.msra.mxu0 %v748
        %752 = vmatprep.subr.mxu0 0.0
        %753 = vmatpush1.msra.mxu0 %v747
        %754 = vmatprep.subr.mxu0 0.0
        %755 = vmatpush1.msra.mxu0 %v746
        %756 = vmatprep.subr.mxu0 0.0
        %757 = vmatpush1.msra.mxu0 %v745
        %758 = vmatprep.subr.mxu0 0.0
        %759 = vmatpush1.msra.mxu0 %v744
        %760 = vmatprep.subr.mxu0 0.0
        %761 = vmatpush1.msra.mxu0 %v743
        %762 = vmatprep.subr.mxu0 0.0
        %763 = vmatpush1.msra.mxu0 %v742
        %764 = vmatprep.subr.mxu0 0.0
        %765 = vmatpush1.msra.mxu0 %v741
        %766 = vmatprep.subr.mxu0 0.0
        %767 = vmatpush1.msra.mxu0 %v740
        %768 = vmatprep.subr.mxu0 0.0
        %769 = vmatpush1.msra.mxu0 %v739
        %770 = vmatprep.subr.mxu0 0.0
        %771 = vmatpush1.msra.mxu0 %v738
        %772 = vmatprep.subr.mxu0 0.0
        %773 = vmatpush1.msra.mxu0 %v737
        %774 = vmatprep.subr.mxu0 0.0
        %775 = vmatpush1.msra.mxu0 %v736
        %776 = vmatprep.subr.mxu0 0.0
        %777 = vmatpush1.msra.mxu0 %v735
        %778 = vmatprep.subr.mxu0 0.0
        %779 = vmatpush1.msra.mxu0 %v734
        %780 = vmatprep.subr.mxu0 0.0
        %781 = vmatpush1.msra.mxu0 %v733
        %782 = vmatprep.subr.mxu0 0.0
        %783 = vmatpush2.msra.mxu0 0.0
        %784 = vmatprep.subr.mxu0 0.0
        %785 = vmatpush2.msra.mxu0 0.0
        %786 = vmatprep.subr.mxu0 0.0
        %787 = vmatpush2.msra.mxu0 0.0
        %788 = vmatprep.subr.mxu0 0.0
        %789 = vmatpush2.msra.mxu0 0.0
        %790 = vmatprep.subr.mxu0 0.0
        %791 = vmatpush2.msra.mxu0 0.0
        %792 = vmatprep.subr.mxu0 0.0
        %793 = vmatpush2.msra.mxu0 0.0
        %794 = vmatprep.subr.mxu0 0.0
        %795 = vmatpush2.msra.mxu0 0.0
        %796 = vmatprep.subr.mxu0 0.0
        %797 = vmatpush2.msra.mxu0 0.0
        %798 = vmatprep.subr.mxu0 0.0
        %799 = vmatpush2.msra.mxu0 0.0
        %800 = vmatprep.subr.mxu0 0.0
        %801 = vmatpush2.msra.mxu0 0.0
        %802 = vmatprep.subr.mxu0 0.0
        %803 = vmatpush2.msra.mxu0 0.0
        %804 = vmatprep.subr.mxu0 0.0
        %805 = vmatpush2.msra.mxu0 0.0
        %806 = vmatprep.subr.mxu0 0.0
        %807 = vmatpush2.msra.mxu0 0.0
        %808 = vmatprep.subr.mxu0 0.0
        %809 = vmatpush2.msra.mxu0 0.0
        %810 = vmatprep.subr.mxu0 0.0
        %811 = vmatpush2.msra.mxu0 0.0
        %812 = vmatprep.subr.mxu0 0.0
        %813 = vmatpush2.msra.mxu0 0.0
        %814 = vmatprep.mubr.f32.mxu0 0.0
        %815 = vmatmul.mubr.f32.gmra.mxu0 %v732
        %v816 = vpop.f32.mrf.mxu0
        %v817 = vadd.f32 %v749, %v816
        %v818 = vpop.f32.mrf.mxu0
        %819 = vdwg.mxu0
        %vm820 = vcmask 32768
        %821 = vst.msk [vmem:[%s432] sm:$0x1] %vm820, %v817
        %s822 = sand.u32 %s315, 1
        %s823 = scalar_lea.sflag [#allocation4], %s822
        %s824 = sand.u32 %s315, 1
        %s825 = scalar_lea.vmem [#allocation3], %s824
        // Predicated region
        $region73: #{eeg_hybrid_forward.7} parent=71 // pred_check
          %p826 = pneg %p325
        $region74: #{eeg_hybrid_forward.7} parent=71 // pred_check_branch
          %828 = sbr.rel (%p826) target = $region76
        $region75: #{eeg_hybrid_forward.7} parent=71 // pred_region
          %s830 = ssub.s32 16, 16
          %831 = vsyncadd %s823, %s830
          %s832 = smul.addr %s29, 16
          %s833 = scalar_lea.hbm %s13, %s832
          %s835 = sshll.u32 %s825, 4
          %s836 = int_to_ptr.vmem [resolvable:$true] %s835
          %838 = dma.vmem_to_hbm [thread:$0]  %s836, 16, %s833, %s823
        $region76: #{eeg_hybrid_forward.7} parent=71 // pred_fallthru
          _
      $region72: #{eeg_hybrid_forward.7} parent=5 // pred_fallthru
        _
      %p839 = scmp.le.s32.totalorder 2, %s24
      // Predicated region
      $region77: #{eeg_hybrid_forward.7} parent=5 // pred_check
        %p840 = pneg %p839
      $region78: #{eeg_hybrid_forward.7} parent=5 // pred_check_branch
        %842 = sbr.rel (%p840) target = $region80
      $region79: #{eeg_hybrid_forward.7} parent=5 // pred_region
        %s843 = ssub.s32 %s24, 2
        // Predicated region
        $region81: #{eeg_hybrid_forward.7} parent=79 // pred_check
          %p844 = pneg %p331
        $region82: #{eeg_hybrid_forward.7} parent=79 // pred_check_branch
          %846 = sbr.rel (%p844) target = $region84
        $region83: #{eeg_hybrid_forward.7} parent=79 // pred_region
          %s847 = sand.u32 %s316, 1
          %s848 = scalar_lea.sflag [#allocation4], %s847
          %s849 = sand.u32 %s316, 1
          %s850 = scalar_lea.vmem [#allocation3], %s849
          %851 = dma.done %s848, 16
        $region84: #{eeg_hybrid_forward.7} parent=79 // pred_fallthru
          _
      $region80: #{eeg_hybrid_forward.7} parent=5 // pred_fallthru
        _
    $region6: #{eeg_hybrid_forward.7} parent=1 // loop_footer
      %s28 = sadd.s32 1, %s24
    $region7: #{eeg_hybrid_forward.7} parent=1 // loop_footer_branch
      %23 = sbr.rel target = $region3
    $region8: #{eeg_hybrid_forward.7} parent=1 // loop_exit
      _
    %852 = vsyncpa [#allocation4], 1
    %s853 = scalar_lea.sflag [#allocation4], 1
    %854 = vsyncpa %s853, 1

// kernel: eeg_hybrid_forward.5
$region0: #{eeg_hybrid_forward.5}
  #allocation0 [shape = 'u32[]', space=smem, size = 0x4, offset = 0x4, fixed_abs, tag = 'smem constant byte address 0x4 - core index']
  #allocation1 [shape = 'u32[144,128]{1,0:T(1,128)}', space=vmem, size = 0x12000, scoped, tag = 'internal scratch']
  #allocation2 [shape = 'f32[18,64]{1,0:T(8,128)}', space=vmem, size = 0x3000, scoped, tag = 'scratch operand']
  %s0 = inlined_call_operand.vmem [shape: f32[2,32,32], index: 0, kind: input, shape index: {}]
  %s1 = inlined_call_operand.vmem [shape: bf16[15,32,64], index: 1, kind: input, shape index: {}]
  %s2 = inlined_call_operand.vmem [shape: f32[1,64], index: 2, kind: input, shape index: {}]
  %s3 = inlined_call_operand.vmem [shape: f32[1,64], index: 3, kind: input, shape index: {}]
  %s4 = inlined_call_operand.vmem [shape: f32[1,64], index: 4, kind: input, shape index: {}]
  %s5 = inlined_call_operand.vmem [shape: f32[2,6,64], index: 5, kind: output, shape index: {}]
  %s6 = sld [smem:[#allocation0]]
  $region53: #{eeg_hybrid_forward.5} parent=0
    _
  %s8 = ssub.s32 1, %s6
  %s9 = scalar_select 0, %s8, %s6
  loop: start=0, step=1, limit=4
  $region2: #{eeg_hybrid_forward.5} parent=0 // loop_pre_header
    _
  $region3: #{eeg_hybrid_forward.5} parent=0 // loop_header
    %s11 = sphi 0, %s15
    %p12 = scmp.ge.s32.totalorder %s11, 4
    %s21 = sphi 0, %s23
    %s24 = sphi 0, %s21
    %s25 = sphi 0, %s24
    %s41 = sphi 0, %s25
    %s45 = sphi 0, %s45
    %s47 = sphi 0, %s45
    %s48 = sphi 0, %s47
    %s62 = sphi 0, %s48
    %s66 = sphi 0, %s66
    %s68 = sphi 0, %s66
    %s69 = sphi 0, %s68
    %s83 = sphi 0, %s69
    %s87 = sphi 0, %s87
    %s89 = sphi 0, %s87
    %s90 = sphi 0, %s89
    %s104 = sphi 0, %s90
    %s108 = sphi 0, %s108
    %s110 = sphi 0, %s108
    %s111 = sphi 0, %s110
    %s125 = sphi 0, %s111
    %s131 = sphi 0, %s133
    %s134 = sphi 0, %s131
    %s135 = sphi 0, %s134
    %s151 = sphi 0, %s135
  $region4: #{eeg_hybrid_forward.5} parent=0 // loop_header_branch
    %14 = sbr.rel (%p12) target = $region8
  $region5: #{eeg_hybrid_forward.5} parent=0 // loop_body
    %s16 = ssub.s32 %s11, 1
    %s17 = ssub.s32 %s11, 2
    %s18 = sadd.s32 %s11, 1
    %s19 = ssub.s32 %s11, %s18
    %p20 = scmp.eq.s32.totalorder %s19, 0
    %s22 = sadd.s32 %s21, 1
    %s23 = scalar_select %p20, %s21, %s22
    %p26 = pneg %p20
    %p27 = scmp.eq.s32.totalorder %s11, 1
    %p28 = por %p26, %p27
    %p29 = scmp.ne.s32.totalorder %s21, %s24
    %p30 = scmp.eq.s32.totalorder %s11, 0
    %p31 = por %p29, %p30
    %p32 = scmp.ne.s32.totalorder %s21, %s24
    %p33 = scmp.eq.s32.totalorder %s16, 1
    %p34 = por %p32, %p33
    %p35 = scmp.ne.s32.totalorder %s24, %s25
    %p36 = scmp.eq.s32.totalorder %s16, 0
    %p37 = por %p35, %p36
    %p38 = scmp.ne.s32.totalorder %s24, %s25
    %p39 = scmp.eq.s32.totalorder %s17, 1
    %p40 = por %p38, %p39
    %p42 = scmp.ne.s32.totalorder %s25, %s41
    %p43 = scmp.eq.s32.totalorder %s17, 0
    %p44 = por %p42, %p43
    %s46 = sadd.s32 %s45, 1
    %p49 = scmp.eq.s32.totalorder %s11, 1
    %p50 = scmp.ne.s32.totalorder %s45, %s47
    %p51 = scmp.eq.s32.totalorder %s11, 0
    %p52 = por %p50, %p51
    %p53 = scmp.ne.s32.totalorder %s45, %s47
    %p54 = scmp.eq.s32.totalorder %s16, 1
    %p55 = por %p53, %p54
    %p56 = scmp.ne.s32.totalorder %s47, %s48
    %p57 = scmp.eq.s32.totalorder %s16, 0
    %p58 = por %p56, %p57
    %p59 = scmp.ne.s32.totalorder %s47, %s48
    %p60 = scmp.eq.s32.totalorder %s17, 1
    %p61 = por %p59, %p60
    %p63 = scmp.ne.s32.totalorder %s48, %s62
    %p64 = scmp.eq.s32.totalorder %s17, 0
    %p65 = por %p63, %p64
    %s67 = sadd.s32 %s66, 1
    %p70 = scmp.eq.s32.totalorder %s11, 1
    %p71 = scmp.ne.s32.totalorder %s66, %s68
    %p72 = scmp.eq.s32.totalorder %s11, 0
    %p73 = por %p71, %p72
    %p74 = scmp.ne.s32.totalorder %s66, %s68
    %p75 = scmp.eq.s32.totalorder %s16, 1
    %p76 = por %p74, %p75
    %p77 = scmp.ne.s32.totalorder %s68, %s69
    %p78 = scmp.eq.s32.totalorder %s16, 0
    %p79 = por %p77, %p78
    %p80 = scmp.ne.s32.totalorder %s68, %s69
    %p81 = scmp.eq.s32.totalorder %s17, 1
    %p82 = por %p80, %p81
    %p84 = scmp.ne.s32.totalorder %s69, %s83
    %p85 = scmp.eq.s32.totalorder %s17, 0
    %p86 = por %p84, %p85
    %s88 = sadd.s32 %s87, 1
    %p91 = scmp.eq.s32.totalorder %s11, 1
    %p92 = scmp.ne.s32.totalorder %s87, %s89
    %p93 = scmp.eq.s32.totalorder %s11, 0
    %p94 = por %p92, %p93
    %p95 = scmp.ne.s32.totalorder %s87, %s89
    %p96 = scmp.eq.s32.totalorder %s16, 1
    %p97 = por %p95, %p96
    %p98 = scmp.ne.s32.totalorder %s89, %s90
    %p99 = scmp.eq.s32.totalorder %s16, 0
    %p100 = por %p98, %p99
    %p101 = scmp.ne.s32.totalorder %s89, %s90
    %p102 = scmp.eq.s32.totalorder %s17, 1
    %p103 = por %p101, %p102
    %p105 = scmp.ne.s32.totalorder %s90, %s104
    %p106 = scmp.eq.s32.totalorder %s17, 0
    %p107 = por %p105, %p106
    %s109 = sadd.s32 %s108, 1
    %p112 = scmp.eq.s32.totalorder %s11, 1
    %p113 = scmp.ne.s32.totalorder %s108, %s110
    %p114 = scmp.eq.s32.totalorder %s11, 0
    %p115 = por %p113, %p114
    %p116 = scmp.ne.s32.totalorder %s108, %s110
    %p117 = scmp.eq.s32.totalorder %s16, 1
    %p118 = por %p116, %p117
    %p119 = scmp.ne.s32.totalorder %s110, %s111
    %p120 = scmp.eq.s32.totalorder %s16, 0
    %p121 = por %p119, %p120
    %p122 = scmp.ne.s32.totalorder %s110, %s111
    %p123 = scmp.eq.s32.totalorder %s17, 1
    %p124 = por %p122, %p123
    %p126 = scmp.ne.s32.totalorder %s111, %s125
    %p127 = scmp.eq.s32.totalorder %s17, 0
    %p128 = por %p126, %p127
    %s129 = ssub.s32 %s11, %s18
    %p130 = scmp.eq.s32.totalorder %s129, 0
    %s132 = sadd.s32 %s131, 1
    %s133 = scalar_select %p130, %s131, %s132
    %p136 = pneg %p130
    %p137 = scmp.eq.s32.totalorder %s11, 1
    %p138 = por %p136, %p137
    %p139 = scmp.ne.s32.totalorder %s131, %s134
    %p140 = scmp.eq.s32.totalorder %s11, 0
    %p141 = por %p139, %p140
    %p142 = scmp.ne.s32.totalorder %s131, %s134
    %p143 = scmp.eq.s32.totalorder %s16, 1
    %p144 = por %p142, %p143
    %p145 = scmp.ne.s32.totalorder %s134, %s135
    %p146 = scmp.eq.s32.totalorder %s16, 0
    %p147 = por %p145, %p146
    %p148 = scmp.ne.s32.totalorder %s134, %s135
    %p149 = scmp.eq.s32.totalorder %s17, 1
    %p150 = por %p148, %p149
    %p152 = scmp.ne.s32.totalorder %s135, %s151
    %p153 = scmp.eq.s32.totalorder %s17, 0
    %p154 = por %p152, %p153
    %p155 = scmp.le.s32.totalorder 1, %s11
    %p156 = scmp.lt.s32.totalorder %s11, 3
    %p157 = pnand %p155, %p156
    %p158 = pneg %p157
    // Predicated region
    $region9: #{eeg_hybrid_forward.5} parent=5 // pred_check
      _
    $region10: #{eeg_hybrid_forward.5} parent=5 // pred_check_branch
      %160 = sbr.rel (%p157) target = $region12
    $region11: #{eeg_hybrid_forward.5} parent=5 // pred_region
      %s161 = ssub.s32 %s11, 1
      // Predicated region
      $region13: #{eeg_hybrid_forward.5} parent=11 // pred_check
        %p162 = pneg %p58
      $region14: #{eeg_hybrid_forward.5} parent=11 // pred_check_branch
        %164 = sbr.rel (%p162) target = $region16
      $region15: #{eeg_hybrid_forward.5} parent=11 // pred_region
        _
      $region16: #{eeg_hybrid_forward.5} parent=11 // pred_fallthru
        _
      // Predicated region
      $region17: #{eeg_hybrid_forward.5} parent=11 // pred_check
        %p165 = pneg %p79
      $region18: #{eeg_hybrid_forward.5} parent=11 // pred_check_branch
        %167 = sbr.rel (%p165) target = $region20
      $region19: #{eeg_hybrid_forward.5} parent=11 // pred_region
        _
      $region20: #{eeg_hybrid_forward.5} parent=11 // pred_fallthru
        _
      // Predicated region
      $region21: #{eeg_hybrid_forward.5} parent=11 // pred_check
        %p168 = pneg %p100
      $region22: #{eeg_hybrid_forward.5} parent=11 // pred_check_branch
        %170 = sbr.rel (%p168) target = $region24
      $region23: #{eeg_hybrid_forward.5} parent=11 // pred_region
        _
      $region24: #{eeg_hybrid_forward.5} parent=11 // pred_fallthru
        _
      // Predicated region
      $region25: #{eeg_hybrid_forward.5} parent=11 // pred_check
        %p171 = pneg %p121
      $region26: #{eeg_hybrid_forward.5} parent=11 // pred_check_branch
        %173 = sbr.rel (%p171) target = $region28
      $region27: #{eeg_hybrid_forward.5} parent=11 // pred_region
        _
      $region28: #{eeg_hybrid_forward.5} parent=11 // pred_fallthru
        _
    $region12: #{eeg_hybrid_forward.5} parent=5 // pred_fallthru
      _
    %p174 = scmp.lt.s32.totalorder %s11, 2
    // Predicated region
    $region29: #{eeg_hybrid_forward.5} parent=5 // pred_check
      %p175 = pneg %p174
    $region30: #{eeg_hybrid_forward.5} parent=5 // pred_check_branch
      %177 = sbr.rel (%p175) target = $region32
    $region31: #{eeg_hybrid_forward.5} parent=5 // pred_region
      // Predicated region
      $region33: #{eeg_hybrid_forward.5} parent=31 // pred_check
        %p178 = pneg %p31
      $region34: #{eeg_hybrid_forward.5} parent=31 // pred_check_branch
        %180 = sbr.rel (%p178) target = $region36
      $region35: #{eeg_hybrid_forward.5} parent=31 // pred_region
        %p181 = scmp.lt.s32.totalorder %s11, 1
        %s182 = scalar_select %p181, %s11, 1
        %s183 = smul.addr %s182, 4
        %s184 = smul.addr %s183, 8
        %s185 = scalar_lea.vmem %s0, %s184
      $region36: #{eeg_hybrid_forward.5} parent=31 // pred_fallthru
        _
    $region32: #{eeg_hybrid_forward.5} parent=5 // pred_fallthru
      _
    %p186 = scmp.le.s32.totalorder 1, %s11
    %p187 = scmp.lt.s32.totalorder %s11, 3
    %p188 = pnand %p186, %p187
    %p189 = pneg %p188
    // Predicated region
    $region37: #{eeg_hybrid_forward.5} parent=5 // pred_check
      _
    $region38: #{eeg_hybrid_forward.5} parent=5 // pred_check_branch
      %191 = sbr.rel (%p188) target = $region40
    $region39: #{eeg_hybrid_forward.5} parent=5 // pred_region
      %s192 = ssub.s32 %s11, 1
      %p193 = scmp.lt.s32.totalorder %s16, 1
      %s194 = scalar_select %p193, %s16, 1
      %s195 = smul.addr %s194, 4
      %s196 = smul.addr %s195, 8
      %s197 = scalar_lea.vmem %s0, %s196
      %p198 = pneg %p37
      %p199 = pneg %p34
      %p200 = pneg %p58
      %p201 = pneg %p55
      %p202 = pneg %p79
      %p203 = pneg %p76
      %p204 = pneg %p100
      %p205 = pneg %p97
      %p206 = pneg %p121
      %p207 = pneg %p118
      %p208 = pneg %p147
      %p209 = pneg %p144
      %p210 = scmp.lt.s32.totalorder %s16, 1
      %s211 = scalar_select %p210, %s16, 1
      %s212 = smul.addr %s211, 8
      %s213 = scalar_lea.vmem %s5, %s212
      %p214 = scmp.lt.s32.totalorder %s16, 1
      %s215 = scalar_select %p214, %s16, 1
      %s216 = smul.addr %s215, 4
      %s217 = smul.addr %s216, 8
      %s218 = scalar_lea.vmem %s0, %s217
      %p219 = scmp.lt.s32.totalorder %s16, 1
      %s220 = scalar_select %p219, %s16, 1
      %s221 = smul.addr %s220, 8
      %s222 = scalar_lea.vmem %s5, %s221
      %v224 = vld [vmem:[%s218] sm:$0xff]
      %v225 = vld [vmem:[%s218 + $0x8] sm:$0xff]
      %v226 = vld [vmem:[%s218 + $0x10] sm:$0xff]
      %v227 = vld [vmem:[%s218 + $0x18] sm:$0xff]
      %v228 = vpack.c.bf16 %v225, %v224
      %v229 = vpack.c.bf16 %v226, %v226
      %v230 = vld [vmem:[%s1] sm:$0xf]
      %v231 = vld [vmem:[%s1 + $0x4] sm:$0xf]
      %v232 = vld [vmem:[%s1 + $0x8] sm:$0xf]
      %v233 = vld [vmem:[%s1 + $0xc] sm:$0xf]
      %s234 = scalar_lea.vmem %s1, 16
      %v235 = vld [vmem:[%s234] sm:$0xf]
      %v236 = vld [vmem:[%s234 + $0x4] sm:$0xf]
      %v237 = vld [vmem:[%s234 + $0x8] sm:$0xf]
      %v238 = vld [vmem:[%s234 + $0xc] sm:$0xf]
      %vm239 = vsmask.f32 7424
      %v241 = vshrl.u32 %v228, 16
      %v243 = vshll.u32 %v228, 16
      %v245 = vrot.slane %v243, 1
      %v246 = vor.u32 %v241, %v245
      %v248 = vshll.u32 %v229, 16
      %v250 = vrot.slane %v248, 1
      %v251 = vsel %vm239, %v246, %v250
      %v252 = vshrl.u32 %v229, 16
      %v254 = vor.u32 %v252, %v250
      %v259 = vunpack.c.l.b16 %v235
      %v260 = vunpack.c.l.b16 %v236
      %v261 = vunpack.c.l.b16 %v237
      %v262 = vunpack.c.l.b16 %v238
      %v263 = vpack.c.b16 %v260, %v259
      %v264 = vpack.c.b16 %v262, %v261
      %vm267 = vcmask 261120
      %v269 = vsel %vm267, %v251, 0
      %v272 = vsel %vm267, %v254, 0
      %274 = vmatprep.subr.bf16.mxu0 0
      %275 = vmatpush1.bf16.msra.mxu0 0
      %276 = vmatprep.subr.bf16.mxu0 0
      %277 = vmatpush1.bf16.msra.mxu0 0
      %278 = vmatprep.subr.bf16.mxu0 0
      %279 = vmatpush1.bf16.msra.mxu0 0
      %280 = vmatprep.subr.bf16.mxu0 0
      %281 = vmatpush1.bf16.msra.mxu0 0
      %282 = vmatprep.subr.bf16.mxu0 0
      %283 = vmatpush1.bf16.msra.mxu0 0
      %284 = vmatprep.subr.bf16.mxu0 0
      %285 = vmatpush1.bf16.msra.mxu0 0
      %286 = vmatprep.subr.bf16.mxu0 0
      %287 = vmatpush1.bf16.msra.mxu0 %v264
      %288 = vmatprep.subr.bf16.mxu0 0
      %289 = vmatpush1.bf16.msra.mxu0 %v263
      %290 = vmatprep.subr.bf16.mxu0 0
      %291 = vmatpush2.bf16.msra.mxu0 0
      %292 = vmatprep.subr.bf16.mxu0 0
      %293 = vmatpush2.bf16.msra.mxu0 0
      %294 = vmatprep.subr.bf16.mxu0 0
      %295 = vmatpush2.bf16.msra.mxu0 0
      %296 = vmatprep.subr.bf16.mxu0 0
      %297 = vmatpush2.bf16.msra.mxu0 0
      %298 = vmatprep.subr.bf16.mxu0 0
      %299 = vmatpush2.bf16.msra.mxu0 0
      %300 = vmatprep.subr.bf16.mxu0 0
      %301 = vmatpush2.bf16.msra.mxu0 0
      %302 = vmatprep.subr.bf16.mxu0 0
      %303 = vmatpush2.bf16.msra.mxu0 0
      %304 = vmatprep.subr.bf16.mxu0 0
      %305 = vmatpush2.bf16.msra.mxu0 0
      %306 = vmatprep.mubr.bf16.mxu0 0
      %307 = vmatmul.mubr.bf16.gmra.mxu0 %v269
      %v308 = vpop.f32.mrf.mxu0
      %v309 = vadd.f32 0.0, %v308
      %v310 = vpop.f32.mrf.mxu0
      %v311 = vpop.f32.mrf.mxu0
      %v312 = vadd.f32 0.0, %v311
      %v313 = vpop.f32.mrf.mxu0
      %314 = vmatprep.mubr.bf16.mxu0 0
      %315 = vmatmul.mubr.bf16.gmra.mxu0 %v272
      %v316 = vpop.f32.mrf.mxu0
      %v317 = vadd.f32 0.0, %v316
      %v318 = vpop.f32.mrf.mxu0
      %v319 = vpop.f32.mrf.mxu0
      %v320 = vpop.f32.mrf.mxu0
      %321 = vdwg.mxu0
      %v326 = vunpack.c.l.b16 %v230
      %v327 = vunpack.c.l.b16 %v231
      %v328 = vunpack.c.l.b16 %v232
      %v329 = vunpack.c.l.b16 %v233
      %v330 = vpack.c.b16 %v327, %v326
      %v331 = vpack.c.b16 %v329, %v328
      %v334 = vsel %vm267, %v228, 0
      %v336 = vsel %vm267, %v229, 0
      %338 = vmatprep.subr.bf16.mxu0 0
      %339 = vmatpush1.bf16.msra.mxu0 0
      %340 = vmatprep.subr.bf16.mxu0 0
      %341 = vmatpush1.bf16.msra.mxu0 0
      %342 = vmatprep.subr.bf16.mxu0 0
      %343 = vmatpush1.bf16.msra.mxu0 0
      %344 = vmatprep.subr.bf16.mxu0 0
      %345 = vmatpush1.bf16.msra.mxu0 0
      %346 = vmatprep.subr.bf16.mxu0 0
      %347 = vmatpush1.bf16.msra.mxu0 0
      %348 = vmatprep.subr.bf16.mxu0 0
      %349 = vmatpush1.bf16.msra.mxu0 0
      %350 = vmatprep.subr.bf16.mxu0 0
      %351 = vmatpush1.bf16.msra.mxu0 %v331
      %352 = vmatprep.subr.bf16.mxu0 0
      %353 = vmatpush1.bf16.msra.mxu0 %v330
      %354 = vmatprep.subr.bf16.mxu0 0
      %355 = vmatpush2.bf16.msra.mxu0 0
      %356 = vmatprep.subr.bf16.mxu0 0
      %357 = vmatpush2.bf16.msra.mxu0 0
      %358 = vmatprep.subr.bf16.mxu0 0
      %359 = vmatpush2.bf16.msra.mxu0 0
      %360 = vmatprep.subr.bf16.mxu0 0
      %361 = vmatpush2.bf16.msra.mxu0 0
      %362 = vmatprep.subr.bf16.mxu0 0
      %363 = vmatpush2.bf16.msra.mxu0 0
      %364 = vmatprep.subr.bf16.mxu0 0
      %365 = vmatpush2.bf16.msra.mxu0 0
      %366 = vmatprep.subr.bf16.mxu0 0
      %367 = vmatpush2.bf16.msra.mxu0 0
      %368 = vmatprep.subr.bf16.mxu0 0
      %369 = vmatpush2.bf16.msra.mxu0 0
      %370 = vmatprep.mubr.bf16.mxu0 0
      %371 = vmatmul.mubr.bf16.gmra.mxu0 %v334
      %v372 = vpop.f32.mrf.mxu0
      %v373 = vadd.f32 %v309, %v372
      %v374 = vpop.f32.mrf.mxu0
      %v375 = vpop.f32.mrf.mxu0
      %v376 = vadd.f32 %v312, %v375
      %v377 = vpop.f32.mrf.mxu0
      %378 = vmatprep.mubr.bf16.mxu0 0
      %379 = vmatmul.mubr.bf16.gmra.mxu0 %v336
      %v380 = vpop.f32.mrf.mxu0
      %v381 = vadd.f32 %v317, %v380
      %v382 = vpop.f32.mrf.mxu0
      %v383 = vpop.f32.mrf.mxu0
      %v384 = vpop.f32.mrf.mxu0
      %385 = vdwg.mxu0
      %s386 = scalar_lea.vmem %s1, 32
      %v387 = vld [vmem:[%s386] sm:$0xf]
      %v388 = vld [vmem:[%s386 + $0x4] sm:$0xf]
      %v389 = vld [vmem:[%s386 + $0x8] sm:$0xf]
      %v390 = vld [vmem:[%s386 + $0xc] sm:$0xf]
      %vm393 = vcmask 1046528
      %v394 = vrot.slane %v228, 1
      %v395 = vrot.slane %v229, 1
      %v396 = vsel %vm393, %v394, %v395
      %v401 = vunpack.c.l.b16 %v387
      %v402 = vunpack.c.l.b16 %v388
      %v403 = vunpack.c.l.b16 %v389
      %v404 = vunpack.c.l.b16 %v390
      %v405 = vpack.c.b16 %v402, %v401
      %v406 = vpack.c.b16 %v404, %v403
      %v410 = vsel %vm267, %v396, 0
      %v413 = vsel %vm267, %v395, 0
      %415 = vmatprep.subr.bf16.mxu0 0
      %416 = vmatpush1.bf16.msra.mxu0 0
      %417 = vmatprep.subr.bf16.mxu0 0
      %418 = vmatpush1.bf16.msra.mxu0 0
      %419 = vmatprep.subr.bf16.mxu0 0
      %420 = vmatpush1.bf16.msra.mxu0 0
      %421 = vmatprep.subr.bf16.mxu0 0
      %422 = vmatpush1.bf16.msra.mxu0 0
      %423 = vmatprep.subr.bf16.mxu0 0
      %424 = vmatpush1.bf16.msra.mxu0 0
      %425 = vmatprep.subr.bf16.mxu0 0
      %426 = vmatpush1.bf16.msra.mxu0 0
      %427 = vmatprep.subr.bf16.mxu0 0
      %428 = vmatpush1.bf16.msra.mxu0 %v406
      %429 = vmatprep.subr.bf16.mxu0 0
      %430 = vmatpush1.bf16.msra.mxu0 %v405
      %431 = vmatprep.subr.bf16.mxu0 0
      %432 = vmatpush2.bf16.msra.mxu0 0
      %433 = vmatprep.subr.bf16.mxu0 0
      %434 = vmatpush2.bf16.msra.mxu0 0
      %435 = vmatprep.subr.bf16.mxu0 0
      %436 = vmatpush2.bf16.msra.mxu0 0
      %437 = vmatprep.subr.bf16.mxu0 0
      %438 = vmatpush2.bf16.msra.mxu0 0
      %439 = vmatprep.subr.bf16.mxu0 0
      %440 = vmatpush2.bf16.msra.mxu0 0
      %441 = vmatprep.subr.bf16.mxu0 0
      %442 = vmatpush2.bf16.msra.mxu0 0
      %443 = vmatprep.subr.bf16.mxu0 0
      %444 = vmatpush2.bf16.msra.mxu0 0
      %445 = vmatprep.subr.bf16.mxu0 0
      %446 = vmatpush2.bf16.msra.mxu0 0
      %447 = vmatprep.mubr.bf16.mxu0 0
      %448 = vmatmul.mubr.bf16.gmra.mxu0 %v410
      %v449 = vpop.f32.mrf.mxu0
      %v450 = vadd.f32 0.0, %v449
      %v451 = vpop.f32.mrf.mxu0
      %v452 = vpop.f32.mrf.mxu0
      %v453 = vadd.f32 0.0, %v452
      %v454 = vpop.f32.mrf.mxu0
      %455 = vmatprep.mubr.bf16.mxu0 0
      %456 = vmatmul.mubr.bf16.gmra.mxu0 %v413
      %v457 = vpop.f32.mrf.mxu0
      %v458 = vadd.f32 0.0, %v457
      %v459 = vpop.f32.mrf.mxu0
      %v460 = vpop.f32.mrf.mxu0
      %v461 = vpop.f32.mrf.mxu0
      %462 = vdwg.mxu0
      %v463 = vadd.f32 %v373, %v450
      %v464 = vadd.f32 %v376, %v453
      %v465 = vadd.f32 %v381, %v458
      %s466 = scalar_lea.vmem %s1, 48
      %v467 = vld [vmem:[%s466] sm:$0xf]
      %v468 = vld [vmem:[%s466 + $0x4] sm:$0xf]
      %v469 = vld [vmem:[%s466 + $0x8] sm:$0xf]
      %v470 = vld [vmem:[%s466 + $0xc] sm:$0xf]
      %vm471 = vsmask.f32 6400
      %v472 = vrot.slane %v241, 1
      %v473 = vrot.slane %v243, 2
      %v474 = vor.u32 %v472, %v473
      %v475 = vrot.slane %v252, 1
      %v476 = vrot.slane %v248, 2
      %v477 = vor.u32 %v475, %v476
      %v478 = vsel %vm471, %v474, %v477
      %v483 = vunpack.c.l.b16 %v467
      %v484 = vunpack.c.l.b16 %v468
      %v485 = vunpack.c.l.b16 %v469
      %v486 = vunpack.c.l.b16 %v470
      %v487 = vpack.c.b16 %v484, %v483
      %v488 = vpack.c.b16 %v486, %v485
      %v492 = vsel %vm267, %v478, 0
      %v495 = vsel %vm267, %v477, 0
      %497 = vmatprep.subr.bf16.mxu0 0
      %498 = vmatpush1.bf16.msra.mxu0 0
      %499 = vmatprep.subr.bf16.mxu0 0
      %500 = vmatpush1.bf16.msra.mxu0 0
      %501 = vmatprep.subr.bf16.mxu0 0
      %502 = vmatpush1.bf16.msra.mxu0 0
      %503 = vmatprep.subr.bf16.mxu0 0
      %504 = vmatpush1.bf16.msra.mxu0 0
      %505 = vmatprep.subr.bf16.mxu0 0
      %506 = vmatpush1.bf16.msra.mxu0 0
      %507 = vmatprep.subr.bf16.mxu0 0
      %508 = vmatpush1.bf16.msra.mxu0 0
      %509 = vmatprep.subr.bf16.mxu0 0
      %510 = vmatpush1.bf16.msra.mxu0 %v488
      %511 = vmatprep.subr.bf16.mxu0 0
      %512 = vmatpush1.bf16.msra.mxu0 %v487
      %513 = vmatprep.subr.bf16.mxu0 0
      %514 = vmatpush2.bf16.msra.mxu0 0
      %515 = vmatprep.subr.bf16.mxu0 0
      %516 = vmatpush2.bf16.msra.mxu0 0
      %517 = vmatprep.subr.bf16.mxu0 0
      %518 = vmatpush2.bf16.msra.mxu0 0
      %519 = vmatprep.subr.bf16.mxu0 0
      %520 = vmatpush2.bf16.msra.mxu0 0
      %521 = vmatprep.subr.bf16.mxu0 0
      %522 = vmatpush2.bf16.msra.mxu0 0
      %523 = vmatprep.subr.bf16.mxu0 0
      %524 = vmatpush2.bf16.msra.mxu0 0
      %525 = vmatprep.subr.bf16.mxu0 0
      %526 = vmatpush2.bf16.msra.mxu0 0
      %527 = vmatprep.subr.bf16.mxu0 0
      %528 = vmatpush2.bf16.msra.mxu0 0
      %529 = vmatprep.mubr.bf16.mxu0 0
      %530 = vmatmul.mubr.bf16.gmra.mxu0 %v492
      %v531 = vpop.f32.mrf.mxu0
      %v532 = vadd.f32 0.0, %v531
      %v533 = vpop.f32.mrf.mxu0
      %v534 = vpop.f32.mrf.mxu0
      %v535 = vadd.f32 0.0, %v534
      %v536 = vpop.f32.mrf.mxu0
      %537 = vmatprep.mubr.bf16.mxu0 0
      %538 = vmatmul.mubr.bf16.gmra.mxu0 %v495
      %v539 = vpop.f32.mrf.mxu0
      %v540 = vadd.f32 0.0, %v539
      %v541 = vpop.f32.mrf.mxu0
      %v542 = vpop.f32.mrf.mxu0
      %v543 = vpop.f32.mrf.mxu0
      %544 = vdwg.mxu0
      %v545 = vadd.f32 %v463, %v532
      %v546 = vadd.f32 %v464, %v535
      %v547 = vadd.f32 %v465, %v540
      %s548 = scalar_lea.vmem %s1, 64
      %v549 = vld [vmem:[%s548] sm:$0xf]
      %v550 = vld [vmem:[%s548 + $0x4] sm:$0xf]
      %v551 = vld [vmem:[%s548 + $0x8] sm:$0xf]
      %v552 = vld [vmem:[%s548 + $0xc] sm:$0xf]
      %vm553 = vcmask 1045504
      %v554 = vrot.slane %v228, 2
      %v555 = vrot.slane %v229, 2
      %v556 = vsel %vm553, %v554, %v555
      %v561 = vunpack.c.l.b16 %v549
      %v562 = vunpack.c.l.b16 %v550
      %v563 = vunpack.c.l.b16 %v551
      %v564 = vunpack.c.l.b16 %v552
      %v565 = vpack.c.b16 %v562, %v561
      %v566 = vpack.c.b16 %v564, %v563
      %v570 = vsel %vm267, %v556, 0
      %v573 = vsel %vm267, %v555, 0
      %575 = vmatprep.subr.bf16.mxu0 0
      %576 = vmatpush1.bf16.msra.mxu0 0
      %577 = vmatprep.subr.bf16.mxu0 0
      %578 = vmatpush1.bf16.msra.mxu0 0
      %579 = vmatprep.subr.bf16.mxu0 0
      %580 = vmatpush1.bf16.msra.mxu0 0
      %581 = vmatprep.subr.bf16.mxu0 0
      %582 = vmatpush1.bf16.msra.mxu0 0
      %583 = vmatprep.subr.bf16.mxu0 0
      %584 = vmatpush1.bf16.msra.mxu0 0
      %585 = vmatprep.subr.bf16.mxu0 0
      %586 = vmatpush1.bf16.msra.mxu0 0
      %587 = vmatprep.subr.bf16.mxu0 0
      %588 = vmatpush1.bf16.msra.mxu0 %v566
      %589 = vmatprep.subr.bf16.mxu0 0
      %590 = vmatpush1.bf16.msra.mxu0 %v565
      %591 = vmatprep.subr.bf16.mxu0 0
      %592 = vmatpush2.bf16.msra.mxu0 0
      %593 = vmatprep.subr.bf16.mxu0 0
      %594 = vmatpush2.bf16.msra.mxu0 0
      %595 = vmatprep.subr.bf16.mxu0 0
      %596 = vmatpush2.bf16.msra.mxu0 0
      %597 = vmatprep.subr.bf16.mxu0 0
      %598 = vmatpush2.bf16.msra.mxu0 0
      %599 = vmatprep.subr.bf16.mxu0 0
      %600 = vmatpush2.bf16.msra.mxu0 0
      %601 = vmatprep.subr.bf16.mxu0 0
      %602 = vmatpush2.bf16.msra.mxu0 0
      %603 = vmatprep.subr.bf16.mxu0 0
      %604 = vmatpush2.bf16.msra.mxu0 0
      %605 = vmatprep.subr.bf16.mxu0 0
      %606 = vmatpush2.bf16.msra.mxu0 0
      %607 = vmatprep.mubr.bf16.mxu0 0
      %608 = vmatmul.mubr.bf16.gmra.mxu0 %v570
      %v609 = vpop.f32.mrf.mxu0
      %v610 = vadd.f32 0.0, %v609
      %v611 = vpop.f32.mrf.mxu0
      %v612 = vpop.f32.mrf.mxu0
      %v613 = vadd.f32 0.0, %v612
      %v614 = vpop.f32.mrf.mxu0
      %615 = vmatprep.mubr.bf16.mxu0 0
      %616 = vmatmul.mubr.bf16.gmra.mxu0 %v573
      %v617 = vpop.f32.mrf.mxu0
      %v618 = vadd.f32 0.0, %v617
      %v619 = vpop.f32.mrf.mxu0
      %v620 = vpop.f32.mrf.mxu0
      %v621 = vpop.f32.mrf.mxu0
      %622 = vdwg.mxu0
      %v623 = vadd.f32 %v545, %v610
      %v624 = vadd.f32 %v546, %v613
      %v625 = vadd.f32 %v547, %v618
      %s626 = scalar_lea.vmem %s1, 80
      %v627 = vld [vmem:[%s626] sm:$0xf]
      %v628 = vld [vmem:[%s626 + $0x4] sm:$0xf]
      %v629 = vld [vmem:[%s626 + $0x8] sm:$0xf]
      %v630 = vld [vmem:[%s626 + $0xc] sm:$0xf]
      %vm631 = vsmask.f32 5376
      %v632 = vrot.slane %v241, 2
      %v633 = vrot.slane %v243, 3
      %v634 = vor.u32 %v632, %v633
      %v635 = vrot.slane %v252, 2
      %v636 = vrot.slane %v248, 3
      %v637 = vor.u32 %v635, %v636
      %v638 = vsel %vm631, %v634, %v637
      %v643 = vunpack.c.l.b16 %v627
      %v644 = vunpack.c.l.b16 %v628
      %v645 = vunpack.c.l.b16 %v629
      %v646 = vunpack.c.l.b16 %v630
      %v647 = vpack.c.b16 %v644, %v643
      %v648 = vpack.c.b16 %v646, %v645
      %v652 = vsel %vm267, %v638, 0
      %v655 = vsel %vm267, %v637, 0
      %657 = vmatprep.subr.bf16.mxu0 0
      %658 = vmatpush1.bf16.msra.mxu0 0
      %659 = vmatprep.subr.bf16.mxu0 0
      %660 = vmatpush1.bf16.msra.mxu0 0
      %661 = vmatprep.subr.bf16.mxu0 0
      %662 = vmatpush1.bf16.msra.mxu0 0
      %663 = vmatprep.subr.bf16.mxu0 0
      %664 = vmatpush1.bf16.msra.mxu0 0
      %665 = vmatprep.subr.bf16.mxu0 0
      %666 = vmatpush1.bf16.msra.mxu0 0
      %667 = vmatprep.subr.bf16.mxu0 0
      %668 = vmatpush1.bf16.msra.mxu0 0
      %669 = vmatprep.subr.bf16.mxu0 0
      %670 = vmatpush1.bf16.msra.mxu0 %v648
      %671 = vmatprep.subr.bf16.mxu0 0
      %672 = vmatpush1.bf16.msra.mxu0 %v647
      %673 = vmatprep.subr.bf16.mxu0 0
      %674 = vmatpush2.bf16.msra.mxu0 0
      %675 = vmatprep.subr.bf16.mxu0 0
      %676 = vmatpush2.bf16.msra.mxu0 0
      %677 = vmatprep.subr.bf16.mxu0 0
      %678 = vmatpush2.bf16.msra.mxu0 0
      %679 = vmatprep.subr.bf16.mxu0 0
      %680 = vmatpush2.bf16.msra.mxu0 0
      %681 = vmatprep.subr.bf16.mxu0 0
      %682 = vmatpush2.bf16.msra.mxu0 0
      %683 = vmatprep.subr.bf16.mxu0 0
      %684 = vmatpush2.bf16.msra.mxu0 0
      %685 = vmatprep.subr.bf16.mxu0 0
      %686 = vmatpush2.bf16.msra.mxu0 0
      %687 = vmatprep.subr.bf16.mxu0 0
      %688 = vmatpush2.bf16.msra.mxu0 0
      %689 = vmatprep.mubr.bf16.mxu0 0
      %690 = vmatmul.mubr.bf16.gmra.mxu0 %v652
      %v691 = vpop.f32.mrf.mxu0
      %v692 = vadd.f32 0.0, %v691
      %v693 = vpop.f32.mrf.mxu0
      %v694 = vpop.f32.mrf.mxu0
      %v695 = vadd.f32 0.0, %v694
      %v696 = vpop.f32.mrf.mxu0
      %697 = vmatprep.mubr.bf16.mxu0 0
      %698 = vmatmul.mubr.bf16.gmra.mxu0 %v655
      %v699 = vpop.f32.mrf.mxu0
      %v700 = vadd.f32 0.0, %v699
      %v701 = vpop.f32.mrf.mxu0
      %v702 = vpop.f32.mrf.mxu0
      %v703 = vpop.f32.mrf.mxu0
      %704 = vdwg.mxu0
      %v705 = vadd.f32 %v623, %v692
      %v706 = vadd.f32 %v624, %v695
      %v707 = vadd.f32 %v625, %v700
      %s708 = scalar_lea.vmem %s1, 96
      %v709 = vld [vmem:[%s708] sm:$0xf]
      %v710 = vld [vmem:[%s708 + $0x4] sm:$0xf]
      %v711 = vld [vmem:[%s708 + $0x8] sm:$0xf]
      %v712 = vld [vmem:[%s708 + $0xc] sm:$0xf]
      %vm713 = vcmask 1044480
      %v714 = vrot.slane %v228, 3
      %v715 = vrot.slane %v229, 3
      %v716 = vsel %vm713, %v714, %v715
      %v721 = vunpack.c.l.b16 %v709
      %v722 = vunpack.c.l.b16 %v710
      %v723 = vunpack.c.l.b16 %v711
      %v724 = vunpack.c.l.b16 %v712
      %v725 = vpack.c.b16 %v722, %v721
      %v726 = vpack.c.b16 %v724, %v723
      %v730 = vsel %vm267, %v716, 0
      %v733 = vsel %vm267, %v715, 0
      %735 = vmatprep.subr.bf16.mxu0 0
      %736 = vmatpush1.bf16.msra.mxu0 0
      %737 = vmatprep.subr.bf16.mxu0 0
      %738 = vmatpush1.bf16.msra.mxu0 0
      %739 = vmatprep.subr.bf16.mxu0 0
      %740 = vmatpush1.bf16.msra.mxu0 0
      %741 = vmatprep.subr.bf16.mxu0 0
      %742 = vmatpush1.bf16.msra.mxu0 0
      %743 = vmatprep.subr.bf16.mxu0 0
      %744 = vmatpush1.bf16.msra.mxu0 0
      %745 = vmatprep.subr.bf16.mxu0 0
      %746 = vmatpush1.bf16.msra.mxu0 0
      %747 = vmatprep.subr.bf16.mxu0 0
      %748 = vmatpush1.bf16.msra.mxu0 %v726
      %749 = vmatprep.subr.bf16.mxu0 0
      %750 = vmatpush1.bf16.msra.mxu0 %v725
      %751 = vmatprep.subr.bf16.mxu0 0
      %752 = vmatpush2.bf16.msra.mxu0 0
      %753 = vmatprep.subr.bf16.mxu0 0
      %754 = vmatpush2.bf16.msra.mxu0 0
      %755 = vmatprep.subr.bf16.mxu0 0
      %756 = vmatpush2.bf16.msra.mxu0 0
      %757 = vmatprep.subr.bf16.mxu0 0
      %758 = vmatpush2.bf16.msra.mxu0 0
      %759 = vmatprep.subr.bf16.mxu0 0
      %760 = vmatpush2.bf16.msra.mxu0 0
      %761 = vmatprep.subr.bf16.mxu0 0
      %762 = vmatpush2.bf16.msra.mxu0 0
      %763 = vmatprep.subr.bf16.mxu0 0
      %764 = vmatpush2.bf16.msra.mxu0 0
      %765 = vmatprep.subr.bf16.mxu0 0
      %766 = vmatpush2.bf16.msra.mxu0 0
      %767 = vmatprep.mubr.bf16.mxu0 0
      %768 = vmatmul.mubr.bf16.gmra.mxu0 %v730
      %v769 = vpop.f32.mrf.mxu0
      %v770 = vadd.f32 0.0, %v769
      %v771 = vpop.f32.mrf.mxu0
      %v772 = vpop.f32.mrf.mxu0
      %v773 = vadd.f32 0.0, %v772
      %v774 = vpop.f32.mrf.mxu0
      %775 = vmatprep.mubr.bf16.mxu0 0
      %776 = vmatmul.mubr.bf16.gmra.mxu0 %v733
      %v777 = vpop.f32.mrf.mxu0
      %v778 = vadd.f32 0.0, %v777
      %v779 = vpop.f32.mrf.mxu0
      %v780 = vpop.f32.mrf.mxu0
      %v781 = vpop.f32.mrf.mxu0
      %782 = vdwg.mxu0
      %v783 = vadd.f32 %v705, %v770
      %v784 = vadd.f32 %v706, %v773
      %v785 = vadd.f32 %v707, %v778
      %v786 = vpack.c.bf16 %v227, %v226
      %s787 = scalar_lea.vmem %s1, 112
      %v788 = vld [vmem:[%s787] sm:$0xf]
      %v789 = vld [vmem:[%s787 + $0x4] sm:$0xf]
      %v790 = vld [vmem:[%s787 + $0x8] sm:$0xf]
      %v791 = vld [vmem:[%s787 + $0xc] sm:$0xf]
      %vm792 = vsmask.f32 4352
      %v793 = vrot.slane %v241, 3
      %v794 = vrot.slane %v243, 4
      %v795 = vor.u32 %v793, %v794
      %v797 = vshrl.u32 %v786, 16
      %v799 = vrot.slane %v797, 3
      %v800 = vshll.u32 %v786, 16
      %v802 = vrot.slane %v800, 4
      %v803 = vor.u32 %v799, %v802
      %v804 = vsel %vm792, %v795, %v803
      %v809 = vunpack.c.l.b16 %v788
      %v810 = vunpack.c.l.b16 %v789
      %v811 = vunpack.c.l.b16 %v790
      %v812 = vunpack.c.l.b16 %v791
      %v813 = vpack.c.b16 %v810, %v809
      %v814 = vpack.c.b16 %v812, %v811
      %v818 = vsel %vm267, %v804, 0
      %v821 = vsel %vm267, %v803, 0
      %823 = vmatprep.subr.bf16.mxu0 0
      %824 = vmatpush1.bf16.msra.mxu0 0
      %825 = vmatprep.subr.bf16.mxu0 0
      %826 = vmatpush1.bf16.msra.mxu0 0
      %827 = vmatprep.subr.bf16.mxu0 0
      %828 = vmatpush1.bf16.msra.mxu0 0
      %829 = vmatprep.subr.bf16.mxu0 0
      %830 = vmatpush1.bf16.msra.mxu0 0
      %831 = vmatprep.subr.bf16.mxu0 0
      %832 = vmatpush1.bf16.msra.mxu0 0
      %833 = vmatprep.subr.bf16.mxu0 0
      %834 = vmatpush1.bf16.msra.mxu0 0
      %835 = vmatprep.subr.bf16.mxu0 0
      %836 = vmatpush1.bf16.msra.mxu0 %v814
      %837 = vmatprep.subr.bf16.mxu0 0
      %838 = vmatpush1.bf16.msra.mxu0 %v813
      %839 = vmatprep.subr.bf16.mxu0 0
      %840 = vmatpush2.bf16.msra.mxu0 0
      %841 = vmatprep.subr.bf16.mxu0 0
      %842 = vmatpush2.bf16.msra.mxu0 0
      %843 = vmatprep.subr.bf16.mxu0 0
      %844 = vmatpush2.bf16.msra.mxu0 0
      %845 = vmatprep.subr.bf16.mxu0 0
      %846 = vmatpush2.bf16.msra.mxu0 0
      %847 = vmatprep.subr.bf16.mxu0 0
      %848 = vmatpush2.bf16.msra.mxu0 0
      %849 = vmatprep.subr.bf16.mxu0 0
      %850 = vmatpush2.bf16.msra.mxu0 0
      %851 = vmatprep.subr.bf16.mxu0 0
      %852 = vmatpush2.bf16.msra.mxu0 0
      %853 = vmatprep.subr.bf16.mxu0 0
      %854 = vmatpush2.bf16.msra.mxu0 0
      %855 = vmatprep.mubr.bf16.mxu0 0
      %856 = vmatmul.mubr.bf16.gmra.mxu0 %v818
      %v857 = vpop.f32.mrf.mxu0
      %v858 = vadd.f32 0.0, %v857
      %v859 = vpop.f32.mrf.mxu0
      %v860 = vpop.f32.mrf.mxu0
      %v861 = vadd.f32 0.0, %v860
      %v862 = vpop.f32.mrf.mxu0
      %863 = vmatprep.mubr.bf16.mxu0 0
      %864 = vmatmul.mubr.bf16.gmra.mxu0 %v821
      %v865 = vpop.f32.mrf.mxu0
      %v866 = vadd.f32 0.0, %v865
      %v867 = vpop.f32.mrf.mxu0
      %v868 = vpop.f32.mrf.mxu0
      %v869 = vpop.f32.mrf.mxu0
      %870 = vdwg.mxu0
      %v871 = vadd.f32 %v783, %v858
      %v872 = vadd.f32 %v784, %v861
      %v873 = vadd.f32 %v785, %v866
      %v874 = vpack.c.bf16 %v226, %v225
      %v875 = vpack.c.bf16 %v227, %v227
      %s876 = scalar_lea.vmem %s1, 128
      %v877 = vld [vmem:[%s876] sm:$0xf]
      %v878 = vld [vmem:[%s876 + $0x4] sm:$0xf]
      %v879 = vld [vmem:[%s876 + $0x8] sm:$0xf]
      %v880 = vld [vmem:[%s876 + $0xc] sm:$0xf]
      %v885 = vunpack.c.l.b16 %v877
      %v886 = vunpack.c.l.b16 %v878
      %v887 = vunpack.c.l.b16 %v879
      %v888 = vunpack.c.l.b16 %v880
      %v889 = vpack.c.b16 %v886, %v885
      %v890 = vpack.c.b16 %v888, %v887
      %v894 = vsel %vm267, %v874, 0
      %v897 = vsel %vm267, %v875, 0
      %899 = vmatprep.subr.bf16.mxu0 0
      %900 = vmatpush1.bf16.msra.mxu0 0
      %901 = vmatprep.subr.bf16.mxu0 0
      %902 = vmatpush1.bf16.msra.mxu0 0
      %903 = vmatprep.subr.bf16.mxu0 0
      %904 = vmatpush1.bf16.msra.mxu0 0
      %905 = vmatprep.subr.bf16.mxu0 0
      %906 = vmatpush1.bf16.msra.mxu0 0
      %907 = vmatprep.subr.bf16.mxu0 0
      %908 = vmatpush1.bf16.msra.mxu0 0
      %909 = vmatprep.subr.bf16.mxu0 0
      %910 = vmatpush1.bf16.msra.mxu0 0
      %911 = vmatprep.subr.bf16.mxu0 0
      %912 = vmatpush1.bf16.msra.mxu0 %v890
      %913 = vmatprep.subr.bf16.mxu0 0
      %914 = vmatpush1.bf16.msra.mxu0 %v889
      %915 = vmatprep.subr.bf16.mxu0 0
      %916 = vmatpush2.bf16.msra.mxu0 0
      %917 = vmatprep.subr.bf16.mxu0 0
      %918 = vmatpush2.bf16.msra.mxu0 0
      %919 = vmatprep.subr.bf16.mxu0 0
      %920 = vmatpush2.bf16.msra.mxu0 0
      %921 = vmatprep.subr.bf16.mxu0 0
      %922 = vmatpush2.bf16.msra.mxu0 0
      %923 = vmatprep.subr.bf16.mxu0 0
      %924 = vmatpush2.bf16.msra.mxu0 0
      %925 = vmatprep.subr.bf16.mxu0 0
      %926 = vmatpush2.bf16.msra.mxu0 0
      %927 = vmatprep.subr.bf16.mxu0 0
      %928 = vmatpush2.bf16.msra.mxu0 0
      %929 = vmatprep.subr.bf16.mxu0 0
      %930 = vmatpush2.bf16.msra.mxu0 0
      %931 = vmatprep.mubr.bf16.mxu0 0
      %932 = vmatmul.mubr.bf16.gmra.mxu0 %v894
      %v933 = vpop.f32.mrf.mxu0
      %v934 = vadd.f32 0.0, %v933
      %v935 = vpop.f32.mrf.mxu0
      %v936 = vpop.f32.mrf.mxu0
      %v937 = vadd.f32 0.0, %v936
      %v938 = vpop.f32.mrf.mxu0
      %939 = vmatprep.mubr.bf16.mxu0 0
      %940 = vmatmul.mubr.bf16.gmra.mxu0 %v897
      %v941 = vpop.f32.mrf.mxu0
      %v942 = vadd.f32 0.0, %v941
      %v943 = vpop.f32.mrf.mxu0
      %v944 = vpop.f32.mrf.mxu0
      %v945 = vpop.f32.mrf.mxu0
      %946 = vdwg.mxu0
      %v947 = vadd.f32 %v871, %v934
      %v948 = vadd.f32 %v872, %v937
      %v949 = vadd.f32 %v873, %v942
      %s950 = scalar_lea.vmem %s1, 144
      %v951 = vld [vmem:[%s950] sm:$0xf]
      %v952 = vld [vmem:[%s950 + $0x4] sm:$0xf]
      %v953 = vld [vmem:[%s950 + $0x8] sm:$0xf]
      %v954 = vld [vmem:[%s950 + $0xc] sm:$0xf]
      %v955 = vshrl.u32 %v874, 16
      %v957 = vshll.u32 %v874, 16
      %v959 = vrot.slane %v957, 1
      %v960 = vor.u32 %v955, %v959
      %v961 = vshll.u32 %v875, 16
      %v963 = vrot.slane %v961, 1
      %v964 = vsel %vm239, %v960, %v963
      %v965 = vshrl.u32 %v875, 16
      %v967 = vor.u32 %v965, %v963
      %v972 = vunpack.c.l.b16 %v951
      %v973 = vunpack.c.l.b16 %v952
      %v974 = vunpack.c.l.b16 %v953
      %v975 = vunpack.c.l.b16 %v954
      %v976 = vpack.c.b16 %v973, %v972
      %v977 = vpack.c.b16 %v975, %v974
      %v981 = vsel %vm267, %v964, 0
      %v984 = vsel %vm267, %v967, 0
      %986 = vmatprep.subr.bf16.mxu0 0
      %987 = vmatpush1.bf16.msra.mxu0 0
      %988 = vmatprep.subr.bf16.mxu0 0
      %989 = vmatpush1.bf16.msra.mxu0 0
      %990 = vmatprep.subr.bf16.mxu0 0
      %991 = vmatpush1.bf16.msra.mxu0 0
      %992 = vmatprep.subr.bf16.mxu0 0
      %993 = vmatpush1.bf16.msra.mxu0 0
      %994 = vmatprep.subr.bf16.mxu0 0
      %995 = vmatpush1.bf16.msra.mxu0 0
      %996 = vmatprep.subr.bf16.mxu0 0
      %997 = vmatpush1.bf16.msra.mxu0 0
      %998 = vmatprep.subr.bf16.mxu0 0
      %999 = vmatpush1.bf16.msra.mxu0 %v977
      %1000 = vmatprep.subr.bf16.mxu0 0
      %1001 = vmatpush1.bf16.msra.mxu0 %v976
      %1002 = vmatprep.subr.bf16.mxu0 0
      %1003 = vmatpush2.bf16.msra.mxu0 0
      %1004 = vmatprep.subr.bf16.mxu0 0
      %1005 = vmatpush2.bf16.msra.mxu0 0
      %1006 = vmatprep.subr.bf16.mxu0 0
      %1007 = vmatpush2.bf16.msra.mxu0 0
      %1008 = vmatprep.subr.bf16.mxu0 0
      %1009 = vmatpush2.bf16.msra.mxu0 0
      %1010 = vmatprep.subr.bf16.mxu0 0
      %1011 = vmatpush2.bf16.msra.mxu0 0
      %1012 = vmatprep.subr.bf16.mxu0 0
      %1013 = vmatpush2.bf16.msra.mxu0 0
      %1014 = vmatprep.subr.bf16.mxu0 0
      %1015 = vmatpush2.bf16.msra.mxu0 0
      %1016 = vmatprep.subr.bf16.mxu0 0
      %1017 = vmatpush2.bf16.msra.mxu0 0
      %1018 = vmatprep.mubr.bf16.mxu0 0
      %1019 = vmatmul.mubr.bf16.gmra.mxu0 %v981
      %v1020 = vpop.f32.mrf.mxu0
      %v1021 = vadd.f32 0.0, %v1020
      %v1022 = vpop.f32.mrf.mxu0
      %v1023 = vpop.f32.mrf.mxu0
      %v1024 = vadd.f32 0.0, %v1023
      %v1025 = vpop.f32.mrf.mxu0
      %1026 = vmatprep.mubr.bf16.mxu0 0
      %1027 = vmatmul.mubr.bf16.gmra.mxu0 %v984
      %v1028 = vpop.f32.mrf.mxu0
      %v1029 = vadd.f32 0.0, %v1028
      %v1030 = vpop.f32.mrf.mxu0
      %v1031 = vpop.f32.mrf.mxu0
      %v1032 = vpop.f32.mrf.mxu0
      %1033 = vdwg.mxu0
      %v1034 = vadd.f32 %v947, %v1021
      %v1035 = vadd.f32 %v948, %v1024
      %v1036 = vadd.f32 %v949, %v1029
      %s1037 = scalar_lea.vmem %s1, 160
      %v1038 = vld [vmem:[%s1037] sm:$0xf]
      %v1039 = vld [vmem:[%s1037 + $0x4] sm:$0xf]
      %v1040 = vld [vmem:[%s1037 + $0x8] sm:$0xf]
      %v1041 = vld [vmem:[%s1037 + $0xc] sm:$0xf]
      %v1044 = vrot.slane %v874, 1
      %v1045 = vrot.slane %v875, 1
      %v1046 = vsel %vm393, %v1044, %v1045
      %v1051 = vunpack.c.l.b16 %v1038
      %v1052 = vunpack.c.l.b16 %v1039
      %v1053 = vunpack.c.l.b16 %v1040
      %v1054 = vunpack.c.l.b16 %v1041
      %v1055 = vpack.c.b16 %v1052, %v1051
      %v1056 = vpack.c.b16 %v1054, %v1053
      %v1060 = vsel %vm267, %v1046, 0
      %v1063 = vsel %vm267, %v1045, 0
      %1065 = vmatprep.subr.bf16.mxu0 0
      %1066 = vmatpush1.bf16.msra.mxu0 0
      %1067 = vmatprep.subr.bf16.mxu0 0
      %1068 = vmatpush1.bf16.msra.mxu0 0
      %1069 = vmatprep.subr.bf16.mxu0 0
      %1070 = vmatpush1.bf16.msra.mxu0 0
      %1071 = vmatprep.subr.bf16.mxu0 0
      %1072 = vmatpush1.bf16.msra.mxu0 0
      %1073 = vmatprep.subr.bf16.mxu0 0
      %1074 = vmatpush1.bf16.msra.mxu0 0
      %1075 = vmatprep.subr.bf16.mxu0 0
      %1076 = vmatpush1.bf16.msra.mxu0 0
      %1077 = vmatprep.subr.bf16.mxu0 0
      %1078 = vmatpush1.bf16.msra.mxu0 %v1056
      %1079 = vmatprep.subr.bf16.mxu0 0
      %1080 = vmatpush1.bf16.msra.mxu0 %v1055
      %1081 = vmatprep.subr.bf16.mxu0 0
      %1082 = vmatpush2.bf16.msra.mxu0 0
      %1083 = vmatprep.subr.bf16.mxu0 0
      %1084 = vmatpush2.bf16.msra.mxu0 0
      %1085 = vmatprep.subr.bf16.mxu0 0
      %1086 = vmatpush2.bf16.msra.mxu0 0
      %1087 = vmatprep.subr.bf16.mxu0 0
      %1088 = vmatpush2.bf16.msra.mxu0 0
      %1089 = vmatprep.subr.bf16.mxu0 0
      %1090 = vmatpush2.bf16.msra.mxu0 0
      %1091 = vmatprep.subr.bf16.mxu0 0
      %1092 = vmatpush2.bf16.msra.mxu0 0
      %1093 = vmatprep.subr.bf16.mxu0 0
      %1094 = vmatpush2.bf16.msra.mxu0 0
      %1095 = vmatprep.subr.bf16.mxu0 0
      %1096 = vmatpush2.bf16.msra.mxu0 0
      %1097 = vmatprep.mubr.bf16.mxu0 0
      %1098 = vmatmul.mubr.bf16.gmra.mxu0 %v1060
      %v1099 = vpop.f32.mrf.mxu0
      %v1100 = vadd.f32 0.0, %v1099
      %v1101 = vpop.f32.mrf.mxu0
      %v1102 = vpop.f32.mrf.mxu0
      %v1103 = vadd.f32 0.0, %v1102
      %v1104 = vpop.f32.mrf.mxu0
      %1105 = vmatprep.mubr.bf16.mxu0 0
      %1106 = vmatmul.mubr.bf16.gmra.mxu0 %v1063
      %v1107 = vpop.f32.mrf.mxu0
      %v1108 = vadd.f32 0.0, %v1107
      %v1109 = vpop.f32.mrf.mxu0
      %v1110 = vpop.f32.mrf.mxu0
      %v1111 = vpop.f32.mrf.mxu0
      %1112 = vdwg.mxu0
      %v1113 = vadd.f32 %v1034, %v1100
      %v1114 = vadd.f32 %v1035, %v1103
      %v1115 = vadd.f32 %v1036, %v1108
      %s1116 = scalar_lea.vmem %s1, 176
      %v1117 = vld [vmem:[%s1116] sm:$0xf]
      %v1118 = vld [vmem:[%s1116 + $0x4] sm:$0xf]
      %v1119 = vld [vmem:[%s1116 + $0x8] sm:$0xf]
      %v1120 = vld [vmem:[%s1116 + $0xc] sm:$0xf]
      %v1121 = vrot.slane %v955, 1
      %v1122 = vrot.slane %v957, 2
      %v1123 = vor.u32 %v1121, %v1122
      %v1124 = vrot.slane %v965, 1
      %v1125 = vrot.slane %v961, 2
      %v1126 = vor.u32 %v1124, %v1125
      %v1127 = vsel %vm471, %v1123, %v1126
      %v1132 = vunpack.c.l.b16 %v1117
      %v1133 = vunpack.c.l.b16 %v1118
      %v1134 = vunpack.c.l.b16 %v1119
      %v1135 = vunpack.c.l.b16 %v1120
      %v1136 = vpack.c.b16 %v1133, %v1132
      %v1137 = vpack.c.b16 %v1135, %v1134
      %v1141 = vsel %vm267, %v1127, 0
      %v1144 = vsel %vm267, %v1126, 0
      %1146 = vmatprep.subr.bf16.mxu0 0
      %1147 = vmatpush1.bf16.msra.mxu0 0
      %1148 = vmatprep.subr.bf16.mxu0 0
      %1149 = vmatpush1.bf16.msra.mxu0 0
      %1150 = vmatprep.subr.bf16.mxu0 0
      %1151 = vmatpush1.bf16.msra.mxu0 0
      %1152 = vmatprep.subr.bf16.mxu0 0
      %1153 = vmatpush1.bf16.msra.mxu0 0
      %1154 = vmatprep.subr.bf16.mxu0 0
      %1155 = vmatpush1.bf16.msra.mxu0 0
      %1156 = vmatprep.subr.bf16.mxu0 0
      %1157 = vmatpush1.bf16.msra.mxu0 0
      %1158 = vmatprep.subr.bf16.mxu0 0
      %1159 = vmatpush1.bf16.msra.mxu0 %v1137
      %1160 = vmatprep.subr.bf16.mxu0 0
      %1161 = vmatpush1.bf16.msra.mxu0 %v1136
      %1162 = vmatprep.subr.bf16.mxu0 0
      %1163 = vmatpush2.bf16.msra.mxu0 0
      %1164 = vmatprep.subr.bf16.mxu0 0
      %1165 = vmatpush2.bf16.msra.mxu0 0
      %1166 = vmatprep.subr.bf16.mxu0 0
      %1167 = vmatpush2.bf16.msra.mxu0 0
      %1168 = vmatprep.subr.bf16.mxu0 0
      %1169 = vmatpush2.bf16.msra.mxu0 0
      %1170 = vmatprep.subr.bf16.mxu0 0
      %1171 = vmatpush2.bf16.msra.mxu0 0
      %1172 = vmatprep.subr.bf16.mxu0 0
      %1173 = vmatpush2.bf16.msra.mxu0 0
      %1174 = vmatprep.subr.bf16.mxu0 0
      %1175 = vmatpush2.bf16.msra.mxu0 0
      %1176 = vmatprep.subr.bf16.mxu0 0
      %1177 = vmatpush2.bf16.msra.mxu0 0
      %1178 = vmatprep.mubr.bf16.mxu0 0
      %1179 = vmatmul.mubr.bf16.gmra.mxu0 %v1141
      %v1180 = vpop.f32.mrf.mxu0
      %v1181 = vadd.f32 0.0, %v1180
      %v1182 = vpop.f32.mrf.mxu0
      %v1183 = vpop.f32.mrf.mxu0
      %v1184 = vadd.f32 0.0, %v1183
      %v1185 = vpop.f32.mrf.mxu0
      %1186 = vmatprep.mubr.bf16.mxu0 0
      %1187 = vmatmul.mubr.bf16.gmra.mxu0 %v1144
      %v1188 = vpop.f32.mrf.mxu0
      %v1189 = vadd.f32 0.0, %v1188
      %v1190 = vpop.f32.mrf.mxu0
      %v1191 = vpop.f32.mrf.mxu0
      %v1192 = vpop.f32.mrf.mxu0
      %1193 = vdwg.mxu0
      %v1194 = vadd.f32 %v1113, %v1181
      %v1195 = vadd.f32 %v1114, %v1184
      %v1196 = vadd.f32 %v1115, %v1189
      %s1197 = scalar_lea.vmem %s1, 192
      %v1198 = vld [vmem:[%s1197] sm:$0xf]
      %v1199 = vld [vmem:[%s1197 + $0x4] sm:$0xf]
      %v1200 = vld [vmem:[%s1197 + $0x8] sm:$0xf]
      %v1201 = vld [vmem:[%s1197 + $0xc] sm:$0xf]
      %v1202 = vrot.slane %v874, 2
      %v1203 = vrot.slane %v875, 2
      %v1204 = vsel %vm553, %v1202, %v1203
      %v1209 = vunpack.c.l.b16 %v1198
      %v1210 = vunpack.c.l.b16 %v1199
      %v1211 = vunpack.c.l.b16 %v1200
      %v1212 = vunpack.c.l.b16 %v1201
      %v1213 = vpack.c.b16 %v1210, %v1209
      %v1214 = vpack.c.b16 %v1212, %v1211
      %v1218 = vsel %vm267, %v1204, 0
      %v1221 = vsel %vm267, %v1203, 0
      %1223 = vmatprep.subr.bf16.mxu0 0
      %1224 = vmatpush1.bf16.msra.mxu0 0
      %1225 = vmatprep.subr.bf16.mxu0 0
      %1226 = vmatpush1.bf16.msra.mxu0 0
      %1227 = vmatprep.subr.bf16.mxu0 0
      %1228 = vmatpush1.bf16.msra.mxu0 0
      %1229 = vmatprep.subr.bf16.mxu0 0
      %1230 = vmatpush1.bf16.msra.mxu0 0
      %1231 = vmatprep.subr.bf16.mxu0 0
      %1232 = vmatpush1.bf16.msra.mxu0 0
      %1233 = vmatprep.subr.bf16.mxu0 0
      %1234 = vmatpush1.bf16.msra.mxu0 0
      %1235 = vmatprep.subr.bf16.mxu0 0
      %1236 = vmatpush1.bf16.msra.mxu0 %v1214
      %1237 = vmatprep.subr.bf16.mxu0 0
      %1238 = vmatpush1.bf16.msra.mxu0 %v1213
      %1239 = vmatprep.subr.bf16.mxu0 0
      %1240 = vmatpush2.bf16.msra.mxu0 0
      %1241 = vmatprep.subr.bf16.mxu0 0
      %1242 = vmatpush2.bf16.msra.mxu0 0
      %1243 = vmatprep.subr.bf16.mxu0 0
      %1244 = vmatpush2.bf16.msra.mxu0 0
      %1245 = vmatprep.subr.bf16.mxu0 0
      %1246 = vmatpush2.bf16.msra.mxu0 0
      %1247 = vmatprep.subr.bf16.mxu0 0
      %1248 = vmatpush2.bf16.msra.mxu0 0
      %1249 = vmatprep.subr.bf16.mxu0 0
      %1250 = vmatpush2.bf16.msra.mxu0 0
      %1251 = vmatprep.subr.bf16.mxu0 0
      %1252 = vmatpush2.bf16.msra.mxu0 0
      %1253 = vmatprep.subr.bf16.mxu0 0
      %1254 = vmatpush2.bf16.msra.mxu0 0
      %1255 = vmatprep.mubr.bf16.mxu0 0
      %1256 = vmatmul.mubr.bf16.gmra.mxu0 %v1218
      %v1257 = vpop.f32.mrf.mxu0
      %v1258 = vadd.f32 0.0, %v1257
      %v1259 = vpop.f32.mrf.mxu0
      %v1260 = vpop.f32.mrf.mxu0
      %v1261 = vadd.f32 0.0, %v1260
      %v1262 = vpop.f32.mrf.mxu0
      %1263 = vmatprep.mubr.bf16.mxu0 0
      %1264 = vmatmul.mubr.bf16.gmra.mxu0 %v1221
      %v1265 = vpop.f32.mrf.mxu0
      %v1266 = vadd.f32 0.0, %v1265
      %v1267 = vpop.f32.mrf.mxu0
      %v1268 = vpop.f32.mrf.mxu0
      %v1269 = vpop.f32.mrf.mxu0
      %1270 = vdwg.mxu0
      %v1271 = vadd.f32 %v1194, %v1258
      %v1272 = vadd.f32 %v1195, %v1261
      %v1273 = vadd.f32 %v1196, %v1266
      %s1274 = scalar_lea.vmem %s1, 208
      %v1275 = vld [vmem:[%s1274] sm:$0xf]
      %v1276 = vld [vmem:[%s1274 + $0x4] sm:$0xf]
      %v1277 = vld [vmem:[%s1274 + $0x8] sm:$0xf]
      %v1278 = vld [vmem:[%s1274 + $0xc] sm:$0xf]
      %v1279 = vrot.slane %v955, 2
      %v1280 = vrot.slane %v957, 3
      %v1281 = vor.u32 %v1279, %v1280
      %v1282 = vrot.slane %v965, 2
      %v1283 = vrot.slane %v961, 3
      %v1284 = vor.u32 %v1282, %v1283
      %v1285 = vsel %vm631, %v1281, %v1284
      %v1290 = vunpack.c.l.b16 %v1275
      %v1291 = vunpack.c.l.b16 %v1276
      %v1292 = vunpack.c.l.b16 %v1277
      %v1293 = vunpack.c.l.b16 %v1278
      %v1294 = vpack.c.b16 %v1291, %v1290
      %v1295 = vpack.c.b16 %v1293, %v1292
      %v1299 = vsel %vm267, %v1285, 0
      %v1302 = vsel %vm267, %v1284, 0
      %1304 = vmatprep.subr.bf16.mxu0 0
      %1305 = vmatpush1.bf16.msra.mxu0 0
      %1306 = vmatprep.subr.bf16.mxu0 0
      %1307 = vmatpush1.bf16.msra.mxu0 0
      %1308 = vmatprep.subr.bf16.mxu0 0
      %1309 = vmatpush1.bf16.msra.mxu0 0
      %1310 = vmatprep.subr.bf16.mxu0 0
      %1311 = vmatpush1.bf16.msra.mxu0 0
      %1312 = vmatprep.subr.bf16.mxu0 0
      %1313 = vmatpush1.bf16.msra.mxu0 0
      %1314 = vmatprep.subr.bf16.mxu0 0
      %1315 = vmatpush1.bf16.msra.mxu0 0
      %1316 = vmatprep.subr.bf16.mxu0 0
      %1317 = vmatpush1.bf16.msra.mxu0 %v1295
      %1318 = vmatprep.subr.bf16.mxu0 0
      %1319 = vmatpush1.bf16.msra.mxu0 %v1294
      %1320 = vmatprep.subr.bf16.mxu0 0
      %1321 = vmatpush2.bf16.msra.mxu0 0
      %1322 = vmatprep.subr.bf16.mxu0 0
      %1323 = vmatpush2.bf16.msra.mxu0 0
      %1324 = vmatprep.subr.bf16.mxu0 0
      %1325 = vmatpush2.bf16.msra.mxu0 0
      %1326 = vmatprep.subr.bf16.mxu0 0
      %1327 = vmatpush2.bf16.msra.mxu0 0
      %1328 = vmatprep.subr.bf16.mxu0 0
      %1329 = vmatpush2.bf16.msra.mxu0 0
      %1330 = vmatprep.subr.bf16.mxu0 0
      %1331 = vmatpush2.bf16.msra.mxu0 0
      %1332 = vmatprep.subr.bf16.mxu0 0
      %1333 = vmatpush2.bf16.msra.mxu0 0
      %1334 = vmatprep.subr.bf16.mxu0 0
      %1335 = vmatpush2.bf16.msra.mxu0 0
      %1336 = vmatprep.mubr.bf16.mxu0 0
      %1337 = vmatmul.mubr.bf16.gmra.mxu0 %v1299
      %v1338 = vpop.f32.mrf.mxu0
      %v1339 = vadd.f32 0.0, %v1338
      %v1340 = vpop.f32.mrf.mxu0
      %v1341 = vpop.f32.mrf.mxu0
      %v1342 = vadd.f32 0.0, %v1341
      %v1343 = vpop.f32.mrf.mxu0
      %1344 = vmatprep.mubr.bf16.mxu0 0
      %1345 = vmatmul.mubr.bf16.gmra.mxu0 %v1302
      %v1346 = vpop.f32.mrf.mxu0
      %v1347 = vadd.f32 0.0, %v1346
      %v1348 = vpop.f32.mrf.mxu0
      %v1349 = vpop.f32.mrf.mxu0
      %v1350 = vpop.f32.mrf.mxu0
      %1351 = vdwg.mxu0
      %v1352 = vadd.f32 %v1271, %v1339
      %v1353 = vadd.f32 %v1272, %v1342
      %v1354 = vadd.f32 %v1273, %v1347
      %s1355 = scalar_lea.vmem %s1, 224
      %v1356 = vld [vmem:[%s1355] sm:$0xf]
      %v1357 = vld [vmem:[%s1355 + $0x4] sm:$0xf]
      %v1358 = vld [vmem:[%s1355 + $0x8] sm:$0xf]
      %v1359 = vld [vmem:[%s1355 + $0xc] sm:$0xf]
      %v1360 = vrot.slane %v874, 3
      %v1361 = vrot.slane %v875, 3
      %v1362 = vsel %vm713, %v1360, %v1361
      %v1367 = vunpack.c.l.b16 %v1356
      %v1368 = vunpack.c.l.b16 %v1357
      %v1369 = vunpack.c.l.b16 %v1358
      %v1370 = vunpack.c.l.b16 %v1359
      %v1371 = vpack.c.b16 %v1368, %v1367
      %v1372 = vpack.c.b16 %v1370, %v1369
      %v1376 = vsel %vm267, %v1362, 0
      %v1379 = vsel %vm267, %v1361, 0
      %1381 = vmatprep.subr.bf16.mxu0 0
      %1382 = vmatpush1.bf16.msra.mxu0 0
      %1383 = vmatprep.subr.bf16.mxu0 0
      %1384 = vmatpush1.bf16.msra.mxu0 0
      %1385 = vmatprep.subr.bf16.mxu0 0
      %1386 = vmatpush1.bf16.msra.mxu0 0
      %1387 = vmatprep.subr.bf16.mxu0 0
      %1388 = vmatpush1.bf16.msra.mxu0 0
      %1389 = vmatprep.subr.bf16.mxu0 0
      %1390 = vmatpush1.bf16.msra.mxu0 0
      %1391 = vmatprep.subr.bf16.mxu0 0
      %1392 = vmatpush1.bf16.msra.mxu0 0
      %1393 = vmatprep.subr.bf16.mxu0 0
      %1394 = vmatpush1.bf16.msra.mxu0 %v1372
      %1395 = vmatprep.subr.bf16.mxu0 0
      %1396 = vmatpush1.bf16.msra.mxu0 %v1371
      %1397 = vmatprep.subr.bf16.mxu0 0
      %1398 = vmatpush2.bf16.msra.mxu0 0
      %1399 = vmatprep.subr.bf16.mxu0 0
      %1400 = vmatpush2.bf16.msra.mxu0 0
      %1401 = vmatprep.subr.bf16.mxu0 0
      %1402 = vmatpush2.bf16.msra.mxu0 0
      %1403 = vmatprep.subr.bf16.mxu0 0
      %1404 = vmatpush2.bf16.msra.mxu0 0
      %1405 = vmatprep.subr.bf16.mxu0 0
      %1406 = vmatpush2.bf16.msra.mxu0 0
      %1407 = vmatprep.subr.bf16.mxu0 0
      %1408 = vmatpush2.bf16.msra.mxu0 0
      %1409 = vmatprep.subr.bf16.mxu0 0
      %1410 = vmatpush2.bf16.msra.mxu0 0
      %1411 = vmatprep.subr.bf16.mxu0 0
      %1412 = vmatpush2.bf16.msra.mxu0 0
      %1413 = vmatprep.mubr.bf16.mxu0 0
      %1414 = vmatmul.mubr.bf16.gmra.mxu0 %v1376
      %v1415 = vpop.f32.mrf.mxu0
      %v1416 = vadd.f32 0.0, %v1415
      %v1417 = vpop.f32.mrf.mxu0
      %v1418 = vpop.f32.mrf.mxu0
      %v1419 = vadd.f32 0.0, %v1418
      %v1420 = vpop.f32.mrf.mxu0
      %1421 = vmatprep.mubr.bf16.mxu0 0
      %1422 = vmatmul.mubr.bf16.gmra.mxu0 %v1379
      %v1423 = vpop.f32.mrf.mxu0
      %v1424 = vadd.f32 0.0, %v1423
      %v1425 = vpop.f32.mrf.mxu0
      %v1426 = vpop.f32.mrf.mxu0
      %v1427 = vpop.f32.mrf.mxu0
      %1428 = vdwg.mxu0
      %v1429 = vadd.f32 %v1352, %v1416
      %v1430 = vadd.f32 %v1353, %v1419
      %v1431 = vadd.f32 %v1354, %v1424
      %v1432 = vld [vmem:[%s2] sm:$0x1]
      %v1434 = vlaneseq
      %v1435 = vshrl.u32 %v1434, 7
      %v1436 = vsub.s32 0, %v1435
      %v1437 = vrot.slane %v1432, %v1436
      %v1439 = vadd.f32 %v1429, %v1437
      %v1440 = vadd.f32 %v1430, %v1437
      %v1441 = vadd.f32 %v1431, %v1437
      %v1442 = vld [vmem:[%s3] sm:$0x1]
      %v1444 = vlaneseq
      %v1445 = vshrl.u32 %v1444, 7
      %v1446 = vsub.s32 0, %v1445
      %v1447 = vrot.slane %v1442, %v1446
      %v1449 = vmul.f32 %v1439, %v1447
      %v1450 = vmul.f32 %v1440, %v1447
      %v1451 = vmul.f32 %v1441, %v1447
      %v1452 = vld [vmem:[%s4] sm:$0x1]
      %v1454 = vlaneseq
      %v1455 = vshrl.u32 %v1454, 7
      %v1456 = vsub.s32 0, %v1455
      %v1457 = vrot.slane %v1452, %v1456
      %v1459 = vadd.f32 %v1449, %v1457
      %v1460 = vadd.f32 %v1450, %v1457
      %v1461 = vadd.f32 %v1451, %v1457
      %v1462 = vmul.f32 %v1459, 0.5
      %v1463 = vmul.f32 %v1460, 0.5
      %v1464 = vmul.f32 %v1461, 0.5
      %v1465 = vmul.f32 %v1459, 0.70710677
      %v1466 = vmul.f32 %v1460, 0.70710677
      %v1467 = vmul.f32 %v1461, 0.70710677
      %v1468 = vand.u32 2147483647, %v1465
      %v1469 = vand.u32 2147483647, %v1466
      %v1470 = vand.u32 2147483647, %v1467
      %v1471 = vmul.f32 %v1468, 0.3275911
      %v1472 = vmul.f32 %v1469, 0.3275911
      %v1473 = vmul.f32 %v1470, 0.3275911
      %v1474 = vadd.f32 %v1471, 1.0
      %v1475 = vadd.f32 %v1472, 1.0
      %v1476 = vadd.f32 %v1473, 1.0
      %v1477 = vrcp.pop %v1474
      %v1478 = vrcp.pop %v1475
      %v1479 = vrcp.pop %v1476
      %v1480 = vmul.f32 %v1477, 1.0614054
      %v1481 = vmul.f32 %v1478, 1.0614054
      %v1482 = vmul.f32 %v1479, 1.0614054
      %v1483 = vadd.f32 %v1480, -1.4531521
      %v1484 = vadd.f32 %v1481, -1.4531521
      %v1485 = vadd.f32 %v1482, -1.4531521
      %v1486 = vmul.f32 %v1483, %v1477
      %v1487 = vmul.f32 %v1484, %v1478
      %v1488 = vmul.f32 %v1485, %v1479
      %v1489 = vadd.f32 %v1486, 1.4214138
      %v1490 = vadd.f32 %v1487, 1.4214138
      %v1491 = vadd.f32 %v1488, 1.4214138
      %v1492 = vmul.f32 %v1489, %v1477
      %v1493 = vmul.f32 %v1490, %v1478
      %v1494 = vmul.f32 %v1491, %v1479
      %v1495 = vadd.f32 %v1492, -0.28449672
      %v1496 = vadd.f32 %v1493, -0.28449672
      %v1497 = vadd.f32 %v1494, -0.28449672
      %v1498 = vmul.f32 %v1495, %v1477
      %v1499 = vmul.f32 %v1496, %v1478
      %v1500 = vmul.f32 %v1497, %v1479
      %v1501 = vadd.f32 %v1498, 0.2548296
      %v1502 = vadd.f32 %v1499, 0.2548296
      %v1503 = vadd.f32 %v1500, 0.2548296
      %v1504 = vmul.f32 %v1501, %v1477
      %v1505 = vmul.f32 %v1502, %v1478
      %v1506 = vmul.f32 %v1503, %v1479
      %v1507 = vmul.f32 %v1468, %v1468
      %v1508 = vmul.f32 %v1469, %v1469
      %v1509 = vmul.f32 %v1470, %v1470
      %v1510 = vsub.f32 0.0, %v1507
      %v1511 = vsub.f32 0.0, %v1508
      %v1512 = vsub.f32 0.0, %v1509
      %v1513 = vmul.f32 %v1510, 1.442695
      %v1514 = vpow.pop %v1513
      %v1515 = vmul.f32 %v1511, 1.442695
      %v1516 = vpow.pop %v1515
      %v1517 = vmul.f32 %v1512, 1.442695
      %v1518 = vpow.pop %v1517
      %v1519 = vmul.f32 %v1504, %v1514
      %v1520 = vmul.f32 %v1505, %v1516
      %v1521 = vmul.f32 %v1506, %v1518
      %v1522 = vsub.f32 1.0, %v1519
      %v1523 = vsub.f32 1.0, %v1520
      %v1524 = vsub.f32 1.0, %v1521
      %vm1525 = vcmp.ge.f32.partialorder %v1465, 0.0
      %vm1526 = vcmp.ge.f32.partialorder %v1466, 0.0
      %vm1527 = vcmp.ge.f32.partialorder %v1467, 0.0
      %v1528 = vsub.f32 0.0, %v1522
      %v1529 = vsub.f32 0.0, %v1523
      %v1530 = vsub.f32 0.0, %v1524
      %v1531 = vsel %vm1525, %v1522, %v1528
      %v1532 = vsel %vm1526, %v1523, %v1529
      %v1533 = vsel %vm1527, %v1524, %v1530
      %v1534 = vadd.f32 %v1531, 1.0
      %v1535 = vadd.f32 %v1532, 1.0
      %v1536 = vadd.f32 %v1533, 1.0
      %v1537 = vmul.f32 %v1462, %v1534
      %v1538 = vmul.f32 %v1463, %v1535
      %v1539 = vmul.f32 %v1464, %v1536
      %vm1540 = vcmask 523264
      %1541 = vst.msk [vmem:[#allocation2] sm:$0xff] %vm1540, %v1537
      %1542 = vst.msk [vmem:[#allocation2 + $0x8] sm:$0xff] %vm1540, %v1538
      %vm1543 = vcmask 517120
      %1544 = vst.msk [vmem:[#allocation2 + $0x10] sm:$0x3] %vm1543, %v1539
      %v1545 = vld [vmem:[#allocation2] ss:$3 sm:$0x3f]
      %s1546 = scalar_lea.vmem [#allocation2], 1
      %v1547 = vld [vmem:[%s1546] ss:$3 sm:$0x3f]
      %s1548 = scalar_lea.vmem [#allocation2], 2
      %v1549 = vld [vmem:[%s1548] ss:$3 sm:$0x3f]
      %v1550 = vmax.f32 %v1545, %v1547
      %v1551 = vmax.f32 %v1550, %v1549
      %vm1552 = vcmask 521216
      %1553 = vst.msk [vmem:[%s222] sm:$0x3f] %vm1552, %v1551
      %p1554 = scmp.lt.s32.totalorder %s16, 1
      %s1555 = scalar_select %p1554, %s16, 1
      %s1556 = smul.addr %s1555, 8
      %s1557 = scalar_lea.vmem %s5, %s1556
      // Predicated region
      $region41: #{eeg_hybrid_forward.5} parent=39 // pred_check
        %p1558 = pneg %p144
      $region42: #{eeg_hybrid_forward.5} parent=39 // pred_check_branch
        %1560 = sbr.rel (%p1558) target = $region44
      $region43: #{eeg_hybrid_forward.5} parent=39 // pred_region
        _
      $region44: #{eeg_hybrid_forward.5} parent=39 // pred_fallthru
        _
    $region40: #{eeg_hybrid_forward.5} parent=5 // pred_fallthru
      _
    %p1561 = scmp.le.s32.totalorder 2, %s11
    // Predicated region
    $region45: #{eeg_hybrid_forward.5} parent=5 // pred_check
      %p1562 = pneg %p1561
    $region46: #{eeg_hybrid_forward.5} parent=5 // pred_check_branch
      %1564 = sbr.rel (%p1562) target = $region48
    $region47: #{eeg_hybrid_forward.5} parent=5 // pred_region
      %s1565 = ssub.s32 %s11, 2
      // Predicated region
      $region49: #{eeg_hybrid_forward.5} parent=47 // pred_check
        %p1566 = pneg %p150
      $region50: #{eeg_hybrid_forward.5} parent=47 // pred_check_branch
        %1568 = sbr.rel (%p1566) target = $region52
      $region51: #{eeg_hybrid_forward.5} parent=47 // pred_region
        %p1569 = scmp.lt.s32.totalorder %s17, 1
        %s1570 = scalar_select %p1569, %s17, 1
        %s1571 = smul.addr %s1570, 8
        %s1572 = scalar_lea.vmem %s5, %s1571
      $region52: #{eeg_hybrid_forward.5} parent=47 // pred_fallthru
        _
    $region48: #{eeg_hybrid_forward.5} parent=5 // pred_fallthru
      _
  $region6: #{eeg_hybrid_forward.5} parent=0 // loop_footer
    %s15 = sadd.s32 1, %s11
  $region7: #{eeg_hybrid_forward.5} parent=0 // loop_footer_branch
    %10 = sbr.rel target = $region3
  $region8: #{eeg_hybrid_forward.5} parent=0 // loop_exit
    _

// kernel: eeg_hybrid_forward.6
$region0: #{eeg_hybrid_forward.6}
  #allocation0 [shape = 'u32[]', space=smem, size = 0x4, offset = 0x4, fixed_abs, tag = 'smem constant byte address 0x4 - core index']
  #allocation1 [shape = 'u32[144,128]{1,0:T(1,128)}', space=vmem, size = 0x12000, scoped, tag = 'internal scratch']
  #allocation2 [shape = 'f32[12,512]{1,0:T(8,128)}', space=vmem, size = 0x8000, scoped, tag = 'scratch operand']
  #allocation3 [shape = 'f32[12,128]{1,0:T(8,128)}', space=vmem, size = 0x2000, scoped, tag = 'scratch operand']
  %s0 = inlined_call_operand.vmem [shape: f32[12,64], index: 0, kind: input, shape index: {}]
  %s1 = inlined_call_operand.vmem [shape: bf16[64,512], index: 1, kind: input, shape index: {}]
  %s2 = inlined_call_operand.vmem [shape: bf16[128,512], index: 2, kind: input, shape index: {}]
  %s3 = inlined_call_operand.vmem [shape: f32[1,512], index: 3, kind: input, shape index: {}, may-alias: {3,6}]
  %s4 = inlined_call_operand.vmem [shape: bf16[128,512], index: 4, kind: input, shape index: {}]
  %s5 = inlined_call_operand.vmem [shape: bf16[128,512], index: 5, kind: input, shape index: {}]
  %s6 = inlined_call_operand.vmem [shape: f32[1,512], index: 6, kind: input, shape index: {}, may-alias: {3,6}]
  %s7 = inlined_call_operand.vmem [shape: f32[6,2,128], index: 7, kind: output, shape index: {}]
  %s8 = sld [smem:[#allocation0]]
  $region38: #{eeg_hybrid_forward.6} parent=0
    _
  %s10 = ssub.s32 1, %s8
  %s11 = scalar_select 0, %s10, %s8
  // Predicated region
  $region2: #{eeg_hybrid_forward.6} parent=0 // pred_check
    _
  $region3: #{eeg_hybrid_forward.6} parent=0 // pred_check_branch
    %13 = sbr.rel (0) target = $region5
  $region4: #{eeg_hybrid_forward.6} parent=0 // pred_region
    _
  $region5: #{eeg_hybrid_forward.6} parent=0 // pred_fallthru
    _
  // Predicated region
  $region6: #{eeg_hybrid_forward.6} parent=0 // pred_check
    _
  $region7: #{eeg_hybrid_forward.6} parent=0 // pred_check_branch
    %15 = sbr.rel (0) target = $region9
  $region8: #{eeg_hybrid_forward.6} parent=0 // pred_region
    _
  $region9: #{eeg_hybrid_forward.6} parent=0 // pred_fallthru
    _
  // Predicated region
  $region10: #{eeg_hybrid_forward.6} parent=0 // pred_check
    _
  $region11: #{eeg_hybrid_forward.6} parent=0 // pred_check_branch
    %17 = sbr.rel (0) target = $region13
  $region12: #{eeg_hybrid_forward.6} parent=0 // pred_region
    _
  $region13: #{eeg_hybrid_forward.6} parent=0 // pred_fallthru
    _
  // Predicated region
  $region14: #{eeg_hybrid_forward.6} parent=0 // pred_check
    _
  $region15: #{eeg_hybrid_forward.6} parent=0 // pred_check_branch
    %19 = sbr.rel (0) target = $region17
  $region16: #{eeg_hybrid_forward.6} parent=0 // pred_region
    _
  $region17: #{eeg_hybrid_forward.6} parent=0 // pred_fallthru
    _
  // Predicated region
  $region18: #{eeg_hybrid_forward.6} parent=0 // pred_check
    _
  $region19: #{eeg_hybrid_forward.6} parent=0 // pred_check_branch
    %21 = sbr.rel (0) target = $region21
  $region20: #{eeg_hybrid_forward.6} parent=0 // pred_region
    _
  $region21: #{eeg_hybrid_forward.6} parent=0 // pred_fallthru
    _
  // Predicated region
  $region22: #{eeg_hybrid_forward.6} parent=0 // pred_check
    _
  $region23: #{eeg_hybrid_forward.6} parent=0 // pred_check_branch
    %23 = sbr.rel (0) target = $region25
  $region24: #{eeg_hybrid_forward.6} parent=0 // pred_region
    _
  $region25: #{eeg_hybrid_forward.6} parent=0 // pred_fallthru
    _
  // Predicated region
  $region26: #{eeg_hybrid_forward.6} parent=0 // pred_check
    _
  $region27: #{eeg_hybrid_forward.6} parent=0 // pred_check_branch
    %25 = sbr.rel (0) target = $region29
  $region28: #{eeg_hybrid_forward.6} parent=0 // pred_region
    _
  $region29: #{eeg_hybrid_forward.6} parent=0 // pred_fallthru
    _
  %v27 = vld [vmem:[%s0] sm:$0xff]
  %v28 = vld [vmem:[%s0 + $0x8] sm:$0xf]
  %v29 = vpack.c.bf16 %v28, %v27
  %v30 = vld [vmem:[%s1] sm:$0xff]
  %v31 = vld [vmem:[%s1 + $0x8] sm:$0xff]
  %v32 = vld [vmem:[%s1 + $0x10] sm:$0xff]
  %v33 = vld [vmem:[%s1 + $0x18] sm:$0xff]
  %v34 = vld [vmem:[%s1 + $0x20] sm:$0xff]
  %v35 = vld [vmem:[%s1 + $0x28] sm:$0xff]
  %v36 = vld [vmem:[%s1 + $0x30] sm:$0xff]
  %v37 = vld [vmem:[%s1 + $0x38] sm:$0xff]
  %v38 = vld [vmem:[%s1 + $0x40] sm:$0xff]
  %v39 = vld [vmem:[%s1 + $0x48] sm:$0xff]
  %v40 = vld [vmem:[%s1 + $0x50] sm:$0xff]
  %v41 = vld [vmem:[%s1 + $0x58] sm:$0xff]
  %v42 = vld [vmem:[%s1 + $0x60] sm:$0xff]
  %v43 = vld [vmem:[%s1 + $0x68] sm:$0xff]
  %v44 = vld [vmem:[%s1 + $0x70] sm:$0xff]
  %v45 = vld [vmem:[%s1 + $0x78] sm:$0xff]
  %v46 = vld [vmem:[%s3] sm:$0xf]
  %v48 = vlaneseq
  %v49 = vshrl.u32 %v48, 7
  %v50 = vsub.s32 0, %v49
  %v51 = vrot.slane %v46, %v50
  %v52 = vlaneseq
  %v53 = vshrl.u32 %v52, 7
  %v54 = vsub.s32 1, %v53
  %v55 = vrot.slane %v46, %v54
  %v56 = vlaneseq
  %v57 = vshrl.u32 %v56, 7
  %v58 = vsub.s32 2, %v57
  %v59 = vrot.slane %v46, %v58
  %v60 = vlaneseq
  %v61 = vshrl.u32 %v60, 7
  %v62 = vsub.s32 3, %v61
  %v63 = vrot.slane %v46, %v62
  %v84 = vunpack.c.l.b16 %v30
  %v85 = vunpack.c.h.b16 %v30
  %v86 = vunpack.c.l.b16 %v31
  %v87 = vunpack.c.h.b16 %v31
  %v88 = vunpack.c.l.b16 %v32
  %v89 = vunpack.c.h.b16 %v32
  %v90 = vunpack.c.l.b16 %v33
  %v91 = vunpack.c.h.b16 %v33
  %v92 = vunpack.c.l.b16 %v34
  %v93 = vunpack.c.h.b16 %v34
  %v94 = vunpack.c.l.b16 %v35
  %v95 = vunpack.c.h.b16 %v35
  %v96 = vunpack.c.l.b16 %v36
  %v97 = vunpack.c.h.b16 %v36
  %v98 = vunpack.c.l.b16 %v37
  %v99 = vunpack.c.h.b16 %v37
  %v100 = vunpack.c.l.b16 %v38
  %v101 = vunpack.c.h.b16 %v38
  %v102 = vunpack.c.l.b16 %v39
  %v103 = vunpack.c.h.b16 %v39
  %v104 = vunpack.c.l.b16 %v40
  %v105 = vunpack.c.h.b16 %v40
  %v106 = vunpack.c.l.b16 %v41
  %v107 = vunpack.c.h.b16 %v41
  %v108 = vunpack.c.l.b16 %v42
  %v109 = vunpack.c.h.b16 %v42
  %v110 = vunpack.c.l.b16 %v43
  %v111 = vunpack.c.h.b16 %v43
  %v112 = vunpack.c.l.b16 %v44
  %v113 = vunpack.c.h.b16 %v44
  %v114 = vunpack.c.l.b16 %v45
  %v115 = vunpack.c.h.b16 %v45
  %v116 = vpack.c.b16 %v88, %v84
  %v117 = vpack.c.b16 %v89, %v85
  %v118 = vpack.c.b16 %v90, %v86
  %v119 = vpack.c.b16 %v91, %v87
  %v120 = vpack.c.b16 %v96, %v92
  %v121 = vpack.c.b16 %v97, %v93
  %v122 = vpack.c.b16 %v98, %v94
  %v123 = vpack.c.b16 %v99, %v95
  %v124 = vpack.c.b16 %v104, %v100
  %v125 = vpack.c.b16 %v105, %v101
  %v126 = vpack.c.b16 %v106, %v102
  %v127 = vpack.c.b16 %v107, %v103
  %v128 = vpack.c.b16 %v112, %v108
  %v129 = vpack.c.b16 %v113, %v109
  %v130 = vpack.c.b16 %v114, %v110
  %v131 = vpack.c.b16 %v115, %v111
  %vm148 = vcmask 523264
  %v150 = vsel %vm148, %v29, 0
  %152 = vmatprep.subr.bf16.mxu0 0
  %153 = vmatpush1.bf16.msra.mxu0 0
  %154 = vmatprep.subr.bf16.mxu0 0
  %155 = vmatpush1.bf16.msra.mxu0 0
  %156 = vmatprep.subr.bf16.mxu0 0
  %157 = vmatpush1.bf16.msra.mxu0 0
  %158 = vmatprep.subr.bf16.mxu0 0
  %159 = vmatpush1.bf16.msra.mxu0 0
  %160 = vmatprep.subr.bf16.mxu0 %v129
  %161 = vmatpush1.bf16.msra.mxu0 %v128
  %162 = vmatprep.subr.bf16.mxu0 %v125
  %163 = vmatpush1.bf16.msra.mxu0 %v124
  %164 = vmatprep.subr.bf16.mxu0 %v121
  %165 = vmatpush1.bf16.msra.mxu0 %v120
  %166 = vmatprep.subr.bf16.mxu0 %v117
  %167 = vmatpush1.bf16.msra.mxu0 %v116
  %168 = vmatprep.subr.bf16.mxu0 0
  %169 = vmatpush2.bf16.msra.mxu0 0
  %170 = vmatprep.subr.bf16.mxu0 0
  %171 = vmatpush2.bf16.msra.mxu0 0
  %172 = vmatprep.subr.bf16.mxu0 0
  %173 = vmatpush2.bf16.msra.mxu0 0
  %174 = vmatprep.subr.bf16.mxu0 0
  %175 = vmatpush2.bf16.msra.mxu0 0
  %176 = vmatprep.subr.bf16.mxu0 0
  %177 = vmatpush2.bf16.msra.mxu0 0
  %178 = vmatprep.subr.bf16.mxu0 0
  %179 = vmatpush2.bf16.msra.mxu0 0
  %180 = vmatprep.subr.bf16.mxu0 0
  %181 = vmatpush2.bf16.msra.mxu0 0
  %182 = vmatprep.subr.bf16.mxu0 0
  %183 = vmatpush2.bf16.msra.mxu0 0
  %184 = vmatprep.mubr.bf16.mxu0 0
  %185 = vmatmul.mubr.bf16.gmra.mxu0 %v150
  %v186 = vpop.f32.mrf.mxu0
  %v187 = vadd.f32 %v51, %v186
  %v188 = vpop.f32.mrf.mxu0
  %v189 = vadd.f32 %v55, %v188
  %v190 = vpop.f32.mrf.mxu0
  %v191 = vadd.f32 %v51, %v190
  %v192 = vpop.f32.mrf.mxu0
  %v193 = vadd.f32 %v55, %v192
  %194 = vdwg.mxu0
  %195 = vmatprep.subr.bf16.mxu0 0
  %196 = vmatpush1.bf16.msra.mxu0 0
  %197 = vmatprep.subr.bf16.mxu0 0
  %198 = vmatpush1.bf16.msra.mxu0 0
  %199 = vmatprep.subr.bf16.mxu0 0
  %200 = vmatpush1.bf16.msra.mxu0 0
  %201 = vmatprep.subr.bf16.mxu0 0
  %202 = vmatpush1.bf16.msra.mxu0 0
  %203 = vmatprep.subr.bf16.mxu0 %v131
  %204 = vmatpush1.bf16.msra.mxu0 %v130
  %205 = vmatprep.subr.bf16.mxu0 %v127
  %206 = vmatpush1.bf16.msra.mxu0 %v126
  %207 = vmatprep.subr.bf16.mxu0 %v123
  %208 = vmatpush1.bf16.msra.mxu0 %v122
  %209 = vmatprep.subr.bf16.mxu0 %v119
  %210 = vmatpush1.bf16.msra.mxu0 %v118
  %211 = vmatprep.subr.bf16.mxu0 0
  %212 = vmatpush2.bf16.msra.mxu0 0
  %213 = vmatprep.subr.bf16.mxu0 0
  %214 = vmatpush2.bf16.msra.mxu0 0
  %215 = vmatprep.subr.bf16.mxu0 0
  %216 = vmatpush2.bf16.msra.mxu0 0
  %217 = vmatprep.subr.bf16.mxu0 0
  %218 = vmatpush2.bf16.msra.mxu0 0
  %219 = vmatprep.subr.bf16.mxu0 0
  %220 = vmatpush2.bf16.msra.mxu0 0
  %221 = vmatprep.subr.bf16.mxu0 0
  %222 = vmatpush2.bf16.msra.mxu0 0
  %223 = vmatprep.subr.bf16.mxu0 0
  %224 = vmatpush2.bf16.msra.mxu0 0
  %225 = vmatprep.subr.bf16.mxu0 0
  %226 = vmatpush2.bf16.msra.mxu0 0
  %227 = vmatprep.mubr.bf16.mxu0 0
  %228 = vmatmul.mubr.bf16.gmra.mxu0 %v150
  %v229 = vpop.f32.mrf.mxu0
  %v230 = vadd.f32 %v59, %v229
  %v231 = vpop.f32.mrf.mxu0
  %v232 = vadd.f32 %v63, %v231
  %v233 = vpop.f32.mrf.mxu0
  %v234 = vadd.f32 %v59, %v233
  %v235 = vpop.f32.mrf.mxu0
  %v236 = vadd.f32 %v63, %v235
  %237 = vdwg.mxu0
  %238 = vst [vmem:[#allocation2] sm:$0xff] %v187
  %239 = vst [vmem:[#allocation2 + $0x8] sm:$0xff] %v189
  %240 = vst [vmem:[#allocation2 + $0x10] sm:$0xff] %v230
  %241 = vst [vmem:[#allocation2 + $0x18] sm:$0xff] %v232
  %242 = vst [vmem:[#allocation2 + $0x20] sm:$0xf] %v191
  %243 = vst [vmem:[#allocation2 + $0x28] sm:$0xf] %v193
  %244 = vst [vmem:[#allocation2 + $0x30] sm:$0xf] %v234
  %245 = vst [vmem:[#allocation2 + $0x38] sm:$0xf] %v236
  %v246 = vld [vmem:[#allocation2] sm:$0x3]
  %v247 = vld [vmem:[#allocation2 + $0x8] sm:$0x3]
  %v248 = vld [vmem:[#allocation2 + $0x10] sm:$0x3]
  %v249 = vld [vmem:[#allocation2 + $0x18] sm:$0x3]
  %v250 = vld [vmem:[%s2] sm:$0xff]
  %v251 = vld [vmem:[%s2 + $0x8] sm:$0xff]
  %v252 = vld [vmem:[%s2 + $0x10] sm:$0xff]
  %v253 = vld [vmem:[%s2 + $0x18] sm:$0xff]
  %v254 = vld [vmem:[%s2 + $0x20] sm:$0xff]
  %v255 = vld [vmem:[%s2 + $0x28] sm:$0xff]
  %v256 = vld [vmem:[%s2 + $0x30] sm:$0xff]
  %v257 = vld [vmem:[%s2 + $0x38] sm:$0xff]
  %v258 = vld [vmem:[%s2 + $0x40] sm:$0xff]
  %v259 = vld [vmem:[%s2 + $0x48] sm:$0xff]
  %v260 = vld [vmem:[%s2 + $0x50] sm:$0xff]
  %v261 = vld [vmem:[%s2 + $0x58] sm:$0xff]
  %v262 = vld [vmem:[%s2 + $0x60] sm:$0xff]
  %v263 = vld [vmem:[%s2 + $0x68] sm:$0xff]
  %v264 = vld [vmem:[%s2 + $0x70] sm:$0xff]
  %v265 = vld [vmem:[%s2 + $0x78] sm:$0xff]
  %v266 = vld [vmem:[%s2 + $0x80] sm:$0xff]
  %v267 = vld [vmem:[%s2 + $0x88] sm:$0xff]
  %v268 = vld [vmem:[%s2 + $0x90] sm:$0xff]
  %v269 = vld [vmem:[%s2 + $0x98] sm:$0xff]
  %v270 = vld [vmem:[%s2 + $0xa0] sm:$0xff]
  %v271 = vld [vmem:[%s2 + $0xa8] sm:$0xff]
  %v272 = vld [vmem:[%s2 + $0xb0] sm:$0xff]
  %v273 = vld [vmem:[%s2 + $0xb8] sm:$0xff]
  %v274 = vld [vmem:[%s2 + $0xc0] sm:$0xff]
  %v275 = vld [vmem:[%s2 + $0xc8] sm:$0xff]
  %v276 = vld [vmem:[%s2 + $0xd0] sm:$0xff]
  %v277 = vld [vmem:[%s2 + $0xd8] sm:$0xff]
  %v278 = vld [vmem:[%s2 + $0xe0] sm:$0xff]
  %v279 = vld [vmem:[%s2 + $0xe8] sm:$0xff]
  %v280 = vld [vmem:[%s2 + $0xf0] sm:$0xff]
  %v281 = vld [vmem:[%s2 + $0xf8] sm:$0xff]
  %v314 = vunpack.c.l.b16 %v250
  %v315 = vunpack.c.h.b16 %v250
  %v316 = vunpack.c.l.b16 %v251
  %v317 = vunpack.c.h.b16 %v251
  %v318 = vunpack.c.l.b16 %v252
  %v319 = vunpack.c.h.b16 %v252
  %v320 = vunpack.c.l.b16 %v253
  %v321 = vunpack.c.h.b16 %v253
  %v322 = vunpack.c.l.b16 %v254
  %v323 = vunpack.c.h.b16 %v254
  %v324 = vunpack.c.l.b16 %v255
  %v325 = vunpack.c.h.b16 %v255
  %v326 = vunpack.c.l.b16 %v256
  %v327 = vunpack.c.h.b16 %v256
  %v328 = vunpack.c.l.b16 %v257
  %v329 = vunpack.c.h.b16 %v257
  %v330 = vunpack.c.l.b16 %v258
  %v331 = vunpack.c.h.b16 %v258
  %v332 = vunpack.c.l.b16 %v259
  %v333 = vunpack.c.h.b16 %v259
  %v334 = vunpack.c.l.b16 %v260
  %v335 = vunpack.c.h.b16 %v260
  %v336 = vunpack.c.l.b16 %v261
  %v337 = vunpack.c.h.b16 %v261
  %v338 = vunpack.c.l.b16 %v262
  %v339 = vunpack.c.h.b16 %v262
  %v340 = vunpack.c.l.b16 %v263
  %v341 = vunpack.c.h.b16 %v263
  %v342 = vunpack.c.l.b16 %v264
  %v343 = vunpack.c.h.b16 %v264
  %v344 = vunpack.c.l.b16 %v265
  %v345 = vunpack.c.h.b16 %v265
  %v346 = vunpack.c.l.b16 %v266
  %v347 = vunpack.c.h.b16 %v266
  %v348 = vunpack.c.l.b16 %v267
  %v349 = vunpack.c.h.b16 %v267
  %v350 = vunpack.c.l.b16 %v268
  %v351 = vunpack.c.h.b16 %v268
  %v352 = vunpack.c.l.b16 %v269
  %v353 = vunpack.c.h.b16 %v269
  %v354 = vunpack.c.l.b16 %v270
  %v355 = vunpack.c.h.b16 %v270
  %v356 = vunpack.c.l.b16 %v271
  %v357 = vunpack.c.h.b16 %v271
  %v358 = vunpack.c.l.b16 %v272
  %v359 = vunpack.c.h.b16 %v272
  %v360 = vunpack.c.l.b16 %v273
  %v361 = vunpack.c.h.b16 %v273
  %v362 = vunpack.c.l.b16 %v274
  %v363 = vunpack.c.h.b16 %v274
  %v364 = vunpack.c.l.b16 %v275
  %v365 = vunpack.c.h.b16 %v275
  %v366 = vunpack.c.l.b16 %v276
  %v367 = vunpack.c.h.b16 %v276
  %v368 = vunpack.c.l.b16 %v277
  %v369 = vunpack.c.h.b16 %v277
  %v370 = vunpack.c.l.b16 %v278
  %v371 = vunpack.c.h.b16 %v278
  %v372 = vunpack.c.l.b16 %v279
  %v373 = vunpack.c.h.b16 %v279
  %v374 = vunpack.c.l.b16 %v280
  %v375 = vunpack.c.h.b16 %v280
  %v376 = vunpack.c.l.b16 %v281
  %v377 = vunpack.c.h.b16 %v281
  %v378 = vpack.c.b16 %v318, %v314
  %v379 = vpack.c.b16 %v319, %v315
  %v380 = vpack.c.b16 %v320, %v316
  %v381 = vpack.c.b16 %v321, %v317
  %v382 = vpack.c.b16 %v326, %v322
  %v383 = vpack.c.b16 %v327, %v323
  %v384 = vpack.c.b16 %v328, %v324
  %v385 = vpack.c.b16 %v329, %v325
  %v386 = vpack.c.b16 %v334, %v330
  %v387 = vpack.c.b16 %v335, %v331
  %v388 = vpack.c.b16 %v336, %v332
  %v389 = vpack.c.b16 %v337, %v333
  %v390 = vpack.c.b16 %v342, %v338
  %v391 = vpack.c.b16 %v343, %v339
  %v392 = vpack.c.b16 %v344, %v340
  %v393 = vpack.c.b16 %v345, %v341
  %v394 = vpack.c.b16 %v350, %v346
  %v395 = vpack.c.b16 %v351, %v347
  %v396 = vpack.c.b16 %v352, %v348
  %v397 = vpack.c.b16 %v353, %v349
  %v398 = vpack.c.b16 %v358, %v354
  %v399 = vpack.c.b16 %v359, %v355
  %v400 = vpack.c.b16 %v360, %v356
  %v401 = vpack.c.b16 %v361, %v357
  %v402 = vpack.c.b16 %v366, %v362
  %v403 = vpack.c.b16 %v367, %v363
  %v404 = vpack.c.b16 %v368, %v364
  %v405 = vpack.c.b16 %v369, %v365
  %v406 = vpack.c.b16 %v374, %v370
  %v407 = vpack.c.b16 %v375, %v371
  %v408 = vpack.c.b16 %v376, %v372
  %v409 = vpack.c.b16 %v377, %v373
  %442 = vmatprep.subr.bf16.mxu0 %v407
  %443 = vmatpush1.bf16.msra.mxu0 %v406
  %444 = vmatprep.subr.bf16.mxu0 %v403
  %445 = vmatpush1.bf16.msra.mxu0 %v402
  %446 = vmatprep.subr.bf16.mxu0 %v399
  %447 = vmatpush1.bf16.msra.mxu0 %v398
  %448 = vmatprep.subr.bf16.mxu0 %v395
  %449 = vmatpush1.bf16.msra.mxu0 %v394
  %450 = vmatprep.subr.bf16.mxu0 %v391
  %451 = vmatpush1.bf16.msra.mxu0 %v390
  %452 = vmatprep.subr.bf16.mxu0 %v387
  %453 = vmatpush1.bf16.msra.mxu0 %v386
  %454 = vmatprep.subr.bf16.mxu0 %v383
  %455 = vmatpush1.bf16.msra.mxu0 %v382
  %456 = vmatprep.subr.bf16.mxu0 %v379
  %457 = vmatpush1.bf16.msra.mxu0 %v378
  %458 = vmatprep.subr.bf16.mxu0 0
  %459 = vmatpush2.bf16.msra.mxu0 0
  %460 = vmatprep.subr.bf16.mxu0 0
  %461 = vmatpush2.bf16.msra.mxu0 0
  %462 = vmatprep.subr.bf16.mxu0 0
  %463 = vmatpush2.bf16.msra.mxu0 0
  %464 = vmatprep.subr.bf16.mxu0 0
  %465 = vmatpush2.bf16.msra.mxu0 0
  %466 = vmatprep.subr.bf16.mxu0 0
  %467 = vmatpush2.bf16.msra.mxu0 0
  %468 = vmatprep.subr.bf16.mxu0 0
  %469 = vmatpush2.bf16.msra.mxu0 0
  %470 = vmatprep.subr.bf16.mxu0 0
  %471 = vmatpush2.bf16.msra.mxu0 0
  %472 = vmatprep.subr.bf16.mxu0 0
  %473 = vmatpush2.bf16.msra.mxu0 0
  %474 = vmatprep.mubr.bf16.mxu0 0
  %475 = vmatmul.mubr.bf16.gmra.mxu0 0
  %v476 = vpop.f32.mrf.mxu0
  %v477 = vadd.f32 0.0, %v476
  %v478 = vpop.f32.mrf.mxu0
  %v479 = vadd.f32 0.0, %v478
  %v480 = vpop.f32.mrf.mxu0
  %v481 = vpop.f32.mrf.mxu0
  %482 = vdwg.mxu0
  %483 = vmatprep.subr.bf16.mxu0 %v409
  %484 = vmatpush1.bf16.msra.mxu0 %v408
  %485 = vmatprep.subr.bf16.mxu0 %v405
  %486 = vmatpush1.bf16.msra.mxu0 %v404
  %487 = vmatprep.subr.bf16.mxu0 %v401
  %488 = vmatpush1.bf16.msra.mxu0 %v400
  %489 = vmatprep.subr.bf16.mxu0 %v397
  %490 = vmatpush1.bf16.msra.mxu0 %v396
  %491 = vmatprep.subr.bf16.mxu0 %v393
  %492 = vmatpush1.bf16.msra.mxu0 %v392
  %493 = vmatprep.subr.bf16.mxu0 %v389
  %494 = vmatpush1.bf16.msra.mxu0 %v388
  %495 = vmatprep.subr.bf16.mxu0 %v385
  %496 = vmatpush1.bf16.msra.mxu0 %v384
  %497 = vmatprep.subr.bf16.mxu0 %v381
  %498 = vmatpush1.bf16.msra.mxu0 %v380
  %499 = vmatprep.subr.bf16.mxu0 0
  %500 = vmatpush2.bf16.msra.mxu0 0
  %501 = vmatprep.subr.bf16.mxu0 0
  %502 = vmatpush2.bf16.msra.mxu0 0
  %503 = vmatprep.subr.bf16.mxu0 0
  %504 = vmatpush2.bf16.msra.mxu0 0
  %505 = vmatprep.subr.bf16.mxu0 0
  %506 = vmatpush2.bf16.msra.mxu0 0
  %507 = vmatprep.subr.bf16.mxu0 0
  %508 = vmatpush2.bf16.msra.mxu0 0
  %509 = vmatprep.subr.bf16.mxu0 0
  %510 = vmatpush2.bf16.msra.mxu0 0
  %511 = vmatprep.subr.bf16.mxu0 0
  %512 = vmatpush2.bf16.msra.mxu0 0
  %513 = vmatprep.subr.bf16.mxu0 0
  %514 = vmatpush2.bf16.msra.mxu0 0
  %515 = vmatprep.mubr.bf16.mxu0 0
  %516 = vmatmul.mubr.bf16.gmra.mxu0 0
  %v517 = vpop.f32.mrf.mxu0
  %v518 = vadd.f32 0.0, %v517
  %v519 = vpop.f32.mrf.mxu0
  %v520 = vadd.f32 0.0, %v519
  %v521 = vpop.f32.mrf.mxu0
  %v522 = vpop.f32.mrf.mxu0
  %523 = vdwg.mxu0
  %v524 = vadd.f32 %v246, %v477
  %v525 = vadd.f32 %v247, %v479
  %v526 = vadd.f32 %v248, %v518
  %v527 = vadd.f32 %v249, %v520
  %v528 = vxor.u32 %v524, 2147483648
  %v529 = vmul.f32 %v528, 1.442695
  %v530 = vpow.pop %v529
  %v531 = vadd.f32 %v530, 1.0
  %v532 = vrcp.pop %v531
  %v533 = vmul.f32 1.0, %v532
  %v534 = vxor.u32 %v525, 2147483648
  %v535 = vmul.f32 %v534, 1.442695
  %v536 = vpow.pop %v535
  %v537 = vadd.f32 %v536, 1.0
  %v538 = vrcp.pop %v537
  %v539 = vmul.f32 1.0, %v538
  %v540 = vtanh.pop %v526
  %v541 = vxor.u32 %v527, 2147483648
  %v542 = vmul.f32 %v541, 1.442695
  %v543 = vpow.pop %v542
  %v544 = vadd.f32 %v543, 1.0
  %v545 = vrcp.pop %v544
  %v546 = vmul.f32 1.0, %v545
  %v547 = vmul.f32 %v539, 0.0
  %v548 = vmul.f32 %v533, %v540
  %v549 = vadd.f32 %v547, %v548
  %v550 = vtanh.pop %v549
  %v551 = vmul.f32 %v546, %v550
  %552 = vst [vmem:[#allocation3] sm:$0x3] %v551
  %v553 = vld [vmem:[#allocation2] sm:$0xc]
  %v554 = vld [vmem:[#allocation2 + $0x8] sm:$0xc]
  %v555 = vld [vmem:[#allocation2 + $0x10] sm:$0xc]
  %v556 = vld [vmem:[#allocation2 + $0x18] sm:$0xc]
  %v557 = vpack.c.bf16 %v551, %v551
  %v558 = vld [vmem:[%s2] sm:$0xff]
  %v559 = vld [vmem:[%s2 + $0x8] sm:$0xff]
  %v560 = vld [vmem:[%s2 + $0x10] sm:$0xff]
  %v561 = vld [vmem:[%s2 + $0x18] sm:$0xff]
  %v562 = vld [vmem:[%s2 + $0x20] sm:$0xff]
  %v563 = vld [vmem:[%s2 + $0x28] sm:$0xff]
  %v564 = vld [vmem:[%s2 + $0x30] sm:$0xff]
  %v565 = vld [vmem:[%s2 + $0x38] sm:$0xff]
  %v566 = vld [vmem:[%s2 + $0x40] sm:$0xff]
  %v567 = vld [vmem:[%s2 + $0x48] sm:$0xff]
  %v568 = vld [vmem:[%s2 + $0x50] sm:$0xff]
  %v569 = vld [vmem:[%s2 + $0x58] sm:$0xff]
  %v570 = vld [vmem:[%s2 + $0x60] sm:$0xff]
  %v571 = vld [vmem:[%s2 + $0x68] sm:$0xff]
  %v572 = vld [vmem:[%s2 + $0x70] sm:$0xff]
  %v573 = vld [vmem:[%s2 + $0x78] sm:$0xff]
  %v574 = vld [vmem:[%s2 + $0x80] sm:$0xff]
  %v575 = vld [vmem:[%s2 + $0x88] sm:$0xff]
  %v576 = vld [vmem:[%s2 + $0x90] sm:$0xff]
  %v577 = vld [vmem:[%s2 + $0x98] sm:$0xff]
  %v578 = vld [vmem:[%s2 + $0xa0] sm:$0xff]
  %v579 = vld [vmem:[%s2 + $0xa8] sm:$0xff]
  %v580 = vld [vmem:[%s2 + $0xb0] sm:$0xff]
  %v581 = vld [vmem:[%s2 + $0xb8] sm:$0xff]
  %v582 = vld [vmem:[%s2 + $0xc0] sm:$0xff]
  %v583 = vld [vmem:[%s2 + $0xc8] sm:$0xff]
  %v584 = vld [vmem:[%s2 + $0xd0] sm:$0xff]
  %v585 = vld [vmem:[%s2 + $0xd8] sm:$0xff]
  %v586 = vld [vmem:[%s2 + $0xe0] sm:$0xff]
  %v587 = vld [vmem:[%s2 + $0xe8] sm:$0xff]
  %v588 = vld [vmem:[%s2 + $0xf0] sm:$0xff]
  %v589 = vld [vmem:[%s2 + $0xf8] sm:$0xff]
  %v622 = vunpack.c.l.b16 %v558
  %v623 = vunpack.c.h.b16 %v558
  %v624 = vunpack.c.l.b16 %v559
  %v625 = vunpack.c.h.b16 %v559
  %v626 = vunpack.c.l.b16 %v560
  %v627 = vunpack.c.h.b16 %v560
  %v628 = vunpack.c.l.b16 %v561
  %v629 = vunpack.c.h.b16 %v561
  %v630 = vunpack.c.l.b16 %v562
  %v631 = vunpack.c.h.b16 %v562
  %v632 = vunpack.c.l.b16 %v563
  %v633 = vunpack.c.h.b16 %v563
  %v634 = vunpack.c.l.b16 %v564
  %v635 = vunpack.c.h.b16 %v564
  %v636 = vunpack.c.l.b16 %v565
  %v637 = vunpack.c.h.b16 %v565
  %v638 = vunpack.c.l.b16 %v566
  %v639 = vunpack.c.h.b16 %v566
  %v640 = vunpack.c.l.b16 %v567
  %v641 = vunpack.c.h.b16 %v567
  %v642 = vunpack.c.l.b16 %v568
  %v643 = vunpack.c.h.b16 %v568
  %v644 = vunpack.c.l.b16 %v569
  %v645 = vunpack.c.h.b16 %v569
  %v646 = vunpack.c.l.b16 %v570
  %v647 = vunpack.c.h.b16 %v570
  %v648 = vunpack.c.l.b16 %v571
  %v649 = vunpack.c.h.b16 %v571
  %v650 = vunpack.c.l.b16 %v572
  %v651 = vunpack.c.h.b16 %v572
  %v652 = vunpack.c.l.b16 %v573
  %v653 = vunpack.c.h.b16 %v573
  %v654 = vunpack.c.l.b16 %v574
  %v655 = vunpack.c.h.b16 %v574
  %v656 = vunpack.c.l.b16 %v575
  %v657 = vunpack.c.h.b16 %v575
  %v658 = vunpack.c.l.b16 %v576
  %v659 = vunpack.c.h.b16 %v576
  %v660 = vunpack.c.l.b16 %v577
  %v661 = vunpack.c.h.b16 %v577
  %v662 = vunpack.c.l.b16 %v578
  %v663 = vunpack.c.h.b16 %v578
  %v664 = vunpack.c.l.b16 %v579
  %v665 = vunpack.c.h.b16 %v579
  %v666 = vunpack.c.l.b16 %v580
  %v667 = vunpack.c.h.b16 %v580
  %v668 = vunpack.c.l.b16 %v581
  %v669 = vunpack.c.h.b16 %v581
  %v670 = vunpack.c.l.b16 %v582
  %v671 = vunpack.c.h.b16 %v582
  %v672 = vunpack.c.l.b16 %v583
  %v673 = vunpack.c.h.b16 %v583
  %v674 = vunpack.c.l.b16 %v584
  %v675 = vunpack.c.h.b16 %v584
  %v676 = vunpack.c.l.b16 %v585
  %v677 = vunpack.c.h.b16 %v585
  %v678 = vunpack.c.l.b16 %v586
  %v679 = vunpack.c.h.b16 %v586
  %v680 = vunpack.c.l.b16 %v587
  %v681 = vunpack.c.h.b16 %v587
  %v682 = vunpack.c.l.b16 %v588
  %v683 = vunpack.c.h.b16 %v588
  %v684 = vunpack.c.l.b16 %v589
  %v685 = vunpack.c.h.b16 %v589
  %v686 = vpack.c.b16 %v626, %v622
  %v687 = vpack.c.b16 %v627, %v623
  %v688 = vpack.c.b16 %v628, %v624
  %v689 = vpack.c.b16 %v629, %v625
  %v690 = vpack.c.b16 %v634, %v630
  %v691 = vpack.c.b16 %v635, %v631
  %v692 = vpack.c.b16 %v636, %v632
  %v693 = vpack.c.b16 %v637, %v633
  %v694 = vpack.c.b16 %v642, %v638
  %v695 = vpack.c.b16 %v643, %v639
  %v696 = vpack.c.b16 %v644, %v640
  %v697 = vpack.c.b16 %v645, %v641
  %v698 = vpack.c.b16 %v650, %v646
  %v699 = vpack.c.b16 %v651, %v647
  %v700 = vpack.c.b16 %v652, %v648
  %v701 = vpack.c.b16 %v653, %v649
  %v702 = vpack.c.b16 %v658, %v654
  %v703 = vpack.c.b16 %v659, %v655
  %v704 = vpack.c.b16 %v660, %v656
  %v705 = vpack.c.b16 %v661, %v657
  %v706 = vpack.c.b16 %v666, %v662
  %v707 = vpack.c.b16 %v667, %v663
  %v708 = vpack.c.b16 %v668, %v664
  %v709 = vpack.c.b16 %v669, %v665
  %v710 = vpack.c.b16 %v674, %v670
  %v711 = vpack.c.b16 %v675, %v671
  %v712 = vpack.c.b16 %v676, %v672
  %v713 = vpack.c.b16 %v677, %v673
  %v714 = vpack.c.b16 %v682, %v678
  %v715 = vpack.c.b16 %v683, %v679
  %v716 = vpack.c.b16 %v684, %v680
  %v717 = vpack.c.b16 %v685, %v681
  %750 = vmatprep.subr.bf16.mxu0 %v715
  %751 = vmatpush1.bf16.msra.mxu0 %v714
  %752 = vmatprep.subr.bf16.mxu0 %v711
  %753 = vmatpush1.bf16.msra.mxu0 %v710
  %754 = vmatprep.subr.bf16.mxu0 %v707
  %755 = vmatpush1.bf16.msra.mxu0 %v706
  %756 = vmatprep.subr.bf16.mxu0 %v703
  %757 = vmatpush1.bf16.msra.mxu0 %v702
  %758 = vmatprep.subr.bf16.mxu0 %v699
  %759 = vmatpush1.bf16.msra.mxu0 %v698
  %760 = vmatprep.subr.bf16.mxu0 %v695
  %761 = vmatpush1.bf16.msra.mxu0 %v694
  %762 = vmatprep.subr.bf16.mxu0 %v691
  %763 = vmatpush1.bf16.msra.mxu0 %v690
  %764 = vmatprep.subr.bf16.mxu0 %v687
  %765 = vmatpush1.bf16.msra.mxu0 %v686
  %766 = vmatprep.subr.bf16.mxu0 0
  %767 = vmatpush2.bf16.msra.mxu0 0
  %768 = vmatprep.subr.bf16.mxu0 0
  %769 = vmatpush2.bf16.msra.mxu0 0
  %770 = vmatprep.subr.bf16.mxu0 0
  %771 = vmatpush2.bf16.msra.mxu0 0
  %772 = vmatprep.subr.bf16.mxu0 0
  %773 = vmatpush2.bf16.msra.mxu0 0
  %774 = vmatprep.subr.bf16.mxu0 0
  %775 = vmatpush2.bf16.msra.mxu0 0
  %776 = vmatprep.subr.bf16.mxu0 0
  %777 = vmatpush2.bf16.msra.mxu0 0
  %778 = vmatprep.subr.bf16.mxu0 0
  %779 = vmatpush2.bf16.msra.mxu0 0
  %780 = vmatprep.subr.bf16.mxu0 0
  %781 = vmatpush2.bf16.msra.mxu0 0
  %782 = vmatprep.mubr.bf16.mxu0 0
  %783 = vmatmul.mubr.bf16.gmra.mxu0 %v557
  %v784 = vpop.f32.mrf.mxu0
  %v785 = vadd.f32 0.0, %v784
  %v786 = vpop.f32.mrf.mxu0
  %v787 = vadd.f32 0.0, %v786
  %v788 = vpop.f32.mrf.mxu0
  %v789 = vpop.f32.mrf.mxu0
  %790 = vdwg.mxu0
  %791 = vmatprep.subr.bf16.mxu0 %v717
  %792 = vmatpush1.bf16.msra.mxu0 %v716
  %793 = vmatprep.subr.bf16.mxu0 %v713
  %794 = vmatpush1.bf16.msra.mxu0 %v712
  %795 = vmatprep.subr.bf16.mxu0 %v709
  %796 = vmatpush1.bf16.msra.mxu0 %v708
  %797 = vmatprep.subr.bf16.mxu0 %v705
  %798 = vmatpush1.bf16.msra.mxu0 %v704
  %799 = vmatprep.subr.bf16.mxu0 %v701
  %800 = vmatpush1.bf16.msra.mxu0 %v700
  %801 = vmatprep.subr.bf16.mxu0 %v697
  %802 = vmatpush1.bf16.msra.mxu0 %v696
  %803 = vmatprep.subr.bf16.mxu0 %v693
  %804 = vmatpush1.bf16.msra.mxu0 %v692
  %805 = vmatprep.subr.bf16.mxu0 %v689
  %806 = vmatpush1.bf16.msra.mxu0 %v688
  %807 = vmatprep.subr.bf16.mxu0 0
  %808 = vmatpush2.bf16.msra.mxu0 0
  %809 = vmatprep.subr.bf16.mxu0 0
  %810 = vmatpush2.bf16.msra.mxu0 0
  %811 = vmatprep.subr.bf16.mxu0 0
  %812 = vmatpush2.bf16.msra.mxu0 0
  %813 = vmatprep.subr.bf16.mxu0 0
  %814 = vmatpush2.bf16.msra.mxu0 0
  %815 = vmatprep.subr.bf16.mxu0 0
  %816 = vmatpush2.bf16.msra.mxu0 0
  %817 = vmatprep.subr.bf16.mxu0 0
  %818 = vmatpush2.bf16.msra.mxu0 0
  %819 = vmatprep.subr.bf16.mxu0 0
  %820 = vmatpush2.bf16.msra.mxu0 0
  %821 = vmatprep.subr.bf16.mxu0 0
  %822 = vmatpush2.bf16.msra.mxu0 0
  %823 = vmatprep.mubr.bf16.mxu0 0
  %824 = vmatmul.mubr.bf16.gmra.mxu0 %v557
  %v825 = vpop.f32.mrf.mxu0
  %v826 = vadd.f32 0.0, %v825
  %v827 = vpop.f32.mrf.mxu0
  %v828 = vadd.f32 0.0, %v827
  %v829 = vpop.f32.mrf.mxu0
  %v830 = vpop.f32.mrf.mxu0
  %831 = vdwg.mxu0
  %v836 = vrot.slane %v785, 6
  %v837 = vrot.slane %v787, 6
  %v838 = vrot.slane %v826, 6
  %v839 = vrot.slane %v828, 6
  %v844 = vadd.f32 %v553, %v836
  %v845 = vadd.f32 %v554, %v837
  %v846 = vadd.f32 %v555, %v838
  %v847 = vadd.f32 %v556, %v839
  %v848 = vxor.u32 %v844, 2147483648
  %v849 = vmul.f32 %v848, 1.442695
  %v850 = vpow.pop %v849
  %v851 = vadd.f32 %v850, 1.0
  %v852 = vrcp.pop %v851
  %v853 = vmul.f32 1.0, %v852
  %v854 = vxor.u32 %v845, 2147483648
  %v855 = vmul.f32 %v854, 1.442695
  %v856 = vpow.pop %v855
  %v857 = vadd.f32 %v856, 1.0
  %v858 = vrcp.pop %v857
  %v859 = vmul.f32 1.0, %v858
  %v860 = vtanh.pop %v846
  %v861 = vxor.u32 %v847, 2147483648
  %v862 = vmul.f32 %v861, 1.442695
  %v863 = vpow.pop %v862
  %v864 = vadd.f32 %v863, 1.0
  %v865 = vrcp.pop %v864
  %v866 = vmul.f32 1.0, %v865
  %v868 = vrot.slane %v549, 6
  %v870 = vmul.f32 %v859, %v868
  %v871 = vmul.f32 %v853, %v860
  %v872 = vadd.f32 %v870, %v871
  %v873 = vtanh.pop %v872
  %v874 = vmul.f32 %v866, %v873
  %875 = vst [vmem:[#allocation3] sm:$0xc] %v874
  %v876 = vld [vmem:[#allocation2] sm:$0x30]
  %v877 = vld [vmem:[#allocation2 + $0x8] sm:$0x30]
  %v878 = vld [vmem:[#allocation2 + $0x10] sm:$0x30]
  %v879 = vld [vmem:[#allocation2 + $0x18] sm:$0x30]
  %v880 = vpack.c.bf16 %v874, %v874
  %v881 = vld [vmem:[%s2] sm:$0xff]
  %v882 = vld [vmem:[%s2 + $0x8] sm:$0xff]
  %v883 = vld [vmem:[%s2 + $0x10] sm:$0xff]
  %v884 = vld [vmem:[%s2 + $0x18] sm:$0xff]
  %v885 = vld [vmem:[%s2 + $0x20] sm:$0xff]
  %v886 = vld [vmem:[%s2 + $0x28] sm:$0xff]
  %v887 = vld [vmem:[%s2 + $0x30] sm:$0xff]
  %v888 = vld [vmem:[%s2 + $0x38] sm:$0xff]
  %v889 = vld [vmem:[%s2 + $0x40] sm:$0xff]
  %v890 = vld [vmem:[%s2 + $0x48] sm:$0xff]
  %v891 = vld [vmem:[%s2 + $0x50] sm:$0xff]
  %v892 = vld [vmem:[%s2 + $0x58] sm:$0xff]
  %v893 = vld [vmem:[%s2 + $0x60] sm:$0xff]
  %v894 = vld [vmem:[%s2 + $0x68] sm:$0xff]
  %v895 = vld [vmem:[%s2 + $0x70] sm:$0xff]
  %v896 = vld [vmem:[%s2 + $0x78] sm:$0xff]
  %v897 = vld [vmem:[%s2 + $0x80] sm:$0xff]
  %v898 = vld [vmem:[%s2 + $0x88] sm:$0xff]
  %v899 = vld [vmem:[%s2 + $0x90] sm:$0xff]
  %v900 = vld [vmem:[%s2 + $0x98] sm:$0xff]
  %v901 = vld [vmem:[%s2 + $0xa0] sm:$0xff]
  %v902 = vld [vmem:[%s2 + $0xa8] sm:$0xff]
  %v903 = vld [vmem:[%s2 + $0xb0] sm:$0xff]
  %v904 = vld [vmem:[%s2 + $0xb8] sm:$0xff]
  %v905 = vld [vmem:[%s2 + $0xc0] sm:$0xff]
  %v906 = vld [vmem:[%s2 + $0xc8] sm:$0xff]
  %v907 = vld [vmem:[%s2 + $0xd0] sm:$0xff]
  %v908 = vld [vmem:[%s2 + $0xd8] sm:$0xff]
  %v909 = vld [vmem:[%s2 + $0xe0] sm:$0xff]
  %v910 = vld [vmem:[%s2 + $0xe8] sm:$0xff]
  %v911 = vld [vmem:[%s2 + $0xf0] sm:$0xff]
  %v912 = vld [vmem:[%s2 + $0xf8] sm:$0xff]
  %v914 = vrot.slane %v880, 1
  %v948 = vunpack.c.l.b16 %v881
  %v949 = vunpack.c.h.b16 %v881
  %v950 = vunpack.c.l.b16 %v882
  %v951 = vunpack.c.h.b16 %v882
  %v952 = vunpack.c.l.b16 %v883
  %v953 = vunpack.c.h.b16 %v883
  %v954 = vunpack.c.l.b16 %v884
  %v955 = vunpack.c.h.b16 %v884
  %v956 = vunpack.c.l.b16 %v885
  %v957 = vunpack.c.h.b16 %v885
  %v958 = vunpack.c.l.b16 %v886
  %v959 = vunpack.c.h.b16 %v886
  %v960 = vunpack.c.l.b16 %v887
  %v961 = vunpack.c.h.b16 %v887
  %v962 = vunpack.c.l.b16 %v888
  %v963 = vunpack.c.h.b16 %v888
  %v964 = vunpack.c.l.b16 %v889
  %v965 = vunpack.c.h.b16 %v889
  %v966 = vunpack.c.l.b16 %v890
  %v967 = vunpack.c.h.b16 %v890
  %v968 = vunpack.c.l.b16 %v891
  %v969 = vunpack.c.h.b16 %v891
  %v970 = vunpack.c.l.b16 %v892
  %v971 = vunpack.c.h.b16 %v892
  %v972 = vunpack.c.l.b16 %v893
  %v973 = vunpack.c.h.b16 %v893
  %v974 = vunpack.c.l.b16 %v894
  %v975 = vunpack.c.h.b16 %v894
  %v976 = vunpack.c.l.b16 %v895
  %v977 = vunpack.c.h.b16 %v895
  %v978 = vunpack.c.l.b16 %v896
  %v979 = vunpack.c.h.b16 %v896
  %v980 = vunpack.c.l.b16 %v897
  %v981 = vunpack.c.h.b16 %v897
  %v982 = vunpack.c.l.b16 %v898
  %v983 = vunpack.c.h.b16 %v898
  %v984 = vunpack.c.l.b16 %v899
  %v985 = vunpack.c.h.b16 %v899
  %v986 = vunpack.c.l.b16 %v900
  %v987 = vunpack.c.h.b16 %v900
  %v988 = vunpack.c.l.b16 %v901
  %v989 = vunpack.c.h.b16 %v901
  %v990 = vunpack.c.l.b16 %v902
  %v991 = vunpack.c.h.b16 %v902
  %v992 = vunpack.c.l.b16 %v903
  %v993 = vunpack.c.h.b16 %v903
  %v994 = vunpack.c.l.b16 %v904
  %v995 = vunpack.c.h.b16 %v904
  %v996 = vunpack.c.l.b16 %v905
  %v997 = vunpack.c.h.b16 %v905
  %v998 = vunpack.c.l.b16 %v906
  %v999 = vunpack.c.h.b16 %v906
  %v1000 = vunpack.c.l.b16 %v907
  %v1001 = vunpack.c.h.b16 %v907
  %v1002 = vunpack.c.l.b16 %v908
  %v1003 = vunpack.c.h.b16 %v908
  %v1004 = vunpack.c.l.b16 %v909
  %v1005 = vunpack.c.h.b16 %v909
  %v1006 = vunpack.c.l.b16 %v910
  %v1007 = vunpack.c.h.b16 %v910
  %v1008 = vunpack.c.l.b16 %v911
  %v1009 = vunpack.c.h.b16 %v911
  %v1010 = vunpack.c.l.b16 %v912
  %v1011 = vunpack.c.h.b16 %v912
  %v1012 = vpack.c.b16 %v952, %v948
  %v1013 = vpack.c.b16 %v953, %v949
  %v1014 = vpack.c.b16 %v954, %v950
  %v1015 = vpack.c.b16 %v955, %v951
  %v1016 = vpack.c.b16 %v960, %v956
  %v1017 = vpack.c.b16 %v961, %v957
  %v1018 = vpack.c.b16 %v962, %v958
  %v1019 = vpack.c.b16 %v963, %v959
  %v1020 = vpack.c.b16 %v968, %v964
  %v1021 = vpack.c.b16 %v969, %v965
  %v1022 = vpack.c.b16 %v970, %v966
  %v1023 = vpack.c.b16 %v971, %v967
  %v1024 = vpack.c.b16 %v976, %v972
  %v1025 = vpack.c.b16 %v977, %v973
  %v1026 = vpack.c.b16 %v978, %v974
  %v1027 = vpack.c.b16 %v979, %v975
  %v1028 = vpack.c.b16 %v984, %v980
  %v1029 = vpack.c.b16 %v985, %v981
  %v1030 = vpack.c.b16 %v986, %v982
  %v1031 = vpack.c.b16 %v987, %v983
  %v1032 = vpack.c.b16 %v992, %v988
  %v1033 = vpack.c.b16 %v993, %v989
  %v1034 = vpack.c.b16 %v994, %v990
  %v1035 = vpack.c.b16 %v995, %v991
  %v1036 = vpack.c.b16 %v1000, %v996
  %v1037 = vpack.c.b16 %v1001, %v997
  %v1038 = vpack.c.b16 %v1002, %v998
  %v1039 = vpack.c.b16 %v1003, %v999
  %v1040 = vpack.c.b16 %v1008, %v1004
  %v1041 = vpack.c.b16 %v1009, %v1005
  %v1042 = vpack.c.b16 %v1010, %v1006
  %v1043 = vpack.c.b16 %v1011, %v1007
  %1076 = vmatprep.subr.bf16.mxu0 %v1041
  %1077 = vmatpush1.bf16.msra.mxu0 %v1040
  %1078 = vmatprep.subr.bf16.mxu0 %v1037
  %1079 = vmatpush1.bf16.msra.mxu0 %v1036
  %1080 = vmatprep.subr.bf16.mxu0 %v1033
  %1081 = vmatpush1.bf16.msra.mxu0 %v1032
  %1082 = vmatprep.subr.bf16.mxu0 %v1029
  %1083 = vmatpush1.bf16.msra.mxu0 %v1028
  %1084 = vmatprep.subr.bf16.mxu0 %v1025
  %1085 = vmatpush1.bf16.msra.mxu0 %v1024
  %1086 = vmatprep.subr.bf16.mxu0 %v1021
  %1087 = vmatpush1.bf16.msra.mxu0 %v1020
  %1088 = vmatprep.subr.bf16.mxu0 %v1017
  %1089 = vmatpush1.bf16.msra.mxu0 %v1016
  %1090 = vmatprep.subr.bf16.mxu0 %v1013
  %1091 = vmatpush1.bf16.msra.mxu0 %v1012
  %1092 = vmatprep.subr.bf16.mxu0 0
  %1093 = vmatpush2.bf16.msra.mxu0 0
  %1094 = vmatprep.subr.bf16.mxu0 0
  %1095 = vmatpush2.bf16.msra.mxu0 0
  %1096 = vmatprep.subr.bf16.mxu0 0
  %1097 = vmatpush2.bf16.msra.mxu0 0
  %1098 = vmatprep.subr.bf16.mxu0 0
  %1099 = vmatpush2.bf16.msra.mxu0 0
  %1100 = vmatprep.subr.bf16.mxu0 0
  %1101 = vmatpush2.bf16.msra.mxu0 0
  %1102 = vmatprep.subr.bf16.mxu0 0
  %1103 = vmatpush2.bf16.msra.mxu0 0
  %1104 = vmatprep.subr.bf16.mxu0 0
  %1105 = vmatpush2.bf16.msra.mxu0 0
  %1106 = vmatprep.subr.bf16.mxu0 0
  %1107 = vmatpush2.bf16.msra.mxu0 0
  %1108 = vmatprep.mubr.bf16.mxu0 0
  %1109 = vmatmul.mubr.bf16.gmra.mxu0 %v914
  %v1110 = vpop.f32.mrf.mxu0
  %v1111 = vadd.f32 0.0, %v1110
  %v1112 = vpop.f32.mrf.mxu0
  %v1113 = vadd.f32 0.0, %v1112
  %v1114 = vpop.f32.mrf.mxu0
  %v1115 = vpop.f32.mrf.mxu0
  %1116 = vdwg.mxu0
  %1117 = vmatprep.subr.bf16.mxu0 %v1043
  %1118 = vmatpush1.bf16.msra.mxu0 %v1042
  %1119 = vmatprep.subr.bf16.mxu0 %v1039
  %1120 = vmatpush1.bf16.msra.mxu0 %v1038
  %1121 = vmatprep.subr.bf16.mxu0 %v1035
  %1122 = vmatpush1.bf16.msra.mxu0 %v1034
  %1123 = vmatprep.subr.bf16.mxu0 %v1031
  %1124 = vmatpush1.bf16.msra.mxu0 %v1030
  %1125 = vmatprep.subr.bf16.mxu0 %v1027
  %1126 = vmatpush1.bf16.msra.mxu0 %v1026
  %1127 = vmatprep.subr.bf16.mxu0 %v1023
  %1128 = vmatpush1.bf16.msra.mxu0 %v1022
  %1129 = vmatprep.subr.bf16.mxu0 %v1019
  %1130 = vmatpush1.bf16.msra.mxu0 %v1018
  %1131 = vmatprep.subr.bf16.mxu0 %v1015
  %1132 = vmatpush1.bf16.msra.mxu0 %v1014
  %1133 = vmatprep.subr.bf16.mxu0 0
  %1134 = vmatpush2.bf16.msra.mxu0 0
  %1135 = vmatprep.subr.bf16.mxu0 0
  %1136 = vmatpush2.bf16.msra.mxu0 0
  %1137 = vmatprep.subr.bf16.mxu0 0
  %1138 = vmatpush2.bf16.msra.mxu0 0
  %1139 = vmatprep.subr.bf16.mxu0 0
  %1140 = vmatpush2.bf16.msra.mxu0 0
  %1141 = vmatprep.subr.bf16.mxu0 0
  %1142 = vmatpush2.bf16.msra.mxu0 0
  %1143 = vmatprep.subr.bf16.mxu0 0
  %1144 = vmatpush2.bf16.msra.mxu0 0
  %1145 = vmatprep.subr.bf16.mxu0 0
  %1146 = vmatpush2.bf16.msra.mxu0 0
  %1147 = vmatprep.subr.bf16.mxu0 0
  %1148 = vmatpush2.bf16.msra.mxu0 0
  %1149 = vmatprep.mubr.bf16.mxu0 0
  %1150 = vmatmul.mubr.bf16.gmra.mxu0 %v914
  %v1151 = vpop.f32.mrf.mxu0
  %v1152 = vadd.f32 0.0, %v1151
  %v1153 = vpop.f32.mrf.mxu0
  %v1154 = vadd.f32 0.0, %v1153
  %v1155 = vpop.f32.mrf.mxu0
  %v1156 = vpop.f32.mrf.mxu0
  %1157 = vdwg.mxu0
  %v1162 = vrot.slane %v1111, 4
  %v1163 = vrot.slane %v1113, 4
  %v1164 = vrot.slane %v1152, 4
  %v1165 = vrot.slane %v1154, 4
  %v1170 = vadd.f32 %v876, %v1162
  %v1171 = vadd.f32 %v877, %v1163
  %v1172 = vadd.f32 %v878, %v1164
  %v1173 = vadd.f32 %v879, %v1165
  %v1174 = vxor.u32 %v1170, 2147483648
  %v1175 = vmul.f32 %v1174, 1.442695
  %v1176 = vpow.pop %v1175
  %v1177 = vadd.f32 %v1176, 1.0
  %v1178 = vrcp.pop %v1177
  %v1179 = vmul.f32 1.0, %v1178
  %v1180 = vxor.u32 %v1171, 2147483648
  %v1181 = vmul.f32 %v1180, 1.442695
  %v1182 = vpow.pop %v1181
  %v1183 = vadd.f32 %v1182, 1.0
  %v1184 = vrcp.pop %v1183
  %v1185 = vmul.f32 1.0, %v1184
  %v1186 = vtanh.pop %v1172
  %v1187 = vxor.u32 %v1173, 2147483648
  %v1188 = vmul.f32 %v1187, 1.442695
  %v1189 = vpow.pop %v1188
  %v1190 = vadd.f32 %v1189, 1.0
  %v1191 = vrcp.pop %v1190
  %v1192 = vmul.f32 1.0, %v1191
  %v1194 = vrot.slane %v872, 6
  %v1196 = vmul.f32 %v1185, %v1194
  %v1197 = vmul.f32 %v1179, %v1186
  %v1198 = vadd.f32 %v1196, %v1197
  %v1199 = vtanh.pop %v1198
  %v1200 = vmul.f32 %v1192, %v1199
  %1201 = vst [vmem:[#allocation3] sm:$0x30] %v1200
  %v1202 = vld [vmem:[#allocation2] sm:$0xc0]
  %v1203 = vld [vmem:[#allocation2 + $0x8] sm:$0xc0]
  %v1204 = vld [vmem:[#allocation2 + $0x10] sm:$0xc0]
  %v1205 = vld [vmem:[#allocation2 + $0x18] sm:$0xc0]
  %v1206 = vpack.c.bf16 %v1200, %v1200
  %v1207 = vld [vmem:[%s2] sm:$0xff]
  %v1208 = vld [vmem:[%s2 + $0x8] sm:$0xff]
  %v1209 = vld [vmem:[%s2 + $0x10] sm:$0xff]
  %v1210 = vld [vmem:[%s2 + $0x18] sm:$0xff]
  %v1211 = vld [vmem:[%s2 + $0x20] sm:$0xff]
  %v1212 = vld [vmem:[%s2 + $0x28] sm:$0xff]
  %v1213 = vld [vmem:[%s2 + $0x30] sm:$0xff]
  %v1214 = vld [vmem:[%s2 + $0x38] sm:$0xff]
  %v1215 = vld [vmem:[%s2 + $0x40] sm:$0xff]
  %v1216 = vld [vmem:[%s2 + $0x48] sm:$0xff]
  %v1217 = vld [vmem:[%s2 + $0x50] sm:$0xff]
  %v1218 = vld [vmem:[%s2 + $0x58] sm:$0xff]
  %v1219 = vld [vmem:[%s2 + $0x60] sm:$0xff]
  %v1220 = vld [vmem:[%s2 + $0x68] sm:$0xff]
  %v1221 = vld [vmem:[%s2 + $0x70] sm:$0xff]
  %v1222 = vld [vmem:[%s2 + $0x78] sm:$0xff]
  %v1223 = vld [vmem:[%s2 + $0x80] sm:$0xff]
  %v1224 = vld [vmem:[%s2 + $0x88] sm:$0xff]
  %v1225 = vld [vmem:[%s2 + $0x90] sm:$0xff]
  %v1226 = vld [vmem:[%s2 + $0x98] sm:$0xff]
  %v1227 = vld [vmem:[%s2 + $0xa0] sm:$0xff]
  %v1228 = vld [vmem:[%s2 + $0xa8] sm:$0xff]
  %v1229 = vld [vmem:[%s2 + $0xb0] sm:$0xff]
  %v1230 = vld [vmem:[%s2 + $0xb8] sm:$0xff]
  %v1231 = vld [vmem:[%s2 + $0xc0] sm:$0xff]
  %v1232 = vld [vmem:[%s2 + $0xc8] sm:$0xff]
  %v1233 = vld [vmem:[%s2 + $0xd0] sm:$0xff]
  %v1234 = vld [vmem:[%s2 + $0xd8] sm:$0xff]
  %v1235 = vld [vmem:[%s2 + $0xe0] sm:$0xff]
  %v1236 = vld [vmem:[%s2 + $0xe8] sm:$0xff]
  %v1237 = vld [vmem:[%s2 + $0xf0] sm:$0xff]
  %v1238 = vld [vmem:[%s2 + $0xf8] sm:$0xff]
  %v1240 = vrot.slane %v1206, 2
  %v1274 = vunpack.c.l.b16 %v1207
  %v1275 = vunpack.c.h.b16 %v1207
  %v1276 = vunpack.c.l.b16 %v1208
  %v1277 = vunpack.c.h.b16 %v1208
  %v1278 = vunpack.c.l.b16 %v1209
  %v1279 = vunpack.c.h.b16 %v1209
  %v1280 = vunpack.c.l.b16 %v1210
  %v1281 = vunpack.c.h.b16 %v1210
  %v1282 = vunpack.c.l.b16 %v1211
  %v1283 = vunpack.c.h.b16 %v1211
  %v1284 = vunpack.c.l.b16 %v1212
  %v1285 = vunpack.c.h.b16 %v1212
  %v1286 = vunpack.c.l.b16 %v1213
  %v1287 = vunpack.c.h.b16 %v1213
  %v1288 = vunpack.c.l.b16 %v1214
  %v1289 = vunpack.c.h.b16 %v1214
  %v1290 = vunpack.c.l.b16 %v1215
  %v1291 = vunpack.c.h.b16 %v1215
  %v1292 = vunpack.c.l.b16 %v1216
  %v1293 = vunpack.c.h.b16 %v1216
  %v1294 = vunpack.c.l.b16 %v1217
  %v1295 = vunpack.c.h.b16 %v1217
  %v1296 = vunpack.c.l.b16 %v1218
  %v1297 = vunpack.c.h.b16 %v1218
  %v1298 = vunpack.c.l.b16 %v1219
  %v1299 = vunpack.c.h.b16 %v1219
  %v1300 = vunpack.c.l.b16 %v1220
  %v1301 = vunpack.c.h.b16 %v1220
  %v1302 = vunpack.c.l.b16 %v1221
  %v1303 = vunpack.c.h.b16 %v1221
  %v1304 = vunpack.c.l.b16 %v1222
  %v1305 = vunpack.c.h.b16 %v1222
  %v1306 = vunpack.c.l.b16 %v1223
  %v1307 = vunpack.c.h.b16 %v1223
  %v1308 = vunpack.c.l.b16 %v1224
  %v1309 = vunpack.c.h.b16 %v1224
  %v1310 = vunpack.c.l.b16 %v1225
  %v1311 = vunpack.c.h.b16 %v1225
  %v1312 = vunpack.c.l.b16 %v1226
  %v1313 = vunpack.c.h.b16 %v1226
  %v1314 = vunpack.c.l.b16 %v1227
  %v1315 = vunpack.c.h.b16 %v1227
  %v1316 = vunpack.c.l.b16 %v1228
  %v1317 = vunpack.c.h.b16 %v1228
  %v1318 = vunpack.c.l.b16 %v1229
  %v1319 = vunpack.c.h.b16 %v1229
  %v1320 = vunpack.c.l.b16 %v1230
  %v1321 = vunpack.c.h.b16 %v1230
  %v1322 = vunpack.c.l.b16 %v1231
  %v1323 = vunpack.c.h.b16 %v1231
  %v1324 = vunpack.c.l.b16 %v1232
  %v1325 = vunpack.c.h.b16 %v1232
  %v1326 = vunpack.c.l.b16 %v1233
  %v1327 = vunpack.c.h.b16 %v1233
  %v1328 = vunpack.c.l.b16 %v1234
  %v1329 = vunpack.c.h.b16 %v1234
  %v1330 = vunpack.c.l.b16 %v1235
  %v1331 = vunpack.c.h.b16 %v1235
  %v1332 = vunpack.c.l.b16 %v1236
  %v1333 = vunpack.c.h.b16 %v1236
  %v1334 = vunpack.c.l.b16 %v1237
  %v1335 = vunpack.c.h.b16 %v1237
  %v1336 = vunpack.c.l.b16 %v1238
  %v1337 = vunpack.c.h.b16 %v1238
  %v1338 = vpack.c.b16 %v1278, %v1274
  %v1339 = vpack.c.b16 %v1279, %v1275
  %v1340 = vpack.c.b16 %v1280, %v1276
  %v1341 = vpack.c.b16 %v1281, %v1277
  %v1342 = vpack.c.b16 %v1286, %v1282
  %v1343 = vpack.c.b16 %v1287, %v1283
  %v1344 = vpack.c.b16 %v1288, %v1284
  %v1345 = vpack.c.b16 %v1289, %v1285
  %v1346 = vpack.c.b16 %v1294, %v1290
  %v1347 = vpack.c.b16 %v1295, %v1291
  %v1348 = vpack.c.b16 %v1296, %v1292
  %v1349 = vpack.c.b16 %v1297, %v1293
  %v1350 = vpack.c.b16 %v1302, %v1298
  %v1351 = vpack.c.b16 %v1303, %v1299
  %v1352 = vpack.c.b16 %v1304, %v1300
  %v1353 = vpack.c.b16 %v1305, %v1301
  %v1354 = vpack.c.b16 %v1310, %v1306
  %v1355 = vpack.c.b16 %v1311, %v1307
  %v1356 = vpack.c.b16 %v1312, %v1308
  %v1357 = vpack.c.b16 %v1313, %v1309
  %v1358 = vpack.c.b16 %v1318, %v1314
  %v1359 = vpack.c.b16 %v1319, %v1315
  %v1360 = vpack.c.b16 %v1320, %v1316
  %v1361 = vpack.c.b16 %v1321, %v1317
  %v1362 = vpack.c.b16 %v1326, %v1322
  %v1363 = vpack.c.b16 %v1327, %v1323
  %v1364 = vpack.c.b16 %v1328, %v1324
  %v1365 = vpack.c.b16 %v1329, %v1325
  %v1366 = vpack.c.b16 %v1334, %v1330
  %v1367 = vpack.c.b16 %v1335, %v1331
  %v1368 = vpack.c.b16 %v1336, %v1332
  %v1369 = vpack.c.b16 %v1337, %v1333
  %1402 = vmatprep.subr.bf16.mxu0 %v1367
  %1403 = vmatpush1.bf16.msra.mxu0 %v1366
  %1404 = vmatprep.subr.bf16.mxu0 %v1363
  %1405 = vmatpush1.bf16.msra.mxu0 %v1362
  %1406 = vmatprep.subr.bf16.mxu0 %v1359
  %1407 = vmatpush1.bf16.msra.mxu0 %v1358
  %1408 = vmatprep.subr.bf16.mxu0 %v1355
  %1409 = vmatpush1.bf16.msra.mxu0 %v1354
  %1410 = vmatprep.subr.bf16.mxu0 %v1351
  %1411 = vmatpush1.bf16.msra.mxu0 %v1350
  %1412 = vmatprep.subr.bf16.mxu0 %v1347
  %1413 = vmatpush1.bf16.msra.mxu0 %v1346
  %1414 = vmatprep.subr.bf16.mxu0 %v1343
  %1415 = vmatpush1.bf16.msra.mxu0 %v1342
  %1416 = vmatprep.subr.bf16.mxu0 %v1339
  %1417 = vmatpush1.bf16.msra.mxu0 %v1338
  %1418 = vmatprep.subr.bf16.mxu0 0
  %1419 = vmatpush2.bf16.msra.mxu0 0
  %1420 = vmatprep.subr.bf16.mxu0 0
  %1421 = vmatpush2.bf16.msra.mxu0 0
  %1422 = vmatprep.subr.bf16.mxu0 0
  %1423 = vmatpush2.bf16.msra.mxu0 0
  %1424 = vmatprep.subr.bf16.mxu0 0
  %1425 = vmatpush2.bf16.msra.mxu0 0
  %1426 = vmatprep.subr.bf16.mxu0 0
  %1427 = vmatpush2.bf16.msra.mxu0 0
  %1428 = vmatprep.subr.bf16.mxu0 0
  %1429 = vmatpush2.bf16.msra.mxu0 0
  %1430 = vmatprep.subr.bf16.mxu0 0
  %1431 = vmatpush2.bf16.msra.mxu0 0
  %1432 = vmatprep.subr.bf16.mxu0 0
  %1433 = vmatpush2.bf16.msra.mxu0 0
  %1434 = vmatprep.mubr.bf16.mxu0 0
  %1435 = vmatmul.mubr.bf16.gmra.mxu0 %v1240
  %v1436 = vpop.f32.mrf.mxu0
  %v1437 = vadd.f32 0.0, %v1436
  %v1438 = vpop.f32.mrf.mxu0
  %v1439 = vadd.f32 0.0, %v1438
  %v1440 = vpop.f32.mrf.mxu0
  %v1441 = vpop.f32.mrf.mxu0
  %1442 = vdwg.mxu0
  %1443 = vmatprep.subr.bf16.mxu0 %v1369
  %1444 = vmatpush1.bf16.msra.mxu0 %v1368
  %1445 = vmatprep.subr.bf16.mxu0 %v1365
  %1446 = vmatpush1.bf16.msra.mxu0 %v1364
  %1447 = vmatprep.subr.bf16.mxu0 %v1361
  %1448 = vmatpush1.bf16.msra.mxu0 %v1360
  %1449 = vmatprep.subr.bf16.mxu0 %v1357
  %1450 = vmatpush1.bf16.msra.mxu0 %v1356
  %1451 = vmatprep.subr.bf16.mxu0 %v1353
  %1452 = vmatpush1.bf16.msra.mxu0 %v1352
  %1453 = vmatprep.subr.bf16.mxu0 %v1349
  %1454 = vmatpush1.bf16.msra.mxu0 %v1348
  %1455 = vmatprep.subr.bf16.mxu0 %v1345
  %1456 = vmatpush1.bf16.msra.mxu0 %v1344
  %1457 = vmatprep.subr.bf16.mxu0 %v1341
  %1458 = vmatpush1.bf16.msra.mxu0 %v1340
  %1459 = vmatprep.subr.bf16.mxu0 0
  %1460 = vmatpush2.bf16.msra.mxu0 0
  %1461 = vmatprep.subr.bf16.mxu0 0
  %1462 = vmatpush2.bf16.msra.mxu0 0
  %1463 = vmatprep.subr.bf16.mxu0 0
  %1464 = vmatpush2.bf16.msra.mxu0 0
  %1465 = vmatprep.subr.bf16.mxu0 0
  %1466 = vmatpush2.bf16.msra.mxu0 0
  %1467 = vmatprep.subr.bf16.mxu0 0
  %1468 = vmatpush2.bf16.msra.mxu0 0
  %1469 = vmatprep.subr.bf16.mxu0 0
  %1470 = vmatpush2.bf16.msra.mxu0 0
  %1471 = vmatprep.subr.bf16.mxu0 0
  %1472 = vmatpush2.bf16.msra.mxu0 0
  %1473 = vmatprep.subr.bf16.mxu0 0
  %1474 = vmatpush2.bf16.msra.mxu0 0
  %1475 = vmatprep.mubr.bf16.mxu0 0
  %1476 = vmatmul.mubr.bf16.gmra.mxu0 %v1240
  %v1477 = vpop.f32.mrf.mxu0
  %v1478 = vadd.f32 0.0, %v1477
  %v1479 = vpop.f32.mrf.mxu0
  %v1480 = vadd.f32 0.0, %v1479
  %v1481 = vpop.f32.mrf.mxu0
  %v1482 = vpop.f32.mrf.mxu0
  %1483 = vdwg.mxu0
  %v1488 = vrot.slane %v1437, 2
  %v1489 = vrot.slane %v1439, 2
  %v1490 = vrot.slane %v1478, 2
  %v1491 = vrot.slane %v1480, 2
  %v1496 = vadd.f32 %v1202, %v1488
  %v1497 = vadd.f32 %v1203, %v1489
  %v1498 = vadd.f32 %v1204, %v1490
  %v1499 = vadd.f32 %v1205, %v1491
  %v1500 = vxor.u32 %v1496, 2147483648
  %v1501 = vmul.f32 %v1500, 1.442695
  %v1502 = vpow.pop %v1501
  %v1503 = vadd.f32 %v1502, 1.0
  %v1504 = vrcp.pop %v1503
  %v1505 = vmul.f32 1.0, %v1504
  %v1506 = vxor.u32 %v1497, 2147483648
  %v1507 = vmul.f32 %v1506, 1.442695
  %v1508 = vpow.pop %v1507
  %v1509 = vadd.f32 %v1508, 1.0
  %v1510 = vrcp.pop %v1509
  %v1511 = vmul.f32 1.0, %v1510
  %v1512 = vtanh.pop %v1498
  %v1513 = vxor.u32 %v1499, 2147483648
  %v1514 = vmul.f32 %v1513, 1.442695
  %v1515 = vpow.pop %v1514
  %v1516 = vadd.f32 %v1515, 1.0
  %v1517 = vrcp.pop %v1516
  %v1518 = vmul.f32 1.0, %v1517
  %v1520 = vrot.slane %v1198, 6
  %v1522 = vmul.f32 %v1511, %v1520
  %v1523 = vmul.f32 %v1505, %v1512
  %v1524 = vadd.f32 %v1522, %v1523
  %v1525 = vtanh.pop %v1524
  %v1526 = vmul.f32 %v1518, %v1525
  %1527 = vst [vmem:[#allocation3] sm:$0xc0] %v1526
  %v1528 = vld [vmem:[#allocation2 + $0x20] sm:$0x3]
  %v1529 = vld [vmem:[#allocation2 + $0x28] sm:$0x3]
  %v1530 = vld [vmem:[#allocation2 + $0x30] sm:$0x3]
  %v1531 = vld [vmem:[#allocation2 + $0x38] sm:$0x3]
  %v1532 = vpack.c.bf16 %v1526, %v1526
  %v1533 = vld [vmem:[%s2] sm:$0xff]
  %v1534 = vld [vmem:[%s2 + $0x8] sm:$0xff]
  %v1535 = vld [vmem:[%s2 + $0x10] sm:$0xff]
  %v1536 = vld [vmem:[%s2 + $0x18] sm:$0xff]
  %v1537 = vld [vmem:[%s2 + $0x20] sm:$0xff]
  %v1538 = vld [vmem:[%s2 + $0x28] sm:$0xff]
  %v1539 = vld [vmem:[%s2 + $0x30] sm:$0xff]
  %v1540 = vld [vmem:[%s2 + $0x38] sm:$0xff]
  %v1541 = vld [vmem:[%s2 + $0x40] sm:$0xff]
  %v1542 = vld [vmem:[%s2 + $0x48] sm:$0xff]
  %v1543 = vld [vmem:[%s2 + $0x50] sm:$0xff]
  %v1544 = vld [vmem:[%s2 + $0x58] sm:$0xff]
  %v1545 = vld [vmem:[%s2 + $0x60] sm:$0xff]
  %v1546 = vld [vmem:[%s2 + $0x68] sm:$0xff]
  %v1547 = vld [vmem:[%s2 + $0x70] sm:$0xff]
  %v1548 = vld [vmem:[%s2 + $0x78] sm:$0xff]
  %v1549 = vld [vmem:[%s2 + $0x80] sm:$0xff]
  %v1550 = vld [vmem:[%s2 + $0x88] sm:$0xff]
  %v1551 = vld [vmem:[%s2 + $0x90] sm:$0xff]
  %v1552 = vld [vmem:[%s2 + $0x98] sm:$0xff]
  %v1553 = vld [vmem:[%s2 + $0xa0] sm:$0xff]
  %v1554 = vld [vmem:[%s2 + $0xa8] sm:$0xff]
  %v1555 = vld [vmem:[%s2 + $0xb0] sm:$0xff]
  %v1556 = vld [vmem:[%s2 + $0xb8] sm:$0xff]
  %v1557 = vld [vmem:[%s2 + $0xc0] sm:$0xff]
  %v1558 = vld [vmem:[%s2 + $0xc8] sm:$0xff]
  %v1559 = vld [vmem:[%s2 + $0xd0] sm:$0xff]
  %v1560 = vld [vmem:[%s2 + $0xd8] sm:$0xff]
  %v1561 = vld [vmem:[%s2 + $0xe0] sm:$0xff]
  %v1562 = vld [vmem:[%s2 + $0xe8] sm:$0xff]
  %v1563 = vld [vmem:[%s2 + $0xf0] sm:$0xff]
  %v1564 = vld [vmem:[%s2 + $0xf8] sm:$0xff]
  %v1566 = vrot.slane %v1532, 3
  %v1600 = vunpack.c.l.b16 %v1533
  %v1601 = vunpack.c.h.b16 %v1533
  %v1602 = vunpack.c.l.b16 %v1534
  %v1603 = vunpack.c.h.b16 %v1534
  %v1604 = vunpack.c.l.b16 %v1535
  %v1605 = vunpack.c.h.b16 %v1535
  %v1606 = vunpack.c.l.b16 %v1536
  %v1607 = vunpack.c.h.b16 %v1536
  %v1608 = vunpack.c.l.b16 %v1537
  %v1609 = vunpack.c.h.b16 %v1537
  %v1610 = vunpack.c.l.b16 %v1538
  %v1611 = vunpack.c.h.b16 %v1538
  %v1612 = vunpack.c.l.b16 %v1539
  %v1613 = vunpack.c.h.b16 %v1539
  %v1614 = vunpack.c.l.b16 %v1540
  %v1615 = vunpack.c.h.b16 %v1540
  %v1616 = vunpack.c.l.b16 %v1541
  %v1617 = vunpack.c.h.b16 %v1541
  %v1618 = vunpack.c.l.b16 %v1542
  %v1619 = vunpack.c.h.b16 %v1542
  %v1620 = vunpack.c.l.b16 %v1543
  %v1621 = vunpack.c.h.b16 %v1543
  %v1622 = vunpack.c.l.b16 %v1544
  %v1623 = vunpack.c.h.b16 %v1544
  %v1624 = vunpack.c.l.b16 %v1545
  %v1625 = vunpack.c.h.b16 %v1545
  %v1626 = vunpack.c.l.b16 %v1546
  %v1627 = vunpack.c.h.b16 %v1546
  %v1628 = vunpack.c.l.b16 %v1547
  %v1629 = vunpack.c.h.b16 %v1547
  %v1630 = vunpack.c.l.b16 %v1548
  %v1631 = vunpack.c.h.b16 %v1548
  %v1632 = vunpack.c.l.b16 %v1549
  %v1633 = vunpack.c.h.b16 %v1549
  %v1634 = vunpack.c.l.b16 %v1550
  %v1635 = vunpack.c.h.b16 %v1550
  %v1636 = vunpack.c.l.b16 %v1551
  %v1637 = vunpack.c.h.b16 %v1551
  %v1638 = vunpack.c.l.b16 %v1552
  %v1639 = vunpack.c.h.b16 %v1552
  %v1640 = vunpack.c.l.b16 %v1553
  %v1641 = vunpack.c.h.b16 %v1553
  %v1642 = vunpack.c.l.b16 %v1554
  %v1643 = vunpack.c.h.b16 %v1554
  %v1644 = vunpack.c.l.b16 %v1555
  %v1645 = vunpack.c.h.b16 %v1555
  %v1646 = vunpack.c.l.b16 %v1556
  %v1647 = vunpack.c.h.b16 %v1556
  %v1648 = vunpack.c.l.b16 %v1557
  %v1649 = vunpack.c.h.b16 %v1557
  %v1650 = vunpack.c.l.b16 %v1558
  %v1651 = vunpack.c.h.b16 %v1558
  %v1652 = vunpack.c.l.b16 %v1559
  %v1653 = vunpack.c.h.b16 %v1559
  %v1654 = vunpack.c.l.b16 %v1560
  %v1655 = vunpack.c.h.b16 %v1560
  %v1656 = vunpack.c.l.b16 %v1561
  %v1657 = vunpack.c.h.b16 %v1561
  %v1658 = vunpack.c.l.b16 %v1562
  %v1659 = vunpack.c.h.b16 %v1562
  %v1660 = vunpack.c.l.b16 %v1563
  %v1661 = vunpack.c.h.b16 %v1563
  %v1662 = vunpack.c.l.b16 %v1564
  %v1663 = vunpack.c.h.b16 %v1564
  %v1664 = vpack.c.b16 %v1604, %v1600
  %v1665 = vpack.c.b16 %v1605, %v1601
  %v1666 = vpack.c.b16 %v1606, %v1602
  %v1667 = vpack.c.b16 %v1607, %v1603
  %v1668 = vpack.c.b16 %v1612, %v1608
  %v1669 = vpack.c.b16 %v1613, %v1609
  %v1670 = vpack.c.b16 %v1614, %v1610
  %v1671 = vpack.c.b16 %v1615, %v1611
  %v1672 = vpack.c.b16 %v1620, %v1616
  %v1673 = vpack.c.b16 %v1621, %v1617
  %v1674 = vpack.c.b16 %v1622, %v1618
  %v1675 = vpack.c.b16 %v1623, %v1619
  %v1676 = vpack.c.b16 %v1628, %v1624
  %v1677 = vpack.c.b16 %v1629, %v1625
  %v1678 = vpack.c.b16 %v1630, %v1626
  %v1679 = vpack.c.b16 %v1631, %v1627
  %v1680 = vpack.c.b16 %v1636, %v1632
  %v1681 = vpack.c.b16 %v1637, %v1633
  %v1682 = vpack.c.b16 %v1638, %v1634
  %v1683 = vpack.c.b16 %v1639, %v1635
  %v1684 = vpack.c.b16 %v1644, %v1640
  %v1685 = vpack.c.b16 %v1645, %v1641
  %v1686 = vpack.c.b16 %v1646, %v1642
  %v1687 = vpack.c.b16 %v1647, %v1643
  %v1688 = vpack.c.b16 %v1652, %v1648
  %v1689 = vpack.c.b16 %v1653, %v1649
  %v1690 = vpack.c.b16 %v1654, %v1650
  %v1691 = vpack.c.b16 %v1655, %v1651
  %v1692 = vpack.c.b16 %v1660, %v1656
  %v1693 = vpack.c.b16 %v1661, %v1657
  %v1694 = vpack.c.b16 %v1662, %v1658
  %v1695 = vpack.c.b16 %v1663, %v1659
  %1728 = vmatprep.subr.bf16.mxu0 %v1693
  %1729 = vmatpush1.bf16.msra.mxu0 %v1692
  %1730 = vmatprep.subr.bf16.mxu0 %v1689
  %1731 = vmatpush1.bf16.msra.mxu0 %v1688
  %1732 = vmatprep.subr.bf16.mxu0 %v1685
  %1733 = vmatpush1.bf16.msra.mxu0 %v1684
  %1734 = vmatprep.subr.bf16.mxu0 %v1681
  %1735 = vmatpush1.bf16.msra.mxu0 %v1680
  %1736 = vmatprep.subr.bf16.mxu0 %v1677
  %1737 = vmatpush1.bf16.msra.mxu0 %v1676
  %1738 = vmatprep.subr.bf16.mxu0 %v1673
  %1739 = vmatpush1.bf16.msra.mxu0 %v1672
  %1740 = vmatprep.subr.bf16.mxu0 %v1669
  %1741 = vmatpush1.bf16.msra.mxu0 %v1668
  %1742 = vmatprep.subr.bf16.mxu0 %v1665
  %1743 = vmatpush1.bf16.msra.mxu0 %v1664
  %1744 = vmatprep.subr.bf16.mxu0 0
  %1745 = vmatpush2.bf16.msra.mxu0 0
  %1746 = vmatprep.subr.bf16.mxu0 0
  %1747 = vmatpush2.bf16.msra.mxu0 0
  %1748 = vmatprep.subr.bf16.mxu0 0
  %1749 = vmatpush2.bf16.msra.mxu0 0
  %1750 = vmatprep.subr.bf16.mxu0 0
  %1751 = vmatpush2.bf16.msra.mxu0 0
  %1752 = vmatprep.subr.bf16.mxu0 0
  %1753 = vmatpush2.bf16.msra.mxu0 0
  %1754 = vmatprep.subr.bf16.mxu0 0
  %1755 = vmatpush2.bf16.msra.mxu0 0
  %1756 = vmatprep.subr.bf16.mxu0 0
  %1757 = vmatpush2.bf16.msra.mxu0 0
  %1758 = vmatprep.subr.bf16.mxu0 0
  %1759 = vmatpush2.bf16.msra.mxu0 0
  %1760 = vmatprep.mubr.bf16.mxu0 0
  %1761 = vmatmul.mubr.bf16.gmra.mxu0 %v1566
  %v1762 = vpop.f32.mrf.mxu0
  %v1763 = vadd.f32 0.0, %v1762
  %v1764 = vpop.f32.mrf.mxu0
  %v1765 = vadd.f32 0.0, %v1764
  %v1766 = vpop.f32.mrf.mxu0
  %v1767 = vpop.f32.mrf.mxu0
  %1768 = vdwg.mxu0
  %1769 = vmatprep.subr.bf16.mxu0 %v1695
  %1770 = vmatpush1.bf16.msra.mxu0 %v1694
  %1771 = vmatprep.subr.bf16.mxu0 %v1691
  %1772 = vmatpush1.bf16.msra.mxu0 %v1690
  %1773 = vmatprep.subr.bf16.mxu0 %v1687
  %1774 = vmatpush1.bf16.msra.mxu0 %v1686
  %1775 = vmatprep.subr.bf16.mxu0 %v1683
  %1776 = vmatpush1.bf16.msra.mxu0 %v1682
  %1777 = vmatprep.subr.bf16.mxu0 %v1679
  %1778 = vmatpush1.bf16.msra.mxu0 %v1678
  %1779 = vmatprep.subr.bf16.mxu0 %v1675
  %1780 = vmatpush1.bf16.msra.mxu0 %v1674
  %1781 = vmatprep.subr.bf16.mxu0 %v1671
  %1782 = vmatpush1.bf16.msra.mxu0 %v1670
  %1783 = vmatprep.subr.bf16.mxu0 %v1667
  %1784 = vmatpush1.bf16.msra.mxu0 %v1666
  %1785 = vmatprep.subr.bf16.mxu0 0
  %1786 = vmatpush2.bf16.msra.mxu0 0
  %1787 = vmatprep.subr.bf16.mxu0 0
  %1788 = vmatpush2.bf16.msra.mxu0 0
  %1789 = vmatprep.subr.bf16.mxu0 0
  %1790 = vmatpush2.bf16.msra.mxu0 0
  %1791 = vmatprep.subr.bf16.mxu0 0
  %1792 = vmatpush2.bf16.msra.mxu0 0
  %1793 = vmatprep.subr.bf16.mxu0 0
  %1794 = vmatpush2.bf16.msra.mxu0 0
  %1795 = vmatprep.subr.bf16.mxu0 0
  %1796 = vmatpush2.bf16.msra.mxu0 0
  %1797 = vmatprep.subr.bf16.mxu0 0
  %1798 = vmatpush2.bf16.msra.mxu0 0
  %1799 = vmatprep.subr.bf16.mxu0 0
  %1800 = vmatpush2.bf16.msra.mxu0 0
  %1801 = vmatprep.mubr.bf16.mxu0 0
  %1802 = vmatmul.mubr.bf16.gmra.mxu0 %v1566
  %v1803 = vpop.f32.mrf.mxu0
  %v1804 = vadd.f32 0.0, %v1803
  %v1805 = vpop.f32.mrf.mxu0
  %v1806 = vadd.f32 0.0, %v1805
  %v1807 = vpop.f32.mrf.mxu0
  %v1808 = vpop.f32.mrf.mxu0
  %1809 = vdwg.mxu0
  %v1810 = vadd.f32 %v1528, %v1763
  %v1811 = vadd.f32 %v1529, %v1765
  %v1812 = vadd.f32 %v1530, %v1804
  %v1813 = vadd.f32 %v1531, %v1806
  %v1814 = vxor.u32 %v1810, 2147483648
  %v1815 = vmul.f32 %v1814, 1.442695
  %v1816 = vpow.pop %v1815
  %v1817 = vadd.f32 %v1816, 1.0
  %v1818 = vrcp.pop %v1817
  %v1819 = vmul.f32 1.0, %v1818
  %v1820 = vxor.u32 %v1811, 2147483648
  %v1821 = vmul.f32 %v1820, 1.442695
  %v1822 = vpow.pop %v1821
  %v1823 = vadd.f32 %v1822, 1.0
  %v1824 = vrcp.pop %v1823
  %v1825 = vmul.f32 1.0, %v1824
  %v1826 = vtanh.pop %v1812
  %v1827 = vxor.u32 %v1813, 2147483648
  %v1828 = vmul.f32 %v1827, 1.442695
  %v1829 = vpow.pop %v1828
  %v1830 = vadd.f32 %v1829, 1.0
  %v1831 = vrcp.pop %v1830
  %v1832 = vmul.f32 1.0, %v1831
  %v1834 = vrot.slane %v1524, 6
  %v1836 = vmul.f32 %v1825, %v1834
  %v1837 = vmul.f32 %v1819, %v1826
  %v1838 = vadd.f32 %v1836, %v1837
  %v1839 = vtanh.pop %v1838
  %v1840 = vmul.f32 %v1832, %v1839
  %1841 = vst [vmem:[#allocation3 + $0x8] sm:$0x3] %v1840
  %v1842 = vld [vmem:[#allocation2 + $0x20] sm:$0xc]
  %v1843 = vld [vmem:[#allocation2 + $0x28] sm:$0xc]
  %v1844 = vld [vmem:[#allocation2 + $0x30] sm:$0xc]
  %v1845 = vld [vmem:[#allocation2 + $0x38] sm:$0xc]
  %v1846 = vpack.c.bf16 %v1840, %v1840
  %v1847 = vld [vmem:[%s2] sm:$0xff]
  %v1848 = vld [vmem:[%s2 + $0x8] sm:$0xff]
  %v1849 = vld [vmem:[%s2 + $0x10] sm:$0xff]
  %v1850 = vld [vmem:[%s2 + $0x18] sm:$0xff]
  %v1851 = vld [vmem:[%s2 + $0x20] sm:$0xff]
  %v1852 = vld [vmem:[%s2 + $0x28] sm:$0xff]
  %v1853 = vld [vmem:[%s2 + $0x30] sm:$0xff]
  %v1854 = vld [vmem:[%s2 + $0x38] sm:$0xff]
  %v1855 = vld [vmem:[%s2 + $0x40] sm:$0xff]
  %v1856 = vld [vmem:[%s2 + $0x48] sm:$0xff]
  %v1857 = vld [vmem:[%s2 + $0x50] sm:$0xff]
  %v1858 = vld [vmem:[%s2 + $0x58] sm:$0xff]
  %v1859 = vld [vmem:[%s2 + $0x60] sm:$0xff]
  %v1860 = vld [vmem:[%s2 + $0x68] sm:$0xff]
  %v1861 = vld [vmem:[%s2 + $0x70] sm:$0xff]
  %v1862 = vld [vmem:[%s2 + $0x78] sm:$0xff]
  %v1863 = vld [vmem:[%s2 + $0x80] sm:$0xff]
  %v1864 = vld [vmem:[%s2 + $0x88] sm:$0xff]
  %v1865 = vld [vmem:[%s2 + $0x90] sm:$0xff]
  %v1866 = vld [vmem:[%s2 + $0x98] sm:$0xff]
  %v1867 = vld [vmem:[%s2 + $0xa0] sm:$0xff]
  %v1868 = vld [vmem:[%s2 + $0xa8] sm:$0xff]
  %v1869 = vld [vmem:[%s2 + $0xb0] sm:$0xff]
  %v1870 = vld [vmem:[%s2 + $0xb8] sm:$0xff]
  %v1871 = vld [vmem:[%s2 + $0xc0] sm:$0xff]
  %v1872 = vld [vmem:[%s2 + $0xc8] sm:$0xff]
  %v1873 = vld [vmem:[%s2 + $0xd0] sm:$0xff]
  %v1874 = vld [vmem:[%s2 + $0xd8] sm:$0xff]
  %v1875 = vld [vmem:[%s2 + $0xe0] sm:$0xff]
  %v1876 = vld [vmem:[%s2 + $0xe8] sm:$0xff]
  %v1877 = vld [vmem:[%s2 + $0xf0] sm:$0xff]
  %v1878 = vld [vmem:[%s2 + $0xf8] sm:$0xff]
  %v1911 = vunpack.c.l.b16 %v1847
  %v1912 = vunpack.c.h.b16 %v1847
  %v1913 = vunpack.c.l.b16 %v1848
  %v1914 = vunpack.c.h.b16 %v1848
  %v1915 = vunpack.c.l.b16 %v1849
  %v1916 = vunpack.c.h.b16 %v1849
  %v1917 = vunpack.c.l.b16 %v1850
  %v1918 = vunpack.c.h.b16 %v1850
  %v1919 = vunpack.c.l.b16 %v1851
  %v1920 = vunpack.c.h.b16 %v1851
  %v1921 = vunpack.c.l.b16 %v1852
  %v1922 = vunpack.c.h.b16 %v1852
  %v1923 = vunpack.c.l.b16 %v1853
  %v1924 = vunpack.c.h.b16 %v1853
  %v1925 = vunpack.c.l.b16 %v1854
  %v1926 = vunpack.c.h.b16 %v1854
  %v1927 = vunpack.c.l.b16 %v1855
  %v1928 = vunpack.c.h.b16 %v1855
  %v1929 = vunpack.c.l.b16 %v1856
  %v1930 = vunpack.c.h.b16 %v1856
  %v1931 = vunpack.c.l.b16 %v1857
  %v1932 = vunpack.c.h.b16 %v1857
  %v1933 = vunpack.c.l.b16 %v1858
  %v1934 = vunpack.c.h.b16 %v1858
  %v1935 = vunpack.c.l.b16 %v1859
  %v1936 = vunpack.c.h.b16 %v1859
  %v1937 = vunpack.c.l.b16 %v1860
  %v1938 = vunpack.c.h.b16 %v1860
  %v1939 = vunpack.c.l.b16 %v1861
  %v1940 = vunpack.c.h.b16 %v1861
  %v1941 = vunpack.c.l.b16 %v1862
  %v1942 = vunpack.c.h.b16 %v1862
  %v1943 = vunpack.c.l.b16 %v1863
  %v1944 = vunpack.c.h.b16 %v1863
  %v1945 = vunpack.c.l.b16 %v1864
  %v1946 = vunpack.c.h.b16 %v1864
  %v1947 = vunpack.c.l.b16 %v1865
  %v1948 = vunpack.c.h.b16 %v1865
  %v1949 = vunpack.c.l.b16 %v1866
  %v1950 = vunpack.c.h.b16 %v1866
  %v1951 = vunpack.c.l.b16 %v1867
  %v1952 = vunpack.c.h.b16 %v1867
  %v1953 = vunpack.c.l.b16 %v1868
  %v1954 = vunpack.c.h.b16 %v1868
  %v1955 = vunpack.c.l.b16 %v1869
  %v1956 = vunpack.c.h.b16 %v1869
  %v1957 = vunpack.c.l.b16 %v1870
  %v1958 = vunpack.c.h.b16 %v1870
  %v1959 = vunpack.c.l.b16 %v1871
  %v1960 = vunpack.c.h.b16 %v1871
  %v1961 = vunpack.c.l.b16 %v1872
  %v1962 = vunpack.c.h.b16 %v1872
  %v1963 = vunpack.c.l.b16 %v1873
  %v1964 = vunpack.c.h.b16 %v1873
  %v1965 = vunpack.c.l.b16 %v1874
  %v1966 = vunpack.c.h.b16 %v1874
  %v1967 = vunpack.c.l.b16 %v1875
  %v1968 = vunpack.c.h.b16 %v1875
  %v1969 = vunpack.c.l.b16 %v1876
  %v1970 = vunpack.c.h.b16 %v1876
  %v1971 = vunpack.c.l.b16 %v1877
  %v1972 = vunpack.c.h.b16 %v1877
  %v1973 = vunpack.c.l.b16 %v1878
  %v1974 = vunpack.c.h.b16 %v1878
  %v1975 = vpack.c.b16 %v1915, %v1911
  %v1976 = vpack.c.b16 %v1916, %v1912
  %v1977 = vpack.c.b16 %v1917, %v1913
  %v1978 = vpack.c.b16 %v1918, %v1914
  %v1979 = vpack.c.b16 %v1923, %v1919
  %v1980 = vpack.c.b16 %v1924, %v1920
  %v1981 = vpack.c.b16 %v1925, %v1921
  %v1982 = vpack.c.b16 %v1926, %v1922
  %v1983 = vpack.c.b16 %v1931, %v1927
  %v1984 = vpack.c.b16 %v1932, %v1928
  %v1985 = vpack.c.b16 %v1933, %v1929
  %v1986 = vpack.c.b16 %v1934, %v1930
  %v1987 = vpack.c.b16 %v1939, %v1935
  %v1988 = vpack.c.b16 %v1940, %v1936
  %v1989 = vpack.c.b16 %v1941, %v1937
  %v1990 = vpack.c.b16 %v1942, %v1938
  %v1991 = vpack.c.b16 %v1947, %v1943
  %v1992 = vpack.c.b16 %v1948, %v1944
  %v1993 = vpack.c.b16 %v1949, %v1945
  %v1994 = vpack.c.b16 %v1950, %v1946
  %v1995 = vpack.c.b16 %v1955, %v1951
  %v1996 = vpack.c.b16 %v1956, %v1952
  %v1997 = vpack.c.b16 %v1957, %v1953
  %v1998 = vpack.c.b16 %v1958, %v1954
  %v1999 = vpack.c.b16 %v1963, %v1959
  %v2000 = vpack.c.b16 %v1964, %v1960
  %v2001 = vpack.c.b16 %v1965, %v1961
  %v2002 = vpack.c.b16 %v1966, %v1962
  %v2003 = vpack.c.b16 %v1971, %v1967
  %v2004 = vpack.c.b16 %v1972, %v1968
  %v2005 = vpack.c.b16 %v1973, %v1969
  %v2006 = vpack.c.b16 %v1974, %v1970
  %2039 = vmatprep.subr.bf16.mxu0 %v2004
  %2040 = vmatpush1.bf16.msra.mxu0 %v2003
  %2041 = vmatprep.subr.bf16.mxu0 %v2000
  %2042 = vmatpush1.bf16.msra.mxu0 %v1999
  %2043 = vmatprep.subr.bf16.mxu0 %v1996
  %2044 = vmatpush1.bf16.msra.mxu0 %v1995
  %2045 = vmatprep.subr.bf16.mxu0 %v1992
  %2046 = vmatpush1.bf16.msra.mxu0 %v1991
  %2047 = vmatprep.subr.bf16.mxu0 %v1988
  %2048 = vmatpush1.bf16.msra.mxu0 %v1987
  %2049 = vmatprep.subr.bf16.mxu0 %v1984
  %2050 = vmatpush1.bf16.msra.mxu0 %v1983
  %2051 = vmatprep.subr.bf16.mxu0 %v1980
  %2052 = vmatpush1.bf16.msra.mxu0 %v1979
  %2053 = vmatprep.subr.bf16.mxu0 %v1976
  %2054 = vmatpush1.bf16.msra.mxu0 %v1975
  %2055 = vmatprep.subr.bf16.mxu0 0
  %2056 = vmatpush2.bf16.msra.mxu0 0
  %2057 = vmatprep.subr.bf16.mxu0 0
  %2058 = vmatpush2.bf16.msra.mxu0 0
  %2059 = vmatprep.subr.bf16.mxu0 0
  %2060 = vmatpush2.bf16.msra.mxu0 0
  %2061 = vmatprep.subr.bf16.mxu0 0
  %2062 = vmatpush2.bf16.msra.mxu0 0
  %2063 = vmatprep.subr.bf16.mxu0 0
  %2064 = vmatpush2.bf16.msra.mxu0 0
  %2065 = vmatprep.subr.bf16.mxu0 0
  %2066 = vmatpush2.bf16.msra.mxu0 0
  %2067 = vmatprep.subr.bf16.mxu0 0
  %2068 = vmatpush2.bf16.msra.mxu0 0
  %2069 = vmatprep.subr.bf16.mxu0 0
  %2070 = vmatpush2.bf16.msra.mxu0 0
  %2071 = vmatprep.mubr.bf16.mxu0 0
  %2072 = vmatmul.mubr.bf16.gmra.mxu0 %v1846
  %v2073 = vpop.f32.mrf.mxu0
  %v2074 = vadd.f32 0.0, %v2073
  %v2075 = vpop.f32.mrf.mxu0
  %v2076 = vadd.f32 0.0, %v2075
  %v2077 = vpop.f32.mrf.mxu0
  %v2078 = vpop.f32.mrf.mxu0
  %2079 = vdwg.mxu0
  %2080 = vmatprep.subr.bf16.mxu0 %v2006
  %2081 = vmatpush1.bf16.msra.mxu0 %v2005
  %2082 = vmatprep.subr.bf16.mxu0 %v2002
  %2083 = vmatpush1.bf16.msra.mxu0 %v2001
  %2084 = vmatprep.subr.bf16.mxu0 %v1998
  %2085 = vmatpush1.bf16.msra.mxu0 %v1997
  %2086 = vmatprep.subr.bf16.mxu0 %v1994
  %2087 = vmatpush1.bf16.msra.mxu0 %v1993
  %2088 = vmatprep.subr.bf16.mxu0 %v1990
  %2089 = vmatpush1.bf16.msra.mxu0 %v1989
  %2090 = vmatprep.subr.bf16.mxu0 %v1986
  %2091 = vmatpush1.bf16.msra.mxu0 %v1985
  %2092 = vmatprep.subr.bf16.mxu0 %v1982
  %2093 = vmatpush1.bf16.msra.mxu0 %v1981
  %2094 = vmatprep.subr.bf16.mxu0 %v1978
  %2095 = vmatpush1.bf16.msra.mxu0 %v1977
  %2096 = vmatprep.subr.bf16.mxu0 0
  %2097 = vmatpush2.bf16.msra.mxu0 0
  %2098 = vmatprep.subr.bf16.mxu0 0
  %2099 = vmatpush2.bf16.msra.mxu0 0
  %2100 = vmatprep.subr.bf16.mxu0 0
  %2101 = vmatpush2.bf16.msra.mxu0 0
  %2102 = vmatprep.subr.bf16.mxu0 0
  %2103 = vmatpush2.bf16.msra.mxu0 0
  %2104 = vmatprep.subr.bf16.mxu0 0
  %2105 = vmatpush2.bf16.msra.mxu0 0
  %2106 = vmatprep.subr.bf16.mxu0 0
  %2107 = vmatpush2.bf16.msra.mxu0 0
  %2108 = vmatprep.subr.bf16.mxu0 0
  %2109 = vmatpush2.bf16.msra.mxu0 0
  %2110 = vmatprep.subr.bf16.mxu0 0
  %2111 = vmatpush2.bf16.msra.mxu0 0
  %2112 = vmatprep.mubr.bf16.mxu0 0
  %2113 = vmatmul.mubr.bf16.gmra.mxu0 %v1846
  %v2114 = vpop.f32.mrf.mxu0
  %v2115 = vadd.f32 0.0, %v2114
  %v2116 = vpop.f32.mrf.mxu0
  %v2117 = vadd.f32 0.0, %v2116
  %v2118 = vpop.f32.mrf.mxu0
  %v2119 = vpop.f32.mrf.mxu0
  %2120 = vdwg.mxu0
  %v2125 = vrot.slane %v2074, 6
  %v2126 = vrot.slane %v2076, 6
  %v2127 = vrot.slane %v2115, 6
  %v2128 = vrot.slane %v2117, 6
  %v2133 = vadd.f32 %v1842, %v2125
  %v2134 = vadd.f32 %v1843, %v2126
  %v2135 = vadd.f32 %v1844, %v2127
  %v2136 = vadd.f32 %v1845, %v2128
  %v2137 = vxor.u32 %v2133, 2147483648
  %v2138 = vmul.f32 %v2137, 1.442695
  %v2139 = vpow.pop %v2138
  %v2140 = vadd.f32 %v2139, 1.0
  %v2141 = vrcp.pop %v2140
  %v2142 = vmul.f32 1.0, %v2141
  %v2143 = vxor.u32 %v2134, 2147483648
  %v2144 = vmul.f32 %v2143, 1.442695
  %v2145 = vpow.pop %v2144
  %v2146 = vadd.f32 %v2145, 1.0
  %v2147 = vrcp.pop %v2146
  %v2148 = vmul.f32 1.0, %v2147
  %v2149 = vtanh.pop %v2135
  %v2150 = vxor.u32 %v2136, 2147483648
  %v2151 = vmul.f32 %v2150, 1.442695
  %v2152 = vpow.pop %v2151
  %v2153 = vadd.f32 %v2152, 1.0
  %v2154 = vrcp.pop %v2153
  %v2155 = vmul.f32 1.0, %v2154
  %v2157 = vrot.slane %v1838, 6
  %v2159 = vmul.f32 %v2148, %v2157
  %v2160 = vmul.f32 %v2142, %v2149
  %v2161 = vadd.f32 %v2159, %v2160
  %v2162 = vtanh.pop %v2161
  %v2163 = vmul.f32 %v2155, %v2162
  %2164 = vst [vmem:[#allocation3 + $0x8] sm:$0xc] %v2163
  %v2165 = vld [vmem:[#allocation3] sm:$0xff]
  %v2166 = vld [vmem:[#allocation3 + $0x8] sm:$0xf]
  %v2167 = vpack.c.bf16 %v2166, %v2165
  %v2168 = vld [vmem:[%s4] sm:$0xff]
  %v2169 = vld [vmem:[%s4 + $0x8] sm:$0xff]
  %v2170 = vld [vmem:[%s4 + $0x10] sm:$0xff]
  %v2171 = vld [vmem:[%s4 + $0x18] sm:$0xff]
  %v2172 = vld [vmem:[%s4 + $0x20] sm:$0xff]
  %v2173 = vld [vmem:[%s4 + $0x28] sm:$0xff]
  %v2174 = vld [vmem:[%s4 + $0x30] sm:$0xff]
  %v2175 = vld [vmem:[%s4 + $0x38] sm:$0xff]
  %v2176 = vld [vmem:[%s4 + $0x40] sm:$0xff]
  %v2177 = vld [vmem:[%s4 + $0x48] sm:$0xff]
  %v2178 = vld [vmem:[%s4 + $0x50] sm:$0xff]
  %v2179 = vld [vmem:[%s4 + $0x58] sm:$0xff]
  %v2180 = vld [vmem:[%s4 + $0x60] sm:$0xff]
  %v2181 = vld [vmem:[%s4 + $0x68] sm:$0xff]
  %v2182 = vld [vmem:[%s4 + $0x70] sm:$0xff]
  %v2183 = vld [vmem:[%s4 + $0x78] sm:$0xff]
  %v2184 = vld [vmem:[%s4 + $0x80] sm:$0xff]
  %v2185 = vld [vmem:[%s4 + $0x88] sm:$0xff]
  %v2186 = vld [vmem:[%s4 + $0x90] sm:$0xff]
  %v2187 = vld [vmem:[%s4 + $0x98] sm:$0xff]
  %v2188 = vld [vmem:[%s4 + $0xa0] sm:$0xff]
  %v2189 = vld [vmem:[%s4 + $0xa8] sm:$0xff]
  %v2190 = vld [vmem:[%s4 + $0xb0] sm:$0xff]
  %v2191 = vld [vmem:[%s4 + $0xb8] sm:$0xff]
  %v2192 = vld [vmem:[%s4 + $0xc0] sm:$0xff]
  %v2193 = vld [vmem:[%s4 + $0xc8] sm:$0xff]
  %v2194 = vld [vmem:[%s4 + $0xd0] sm:$0xff]
  %v2195 = vld [vmem:[%s4 + $0xd8] sm:$0xff]
  %v2196 = vld [vmem:[%s4 + $0xe0] sm:$0xff]
  %v2197 = vld [vmem:[%s4 + $0xe8] sm:$0xff]
  %v2198 = vld [vmem:[%s4 + $0xf0] sm:$0xff]
  %v2199 = vld [vmem:[%s4 + $0xf8] sm:$0xff]
  %v2200 = vld [vmem:[%s6] sm:$0xf]
  %v2202 = vlaneseq
  %v2203 = vshrl.u32 %v2202, 7
  %v2204 = vsub.s32 0, %v2203
  %v2205 = vrot.slane %v2200, %v2204
  %v2206 = vlaneseq
  %v2207 = vshrl.u32 %v2206, 7
  %v2208 = vsub.s32 1, %v2207
  %v2209 = vrot.slane %v2200, %v2208
  %v2210 = vlaneseq
  %v2211 = vshrl.u32 %v2210, 7
  %v2212 = vsub.s32 2, %v2211
  %v2213 = vrot.slane %v2200, %v2212
  %v2214 = vlaneseq
  %v2215 = vshrl.u32 %v2214, 7
  %v2216 = vsub.s32 3, %v2215
  %v2217 = vrot.slane %v2200, %v2216
  %v2254 = vunpack.c.l.b16 %v2168
  %v2255 = vunpack.c.h.b16 %v2168
  %v2256 = vunpack.c.l.b16 %v2169
  %v2257 = vunpack.c.h.b16 %v2169
  %v2258 = vunpack.c.l.b16 %v2170
  %v2259 = vunpack.c.h.b16 %v2170
  %v2260 = vunpack.c.l.b16 %v2171
  %v2261 = vunpack.c.h.b16 %v2171
  %v2262 = vunpack.c.l.b16 %v2172
  %v2263 = vunpack.c.h.b16 %v2172
  %v2264 = vunpack.c.l.b16 %v2173
  %v2265 = vunpack.c.h.b16 %v2173
  %v2266 = vunpack.c.l.b16 %v2174
  %v2267 = vunpack.c.h.b16 %v2174
  %v2268 = vunpack.c.l.b16 %v2175
  %v2269 = vunpack.c.h.b16 %v2175
  %v2270 = vunpack.c.l.b16 %v2176
  %v2271 = vunpack.c.h.b16 %v2176
  %v2272 = vunpack.c.l.b16 %v2177
  %v2273 = vunpack.c.h.b16 %v2177
  %v2274 = vunpack.c.l.b16 %v2178
  %v2275 = vunpack.c.h.b16 %v2178
  %v2276 = vunpack.c.l.b16 %v2179
  %v2277 = vunpack.c.h.b16 %v2179
  %v2278 = vunpack.c.l.b16 %v2180
  %v2279 = vunpack.c.h.b16 %v2180
  %v2280 = vunpack.c.l.b16 %v2181
  %v2281 = vunpack.c.h.b16 %v2181
  %v2282 = vunpack.c.l.b16 %v2182
  %v2283 = vunpack.c.h.b16 %v2182
  %v2284 = vunpack.c.l.b16 %v2183
  %v2285 = vunpack.c.h.b16 %v2183
  %v2286 = vunpack.c.l.b16 %v2184
  %v2287 = vunpack.c.h.b16 %v2184
  %v2288 = vunpack.c.l.b16 %v2185
  %v2289 = vunpack.c.h.b16 %v2185
  %v2290 = vunpack.c.l.b16 %v2186
  %v2291 = vunpack.c.h.b16 %v2186
  %v2292 = vunpack.c.l.b16 %v2187
  %v2293 = vunpack.c.h.b16 %v2187
  %v2294 = vunpack.c.l.b16 %v2188
  %v2295 = vunpack.c.h.b16 %v2188
  %v2296 = vunpack.c.l.b16 %v2189
  %v2297 = vunpack.c.h.b16 %v2189
  %v2298 = vunpack.c.l.b16 %v2190
  %v2299 = vunpack.c.h.b16 %v2190
  %v2300 = vunpack.c.l.b16 %v2191
  %v2301 = vunpack.c.h.b16 %v2191
  %v2302 = vunpack.c.l.b16 %v2192
  %v2303 = vunpack.c.h.b16 %v2192
  %v2304 = vunpack.c.l.b16 %v2193
  %v2305 = vunpack.c.h.b16 %v2193
  %v2306 = vunpack.c.l.b16 %v2194
  %v2307 = vunpack.c.h.b16 %v2194
  %v2308 = vunpack.c.l.b16 %v2195
  %v2309 = vunpack.c.h.b16 %v2195
  %v2310 = vunpack.c.l.b16 %v2196
  %v2311 = vunpack.c.h.b16 %v2196
  %v2312 = vunpack.c.l.b16 %v2197
  %v2313 = vunpack.c.h.b16 %v2197
  %v2314 = vunpack.c.l.b16 %v2198
  %v2315 = vunpack.c.h.b16 %v2198
  %v2316 = vunpack.c.l.b16 %v2199
  %v2317 = vunpack.c.h.b16 %v2199
  %v2318 = vpack.c.b16 %v2258, %v2254
  %v2319 = vpack.c.b16 %v2259, %v2255
  %v2320 = vpack.c.b16 %v2260, %v2256
  %v2321 = vpack.c.b16 %v2261, %v2257
  %v2322 = vpack.c.b16 %v2266, %v2262
  %v2323 = vpack.c.b16 %v2267, %v2263
  %v2324 = vpack.c.b16 %v2268, %v2264
  %v2325 = vpack.c.b16 %v2269, %v2265
  %v2326 = vpack.c.b16 %v2274, %v2270
  %v2327 = vpack.c.b16 %v2275, %v2271
  %v2328 = vpack.c.b16 %v2276, %v2272
  %v2329 = vpack.c.b16 %v2277, %v2273
  %v2330 = vpack.c.b16 %v2282, %v2278
  %v2331 = vpack.c.b16 %v2283, %v2279
  %v2332 = vpack.c.b16 %v2284, %v2280
  %v2333 = vpack.c.b16 %v2285, %v2281
  %v2334 = vpack.c.b16 %v2290, %v2286
  %v2335 = vpack.c.b16 %v2291, %v2287
  %v2336 = vpack.c.b16 %v2292, %v2288
  %v2337 = vpack.c.b16 %v2293, %v2289
  %v2338 = vpack.c.b16 %v2298, %v2294
  %v2339 = vpack.c.b16 %v2299, %v2295
  %v2340 = vpack.c.b16 %v2300, %v2296
  %v2341 = vpack.c.b16 %v2301, %v2297
  %v2342 = vpack.c.b16 %v2306, %v2302
  %v2343 = vpack.c.b16 %v2307, %v2303
  %v2344 = vpack.c.b16 %v2308, %v2304
  %v2345 = vpack.c.b16 %v2309, %v2305
  %v2346 = vpack.c.b16 %v2314, %v2310
  %v2347 = vpack.c.b16 %v2315, %v2311
  %v2348 = vpack.c.b16 %v2316, %v2312
  %v2349 = vpack.c.b16 %v2317, %v2313
  %2382 = vmatprep.subr.bf16.mxu0 %v2347
  %2383 = vmatpush1.bf16.msra.mxu0 %v2346
  %2384 = vmatprep.subr.bf16.mxu0 %v2343
  %2385 = vmatpush1.bf16.msra.mxu0 %v2342
  %2386 = vmatprep.subr.bf16.mxu0 %v2339
  %2387 = vmatpush1.bf16.msra.mxu0 %v2338
  %2388 = vmatprep.subr.bf16.mxu0 %v2335
  %2389 = vmatpush1.bf16.msra.mxu0 %v2334
  %2390 = vmatprep.subr.bf16.mxu0 %v2331
  %2391 = vmatpush1.bf16.msra.mxu0 %v2330
  %2392 = vmatprep.subr.bf16.mxu0 %v2327
  %2393 = vmatpush1.bf16.msra.mxu0 %v2326
  %2394 = vmatprep.subr.bf16.mxu0 %v2323
  %2395 = vmatpush1.bf16.msra.mxu0 %v2322
  %2396 = vmatprep.subr.bf16.mxu0 %v2319
  %2397 = vmatpush1.bf16.msra.mxu0 %v2318
  %2398 = vmatprep.subr.bf16.mxu0 0
  %2399 = vmatpush2.bf16.msra.mxu0 0
  %2400 = vmatprep.subr.bf16.mxu0 0
  %2401 = vmatpush2.bf16.msra.mxu0 0
  %2402 = vmatprep.subr.bf16.mxu0 0
  %2403 = vmatpush2.bf16.msra.mxu0 0
  %2404 = vmatprep.subr.bf16.mxu0 0
  %2405 = vmatpush2.bf16.msra.mxu0 0
  %2406 = vmatprep.subr.bf16.mxu0 0
  %2407 = vmatpush2.bf16.msra.mxu0 0
  %2408 = vmatprep.subr.bf16.mxu0 0
  %2409 = vmatpush2.bf16.msra.mxu0 0
  %2410 = vmatprep.subr.bf16.mxu0 0
  %2411 = vmatpush2.bf16.msra.mxu0 0
  %2412 = vmatprep.subr.bf16.mxu0 0
  %2413 = vmatpush2.bf16.msra.mxu0 0
  %2414 = vmatprep.mubr.bf16.mxu0 0
  %2415 = vmatmul.mubr.bf16.gmra.mxu0 %v2167
  %v2416 = vpop.f32.mrf.mxu0
  %v2417 = vadd.f32 %v2205, %v2416
  %v2418 = vpop.f32.mrf.mxu0
  %v2419 = vadd.f32 %v2209, %v2418
  %v2420 = vpop.f32.mrf.mxu0
  %v2421 = vadd.f32 %v2205, %v2420
  %v2422 = vpop.f32.mrf.mxu0
  %v2423 = vadd.f32 %v2209, %v2422
  %2424 = vdwg.mxu0
  %2425 = vmatprep.subr.bf16.mxu0 %v2349
  %2426 = vmatpush1.bf16.msra.mxu0 %v2348
  %2427 = vmatprep.subr.bf16.mxu0 %v2345
  %2428 = vmatpush1.bf16.msra.mxu0 %v2344
  %2429 = vmatprep.subr.bf16.mxu0 %v2341
  %2430 = vmatpush1.bf16.msra.mxu0 %v2340
  %2431 = vmatprep.subr.bf16.mxu0 %v2337
  %2432 = vmatpush1.bf16.msra.mxu0 %v2336
  %2433 = vmatprep.subr.bf16.mxu0 %v2333
  %2434 = vmatpush1.bf16.msra.mxu0 %v2332
  %2435 = vmatprep.subr.bf16.mxu0 %v2329
  %2436 = vmatpush1.bf16.msra.mxu0 %v2328
  %2437 = vmatprep.subr.bf16.mxu0 %v2325
  %2438 = vmatpush1.bf16.msra.mxu0 %v2324
  %2439 = vmatprep.subr.bf16.mxu0 %v2321
  %2440 = vmatpush1.bf16.msra.mxu0 %v2320
  %2441 = vmatprep.subr.bf16.mxu0 0
  %2442 = vmatpush2.bf16.msra.mxu0 0
  %2443 = vmatprep.subr.bf16.mxu0 0
  %2444 = vmatpush2.bf16.msra.mxu0 0
  %2445 = vmatprep.subr.bf16.mxu0 0
  %2446 = vmatpush2.bf16.msra.mxu0 0
  %2447 = vmatprep.subr.bf16.mxu0 0
  %2448 = vmatpush2.bf16.msra.mxu0 0
  %2449 = vmatprep.subr.bf16.mxu0 0
  %2450 = vmatpush2.bf16.msra.mxu0 0
  %2451 = vmatprep.subr.bf16.mxu0 0
  %2452 = vmatpush2.bf16.msra.mxu0 0
  %2453 = vmatprep.subr.bf16.mxu0 0
  %2454 = vmatpush2.bf16.msra.mxu0 0
  %2455 = vmatprep.subr.bf16.mxu0 0
  %2456 = vmatpush2.bf16.msra.mxu0 0
  %2457 = vmatprep.mubr.bf16.mxu0 0
  %2458 = vmatmul.mubr.bf16.gmra.mxu0 %v2167
  %v2459 = vpop.f32.mrf.mxu0
  %v2460 = vadd.f32 %v2213, %v2459
  %v2461 = vpop.f32.mrf.mxu0
  %v2462 = vadd.f32 %v2217, %v2461
  %v2463 = vpop.f32.mrf.mxu0
  %v2464 = vadd.f32 %v2213, %v2463
  %v2465 = vpop.f32.mrf.mxu0
  %v2466 = vadd.f32 %v2217, %v2465
  %2467 = vdwg.mxu0
  %2468 = vst [vmem:[#allocation2] sm:$0xff] %v2417
  %2469 = vst [vmem:[#allocation2 + $0x8] sm:$0xff] %v2419
  %2470 = vst [vmem:[#allocation2 + $0x10] sm:$0xff] %v2460
  %2471 = vst [vmem:[#allocation2 + $0x18] sm:$0xff] %v2462
  %2472 = vst [vmem:[#allocation2 + $0x20] sm:$0xf] %v2421
  %2473 = vst [vmem:[#allocation2 + $0x28] sm:$0xf] %v2423
  %2474 = vst [vmem:[#allocation2 + $0x30] sm:$0xf] %v2464
  %2475 = vst [vmem:[#allocation2 + $0x38] sm:$0xf] %v2466
  %v2476 = vld [vmem:[#allocation2] sm:$0x3]
  %v2477 = vld [vmem:[#allocation2 + $0x8] sm:$0x3]
  %v2478 = vld [vmem:[#allocation2 + $0x10] sm:$0x3]
  %v2479 = vld [vmem:[#allocation2 + $0x18] sm:$0x3]
  %v2480 = vld [vmem:[%s5] sm:$0xff]
  %v2481 = vld [vmem:[%s5 + $0x8] sm:$0xff]
  %v2482 = vld [vmem:[%s5 + $0x10] sm:$0xff]
  %v2483 = vld [vmem:[%s5 + $0x18] sm:$0xff]
  %v2484 = vld [vmem:[%s5 + $0x20] sm:$0xff]
  %v2485 = vld [vmem:[%s5 + $0x28] sm:$0xff]
  %v2486 = vld [vmem:[%s5 + $0x30] sm:$0xff]
  %v2487 = vld [vmem:[%s5 + $0x38] sm:$0xff]
  %v2488 = vld [vmem:[%s5 + $0x40] sm:$0xff]
  %v2489 = vld [vmem:[%s5 + $0x48] sm:$0xff]
  %v2490 = vld [vmem:[%s5 + $0x50] sm:$0xff]
  %v2491 = vld [vmem:[%s5 + $0x58] sm:$0xff]
  %v2492 = vld [vmem:[%s5 + $0x60] sm:$0xff]
  %v2493 = vld [vmem:[%s5 + $0x68] sm:$0xff]
  %v2494 = vld [vmem:[%s5 + $0x70] sm:$0xff]
  %v2495 = vld [vmem:[%s5 + $0x78] sm:$0xff]
  %v2496 = vld [vmem:[%s5 + $0x80] sm:$0xff]
  %v2497 = vld [vmem:[%s5 + $0x88] sm:$0xff]
  %v2498 = vld [vmem:[%s5 + $0x90] sm:$0xff]
  %v2499 = vld [vmem:[%s5 + $0x98] sm:$0xff]
  %v2500 = vld [vmem:[%s5 + $0xa0] sm:$0xff]
  %v2501 = vld [vmem:[%s5 + $0xa8] sm:$0xff]
  %v2502 = vld [vmem:[%s5 + $0xb0] sm:$0xff]
  %v2503 = vld [vmem:[%s5 + $0xb8] sm:$0xff]
  %v2504 = vld [vmem:[%s5 + $0xc0] sm:$0xff]
  %v2505 = vld [vmem:[%s5 + $0xc8] sm:$0xff]
  %v2506 = vld [vmem:[%s5 + $0xd0] sm:$0xff]
  %v2507 = vld [vmem:[%s5 + $0xd8] sm:$0xff]
  %v2508 = vld [vmem:[%s5 + $0xe0] sm:$0xff]
  %v2509 = vld [vmem:[%s5 + $0xe8] sm:$0xff]
  %v2510 = vld [vmem:[%s5 + $0xf0] sm:$0xff]
  %v2511 = vld [vmem:[%s5 + $0xf8] sm:$0xff]
  %v2544 = vunpack.c.l.b16 %v2480
  %v2545 = vunpack.c.h.b16 %v2480
  %v2546 = vunpack.c.l.b16 %v2481
  %v2547 = vunpack.c.h.b16 %v2481
  %v2548 = vunpack.c.l.b16 %v2482
  %v2549 = vunpack.c.h.b16 %v2482
  %v2550 = vunpack.c.l.b16 %v2483
  %v2551 = vunpack.c.h.b16 %v2483
  %v2552 = vunpack.c.l.b16 %v2484
  %v2553 = vunpack.c.h.b16 %v2484
  %v2554 = vunpack.c.l.b16 %v2485
  %v2555 = vunpack.c.h.b16 %v2485
  %v2556 = vunpack.c.l.b16 %v2486
  %v2557 = vunpack.c.h.b16 %v2486
  %v2558 = vunpack.c.l.b16 %v2487
  %v2559 = vunpack.c.h.b16 %v2487
  %v2560 = vunpack.c.l.b16 %v2488
  %v2561 = vunpack.c.h.b16 %v2488
  %v2562 = vunpack.c.l.b16 %v2489
  %v2563 = vunpack.c.h.b16 %v2489
  %v2564 = vunpack.c.l.b16 %v2490
  %v2565 = vunpack.c.h.b16 %v2490
  %v2566 = vunpack.c.l.b16 %v2491
  %v2567 = vunpack.c.h.b16 %v2491
  %v2568 = vunpack.c.l.b16 %v2492
  %v2569 = vunpack.c.h.b16 %v2492
  %v2570 = vunpack.c.l.b16 %v2493
  %v2571 = vunpack.c.h.b16 %v2493
  %v2572 = vunpack.c.l.b16 %v2494
  %v2573 = vunpack.c.h.b16 %v2494
  %v2574 = vunpack.c.l.b16 %v2495
  %v2575 = vunpack.c.h.b16 %v2495
  %v2576 = vunpack.c.l.b16 %v2496
  %v2577 = vunpack.c.h.b16 %v2496
  %v2578 = vunpack.c.l.b16 %v2497
  %v2579 = vunpack.c.h.b16 %v2497
  %v2580 = vunpack.c.l.b16 %v2498
  %v2581 = vunpack.c.h.b16 %v2498
  %v2582 = vunpack.c.l.b16 %v2499
  %v2583 = vunpack.c.h.b16 %v2499
  %v2584 = vunpack.c.l.b16 %v2500
  %v2585 = vunpack.c.h.b16 %v2500
  %v2586 = vunpack.c.l.b16 %v2501
  %v2587 = vunpack.c.h.b16 %v2501
  %v2588 = vunpack.c.l.b16 %v2502
  %v2589 = vunpack.c.h.b16 %v2502
  %v2590 = vunpack.c.l.b16 %v2503
  %v2591 = vunpack.c.h.b16 %v2503
  %v2592 = vunpack.c.l.b16 %v2504
  %v2593 = vunpack.c.h.b16 %v2504
  %v2594 = vunpack.c.l.b16 %v2505
  %v2595 = vunpack.c.h.b16 %v2505
  %v2596 = vunpack.c.l.b16 %v2506
  %v2597 = vunpack.c.h.b16 %v2506
  %v2598 = vunpack.c.l.b16 %v2507
  %v2599 = vunpack.c.h.b16 %v2507
  %v2600 = vunpack.c.l.b16 %v2508
  %v2601 = vunpack.c.h.b16 %v2508
  %v2602 = vunpack.c.l.b16 %v2509
  %v2603 = vunpack.c.h.b16 %v2509
  %v2604 = vunpack.c.l.b16 %v2510
  %v2605 = vunpack.c.h.b16 %v2510
  %v2606 = vunpack.c.l.b16 %v2511
  %v2607 = vunpack.c.h.b16 %v2511
  %v2608 = vpack.c.b16 %v2548, %v2544
  %v2609 = vpack.c.b16 %v2549, %v2545
  %v2610 = vpack.c.b16 %v2550, %v2546
  %v2611 = vpack.c.b16 %v2551, %v2547
  %v2612 = vpack.c.b16 %v2556, %v2552
  %v2613 = vpack.c.b16 %v2557, %v2553
  %v2614 = vpack.c.b16 %v2558, %v2554
  %v2615 = vpack.c.b16 %v2559, %v2555
  %v2616 = vpack.c.b16 %v2564, %v2560
  %v2617 = vpack.c.b16 %v2565, %v2561
  %v2618 = vpack.c.b16 %v2566, %v2562
  %v2619 = vpack.c.b16 %v2567, %v2563
  %v2620 = vpack.c.b16 %v2572, %v2568
  %v2621 = vpack.c.b16 %v2573, %v2569
  %v2622 = vpack.c.b16 %v2574, %v2570
  %v2623 = vpack.c.b16 %v2575, %v2571
  %v2624 = vpack.c.b16 %v2580, %v2576
  %v2625 = vpack.c.b16 %v2581, %v2577
  %v2626 = vpack.c.b16 %v2582, %v2578
  %v2627 = vpack.c.b16 %v2583, %v2579
  %v2628 = vpack.c.b16 %v2588, %v2584
  %v2629 = vpack.c.b16 %v2589, %v2585
  %v2630 = vpack.c.b16 %v2590, %v2586
  %v2631 = vpack.c.b16 %v2591, %v2587
  %v2632 = vpack.c.b16 %v2596, %v2592
  %v2633 = vpack.c.b16 %v2597, %v2593
  %v2634 = vpack.c.b16 %v2598, %v2594
  %v2635 = vpack.c.b16 %v2599, %v2595
  %v2636 = vpack.c.b16 %v2604, %v2600
  %v2637 = vpack.c.b16 %v2605, %v2601
  %v2638 = vpack.c.b16 %v2606, %v2602
  %v2639 = vpack.c.b16 %v2607, %v2603
  %2672 = vmatprep.subr.bf16.mxu0 %v2637
  %2673 = vmatpush1.bf16.msra.mxu0 %v2636
  %2674 = vmatprep.subr.bf16.mxu0 %v2633
  %2675 = vmatpush1.bf16.msra.mxu0 %v2632
  %2676 = vmatprep.subr.bf16.mxu0 %v2629
  %2677 = vmatpush1.bf16.msra.mxu0 %v2628
  %2678 = vmatprep.subr.bf16.mxu0 %v2625
  %2679 = vmatpush1.bf16.msra.mxu0 %v2624
  %2680 = vmatprep.subr.bf16.mxu0 %v2621
  %2681 = vmatpush1.bf16.msra.mxu0 %v2620
  %2682 = vmatprep.subr.bf16.mxu0 %v2617
  %2683 = vmatpush1.bf16.msra.mxu0 %v2616
  %2684 = vmatprep.subr.bf16.mxu0 %v2613
  %2685 = vmatpush1.bf16.msra.mxu0 %v2612
  %2686 = vmatprep.subr.bf16.mxu0 %v2609
  %2687 = vmatpush1.bf16.msra.mxu0 %v2608
  %2688 = vmatprep.subr.bf16.mxu0 0
  %2689 = vmatpush2.bf16.msra.mxu0 0
  %2690 = vmatprep.subr.bf16.mxu0 0
  %2691 = vmatpush2.bf16.msra.mxu0 0
  %2692 = vmatprep.subr.bf16.mxu0 0
  %2693 = vmatpush2.bf16.msra.mxu0 0
  %2694 = vmatprep.subr.bf16.mxu0 0
  %2695 = vmatpush2.bf16.msra.mxu0 0
  %2696 = vmatprep.subr.bf16.mxu0 0
  %2697 = vmatpush2.bf16.msra.mxu0 0
  %2698 = vmatprep.subr.bf16.mxu0 0
  %2699 = vmatpush2.bf16.msra.mxu0 0
  %2700 = vmatprep.subr.bf16.mxu0 0
  %2701 = vmatpush2.bf16.msra.mxu0 0
  %2702 = vmatprep.subr.bf16.mxu0 0
  %2703 = vmatpush2.bf16.msra.mxu0 0
  %2704 = vmatprep.mubr.bf16.mxu0 0
  %2705 = vmatmul.mubr.bf16.gmra.mxu0 0
  %v2706 = vpop.f32.mrf.mxu0
  %v2707 = vadd.f32 0.0, %v2706
  %v2708 = vpop.f32.mrf.mxu0
  %v2709 = vadd.f32 0.0, %v2708
  %v2710 = vpop.f32.mrf.mxu0
  %v2711 = vpop.f32.mrf.mxu0
  %2712 = vdwg.mxu0
  %2713 = vmatprep.subr.bf16.mxu0 %v2639
  %2714 = vmatpush1.bf16.msra.mxu0 %v2638
  %2715 = vmatprep.subr.bf16.mxu0 %v2635
  %2716 = vmatpush1.bf16.msra.mxu0 %v2634
  %2717 = vmatprep.subr.bf16.mxu0 %v2631
  %2718 = vmatpush1.bf16.msra.mxu0 %v2630
  %2719 = vmatprep.subr.bf16.mxu0 %v2627
  %2720 = vmatpush1.bf16.msra.mxu0 %v2626
  %2721 = vmatprep.subr.bf16.mxu0 %v2623
  %2722 = vmatpush1.bf16.msra.mxu0 %v2622
  %2723 = vmatprep.subr.bf16.mxu0 %v2619
  %2724 = vmatpush1.bf16.msra.mxu0 %v2618
  %2725 = vmatprep.subr.bf16.mxu0 %v2615
  %2726 = vmatpush1.bf16.msra.mxu0 %v2614
  %2727 = vmatprep.subr.bf16.mxu0 %v2611
  %2728 = vmatpush1.bf16.msra.mxu0 %v2610
  %2729 = vmatprep.subr.bf16.mxu0 0
  %2730 = vmatpush2.bf16.msra.mxu0 0
  %2731 = vmatprep.subr.bf16.mxu0 0
  %2732 = vmatpush2.bf16.msra.mxu0 0
  %2733 = vmatprep.subr.bf16.mxu0 0
  %2734 = vmatpush2.bf16.msra.mxu0 0
  %2735 = vmatprep.subr.bf16.mxu0 0
  %2736 = vmatpush2.bf16.msra.mxu0 0
  %2737 = vmatprep.subr.bf16.mxu0 0
  %2738 = vmatpush2.bf16.msra.mxu0 0
  %2739 = vmatprep.subr.bf16.mxu0 0
  %2740 = vmatpush2.bf16.msra.mxu0 0
  %2741 = vmatprep.subr.bf16.mxu0 0
  %2742 = vmatpush2.bf16.msra.mxu0 0
  %2743 = vmatprep.subr.bf16.mxu0 0
  %2744 = vmatpush2.bf16.msra.mxu0 0
  %2745 = vmatprep.mubr.bf16.mxu0 0
  %2746 = vmatmul.mubr.bf16.gmra.mxu0 0
  %v2747 = vpop.f32.mrf.mxu0
  %v2748 = vadd.f32 0.0, %v2747
  %v2749 = vpop.f32.mrf.mxu0
  %v2750 = vadd.f32 0.0, %v2749
  %v2751 = vpop.f32.mrf.mxu0
  %v2752 = vpop.f32.mrf.mxu0
  %2753 = vdwg.mxu0
  %v2754 = vadd.f32 %v2476, %v2707
  %v2755 = vadd.f32 %v2477, %v2709
  %v2756 = vadd.f32 %v2478, %v2748
  %v2757 = vadd.f32 %v2479, %v2750
  %v2758 = vxor.u32 %v2754, 2147483648
  %v2759 = vmul.f32 %v2758, 1.442695
  %v2760 = vpow.pop %v2759
  %v2761 = vadd.f32 %v2760, 1.0
  %v2762 = vrcp.pop %v2761
  %v2763 = vmul.f32 1.0, %v2762
  %v2764 = vxor.u32 %v2755, 2147483648
  %v2765 = vmul.f32 %v2764, 1.442695
  %v2766 = vpow.pop %v2765
  %v2767 = vadd.f32 %v2766, 1.0
  %v2768 = vrcp.pop %v2767
  %v2769 = vmul.f32 1.0, %v2768
  %v2770 = vtanh.pop %v2756
  %v2771 = vxor.u32 %v2757, 2147483648
  %v2772 = vmul.f32 %v2771, 1.442695
  %v2773 = vpow.pop %v2772
  %v2774 = vadd.f32 %v2773, 1.0
  %v2775 = vrcp.pop %v2774
  %v2776 = vmul.f32 1.0, %v2775
  %v2777 = vmul.f32 %v2769, 0.0
  %v2778 = vmul.f32 %v2763, %v2770
  %v2779 = vadd.f32 %v2777, %v2778
  %v2780 = vtanh.pop %v2779
  %v2781 = vmul.f32 %v2776, %v2780
  %2782 = vst [vmem:[%s7] sm:$0x3] %v2781
  %v2783 = vld [vmem:[#allocation2] sm:$0xc]
  %v2784 = vld [vmem:[#allocation2 + $0x8] sm:$0xc]
  %v2785 = vld [vmem:[#allocation2 + $0x10] sm:$0xc]
  %v2786 = vld [vmem:[#allocation2 + $0x18] sm:$0xc]
  %v2787 = vpack.c.bf16 %v2781, %v2781
  %v2788 = vld [vmem:[%s5] sm:$0xff]
  %v2789 = vld [vmem:[%s5 + $0x8] sm:$0xff]
  %v2790 = vld [vmem:[%s5 + $0x10] sm:$0xff]
  %v2791 = vld [vmem:[%s5 + $0x18] sm:$0xff]
  %v2792 = vld [vmem:[%s5 + $0x20] sm:$0xff]
  %v2793 = vld [vmem:[%s5 + $0x28] sm:$0xff]
  %v2794 = vld [vmem:[%s5 + $0x30] sm:$0xff]
  %v2795 = vld [vmem:[%s5 + $0x38] sm:$0xff]
  %v2796 = vld [vmem:[%s5 + $0x40] sm:$0xff]
  %v2797 = vld [vmem:[%s5 + $0x48] sm:$0xff]
  %v2798 = vld [vmem:[%s5 + $0x50] sm:$0xff]
  %v2799 = vld [vmem:[%s5 + $0x58] sm:$0xff]
  %v2800 = vld [vmem:[%s5 + $0x60] sm:$0xff]
  %v2801 = vld [vmem:[%s5 + $0x68] sm:$0xff]
  %v2802 = vld [vmem:[%s5 + $0x70] sm:$0xff]
  %v2803 = vld [vmem:[%s5 + $0x78] sm:$0xff]
  %v2804 = vld [vmem:[%s5 + $0x80] sm:$0xff]
  %v2805 = vld [vmem:[%s5 + $0x88] sm:$0xff]
  %v2806 = vld [vmem:[%s5 + $0x90] sm:$0xff]
  %v2807 = vld [vmem:[%s5 + $0x98] sm:$0xff]
  %v2808 = vld [vmem:[%s5 + $0xa0] sm:$0xff]
  %v2809 = vld [vmem:[%s5 + $0xa8] sm:$0xff]
  %v2810 = vld [vmem:[%s5 + $0xb0] sm:$0xff]
  %v2811 = vld [vmem:[%s5 + $0xb8] sm:$0xff]
  %v2812 = vld [vmem:[%s5 + $0xc0] sm:$0xff]
  %v2813 = vld [vmem:[%s5 + $0xc8] sm:$0xff]
  %v2814 = vld [vmem:[%s5 + $0xd0] sm:$0xff]
  %v2815 = vld [vmem:[%s5 + $0xd8] sm:$0xff]
  %v2816 = vld [vmem:[%s5 + $0xe0] sm:$0xff]
  %v2817 = vld [vmem:[%s5 + $0xe8] sm:$0xff]
  %v2818 = vld [vmem:[%s5 + $0xf0] sm:$0xff]
  %v2819 = vld [vmem:[%s5 + $0xf8] sm:$0xff]
  %v2852 = vunpack.c.l.b16 %v2788
  %v2853 = vunpack.c.h.b16 %v2788
  %v2854 = vunpack.c.l.b16 %v2789
  %v2855 = vunpack.c.h.b16 %v2789
  %v2856 = vunpack.c.l.b16 %v2790
  %v2857 = vunpack.c.h.b16 %v2790
  %v2858 = vunpack.c.l.b16 %v2791
  %v2859 = vunpack.c.h.b16 %v2791
  %v2860 = vunpack.c.l.b16 %v2792
  %v2861 = vunpack.c.h.b16 %v2792
  %v2862 = vunpack.c.l.b16 %v2793
  %v2863 = vunpack.c.h.b16 %v2793
  %v2864 = vunpack.c.l.b16 %v2794
  %v2865 = vunpack.c.h.b16 %v2794
  %v2866 = vunpack.c.l.b16 %v2795
  %v2867 = vunpack.c.h.b16 %v2795
  %v2868 = vunpack.c.l.b16 %v2796
  %v2869 = vunpack.c.h.b16 %v2796
  %v2870 = vunpack.c.l.b16 %v2797
  %v2871 = vunpack.c.h.b16 %v2797
  %v2872 = vunpack.c.l.b16 %v2798
  %v2873 = vunpack.c.h.b16 %v2798
  %v2874 = vunpack.c.l.b16 %v2799
  %v2875 = vunpack.c.h.b16 %v2799
  %v2876 = vunpack.c.l.b16 %v2800
  %v2877 = vunpack.c.h.b16 %v2800
  %v2878 = vunpack.c.l.b16 %v2801
  %v2879 = vunpack.c.h.b16 %v2801
  %v2880 = vunpack.c.l.b16 %v2802
  %v2881 = vunpack.c.h.b16 %v2802
  %v2882 = vunpack.c.l.b16 %v2803
  %v2883 = vunpack.c.h.b16 %v2803
  %v2884 = vunpack.c.l.b16 %v2804
  %v2885 = vunpack.c.h.b16 %v2804
  %v2886 = vunpack.c.l.b16 %v2805
  %v2887 = vunpack.c.h.b16 %v2805
  %v2888 = vunpack.c.l.b16 %v2806
  %v2889 = vunpack.c.h.b16 %v2806
  %v2890 = vunpack.c.l.b16 %v2807
  %v2891 = vunpack.c.h.b16 %v2807
  %v2892 = vunpack.c.l.b16 %v2808
  %v2893 = vunpack.c.h.b16 %v2808
  %v2894 = vunpack.c.l.b16 %v2809
  %v2895 = vunpack.c.h.b16 %v2809
  %v2896 = vunpack.c.l.b16 %v2810
  %v2897 = vunpack.c.h.b16 %v2810
  %v2898 = vunpack.c.l.b16 %v2811
  %v2899 = vunpack.c.h.b16 %v2811
  %v2900 = vunpack.c.l.b16 %v2812
  %v2901 = vunpack.c.h.b16 %v2812
  %v2902 = vunpack.c.l.b16 %v2813
  %v2903 = vunpack.c.h.b16 %v2813
  %v2904 = vunpack.c.l.b16 %v2814
  %v2905 = vunpack.c.h.b16 %v2814
  %v2906 = vunpack.c.l.b16 %v2815
  %v2907 = vunpack.c.h.b16 %v2815
  %v2908 = vunpack.c.l.b16 %v2816
  %v2909 = vunpack.c.h.b16 %v2816
  %v2910 = vunpack.c.l.b16 %v2817
  %v2911 = vunpack.c.h.b16 %v2817
  %v2912 = vunpack.c.l.b16 %v2818
  %v2913 = vunpack.c.h.b16 %v2818
  %v2914 = vunpack.c.l.b16 %v2819
  %v2915 = vunpack.c.h.b16 %v2819
  %v2916 = vpack.c.b16 %v2856, %v2852
  %v2917 = vpack.c.b16 %v2857, %v2853
  %v2918 = vpack.c.b16 %v2858, %v2854
  %v2919 = vpack.c.b16 %v2859, %v2855
  %v2920 = vpack.c.b16 %v2864, %v2860
  %v2921 = vpack.c.b16 %v2865, %v2861
  %v2922 = vpack.c.b16 %v2866, %v2862
  %v2923 = vpack.c.b16 %v2867, %v2863
  %v2924 = vpack.c.b16 %v2872, %v2868
  %v2925 = vpack.c.b16 %v2873, %v2869
  %v2926 = vpack.c.b16 %v2874, %v2870
  %v2927 = vpack.c.b16 %v2875, %v2871
  %v2928 = vpack.c.b16 %v2880, %v2876
  %v2929 = vpack.c.b16 %v2881, %v2877
  %v2930 = vpack.c.b16 %v2882, %v2878
  %v2931 = vpack.c.b16 %v2883, %v2879
  %v2932 = vpack.c.b16 %v2888, %v2884
  %v2933 = vpack.c.b16 %v2889, %v2885
  %v2934 = vpack.c.b16 %v2890, %v2886
  %v2935 = vpack.c.b16 %v2891, %v2887
  %v2936 = vpack.c.b16 %v2896, %v2892
  %v2937 = vpack.c.b16 %v2897, %v2893
  %v2938 = vpack.c.b16 %v2898, %v2894
  %v2939 = vpack.c.b16 %v2899, %v2895
  %v2940 = vpack.c.b16 %v2904, %v2900
  %v2941 = vpack.c.b16 %v2905, %v2901
  %v2942 = vpack.c.b16 %v2906, %v2902
  %v2943 = vpack.c.b16 %v2907, %v2903
  %v2944 = vpack.c.b16 %v2912, %v2908
  %v2945 = vpack.c.b16 %v2913, %v2909
  %v2946 = vpack.c.b16 %v2914, %v2910
  %v2947 = vpack.c.b16 %v2915, %v2911
  %2980 = vmatprep.subr.bf16.mxu0 %v2945
  %2981 = vmatpush1.bf16.msra.mxu0 %v2944
  %2982 = vmatprep.subr.bf16.mxu0 %v2941
  %2983 = vmatpush1.bf16.msra.mxu0 %v2940
  %2984 = vmatprep.subr.bf16.mxu0 %v2937
  %2985 = vmatpush1.bf16.msra.mxu0 %v2936
  %2986 = vmatprep.subr.bf16.mxu0 %v2933
  %2987 = vmatpush1.bf16.msra.mxu0 %v2932
  %2988 = vmatprep.subr.bf16.mxu0 %v2929
  %2989 = vmatpush1.bf16.msra.mxu0 %v2928
  %2990 = vmatprep.subr.bf16.mxu0 %v2925
  %2991 = vmatpush1.bf16.msra.mxu0 %v2924
  %2992 = vmatprep.subr.bf16.mxu0 %v2921
  %2993 = vmatpush1.bf16.msra.mxu0 %v2920
  %2994 = vmatprep.subr.bf16.mxu0 %v2917
  %2995 = vmatpush1.bf16.msra.mxu0 %v2916
  %2996 = vmatprep.subr.bf16.mxu0 0
  %2997 = vmatpush2.bf16.msra.mxu0 0
  %2998 = vmatprep.subr.bf16.mxu0 0
  %2999 = vmatpush2.bf16.msra.mxu0 0
  %3000 = vmatprep.subr.bf16.mxu0 0
  %3001 = vmatpush2.bf16.msra.mxu0 0
  %3002 = vmatprep.subr.bf16.mxu0 0
  %3003 = vmatpush2.bf16.msra.mxu0 0
  %3004 = vmatprep.subr.bf16.mxu0 0
  %3005 = vmatpush2.bf16.msra.mxu0 0
  %3006 = vmatprep.subr.bf16.mxu0 0
  %3007 = vmatpush2.bf16.msra.mxu0 0
  %3008 = vmatprep.subr.bf16.mxu0 0
  %3009 = vmatpush2.bf16.msra.mxu0 0
  %3010 = vmatprep.subr.bf16.mxu0 0
  %3011 = vmatpush2.bf16.msra.mxu0 0
  %3012 = vmatprep.mubr.bf16.mxu0 0
  %3013 = vmatmul.mubr.bf16.gmra.mxu0 %v2787
  %v3014 = vpop.f32.mrf.mxu0
  %v3015 = vadd.f32 0.0, %v3014
  %v3016 = vpop.f32.mrf.mxu0
  %v3017 = vadd.f32 0.0, %v3016
  %v3018 = vpop.f32.mrf.mxu0
  %v3019 = vpop.f32.mrf.mxu0
  %3020 = vdwg.mxu0
  %3021 = vmatprep.subr.bf16.mxu0 %v2947
  %3022 = vmatpush1.bf16.msra.mxu0 %v2946
  %3023 = vmatprep.subr.bf16.mxu0 %v2943
  %3024 = vmatpush1.bf16.msra.mxu0 %v2942
  %3025 = vmatprep.subr.bf16.mxu0 %v2939
  %3026 = vmatpush1.bf16.msra.mxu0 %v2938
  %3027 = vmatprep.subr.bf16.mxu0 %v2935
  %3028 = vmatpush1.bf16.msra.mxu0 %v2934
  %3029 = vmatprep.subr.bf16.mxu0 %v2931
  %3030 = vmatpush1.bf16.msra.mxu0 %v2930
  %3031 = vmatprep.subr.bf16.mxu0 %v2927
  %3032 = vmatpush1.bf16.msra.mxu0 %v2926
  %3033 = vmatprep.subr.bf16.mxu0 %v2923
  %3034 = vmatpush1.bf16.msra.mxu0 %v2922
  %3035 = vmatprep.subr.bf16.mxu0 %v2919
  %3036 = vmatpush1.bf16.msra.mxu0 %v2918
  %3037 = vmatprep.subr.bf16.mxu0 0
  %3038 = vmatpush2.bf16.msra.mxu0 0
  %3039 = vmatprep.subr.bf16.mxu0 0
  %3040 = vmatpush2.bf16.msra.mxu0 0
  %3041 = vmatprep.subr.bf16.mxu0 0
  %3042 = vmatpush2.bf16.msra.mxu0 0
  %3043 = vmatprep.subr.bf16.mxu0 0
  %3044 = vmatpush2.bf16.msra.mxu0 0
  %3045 = vmatprep.subr.bf16.mxu0 0
  %3046 = vmatpush2.bf16.msra.mxu0 0
  %3047 = vmatprep.subr.bf16.mxu0 0
  %3048 = vmatpush2.bf16.msra.mxu0 0
  %3049 = vmatprep.subr.bf16.mxu0 0
  %3050 = vmatpush2.bf16.msra.mxu0 0
  %3051 = vmatprep.subr.bf16.mxu0 0
  %3052 = vmatpush2.bf16.msra.mxu0 0
  %3053 = vmatprep.mubr.bf16.mxu0 0
  %3054 = vmatmul.mubr.bf16.gmra.mxu0 %v2787
  %v3055 = vpop.f32.mrf.mxu0
  %v3056 = vadd.f32 0.0, %v3055
  %v3057 = vpop.f32.mrf.mxu0
  %v3058 = vadd.f32 0.0, %v3057
  %v3059 = vpop.f32.mrf.mxu0
  %v3060 = vpop.f32.mrf.mxu0
  %3061 = vdwg.mxu0
  %v3066 = vrot.slane %v3015, 6
  %v3067 = vrot.slane %v3017, 6
  %v3068 = vrot.slane %v3056, 6
  %v3069 = vrot.slane %v3058, 6
  %v3074 = vadd.f32 %v2783, %v3066
  %v3075 = vadd.f32 %v2784, %v3067
  %v3076 = vadd.f32 %v2785, %v3068
  %v3077 = vadd.f32 %v2786, %v3069
  %v3078 = vxor.u32 %v3074, 2147483648
  %v3079 = vmul.f32 %v3078, 1.442695
  %v3080 = vpow.pop %v3079
  %v3081 = vadd.f32 %v3080, 1.0
  %v3082 = vrcp.pop %v3081
  %v3083 = vmul.f32 1.0, %v3082
  %v3084 = vxor.u32 %v3075, 2147483648
  %v3085 = vmul.f32 %v3084, 1.442695
  %v3086 = vpow.pop %v3085
  %v3087 = vadd.f32 %v3086, 1.0
  %v3088 = vrcp.pop %v3087
  %v3089 = vmul.f32 1.0, %v3088
  %v3090 = vtanh.pop %v3076
  %v3091 = vxor.u32 %v3077, 2147483648
  %v3092 = vmul.f32 %v3091, 1.442695
  %v3093 = vpow.pop %v3092
  %v3094 = vadd.f32 %v3093, 1.0
  %v3095 = vrcp.pop %v3094
  %v3096 = vmul.f32 1.0, %v3095
  %v3098 = vrot.slane %v2779, 6
  %v3100 = vmul.f32 %v3089, %v3098
  %v3101 = vmul.f32 %v3083, %v3090
  %v3102 = vadd.f32 %v3100, %v3101
  %v3103 = vtanh.pop %v3102
  %v3104 = vmul.f32 %v3096, %v3103
  %s3105 = scalar_lea.vmem %s7, 2
  %3106 = vst [vmem:[%s3105 - $0x2] sm:$0xc] %v3104
  %v3107 = vld [vmem:[#allocation2] sm:$0x30]
  %v3108 = vld [vmem:[#allocation2 + $0x8] sm:$0x30]
  %v3109 = vld [vmem:[#allocation2 + $0x10] sm:$0x30]
  %v3110 = vld [vmem:[#allocation2 + $0x18] sm:$0x30]
  %v3111 = vpack.c.bf16 %v3104, %v3104
  %v3112 = vld [vmem:[%s5] sm:$0xff]
  %v3113 = vld [vmem:[%s5 + $0x8] sm:$0xff]
  %v3114 = vld [vmem:[%s5 + $0x10] sm:$0xff]
  %v3115 = vld [vmem:[%s5 + $0x18] sm:$0xff]
  %v3116 = vld [vmem:[%s5 + $0x20] sm:$0xff]
  %v3117 = vld [vmem:[%s5 + $0x28] sm:$0xff]
  %v3118 = vld [vmem:[%s5 + $0x30] sm:$0xff]
  %v3119 = vld [vmem:[%s5 + $0x38] sm:$0xff]
  %v3120 = vld [vmem:[%s5 + $0x40] sm:$0xff]
  %v3121 = vld [vmem:[%s5 + $0x48] sm:$0xff]
  %v3122 = vld [vmem:[%s5 + $0x50] sm:$0xff]
  %v3123 = vld [vmem:[%s5 + $0x58] sm:$0xff]
  %v3124 = vld [vmem:[%s5 + $0x60] sm:$0xff]
  %v3125 = vld [vmem:[%s5 + $0x68] sm:$0xff]
  %v3126 = vld [vmem:[%s5 + $0x70] sm:$0xff]
  %v3127 = vld [vmem:[%s5 + $0x78] sm:$0xff]
  %v3128 = vld [vmem:[%s5 + $0x80] sm:$0xff]
  %v3129 = vld [vmem:[%s5 + $0x88] sm:$0xff]
  %v3130 = vld [vmem:[%s5 + $0x90] sm:$0xff]
  %v3131 = vld [vmem:[%s5 + $0x98] sm:$0xff]
  %v3132 = vld [vmem:[%s5 + $0xa0] sm:$0xff]
  %v3133 = vld [vmem:[%s5 + $0xa8] sm:$0xff]
  %v3134 = vld [vmem:[%s5 + $0xb0] sm:$0xff]
  %v3135 = vld [vmem:[%s5 + $0xb8] sm:$0xff]
  %v3136 = vld [vmem:[%s5 + $0xc0] sm:$0xff]
  %v3137 = vld [vmem:[%s5 + $0xc8] sm:$0xff]
  %v3138 = vld [vmem:[%s5 + $0xd0] sm:$0xff]
  %v3139 = vld [vmem:[%s5 + $0xd8] sm:$0xff]
  %v3140 = vld [vmem:[%s5 + $0xe0] sm:$0xff]
  %v3141 = vld [vmem:[%s5 + $0xe8] sm:$0xff]
  %v3142 = vld [vmem:[%s5 + $0xf0] sm:$0xff]
  %v3143 = vld [vmem:[%s5 + $0xf8] sm:$0xff]
  %v3145 = vrot.slane %v3111, 1
  %v3179 = vunpack.c.l.b16 %v3112
  %v3180 = vunpack.c.h.b16 %v3112
  %v3181 = vunpack.c.l.b16 %v3113
  %v3182 = vunpack.c.h.b16 %v3113
  %v3183 = vunpack.c.l.b16 %v3114
  %v3184 = vunpack.c.h.b16 %v3114
  %v3185 = vunpack.c.l.b16 %v3115
  %v3186 = vunpack.c.h.b16 %v3115
  %v3187 = vunpack.c.l.b16 %v3116
  %v3188 = vunpack.c.h.b16 %v3116
  %v3189 = vunpack.c.l.b16 %v3117
  %v3190 = vunpack.c.h.b16 %v3117
  %v3191 = vunpack.c.l.b16 %v3118
  %v3192 = vunpack.c.h.b16 %v3118
  %v3193 = vunpack.c.l.b16 %v3119
  %v3194 = vunpack.c.h.b16 %v3119
  %v3195 = vunpack.c.l.b16 %v3120
  %v3196 = vunpack.c.h.b16 %v3120
  %v3197 = vunpack.c.l.b16 %v3121
  %v3198 = vunpack.c.h.b16 %v3121
  %v3199 = vunpack.c.l.b16 %v3122
  %v3200 = vunpack.c.h.b16 %v3122
  %v3201 = vunpack.c.l.b16 %v3123
  %v3202 = vunpack.c.h.b16 %v3123
  %v3203 = vunpack.c.l.b16 %v3124
  %v3204 = vunpack.c.h.b16 %v3124
  %v3205 = vunpack.c.l.b16 %v3125
  %v3206 = vunpack.c.h.b16 %v3125
  %v3207 = vunpack.c.l.b16 %v3126
  %v3208 = vunpack.c.h.b16 %v3126
  %v3209 = vunpack.c.l.b16 %v3127
  %v3210 = vunpack.c.h.b16 %v3127
  %v3211 = vunpack.c.l.b16 %v3128
  %v3212 = vunpack.c.h.b16 %v3128
  %v3213 = vunpack.c.l.b16 %v3129
  %v3214 = vunpack.c.h.b16 %v3129
  %v3215 = vunpack.c.l.b16 %v3130
  %v3216 = vunpack.c.h.b16 %v3130
  %v3217 = vunpack.c.l.b16 %v3131
  %v3218 = vunpack.c.h.b16 %v3131
  %v3219 = vunpack.c.l.b16 %v3132
  %v3220 = vunpack.c.h.b16 %v3132
  %v3221 = vunpack.c.l.b16 %v3133
  %v3222 = vunpack.c.h.b16 %v3133
  %v3223 = vunpack.c.l.b16 %v3134
  %v3224 = vunpack.c.h.b16 %v3134
  %v3225 = vunpack.c.l.b16 %v3135
  %v3226 = vunpack.c.h.b16 %v3135
  %v3227 = vunpack.c.l.b16 %v3136
  %v3228 = vunpack.c.h.b16 %v3136
  %v3229 = vunpack.c.l.b16 %v3137
  %v3230 = vunpack.c.h.b16 %v3137
  %v3231 = vunpack.c.l.b16 %v3138
  %v3232 = vunpack.c.h.b16 %v3138
  %v3233 = vunpack.c.l.b16 %v3139
  %v3234 = vunpack.c.h.b16 %v3139
  %v3235 = vunpack.c.l.b16 %v3140
  %v3236 = vunpack.c.h.b16 %v3140
  %v3237 = vunpack.c.l.b16 %v3141
  %v3238 = vunpack.c.h.b16 %v3141
  %v3239 = vunpack.c.l.b16 %v3142
  %v3240 = vunpack.c.h.b16 %v3142
  %v3241 = vunpack.c.l.b16 %v3143
  %v3242 = vunpack.c.h.b16 %v3143
  %v3243 = vpack.c.b16 %v3183, %v3179
  %v3244 = vpack.c.b16 %v3184, %v3180
  %v3245 = vpack.c.b16 %v3185, %v3181
  %v3246 = vpack.c.b16 %v3186, %v3182
  %v3247 = vpack.c.b16 %v3191, %v3187
  %v3248 = vpack.c.b16 %v3192, %v3188
  %v3249 = vpack.c.b16 %v3193, %v3189
  %v3250 = vpack.c.b16 %v3194, %v3190
  %v3251 = vpack.c.b16 %v3199, %v3195
  %v3252 = vpack.c.b16 %v3200, %v3196
  %v3253 = vpack.c.b16 %v3201, %v3197
  %v3254 = vpack.c.b16 %v3202, %v3198
  %v3255 = vpack.c.b16 %v3207, %v3203
  %v3256 = vpack.c.b16 %v3208, %v3204
  %v3257 = vpack.c.b16 %v3209, %v3205
  %v3258 = vpack.c.b16 %v3210, %v3206
  %v3259 = vpack.c.b16 %v3215, %v3211
  %v3260 = vpack.c.b16 %v3216, %v3212
  %v3261 = vpack.c.b16 %v3217, %v3213
  %v3262 = vpack.c.b16 %v3218, %v3214
  %v3263 = vpack.c.b16 %v3223, %v3219
  %v3264 = vpack.c.b16 %v3224, %v3220
  %v3265 = vpack.c.b16 %v3225, %v3221
  %v3266 = vpack.c.b16 %v3226, %v3222
  %v3267 = vpack.c.b16 %v3231, %v3227
  %v3268 = vpack.c.b16 %v3232, %v3228
  %v3269 = vpack.c.b16 %v3233, %v3229
  %v3270 = vpack.c.b16 %v3234, %v3230
  %v3271 = vpack.c.b16 %v3239, %v3235
  %v3272 = vpack.c.b16 %v3240, %v3236
  %v3273 = vpack.c.b16 %v3241, %v3237
  %v3274 = vpack.c.b16 %v3242, %v3238
  %3307 = vmatprep.subr.bf16.mxu0 %v3272
  %3308 = vmatpush1.bf16.msra.mxu0 %v3271
  %3309 = vmatprep.subr.bf16.mxu0 %v3268
  %3310 = vmatpush1.bf16.msra.mxu0 %v3267
  %3311 = vmatprep.subr.bf16.mxu0 %v3264
  %3312 = vmatpush1.bf16.msra.mxu0 %v3263
  %3313 = vmatprep.subr.bf16.mxu0 %v3260
  %3314 = vmatpush1.bf16.msra.mxu0 %v3259
  %3315 = vmatprep.subr.bf16.mxu0 %v3256
  %3316 = vmatpush1.bf16.msra.mxu0 %v3255
  %3317 = vmatprep.subr.bf16.mxu0 %v3252
  %3318 = vmatpush1.bf16.msra.mxu0 %v3251
  %3319 = vmatprep.subr.bf16.mxu0 %v3248
  %3320 = vmatpush1.bf16.msra.mxu0 %v3247
  %3321 = vmatprep.subr.bf16.mxu0 %v3244
  %3322 = vmatpush1.bf16.msra.mxu0 %v3243
  %3323 = vmatprep.subr.bf16.mxu0 0
  %3324 = vmatpush2.bf16.msra.mxu0 0
  %3325 = vmatprep.subr.bf16.mxu0 0
  %3326 = vmatpush2.bf16.msra.mxu0 0
  %3327 = vmatprep.subr.bf16.mxu0 0
  %3328 = vmatpush2.bf16.msra.mxu0 0
  %3329 = vmatprep.subr.bf16.mxu0 0
  %3330 = vmatpush2.bf16.msra.mxu0 0
  %3331 = vmatprep.subr.bf16.mxu0 0
  %3332 = vmatpush2.bf16.msra.mxu0 0
  %3333 = vmatprep.subr.bf16.mxu0 0
  %3334 = vmatpush2.bf16.msra.mxu0 0
  %3335 = vmatprep.subr.bf16.mxu0 0
  %3336 = vmatpush2.bf16.msra.mxu0 0
  %3337 = vmatprep.subr.bf16.mxu0 0
  %3338 = vmatpush2.bf16.msra.mxu0 0
  %3339 = vmatprep.mubr.bf16.mxu0 0
  %3340 = vmatmul.mubr.bf16.gmra.mxu0 %v3145
  %v3341 = vpop.f32.mrf.mxu0
  %v3342 = vadd.f32 0.0, %v3341
  %v3343 = vpop.f32.mrf.mxu0
  %v3344 = vadd.f32 0.0, %v3343
  %v3345 = vpop.f32.mrf.mxu0
  %v3346 = vpop.f32.mrf.mxu0
  %3347 = vdwg.mxu0
  %3348 = vmatprep.subr.bf16.mxu0 %v3274
  %3349 = vmatpush1.bf16.msra.mxu0 %v3273
  %3350 = vmatprep.subr.bf16.mxu0 %v3270
  %3351 = vmatpush1.bf16.msra.mxu0 %v3269
  %3352 = vmatprep.subr.bf16.mxu0 %v3266
  %3353 = vmatpush1.bf16.msra.mxu0 %v3265
  %3354 = vmatprep.subr.bf16.mxu0 %v3262
  %3355 = vmatpush1.bf16.msra.mxu0 %v3261
  %3356 = vmatprep.subr.bf16.mxu0 %v3258
  %3357 = vmatpush1.bf16.msra.mxu0 %v3257
  %3358 = vmatprep.subr.bf16.mxu0 %v3254
  %3359 = vmatpush1.bf16.msra.mxu0 %v3253
  %3360 = vmatprep.subr.bf16.mxu0 %v3250
  %3361 = vmatpush1.bf16.msra.mxu0 %v3249
  %3362 = vmatprep.subr.bf16.mxu0 %v3246
  %3363 = vmatpush1.bf16.msra.mxu0 %v3245
  %3364 = vmatprep.subr.bf16.mxu0 0
  %3365 = vmatpush2.bf16.msra.mxu0 0
  %3366 = vmatprep.subr.bf16.mxu0 0
  %3367 = vmatpush2.bf16.msra.mxu0 0
  %3368 = vmatprep.subr.bf16.mxu0 0
  %3369 = vmatpush2.bf16.msra.mxu0 0
  %3370 = vmatprep.subr.bf16.mxu0 0
  %3371 = vmatpush2.bf16.msra.mxu0 0
  %3372 = vmatprep.subr.bf16.mxu0 0
  %3373 = vmatpush2.bf16.msra.mxu0 0
  %3374 = vmatprep.subr.bf16.mxu0 0
  %3375 = vmatpush2.bf16.msra.mxu0 0
  %3376 = vmatprep.subr.bf16.mxu0 0
  %3377 = vmatpush2.bf16.msra.mxu0 0
  %3378 = vmatprep.subr.bf16.mxu0 0
  %3379 = vmatpush2.bf16.msra.mxu0 0
  %3380 = vmatprep.mubr.bf16.mxu0 0
  %3381 = vmatmul.mubr.bf16.gmra.mxu0 %v3145
  %v3382 = vpop.f32.mrf.mxu0
  %v3383 = vadd.f32 0.0, %v3382
  %v3384 = vpop.f32.mrf.mxu0
  %v3385 = vadd.f32 0.0, %v3384
  %v3386 = vpop.f32.mrf.mxu0
  %v3387 = vpop.f32.mrf.mxu0
  %3388 = vdwg.mxu0
  %v3393 = vrot.slane %v3342, 4
  %v3394 = vrot.slane %v3344, 4
  %v3395 = vrot.slane %v3383, 4
  %v3396 = vrot.slane %v3385, 4
  %v3401 = vadd.f32 %v3107, %v3393
  %v3402 = vadd.f32 %v3108, %v3394
  %v3403 = vadd.f32 %v3109, %v3395
  %v3404 = vadd.f32 %v3110, %v3396
  %v3405 = vxor.u32 %v3401, 2147483648
  %v3406 = vmul.f32 %v3405, 1.442695
  %v3407 = vpow.pop %v3406
  %v3408 = vadd.f32 %v3407, 1.0
  %v3409 = vrcp.pop %v3408
  %v3410 = vmul.f32 1.0, %v3409
  %v3411 = vxor.u32 %v3402, 2147483648
  %v3412 = vmul.f32 %v3411, 1.442695
  %v3413 = vpow.pop %v3412
  %v3414 = vadd.f32 %v3413, 1.0
  %v3415 = vrcp.pop %v3414
  %v3416 = vmul.f32 1.0, %v3415
  %v3417 = vtanh.pop %v3403
  %v3418 = vxor.u32 %v3404, 2147483648
  %v3419 = vmul.f32 %v3418, 1.442695
  %v3420 = vpow.pop %v3419
  %v3421 = vadd.f32 %v3420, 1.0
  %v3422 = vrcp.pop %v3421
  %v3423 = vmul.f32 1.0, %v3422
  %v3425 = vrot.slane %v3102, 6
  %v3427 = vmul.f32 %v3416, %v3425
  %v3428 = vmul.f32 %v3410, %v3417
  %v3429 = vadd.f32 %v3427, %v3428
  %v3430 = vtanh.pop %v3429
  %v3431 = vmul.f32 %v3423, %v3430
  %s3432 = scalar_lea.vmem %s7, 4
  %3433 = vst [vmem:[%s3432 - $0x4] sm:$0x30] %v3431
  %v3434 = vld [vmem:[#allocation2] sm:$0xc0]
  %v3435 = vld [vmem:[#allocation2 + $0x8] sm:$0xc0]
  %v3436 = vld [vmem:[#allocation2 + $0x10] sm:$0xc0]
  %v3437 = vld [vmem:[#allocation2 + $0x18] sm:$0xc0]
  %v3438 = vpack.c.bf16 %v3431, %v3431
  %v3439 = vld [vmem:[%s5] sm:$0xff]
  %v3440 = vld [vmem:[%s5 + $0x8] sm:$0xff]
  %v3441 = vld [vmem:[%s5 + $0x10] sm:$0xff]
  %v3442 = vld [vmem:[%s5 + $0x18] sm:$0xff]
  %v3443 = vld [vmem:[%s5 + $0x20] sm:$0xff]
  %v3444 = vld [vmem:[%s5 + $0x28] sm:$0xff]
  %v3445 = vld [vmem:[%s5 + $0x30] sm:$0xff]
  %v3446 = vld [vmem:[%s5 + $0x38] sm:$0xff]
  %v3447 = vld [vmem:[%s5 + $0x40] sm:$0xff]
  %v3448 = vld [vmem:[%s5 + $0x48] sm:$0xff]
  %v3449 = vld [vmem:[%s5 + $0x50] sm:$0xff]
  %v3450 = vld [vmem:[%s5 + $0x58] sm:$0xff]
  %v3451 = vld [vmem:[%s5 + $0x60] sm:$0xff]
  %v3452 = vld [vmem:[%s5 + $0x68] sm:$0xff]
  %v3453 = vld [vmem:[%s5 + $0x70] sm:$0xff]
  %v3454 = vld [vmem:[%s5 + $0x78] sm:$0xff]
  %v3455 = vld [vmem:[%s5 + $0x80] sm:$0xff]
  %v3456 = vld [vmem:[%s5 + $0x88] sm:$0xff]
  %v3457 = vld [vmem:[%s5 + $0x90] sm:$0xff]
  %v3458 = vld [vmem:[%s5 + $0x98] sm:$0xff]
  %v3459 = vld [vmem:[%s5 + $0xa0] sm:$0xff]
  %v3460 = vld [vmem:[%s5 + $0xa8] sm:$0xff]
  %v3461 = vld [vmem:[%s5 + $0xb0] sm:$0xff]
  %v3462 = vld [vmem:[%s5 + $0xb8] sm:$0xff]
  %v3463 = vld [vmem:[%s5 + $0xc0] sm:$0xff]
  %v3464 = vld [vmem:[%s5 + $0xc8] sm:$0xff]
  %v3465 = vld [vmem:[%s5 + $0xd0] sm:$0xff]
  %v3466 = vld [vmem:[%s5 + $0xd8] sm:$0xff]
  %v3467 = vld [vmem:[%s5 + $0xe0] sm:$0xff]
  %v3468 = vld [vmem:[%s5 + $0xe8] sm:$0xff]
  %v3469 = vld [vmem:[%s5 + $0xf0] sm:$0xff]
  %v3470 = vld [vmem:[%s5 + $0xf8] sm:$0xff]
  %v3472 = vrot.slane %v3438, 2
  %v3506 = vunpack.c.l.b16 %v3439
  %v3507 = vunpack.c.h.b16 %v3439
  %v3508 = vunpack.c.l.b16 %v3440
  %v3509 = vunpack.c.h.b16 %v3440
  %v3510 = vunpack.c.l.b16 %v3441
  %v3511 = vunpack.c.h.b16 %v3441
  %v3512 = vunpack.c.l.b16 %v3442
  %v3513 = vunpack.c.h.b16 %v3442
  %v3514 = vunpack.c.l.b16 %v3443
  %v3515 = vunpack.c.h.b16 %v3443
  %v3516 = vunpack.c.l.b16 %v3444
  %v3517 = vunpack.c.h.b16 %v3444
  %v3518 = vunpack.c.l.b16 %v3445
  %v3519 = vunpack.c.h.b16 %v3445
  %v3520 = vunpack.c.l.b16 %v3446
  %v3521 = vunpack.c.h.b16 %v3446
  %v3522 = vunpack.c.l.b16 %v3447
  %v3523 = vunpack.c.h.b16 %v3447
  %v3524 = vunpack.c.l.b16 %v3448
  %v3525 = vunpack.c.h.b16 %v3448
  %v3526 = vunpack.c.l.b16 %v3449
  %v3527 = vunpack.c.h.b16 %v3449
  %v3528 = vunpack.c.l.b16 %v3450
  %v3529 = vunpack.c.h.b16 %v3450
  %v3530 = vunpack.c.l.b16 %v3451
  %v3531 = vunpack.c.h.b16 %v3451
  %v3532 = vunpack.c.l.b16 %v3452
  %v3533 = vunpack.c.h.b16 %v3452
  %v3534 = vunpack.c.l.b16 %v3453
  %v3535 = vunpack.c.h.b16 %v3453
  %v3536 = vunpack.c.l.b16 %v3454
  %v3537 = vunpack.c.h.b16 %v3454
  %v3538 = vunpack.c.l.b16 %v3455
  %v3539 = vunpack.c.h.b16 %v3455
  %v3540 = vunpack.c.l.b16 %v3456
  %v3541 = vunpack.c.h.b16 %v3456
  %v3542 = vunpack.c.l.b16 %v3457
  %v3543 = vunpack.c.h.b16 %v3457
  %v3544 = vunpack.c.l.b16 %v3458
  %v3545 = vunpack.c.h.b16 %v3458
  %v3546 = vunpack.c.l.b16 %v3459
  %v3547 = vunpack.c.h.b16 %v3459
  %v3548 = vunpack.c.l.b16 %v3460
  %v3549 = vunpack.c.h.b16 %v3460
  %v3550 = vunpack.c.l.b16 %v3461
  %v3551 = vunpack.c.h.b16 %v3461
  %v3552 = vunpack.c.l.b16 %v3462
  %v3553 = vunpack.c.h.b16 %v3462
  %v3554 = vunpack.c.l.b16 %v3463
  %v3555 = vunpack.c.h.b16 %v3463
  %v3556 = vunpack.c.l.b16 %v3464
  %v3557 = vunpack.c.h.b16 %v3464
  %v3558 = vunpack.c.l.b16 %v3465
  %v3559 = vunpack.c.h.b16 %v3465
  %v3560 = vunpack.c.l.b16 %v3466
  %v3561 = vunpack.c.h.b16 %v3466
  %v3562 = vunpack.c.l.b16 %v3467
  %v3563 = vunpack.c.h.b16 %v3467
  %v3564 = vunpack.c.l.b16 %v3468
  %v3565 = vunpack.c.h.b16 %v3468
  %v3566 = vunpack.c.l.b16 %v3469
  %v3567 = vunpack.c.h.b16 %v3469
  %v3568 = vunpack.c.l.b16 %v3470
  %v3569 = vunpack.c.h.b16 %v3470
  %v3570 = vpack.c.b16 %v3510, %v3506
  %v3571 = vpack.c.b16 %v3511, %v3507
  %v3572 = vpack.c.b16 %v3512, %v3508
  %v3573 = vpack.c.b16 %v3513, %v3509
  %v3574 = vpack.c.b16 %v3518, %v3514
  %v3575 = vpack.c.b16 %v3519, %v3515
  %v3576 = vpack.c.b16 %v3520, %v3516
  %v3577 = vpack.c.b16 %v3521, %v3517
  %v3578 = vpack.c.b16 %v3526, %v3522
  %v3579 = vpack.c.b16 %v3527, %v3523
  %v3580 = vpack.c.b16 %v3528, %v3524
  %v3581 = vpack.c.b16 %v3529, %v3525
  %v3582 = vpack.c.b16 %v3534, %v3530
  %v3583 = vpack.c.b16 %v3535, %v3531
  %v3584 = vpack.c.b16 %v3536, %v3532
  %v3585 = vpack.c.b16 %v3537, %v3533
  %v3586 = vpack.c.b16 %v3542, %v3538
  %v3587 = vpack.c.b16 %v3543, %v3539
  %v3588 = vpack.c.b16 %v3544, %v3540
  %v3589 = vpack.c.b16 %v3545, %v3541
  %v3590 = vpack.c.b16 %v3550, %v3546
  %v3591 = vpack.c.b16 %v3551, %v3547
  %v3592 = vpack.c.b16 %v3552, %v3548
  %v3593 = vpack.c.b16 %v3553, %v3549
  %v3594 = vpack.c.b16 %v3558, %v3554
  %v3595 = vpack.c.b16 %v3559, %v3555
  %v3596 = vpack.c.b16 %v3560, %v3556
  %v3597 = vpack.c.b16 %v3561, %v3557
  %v3598 = vpack.c.b16 %v3566, %v3562
  %v3599 = vpack.c.b16 %v3567, %v3563
  %v3600 = vpack.c.b16 %v3568, %v3564
  %v3601 = vpack.c.b16 %v3569, %v3565
  %3634 = vmatprep.subr.bf16.mxu0 %v3599
  %3635 = vmatpush1.bf16.msra.mxu0 %v3598
  %3636 = vmatprep.subr.bf16.mxu0 %v3595
  %3637 = vmatpush1.bf16.msra.mxu0 %v3594
  %3638 = vmatprep.subr.bf16.mxu0 %v3591
  %3639 = vmatpush1.bf16.msra.mxu0 %v3590
  %3640 = vmatprep.subr.bf16.mxu0 %v3587
  %3641 = vmatpush1.bf16.msra.mxu0 %v3586
  %3642 = vmatprep.subr.bf16.mxu0 %v3583
  %3643 = vmatpush1.bf16.msra.mxu0 %v3582
  %3644 = vmatprep.subr.bf16.mxu0 %v3579
  %3645 = vmatpush1.bf16.msra.mxu0 %v3578
  %3646 = vmatprep.subr.bf16.mxu0 %v3575
  %3647 = vmatpush1.bf16.msra.mxu0 %v3574
  %3648 = vmatprep.subr.bf16.mxu0 %v3571
  %3649 = vmatpush1.bf16.msra.mxu0 %v3570
  %3650 = vmatprep.subr.bf16.mxu0 0
  %3651 = vmatpush2.bf16.msra.mxu0 0
  %3652 = vmatprep.subr.bf16.mxu0 0
  %3653 = vmatpush2.bf16.msra.mxu0 0
  %3654 = vmatprep.subr.bf16.mxu0 0
  %3655 = vmatpush2.bf16.msra.mxu0 0
  %3656 = vmatprep.subr.bf16.mxu0 0
  %3657 = vmatpush2.bf16.msra.mxu0 0
  %3658 = vmatprep.subr.bf16.mxu0 0
  %3659 = vmatpush2.bf16.msra.mxu0 0
  %3660 = vmatprep.subr.bf16.mxu0 0
  %3661 = vmatpush2.bf16.msra.mxu0 0
  %3662 = vmatprep.subr.bf16.mxu0 0
  %3663 = vmatpush2.bf16.msra.mxu0 0
  %3664 = vmatprep.subr.bf16.mxu0 0
  %3665 = vmatpush2.bf16.msra.mxu0 0
  %3666 = vmatprep.mubr.bf16.mxu0 0
  %3667 = vmatmul.mubr.bf16.gmra.mxu0 %v3472
  %v3668 = vpop.f32.mrf.mxu0
  %v3669 = vadd.f32 0.0, %v3668
  %v3670 = vpop.f32.mrf.mxu0
  %v3671 = vadd.f32 0.0, %v3670
  %v3672 = vpop.f32.mrf.mxu0
  %v3673 = vpop.f32.mrf.mxu0
  %3674 = vdwg.mxu0
  %3675 = vmatprep.subr.bf16.mxu0 %v3601
  %3676 = vmatpush1.bf16.msra.mxu0 %v3600
  %3677 = vmatprep.subr.bf16.mxu0 %v3597
  %3678 = vmatpush1.bf16.msra.mxu0 %v3596
  %3679 = vmatprep.subr.bf16.mxu0 %v3593
  %3680 = vmatpush1.bf16.msra.mxu0 %v3592
  %3681 = vmatprep.subr.bf16.mxu0 %v3589
  %3682 = vmatpush1.bf16.msra.mxu0 %v3588
  %3683 = vmatprep.subr.bf16.mxu0 %v3585
  %3684 = vmatpush1.bf16.msra.mxu0 %v3584
  %3685 = vmatprep.subr.bf16.mxu0 %v3581
  %3686 = vmatpush1.bf16.msra.mxu0 %v3580
  %3687 = vmatprep.subr.bf16.mxu0 %v3577
  %3688 = vmatpush1.bf16.msra.mxu0 %v3576
  %3689 = vmatprep.subr.bf16.mxu0 %v3573
  %3690 = vmatpush1.bf16.msra.mxu0 %v3572
  %3691 = vmatprep.subr.bf16.mxu0 0
  %3692 = vmatpush2.bf16.msra.mxu0 0
  %3693 = vmatprep.subr.bf16.mxu0 0
  %3694 = vmatpush2.bf16.msra.mxu0 0
  %3695 = vmatprep.subr.bf16.mxu0 0
  %3696 = vmatpush2.bf16.msra.mxu0 0
  %3697 = vmatprep.subr.bf16.mxu0 0
  %3698 = vmatpush2.bf16.msra.mxu0 0
  %3699 = vmatprep.subr.bf16.mxu0 0
  %3700 = vmatpush2.bf16.msra.mxu0 0
  %3701 = vmatprep.subr.bf16.mxu0 0
  %3702 = vmatpush2.bf16.msra.mxu0 0
  %3703 = vmatprep.subr.bf16.mxu0 0
  %3704 = vmatpush2.bf16.msra.mxu0 0
  %3705 = vmatprep.subr.bf16.mxu0 0
  %3706 = vmatpush2.bf16.msra.mxu0 0
  %3707 = vmatprep.mubr.bf16.mxu0 0
  %3708 = vmatmul.mubr.bf16.gmra.mxu0 %v3472
  %v3709 = vpop.f32.mrf.mxu0
  %v3710 = vadd.f32 0.0, %v3709
  %v3711 = vpop.f32.mrf.mxu0
  %v3712 = vadd.f32 0.0, %v3711
  %v3713 = vpop.f32.mrf.mxu0
  %v3714 = vpop.f32.mrf.mxu0
  %3715 = vdwg.mxu0
  %v3720 = vrot.slane %v3669, 2
  %v3721 = vrot.slane %v3671, 2
  %v3722 = vrot.slane %v3710, 2
  %v3723 = vrot.slane %v3712, 2
  %v3728 = vadd.f32 %v3434, %v3720
  %v3729 = vadd.f32 %v3435, %v3721
  %v3730 = vadd.f32 %v3436, %v3722
  %v3731 = vadd.f32 %v3437, %v3723
  %v3732 = vxor.u32 %v3728, 2147483648
  %v3733 = vmul.f32 %v3732, 1.442695
  %v3734 = vpow.pop %v3733
  %v3735 = vadd.f32 %v3734, 1.0
  %v3736 = vrcp.pop %v3735
  %v3737 = vmul.f32 1.0, %v3736
  %v3738 = vxor.u32 %v3729, 2147483648
  %v3739 = vmul.f32 %v3738, 1.442695
  %v3740 = vpow.pop %v3739
  %v3741 = vadd.f32 %v3740, 1.0
  %v3742 = vrcp.pop %v3741
  %v3743 = vmul.f32 1.0, %v3742
  %v3744 = vtanh.pop %v3730
  %v3745 = vxor.u32 %v3731, 2147483648
  %v3746 = vmul.f32 %v3745, 1.442695
  %v3747 = vpow.pop %v3746
  %v3748 = vadd.f32 %v3747, 1.0
  %v3749 = vrcp.pop %v3748
  %v3750 = vmul.f32 1.0, %v3749
  %v3752 = vrot.slane %v3429, 6
  %v3754 = vmul.f32 %v3743, %v3752
  %v3755 = vmul.f32 %v3737, %v3744
  %v3756 = vadd.f32 %v3754, %v3755
  %v3757 = vtanh.pop %v3756
  %v3758 = vmul.f32 %v3750, %v3757
  %s3759 = scalar_lea.vmem %s7, 6
  %3760 = vst [vmem:[%s3759 - $0x6] sm:$0xc0] %v3758
  %v3761 = vld [vmem:[#allocation2 + $0x20] sm:$0x3]
  %v3762 = vld [vmem:[#allocation2 + $0x28] sm:$0x3]
  %v3763 = vld [vmem:[#allocation2 + $0x30] sm:$0x3]
  %v3764 = vld [vmem:[#allocation2 + $0x38] sm:$0x3]
  %v3765 = vpack.c.bf16 %v3758, %v3758
  %v3766 = vld [vmem:[%s5] sm:$0xff]
  %v3767 = vld [vmem:[%s5 + $0x8] sm:$0xff]
  %v3768 = vld [vmem:[%s5 + $0x10] sm:$0xff]
  %v3769 = vld [vmem:[%s5 + $0x18] sm:$0xff]
  %v3770 = vld [vmem:[%s5 + $0x20] sm:$0xff]
  %v3771 = vld [vmem:[%s5 + $0x28] sm:$0xff]
  %v3772 = vld [vmem:[%s5 + $0x30] sm:$0xff]
  %v3773 = vld [vmem:[%s5 + $0x38] sm:$0xff]
  %v3774 = vld [vmem:[%s5 + $0x40] sm:$0xff]
  %v3775 = vld [vmem:[%s5 + $0x48] sm:$0xff]
  %v3776 = vld [vmem:[%s5 + $0x50] sm:$0xff]
  %v3777 = vld [vmem:[%s5 + $0x58] sm:$0xff]
  %v3778 = vld [vmem:[%s5 + $0x60] sm:$0xff]
  %v3779 = vld [vmem:[%s5 + $0x68] sm:$0xff]
  %v3780 = vld [vmem:[%s5 + $0x70] sm:$0xff]
  %v3781 = vld [vmem:[%s5 + $0x78] sm:$0xff]
  %v3782 = vld [vmem:[%s5 + $0x80] sm:$0xff]
  %v3783 = vld [vmem:[%s5 + $0x88] sm:$0xff]
  %v3784 = vld [vmem:[%s5 + $0x90] sm:$0xff]
  %v3785 = vld [vmem:[%s5 + $0x98] sm:$0xff]
  %v3786 = vld [vmem:[%s5 + $0xa0] sm:$0xff]
  %v3787 = vld [vmem:[%s5 + $0xa8] sm:$0xff]
  %v3788 = vld [vmem:[%s5 + $0xb0] sm:$0xff]
  %v3789 = vld [vmem:[%s5 + $0xb8] sm:$0xff]
  %v3790 = vld [vmem:[%s5 + $0xc0] sm:$0xff]
  %v3791 = vld [vmem:[%s5 + $0xc8] sm:$0xff]
  %v3792 = vld [vmem:[%s5 + $0xd0] sm:$0xff]
  %v3793 = vld [vmem:[%s5 + $0xd8] sm:$0xff]
  %v3794 = vld [vmem:[%s5 + $0xe0] sm:$0xff]
  %v3795 = vld [vmem:[%s5 + $0xe8] sm:$0xff]
  %v3796 = vld [vmem:[%s5 + $0xf0] sm:$0xff]
  %v3797 = vld [vmem:[%s5 + $0xf8] sm:$0xff]
  %v3799 = vrot.slane %v3765, 3
  %v3833 = vunpack.c.l.b16 %v3766
  %v3834 = vunpack.c.h.b16 %v3766
  %v3835 = vunpack.c.l.b16 %v3767
  %v3836 = vunpack.c.h.b16 %v3767
  %v3837 = vunpack.c.l.b16 %v3768
  %v3838 = vunpack.c.h.b16 %v3768
  %v3839 = vunpack.c.l.b16 %v3769
  %v3840 = vunpack.c.h.b16 %v3769
  %v3841 = vunpack.c.l.b16 %v3770
  %v3842 = vunpack.c.h.b16 %v3770
  %v3843 = vunpack.c.l.b16 %v3771
  %v3844 = vunpack.c.h.b16 %v3771
  %v3845 = vunpack.c.l.b16 %v3772
  %v3846 = vunpack.c.h.b16 %v3772
  %v3847 = vunpack.c.l.b16 %v3773
  %v3848 = vunpack.c.h.b16 %v3773
  %v3849 = vunpack.c.l.b16 %v3774
  %v3850 = vunpack.c.h.b16 %v3774
  %v3851 = vunpack.c.l.b16 %v3775
  %v3852 = vunpack.c.h.b16 %v3775
  %v3853 = vunpack.c.l.b16 %v3776
  %v3854 = vunpack.c.h.b16 %v3776
  %v3855 = vunpack.c.l.b16 %v3777
  %v3856 = vunpack.c.h.b16 %v3777
  %v3857 = vunpack.c.l.b16 %v3778
  %v3858 = vunpack.c.h.b16 %v3778
  %v3859 = vunpack.c.l.b16 %v3779
  %v3860 = vunpack.c.h.b16 %v3779
  %v3861 = vunpack.c.l.b16 %v3780
  %v3862 = vunpack.c.h.b16 %v3780
  %v3863 = vunpack.c.l.b16 %v3781
  %v3864 = vunpack.c.h.b16 %v3781
  %v3865 = vunpack.c.l.b16 %v3782
  %v3866 = vunpack.c.h.b16 %v3782
  %v3867 = vunpack.c.l.b16 %v3783
  %v3868 = vunpack.c.h.b16 %v3783
  %v3869 = vunpack.c.l.b16 %v3784
  %v3870 = vunpack.c.h.b16 %v3784
  %v3871 = vunpack.c.l.b16 %v3785
  %v3872 = vunpack.c.h.b16 %v3785
  %v3873 = vunpack.c.l.b16 %v3786
  %v3874 = vunpack.c.h.b16 %v3786
  %v3875 = vunpack.c.l.b16 %v3787
  %v3876 = vunpack.c.h.b16 %v3787
  %v3877 = vunpack.c.l.b16 %v3788
  %v3878 = vunpack.c.h.b16 %v3788
  %v3879 = vunpack.c.l.b16 %v3789
  %v3880 = vunpack.c.h.b16 %v3789
  %v3881 = vunpack.c.l.b16 %v3790
  %v3882 = vunpack.c.h.b16 %v3790
  %v3883 = vunpack.c.l.b16 %v3791
  %v3884 = vunpack.c.h.b16 %v3791
  %v3885 = vunpack.c.l.b16 %v3792
  %v3886 = vunpack.c.h.b16 %v3792
  %v3887 = vunpack.c.l.b16 %v3793
  %v3888 = vunpack.c.h.b16 %v3793
  %v3889 = vunpack.c.l.b16 %v3794
  %v3890 = vunpack.c.h.b16 %v3794
  %v3891 = vunpack.c.l.b16 %v3795
  %v3892 = vunpack.c.h.b16 %v3795
  %v3893 = vunpack.c.l.b16 %v3796
  %v3894 = vunpack.c.h.b16 %v3796
  %v3895 = vunpack.c.l.b16 %v3797
  %v3896 = vunpack.c.h.b16 %v3797
  %v3897 = vpack.c.b16 %v3837, %v3833
  %v3898 = vpack.c.b16 %v3838, %v3834
  %v3899 = vpack.c.b16 %v3839, %v3835
  %v3900 = vpack.c.b16 %v3840, %v3836
  %v3901 = vpack.c.b16 %v3845, %v3841
  %v3902 = vpack.c.b16 %v3846, %v3842
  %v3903 = vpack.c.b16 %v3847, %v3843
  %v3904 = vpack.c.b16 %v3848, %v3844
  %v3905 = vpack.c.b16 %v3853, %v3849
  %v3906 = vpack.c.b16 %v3854, %v3850
  %v3907 = vpack.c.b16 %v3855, %v3851
  %v3908 = vpack.c.b16 %v3856, %v3852
  %v3909 = vpack.c.b16 %v3861, %v3857
  %v3910 = vpack.c.b16 %v3862, %v3858
  %v3911 = vpack.c.b16 %v3863, %v3859
  %v3912 = vpack.c.b16 %v3864, %v3860
  %v3913 = vpack.c.b16 %v3869, %v3865
  %v3914 = vpack.c.b16 %v3870, %v3866
  %v3915 = vpack.c.b16 %v3871, %v3867
  %v3916 = vpack.c.b16 %v3872, %v3868
  %v3917 = vpack.c.b16 %v3877, %v3873
  %v3918 = vpack.c.b16 %v3878, %v3874
  %v3919 = vpack.c.b16 %v3879, %v3875
  %v3920 = vpack.c.b16 %v3880, %v3876
  %v3921 = vpack.c.b16 %v3885, %v3881
  %v3922 = vpack.c.b16 %v3886, %v3882
  %v3923 = vpack.c.b16 %v3887, %v3883
  %v3924 = vpack.c.b16 %v3888, %v3884
  %v3925 = vpack.c.b16 %v3893, %v3889
  %v3926 = vpack.c.b16 %v3894, %v3890
  %v3927 = vpack.c.b16 %v3895, %v3891
  %v3928 = vpack.c.b16 %v3896, %v3892
  %3961 = vmatprep.subr.bf16.mxu0 %v3926
  %3962 = vmatpush1.bf16.msra.mxu0 %v3925
  %3963 = vmatprep.subr.bf16.mxu0 %v3922
  %3964 = vmatpush1.bf16.msra.mxu0 %v3921
  %3965 = vmatprep.subr.bf16.mxu0 %v3918
  %3966 = vmatpush1.bf16.msra.mxu0 %v3917
  %3967 = vmatprep.subr.bf16.mxu0 %v3914
  %3968 = vmatpush1.bf16.msra.mxu0 %v3913
  %3969 = vmatprep.subr.bf16.mxu0 %v3910
  %3970 = vmatpush1.bf16.msra.mxu0 %v3909
  %3971 = vmatprep.subr.bf16.mxu0 %v3906
  %3972 = vmatpush1.bf16.msra.mxu0 %v3905
  %3973 = vmatprep.subr.bf16.mxu0 %v3902
  %3974 = vmatpush1.bf16.msra.mxu0 %v3901
  %3975 = vmatprep.subr.bf16.mxu0 %v3898
  %3976 = vmatpush1.bf16.msra.mxu0 %v3897
  %3977 = vmatprep.subr.bf16.mxu0 0
  %3978 = vmatpush2.bf16.msra.mxu0 0
  %3979 = vmatprep.subr.bf16.mxu0 0
  %3980 = vmatpush2.bf16.msra.mxu0 0
  %3981 = vmatprep.subr.bf16.mxu0 0
  %3982 = vmatpush2.bf16.msra.mxu0 0
  %3983 = vmatprep.subr.bf16.mxu0 0
  %3984 = vmatpush2.bf16.msra.mxu0 0
  %3985 = vmatprep.subr.bf16.mxu0 0
  %3986 = vmatpush2.bf16.msra.mxu0 0
  %3987 = vmatprep.subr.bf16.mxu0 0
  %3988 = vmatpush2.bf16.msra.mxu0 0
  %3989 = vmatprep.subr.bf16.mxu0 0
  %3990 = vmatpush2.bf16.msra.mxu0 0
  %3991 = vmatprep.subr.bf16.mxu0 0
  %3992 = vmatpush2.bf16.msra.mxu0 0
  %3993 = vmatprep.mubr.bf16.mxu0 0
  %3994 = vmatmul.mubr.bf16.gmra.mxu0 %v3799
  %v3995 = vpop.f32.mrf.mxu0
  %v3996 = vadd.f32 0.0, %v3995
  %v3997 = vpop.f32.mrf.mxu0
  %v3998 = vadd.f32 0.0, %v3997
  %v3999 = vpop.f32.mrf.mxu0
  %v4000 = vpop.f32.mrf.mxu0
  %4001 = vdwg.mxu0
  %4002 = vmatprep.subr.bf16.mxu0 %v3928
  %4003 = vmatpush1.bf16.msra.mxu0 %v3927
  %4004 = vmatprep.subr.bf16.mxu0 %v3924
  %4005 = vmatpush1.bf16.msra.mxu0 %v3923
  %4006 = vmatprep.subr.bf16.mxu0 %v3920
  %4007 = vmatpush1.bf16.msra.mxu0 %v3919
  %4008 = vmatprep.subr.bf16.mxu0 %v3916
  %4009 = vmatpush1.bf16.msra.mxu0 %v3915
  %4010 = vmatprep.subr.bf16.mxu0 %v3912
  %4011 = vmatpush1.bf16.msra.mxu0 %v3911
  %4012 = vmatprep.subr.bf16.mxu0 %v3908
  %4013 = vmatpush1.bf16.msra.mxu0 %v3907
  %4014 = vmatprep.subr.bf16.mxu0 %v3904
  %4015 = vmatpush1.bf16.msra.mxu0 %v3903
  %4016 = vmatprep.subr.bf16.mxu0 %v3900
  %4017 = vmatpush1.bf16.msra.mxu0 %v3899
  %4018 = vmatprep.subr.bf16.mxu0 0
  %4019 = vmatpush2.bf16.msra.mxu0 0
  %4020 = vmatprep.subr.bf16.mxu0 0
  %4021 = vmatpush2.bf16.msra.mxu0 0
  %4022 = vmatprep.subr.bf16.mxu0 0
  %4023 = vmatpush2.bf16.msra.mxu0 0
  %4024 = vmatprep.subr.bf16.mxu0 0
  %4025 = vmatpush2.bf16.msra.mxu0 0
  %4026 = vmatprep.subr.bf16.mxu0 0
  %4027 = vmatpush2.bf16.msra.mxu0 0
  %4028 = vmatprep.subr.bf16.mxu0 0
  %4029 = vmatpush2.bf16.msra.mxu0 0
  %4030 = vmatprep.subr.bf16.mxu0 0
  %4031 = vmatpush2.bf16.msra.mxu0 0
  %4032 = vmatprep.subr.bf16.mxu0 0
  %4033 = vmatpush2.bf16.msra.mxu0 0
  %4034 = vmatprep.mubr.bf16.mxu0 0
  %4035 = vmatmul.mubr.bf16.gmra.mxu0 %v3799
  %v4036 = vpop.f32.mrf.mxu0
  %v4037 = vadd.f32 0.0, %v4036
  %v4038 = vpop.f32.mrf.mxu0
  %v4039 = vadd.f32 0.0, %v4038
  %v4040 = vpop.f32.mrf.mxu0
  %v4041 = vpop.f32.mrf.mxu0
  %4042 = vdwg.mxu0
  %v4043 = vadd.f32 %v3761, %v3996
  %v4044 = vadd.f32 %v3762, %v3998
  %v4045 = vadd.f32 %v3763, %v4037
  %v4046 = vadd.f32 %v3764, %v4039
  %v4047 = vxor.u32 %v4043, 2147483648
  %v4048 = vmul.f32 %v4047, 1.442695
  %v4049 = vpow.pop %v4048
  %v4050 = vadd.f32 %v4049, 1.0
  %v4051 = vrcp.pop %v4050
  %v4052 = vmul.f32 1.0, %v4051
  %v4053 = vxor.u32 %v4044, 2147483648
  %v4054 = vmul.f32 %v4053, 1.442695
  %v4055 = vpow.pop %v4054
  %v4056 = vadd.f32 %v4055, 1.0
  %v4057 = vrcp.pop %v4056
  %v4058 = vmul.f32 1.0, %v4057
  %v4059 = vtanh.pop %v4045
  %v4060 = vxor.u32 %v4046, 2147483648
  %v4061 = vmul.f32 %v4060, 1.442695
  %v4062 = vpow.pop %v4061
  %v4063 = vadd.f32 %v4062, 1.0
  %v4064 = vrcp.pop %v4063
  %v4065 = vmul.f32 1.0, %v4064
  %v4067 = vrot.slane %v3756, 6
  %v4069 = vmul.f32 %v4058, %v4067
  %v4070 = vmul.f32 %v4052, %v4059
  %v4071 = vadd.f32 %v4069, %v4070
  %v4072 = vtanh.pop %v4071
  %v4073 = vmul.f32 %v4065, %v4072
  %s4074 = scalar_lea.vmem %s7, 8
  %4075 = vst [vmem:[%s4074] sm:$0x3] %v4073
  %v4076 = vld [vmem:[#allocation2 + $0x20] sm:$0xc]
  %v4077 = vld [vmem:[#allocation2 + $0x28] sm:$0xc]
  %v4078 = vld [vmem:[#allocation2 + $0x30] sm:$0xc]
  %v4079 = vld [vmem:[#allocation2 + $0x38] sm:$0xc]
  %v4080 = vpack.c.bf16 %v4073, %v4073
  %v4081 = vld [vmem:[%s5] sm:$0xff]
  %v4082 = vld [vmem:[%s5 + $0x8] sm:$0xff]
  %v4083 = vld [vmem:[%s5 + $0x10] sm:$0xff]
  %v4084 = vld [vmem:[%s5 + $0x18] sm:$0xff]
  %v4085 = vld [vmem:[%s5 + $0x20] sm:$0xff]
  %v4086 = vld [vmem:[%s5 + $0x28] sm:$0xff]
  %v4087 = vld [vmem:[%s5 + $0x30] sm:$0xff]
  %v4088 = vld [vmem:[%s5 + $0x38] sm:$0xff]
  %v4089 = vld [vmem:[%s5 + $0x40] sm:$0xff]
  %v4090 = vld [vmem:[%s5 + $0x48] sm:$0xff]
  %v4091 = vld [vmem:[%s5 + $0x50] sm:$0xff]
  %v4092 = vld [vmem:[%s5 + $0x58] sm:$0xff]
  %v4093 = vld [vmem:[%s5 + $0x60] sm:$0xff]
  %v4094 = vld [vmem:[%s5 + $0x68] sm:$0xff]
  %v4095 = vld [vmem:[%s5 + $0x70] sm:$0xff]
  %v4096 = vld [vmem:[%s5 + $0x78] sm:$0xff]
  %v4097 = vld [vmem:[%s5 + $0x80] sm:$0xff]
  %v4098 = vld [vmem:[%s5 + $0x88] sm:$0xff]
  %v4099 = vld [vmem:[%s5 + $0x90] sm:$0xff]
  %v4100 = vld [vmem:[%s5 + $0x98] sm:$0xff]
  %v4101 = vld [vmem:[%s5 + $0xa0] sm:$0xff]
  %v4102 = vld [vmem:[%s5 + $0xa8] sm:$0xff]
  %v4103 = vld [vmem:[%s5 + $0xb0] sm:$0xff]
  %v4104 = vld [vmem:[%s5 + $0xb8] sm:$0xff]
  %v4105 = vld [vmem:[%s5 + $0xc0] sm:$0xff]
  %v4106 = vld [vmem:[%s5 + $0xc8] sm:$0xff]
  %v4107 = vld [vmem:[%s5 + $0xd0] sm:$0xff]
  %v4108 = vld [vmem:[%s5 + $0xd8] sm:$0xff]
  %v4109 = vld [vmem:[%s5 + $0xe0] sm:$0xff]
  %v4110 = vld [vmem:[%s5 + $0xe8] sm:$0xff]
  %v4111 = vld [vmem:[%s5 + $0xf0] sm:$0xff]
  %v4112 = vld [vmem:[%s5 + $0xf8] sm:$0xff]
  %v4145 = vunpack.c.l.b16 %v4081
  %v4146 = vunpack.c.h.b16 %v4081
  %v4147 = vunpack.c.l.b16 %v4082
  %v4148 = vunpack.c.h.b16 %v4082
  %v4149 = vunpack.c.l.b16 %v4083
  %v4150 = vunpack.c.h.b16 %v4083
  %v4151 = vunpack.c.l.b16 %v4084
  %v4152 = vunpack.c.h.b16 %v4084
  %v4153 = vunpack.c.l.b16 %v4085
  %v4154 = vunpack.c.h.b16 %v4085
  %v4155 = vunpack.c.l.b16 %v4086
  %v4156 = vunpack.c.h.b16 %v4086
  %v4157 = vunpack.c.l.b16 %v4087
  %v4158 = vunpack.c.h.b16 %v4087
  %v4159 = vunpack.c.l.b16 %v4088
  %v4160 = vunpack.c.h.b16 %v4088
  %v4161 = vunpack.c.l.b16 %v4089
  %v4162 = vunpack.c.h.b16 %v4089
  %v4163 = vunpack.c.l.b16 %v4090
  %v4164 = vunpack.c.h.b16 %v4090
  %v4165 = vunpack.c.l.b16 %v4091
  %v4166 = vunpack.c.h.b16 %v4091
  %v4167 = vunpack.c.l.b16 %v4092
  %v4168 = vunpack.c.h.b16 %v4092
  %v4169 = vunpack.c.l.b16 %v4093
  %v4170 = vunpack.c.h.b16 %v4093
  %v4171 = vunpack.c.l.b16 %v4094
  %v4172 = vunpack.c.h.b16 %v4094
  %v4173 = vunpack.c.l.b16 %v4095
  %v4174 = vunpack.c.h.b16 %v4095
  %v4175 = vunpack.c.l.b16 %v4096
  %v4176 = vunpack.c.h.b16 %v4096
  %v4177 = vunpack.c.l.b16 %v4097
  %v4178 = vunpack.c.h.b16 %v4097
  %v4179 = vunpack.c.l.b16 %v4098
  %v4180 = vunpack.c.h.b16 %v4098
  %v4181 = vunpack.c.l.b16 %v4099
  %v4182 = vunpack.c.h.b16 %v4099
  %v4183 = vunpack.c.l.b16 %v4100
  %v4184 = vunpack.c.h.b16 %v4100
  %v4185 = vunpack.c.l.b16 %v4101
  %v4186 = vunpack.c.h.b16 %v4101
  %v4187 = vunpack.c.l.b16 %v4102
  %v4188 = vunpack.c.h.b16 %v4102
  %v4189 = vunpack.c.l.b16 %v4103
  %v4190 = vunpack.c.h.b16 %v4103
  %v4191 = vunpack.c.l.b16 %v4104
  %v4192 = vunpack.c.h.b16 %v4104
  %v4193 = vunpack.c.l.b16 %v4105
  %v4194 = vunpack.c.h.b16 %v4105
  %v4195 = vunpack.c.l.b16 %v4106
  %v4196 = vunpack.c.h.b16 %v4106
  %v4197 = vunpack.c.l.b16 %v4107
  %v4198 = vunpack.c.h.b16 %v4107
  %v4199 = vunpack.c.l.b16 %v4108
  %v4200 = vunpack.c.h.b16 %v4108
  %v4201 = vunpack.c.l.b16 %v4109
  %v4202 = vunpack.c.h.b16 %v4109
  %v4203 = vunpack.c.l.b16 %v4110
  %v4204 = vunpack.c.h.b16 %v4110
  %v4205 = vunpack.c.l.b16 %v4111
  %v4206 = vunpack.c.h.b16 %v4111
  %v4207 = vunpack.c.l.b16 %v4112
  %v4208 = vunpack.c.h.b16 %v4112
  %v4209 = vpack.c.b16 %v4149, %v4145
  %v4210 = vpack.c.b16 %v4150, %v4146
  %v4211 = vpack.c.b16 %v4151, %v4147
  %v4212 = vpack.c.b16 %v4152, %v4148
  %v4213 = vpack.c.b16 %v4157, %v4153
  %v4214 = vpack.c.b16 %v4158, %v4154
  %v4215 = vpack.c.b16 %v4159, %v4155
  %v4216 = vpack.c.b16 %v4160, %v4156
  %v4217 = vpack.c.b16 %v4165, %v4161
  %v4218 = vpack.c.b16 %v4166, %v4162
  %v4219 = vpack.c.b16 %v4167, %v4163
  %v4220 = vpack.c.b16 %v4168, %v4164
  %v4221 = vpack.c.b16 %v4173, %v4169
  %v4222 = vpack.c.b16 %v4174, %v4170
  %v4223 = vpack.c.b16 %v4175, %v4171
  %v4224 = vpack.c.b16 %v4176, %v4172
  %v4225 = vpack.c.b16 %v4181, %v4177
  %v4226 = vpack.c.b16 %v4182, %v4178
  %v4227 = vpack.c.b16 %v4183, %v4179
  %v4228 = vpack.c.b16 %v4184, %v4180
  %v4229 = vpack.c.b16 %v4189, %v4185
  %v4230 = vpack.c.b16 %v4190, %v4186
  %v4231 = vpack.c.b16 %v4191, %v4187
  %v4232 = vpack.c.b16 %v4192, %v4188
  %v4233 = vpack.c.b16 %v4197, %v4193
  %v4234 = vpack.c.b16 %v4198, %v4194
  %v4235 = vpack.c.b16 %v4199, %v4195
  %v4236 = vpack.c.b16 %v4200, %v4196
  %v4237 = vpack.c.b16 %v4205, %v4201
  %v4238 = vpack.c.b16 %v4206, %v4202
  %v4239 = vpack.c.b16 %v4207, %v4203
  %v4240 = vpack.c.b16 %v4208, %v4204
  %4273 = vmatprep.subr.bf16.mxu0 %v4238
  %4274 = vmatpush1.bf16.msra.mxu0 %v4237
  %4275 = vmatprep.subr.bf16.mxu0 %v4234
  %4276 = vmatpush1.bf16.msra.mxu0 %v4233
  %4277 = vmatprep.subr.bf16.mxu0 %v4230
  %4278 = vmatpush1.bf16.msra.mxu0 %v4229
  %4279 = vmatprep.subr.bf16.mxu0 %v4226
  %4280 = vmatpush1.bf16.msra.mxu0 %v4225
  %4281 = vmatprep.subr.bf16.mxu0 %v4222
  %4282 = vmatpush1.bf16.msra.mxu0 %v4221
  %4283 = vmatprep.subr.bf16.mxu0 %v4218
  %4284 = vmatpush1.bf16.msra.mxu0 %v4217
  %4285 = vmatprep.subr.bf16.mxu0 %v4214
  %4286 = vmatpush1.bf16.msra.mxu0 %v4213
  %4287 = vmatprep.subr.bf16.mxu0 %v4210
  %4288 = vmatpush1.bf16.msra.mxu0 %v4209
  %4289 = vmatprep.subr.bf16.mxu0 0
  %4290 = vmatpush2.bf16.msra.mxu0 0
  %4291 = vmatprep.subr.bf16.mxu0 0
  %4292 = vmatpush2.bf16.msra.mxu0 0
  %4293 = vmatprep.subr.bf16.mxu0 0
  %4294 = vmatpush2.bf16.msra.mxu0 0
  %4295 = vmatprep.subr.bf16.mxu0 0
  %4296 = vmatpush2.bf16.msra.mxu0 0
  %4297 = vmatprep.subr.bf16.mxu0 0
  %4298 = vmatpush2.bf16.msra.mxu0 0
  %4299 = vmatprep.subr.bf16.mxu0 0
  %4300 = vmatpush2.bf16.msra.mxu0 0
  %4301 = vmatprep.subr.bf16.mxu0 0
  %4302 = vmatpush2.bf16.msra.mxu0 0
  %4303 = vmatprep.subr.bf16.mxu0 0
  %4304 = vmatpush2.bf16.msra.mxu0 0
  %4305 = vmatprep.mubr.bf16.mxu0 0
  %4306 = vmatmul.mubr.bf16.gmra.mxu0 %v4080
  %v4307 = vpop.f32.mrf.mxu0
  %v4308 = vadd.f32 0.0, %v4307
  %v4309 = vpop.f32.mrf.mxu0
  %v4310 = vadd.f32 0.0, %v4309
  %v4311 = vpop.f32.mrf.mxu0
  %v4312 = vpop.f32.mrf.mxu0
  %4313 = vdwg.mxu0
  %4314 = vmatprep.subr.bf16.mxu0 %v4240
  %4315 = vmatpush1.bf16.msra.mxu0 %v4239
  %4316 = vmatprep.subr.bf16.mxu0 %v4236
  %4317 = vmatpush1.bf16.msra.mxu0 %v4235
  %4318 = vmatprep.subr.bf16.mxu0 %v4232
  %4319 = vmatpush1.bf16.msra.mxu0 %v4231
  %4320 = vmatprep.subr.bf16.mxu0 %v4228
  %4321 = vmatpush1.bf16.msra.mxu0 %v4227
  %4322 = vmatprep.subr.bf16.mxu0 %v4224
  %4323 = vmatpush1.bf16.msra.mxu0 %v4223
  %4324 = vmatprep.subr.bf16.mxu0 %v4220
  %4325 = vmatpush1.bf16.msra.mxu0 %v4219
  %4326 = vmatprep.subr.bf16.mxu0 %v4216
  %4327 = vmatpush1.bf16.msra.mxu0 %v4215
  %4328 = vmatprep.subr.bf16.mxu0 %v4212
  %4329 = vmatpush1.bf16.msra.mxu0 %v4211
  %4330 = vmatprep.subr.bf16.mxu0 0
  %4331 = vmatpush2.bf16.msra.mxu0 0
  %4332 = vmatprep.subr.bf16.mxu0 0
  %4333 = vmatpush2.bf16.msra.mxu0 0
  %4334 = vmatprep.subr.bf16.mxu0 0
  %4335 = vmatpush2.bf16.msra.mxu0 0
  %4336 = vmatprep.subr.bf16.mxu0 0
  %4337 = vmatpush2.bf16.msra.mxu0 0
  %4338 = vmatprep.subr.bf16.mxu0 0
  %4339 = vmatpush2.bf16.msra.mxu0 0
  %4340 = vmatprep.subr.bf16.mxu0 0
  %4341 = vmatpush2.bf16.msra.mxu0 0
  %4342 = vmatprep.subr.bf16.mxu0 0
  %4343 = vmatpush2.bf16.msra.mxu0 0
  %4344 = vmatprep.subr.bf16.mxu0 0
  %4345 = vmatpush2.bf16.msra.mxu0 0
  %4346 = vmatprep.mubr.bf16.mxu0 0
  %4347 = vmatmul.mubr.bf16.gmra.mxu0 %v4080
  %v4348 = vpop.f32.mrf.mxu0
  %v4349 = vadd.f32 0.0, %v4348
  %v4350 = vpop.f32.mrf.mxu0
  %v4351 = vadd.f32 0.0, %v4350
  %v4352 = vpop.f32.mrf.mxu0
  %v4353 = vpop.f32.mrf.mxu0
  %4354 = vdwg.mxu0
  %v4359 = vrot.slane %v4308, 6
  %v4360 = vrot.slane %v4310, 6
  %v4361 = vrot.slane %v4349, 6
  %v4362 = vrot.slane %v4351, 6
  %v4367 = vadd.f32 %v4076, %v4359
  %v4368 = vadd.f32 %v4077, %v4360
  %v4369 = vadd.f32 %v4078, %v4361
  %v4370 = vadd.f32 %v4079, %v4362
  %v4371 = vxor.u32 %v4367, 2147483648
  %v4372 = vmul.f32 %v4371, 1.442695
  %v4373 = vpow.pop %v4372
  %v4374 = vadd.f32 %v4373, 1.0
  %v4375 = vrcp.pop %v4374
  %v4376 = vmul.f32 1.0, %v4375
  %v4377 = vxor.u32 %v4368, 2147483648
  %v4378 = vmul.f32 %v4377, 1.442695
  %v4379 = vpow.pop %v4378
  %v4380 = vadd.f32 %v4379, 1.0
  %v4381 = vrcp.pop %v4380
  %v4382 = vmul.f32 1.0, %v4381
  %v4383 = vtanh.pop %v4369
  %v4384 = vxor.u32 %v4370, 2147483648
  %v4385 = vmul.f32 %v4384, 1.442695
  %v4386 = vpow.pop %v4385
  %v4387 = vadd.f32 %v4386, 1.0
  %v4388 = vrcp.pop %v4387
  %v4389 = vmul.f32 1.0, %v4388
  %v4391 = vrot.slane %v4071, 6
  %v4393 = vmul.f32 %v4382, %v4391
  %v4394 = vmul.f32 %v4376, %v4383
  %v4395 = vadd.f32 %v4393, %v4394
  %v4396 = vtanh.pop %v4395
  %v4397 = vmul.f32 %v4389, %v4396
  %s4398 = scalar_lea.vmem %s7, 10
  %4399 = vst [vmem:[%s4398 - $0x2] sm:$0xc] %v4397
  // Predicated region
  $region30: #{eeg_hybrid_forward.6} parent=0 // pred_check
    _
  $region31: #{eeg_hybrid_forward.6} parent=0 // pred_check_branch
    %4401 = sbr.rel (0) target = $region33
  $region32: #{eeg_hybrid_forward.6} parent=0 // pred_region
    _
  $region33: #{eeg_hybrid_forward.6} parent=0 // pred_fallthru
    _
  // Predicated region
  $region34: #{eeg_hybrid_forward.6} parent=0 // pred_check
    _
  $region35: #{eeg_hybrid_forward.6} parent=0 // pred_check_branch
    %4403 = sbr.rel (0) target = $region37
  $region36: #{eeg_hybrid_forward.6} parent=0 // pred_region
    _
  $region37: #{eeg_hybrid_forward.6} parent=0 // pred_fallthru
    _

</llo_original>
